<compile_context>
chip_gen: v7x
topology: tpu7x:2x2x1
jax: 0.10.0
libtpu: 0.0.40
codegen_flags: <defaults>
</compile_context>

<pallas_src>
import functools

import jax
import jax.numpy as jnp
from jax.experimental import pallas as pl
from jax.experimental.pallas import tpu as pltpu

FC1_IN = 64 * 7 * 7        # 3136 (hard-coded by the module)
SPLIT = 512
FC1_OUT = 2 * SPLIT        # 1024
HEAD_N = 128               # lane-dense packed head width (cols 0..n_actions-1 are q)


def _round_up(x, m):
    return (x + m - 1) // m * m


# ---------------------------------------------------------------------------
# Pallas kernel: fc1 + ReLU + packed (combine-folded) dueling head
# ---------------------------------------------------------------------------
def _dueling_head_kernel(x_ref, w1_ref, b1_ref, wq_ref, bq_ref, o_ref):
    # fc1: cast the f32 x tile to bf16 in-VMEM, MXU matmul with f32 accumulation.
    xb = x_ref[...].astype(jnp.bfloat16)
    h = jnp.dot(xb, w1_ref[...], preferred_element_type=jnp.float32)
    h = jnp.maximum(h + b1_ref[...], 0.0)                       # (tile_b, 1024) f32

    # Packed dueling head: value broadcast + advantage-mean subtraction are already
    # folded into wq/bq, so one MXU matmul directly produces q (cols 0..n-1).
    q = jnp.dot(h.astype(wq_ref.dtype), wq_ref[...],
                preferred_element_type=jnp.float32) + bq_ref[...]
    o_ref[...] = q.astype(o_ref.dtype)                          # lane-dense (tile_b, 128)


# ---------------------------------------------------------------------------
# Wrapper: batch-tiled grid, VMEM-resident (single-buffered) weights
# ---------------------------------------------------------------------------
def dueling_head_forward(params, x, *, n_actions, tile_b=512):
    B, K = x.shape
    assert K == FC1_IN, (B, K)
    assert n_actions <= HEAD_N
    w1, b1 = params["w1"], params["b1"]      # (3136, 1024) bf16, (1, 1024) f32
    wq, bq = params["w_q"], params["b_q"]    # (1024, 128)  bf16, (1, 128)  f32

    # Batch tiling: no partial trailing tile; >=2 grid steps when it is cheap
    # (lets the "parallel" batch axis actually use both TensorCores on v7x).
    b_pad = _round_up(B, 8)
    if b_pad <= tile_b:
        if b_pad >= 16 and b_pad % 16 == 0:
            tile_b = b_pad // 2              # 2 full tiles, zero extra padding
        else:
            tile_b = b_pad                   # tiny batch: single step
    else:
        b_pad = _round_up(b_pad, tile_b)     # last grid block is a full tile
    if b_pad != B:
        x = jnp.pad(x, ((0, b_pad - B), (0, 0)))
    grid = (b_pad // tile_b,)

    # VMEM budget: x double-buffered f32, weights single-buffered, kernel temps.
    vmem_bytes = (2 * tile_b * K * 4                 # x tile, 2 buffers, f32
                  + K * FC1_OUT * 2                  # w1 bf16, 1 buffer
                  + FC1_OUT * 4                      # b1
                  + FC1_OUT * HEAD_N * 2 + HEAD_N * 4
                  + tile_b * K * 2                   # in-kernel bf16 copy of x tile
                  + tile_b * FC1_OUT * (4 + 2)       # h f32 + bf16
                  + 2 * tile_b * HEAD_N * 4)         # out tile, 2 buffers
    vmem_limit = int(min(110 << 20, vmem_bytes + (8 << 20)))

    flops = 2 * b_pad * K * FC1_OUT + 2 * b_pad * FC1_OUT * HEAD_N
    bytes_accessed = (b_pad * K * 4 + K * FC1_OUT * 2 + FC1_OUT * 4
                      + FC1_OUT * HEAD_N * 2 + HEAD_N * 4 + b_pad * HEAD_N * 4)

    resident = dict(pipeline_mode=pl.Buffered(1))    # constant index -> 1 buffer

    out = pl.pallas_call(
        _dueling_head_kernel,
        out_shape=jax.ShapeDtypeStruct((b_pad, HEAD_N), jnp.float32),
        grid_spec=pltpu.PrefetchScalarGridSpec(
            num_scalar_prefetch=0,
            grid=grid,
            in_specs=[
                pl.BlockSpec((tile_b, K), lambda i: (i, 0)),                   # x (pipelined)
                pl.BlockSpec((K, FC1_OUT), lambda i: (0, 0), **resident),      # fc1 W
                pl.BlockSpec((1, FC1_OUT), lambda i: (0, 0), **resident),      # fc1 b
                pl.BlockSpec((FC1_OUT, HEAD_N), lambda i: (0, 0), **resident), # packed head W
                pl.BlockSpec((1, HEAD_N), lambda i: (0, 0), **resident),       # packed head b
            ],
            out_specs=pl.BlockSpec((tile_b, HEAD_N), lambda i: (i, 0)),
        ),
        compiler_params=pltpu.CompilerParams(
            dimension_semantics=("parallel",),       # megacore sharding on v7x
            vmem_limit_bytes=vmem_limit,
        ),
        cost_estimate=pl.CostEstimate(
            flops=flops, transcendentals=0, bytes_accessed=bytes_accessed),
    )(x, w1, b1, wq, bq)

    return out[:B, :n_actions]


# ---------------------------------------------------------------------------
# Parameter init (torch default nn.Linear init) + kernel-layout packing
# ---------------------------------------------------------------------------
def init_raw_params(key, n_actions=4):
    """f32 parameters mirroring torch's default nn.Linear init, stored (in, out)."""
    def linear_init(k, fan_in, fan_out):
        k1, k2 = jax.random.split(k)
        bound = 1.0 / float(fan_in) ** 0.5
        w = jax.random.uniform(k1, (fan_in, fan_out), jnp.float32, -bound, bound)
        b = jax.random.uniform(k2, (fan_out,), jnp.float32, -bound, bound)
        return w, b

    k1, k2, k3 = jax.random.split(key, 3)
    w1, b1 = linear_init(k1, FC1_IN, FC1_OUT)       # fc1
    wv, bv = linear_init(k2, SPLIT, 1)              # value head
    wa, ba = linear_init(k3, SPLIT, n_actions)      # advantage head
    return {"w1": w1, "b1": b1, "wv": wv, "bv": bv, "wa": wa, "ba": ba}


def pack_params(raw, n_actions=4):
    """Pack fc1 + value/advantage heads into the kernel layout, folding the dueling
    combine (value broadcast + advantage-mean subtraction) into the head weights."""
    assert n_actions <= HEAD_N, n_actions
    w1, b1 = raw["w1"], raw["b1"]
    wv, bv = raw["wv"], raw["bv"]
    wa, ba = raw["wa"], raw["ba"]

    wa_c = wa - jnp.mean(wa, axis=1, keepdims=True)           # (512, n_actions)
    bq_c = bv[0] + ba - jnp.mean(ba)                           # (n_actions,)

    w_q = jnp.zeros((FC1_OUT, HEAD_N), jnp.float32)
    w_q = w_q.at[:SPLIT, :n_actions].set(jnp.broadcast_to(wv, (SPLIT, n_actions)))
    w_q = w_q.at[SPLIT:, :n_actions].set(wa_c)
    b_q = jnp.zeros((1, HEAD_N), jnp.float32).at[0, :n_actions].set(bq_c)

    return {
        "w1": w1.astype(jnp.bfloat16),        # (3136, 1024)
        "b1": b1.reshape(1, FC1_OUT),         # (1, 1024) f32
        "w_q": w_q.astype(jnp.bfloat16),      # (1024, 128)
        "b_q": b_q,                           # (1, 128)  f32
    }


# ---------------------------------------------------------------------------
# Pure-JAX f32 reference with the exact PyTorch DuelingHeadNet semantics
# ---------------------------------------------------------------------------
def module_reference(raw, x, n_actions):
    h = jnp.maximum(jnp.dot(x, raw["w1"]) + raw["b1"], 0.0)
    h1, h2 = h[:, :SPLIT], h[:, SPLIT:]
    value = jnp.dot(h1, raw["wv"]) + raw["bv"]
    adv = jnp.dot(h2, raw["wa"]) + raw["ba"]
    return value + adv - jnp.mean(adv, axis=1, keepdims=True)


if __name__ == "__main__":
    n_actions = 4
    key = jax.random.PRNGKey(0)
    kp, kx = jax.random.split(key)

    raw = init_raw_params(kp, n_actions=n_actions)
    params = pack_params(raw, n_actions=n_actions)
    # Feature dim is hard-coded to 64*7*7 = 3136 by the module; small batch = 2.
    x = jax.random.normal(kx, (2, FC1_IN), dtype=jnp.float32)

    fwd = jax.jit(functools.partial(dueling_head_forward, n_actions=n_actions))
    q = jax.block_until_ready(fwd(params, x))

    assert q.shape == (2, n_actions), q.shape
    assert q.dtype == jnp.float32, q.dtype
    assert bool(jnp.all(jnp.isfinite(q)))
    ref = module_reference(raw, x, n_actions)
    # bf16 MXU inputs (f32 accumulation) -> close to, but not bit-identical to,
    # the f32 PyTorch module; document this for downstream RL loss code.
    assert bool(jnp.allclose(q, ref, rtol=2e-2, atol=2e-2)), (q, ref)
    print("KERNEL_OK")
</pallas_src>

<mosaic_0001>
module attributes {stable_mosaic.version = 11 : i64} {
  func.func @_dueling_head_kernel(%arg0: i32, %arg1: memref<8x3136xf32, #tpu.memory_space<vmem>>, %arg2: memref<3136x1024xbf16, #tpu.memory_space<vmem>>, %arg3: memref<1x1024xf32, #tpu.memory_space<vmem>>, %arg4: memref<1024x128xbf16, #tpu.memory_space<vmem>>, %arg5: memref<1x128xf32, #tpu.memory_space<vmem>>, %arg6: memref<8x128xf32, #tpu.memory_space<vmem>>) attributes {dimension_semantics = [#tpu.dimension_semantics<parallel>], iteration_bounds = array<i64: 1>, scalar_prefetch = 0 : i64, scratch_operands = 0 : i64, tpu.core_type = #tpu.core_type<tc>, window_params = [{transform_indices = @transform_0, window_bounds = array<i64: 8, 3136>}, {pipeline_mode = #tpu.pipeline_mode<synchronous>, transform_indices = @transform_1, window_bounds = array<i64: 3136, 1024>}, {pipeline_mode = #tpu.pipeline_mode<synchronous>, transform_indices = @transform_2, window_bounds = array<i64: 1, 1024>}, {pipeline_mode = #tpu.pipeline_mode<synchronous>, transform_indices = @transform_3, window_bounds = array<i64: 1024, 128>}, {pipeline_mode = #tpu.pipeline_mode<synchronous>, transform_indices = @transform_4, window_bounds = array<i64: 1, 128>}, {transform_indices = @transform_5, window_bounds = array<i64: 8, 128>}]} {
    %c0 = arith.constant 0 : index
    %c0_0 = arith.constant 0 : index
    %0 = vector.load %arg1[%c0, %c0_0] : memref<8x3136xf32, #tpu.memory_space<vmem>>, vector<8x3136xf32>
    %1 = arith.truncf %0 : vector<8x3136xf32> to vector<8x3136xbf16>
    %c0_1 = arith.constant 0 : index
    %c0_2 = arith.constant 0 : index
    %2 = vector.load %arg2[%c0_1, %c0_2] : memref<3136x1024xbf16, #tpu.memory_space<vmem>>, vector<3136x1024xbf16>
    %cst = arith.constant dense<0.000000e+00> : vector<8x1024xf32>
    %3 = tpu.matmul %1, %2, %cst {dimension_numbers = #tpu.dot_dimension_numbers<[1], [0], [0], [1], [0, 0, 1, 1], [], []>} : vector<8x3136xbf16>, vector<3136x1024xbf16>, vector<8x1024xf32> -> vector<8x1024xf32>
    %c0_3 = arith.constant 0 : index
    %c0_4 = arith.constant 0 : index
    %4 = vector.load %arg3[%c0_3, %c0_4] : memref<1x1024xf32, #tpu.memory_space<vmem>>, vector<1x1024xf32>
    %5 = vector.broadcast %4 : vector<1x1024xf32> to vector<8x1024xf32>
    %6 = arith.addf %3, %5 : vector<8x1024xf32>
    %cst_5 = arith.constant 0.000000e+00 : f32
    %7 = vector.broadcast %cst_5 : f32 to vector<8x1024xf32>
    %8 = arith.maximumf %6, %7 : vector<8x1024xf32>
    %9 = arith.truncf %8 : vector<8x1024xf32> to vector<8x1024xbf16>
    %c0_6 = arith.constant 0 : index
    %c0_7 = arith.constant 0 : index
    %10 = vector.load %arg4[%c0_6, %c0_7] : memref<1024x128xbf16, #tpu.memory_space<vmem>>, vector<1024x128xbf16>
    %cst_8 = arith.constant dense<0.000000e+00> : vector<8x128xf32>
    %11 = tpu.matmul %9, %10, %cst_8 {dimension_numbers = #tpu.dot_dimension_numbers<[1], [0], [0], [1], [0, 0, 1, 1], [], []>} : vector<8x1024xbf16>, vector<1024x128xbf16>, vector<8x128xf32> -> vector<8x128xf32>
    %c0_9 = arith.constant 0 : index
    %c0_10 = arith.constant 0 : index
    %12 = vector.load %arg5[%c0_9, %c0_10] : memref<1x128xf32, #tpu.memory_space<vmem>>, vector<1x128xf32>
    %13 = vector.broadcast %12 : vector<1x128xf32> to vector<8x128xf32>
    %14 = arith.addf %11, %13 : vector<8x128xf32>
    %c0_11 = arith.constant 0 : index
    %c0_12 = arith.constant 0 : index
    %15 = vector.load %arg6[%c0_11, %c0_12] : memref<8x128xf32, #tpu.memory_space<vmem>>, vector<8x128xf32>
    tpu.vector_store %arg6[%c0_11, %c0_12], %14 {strides = array<i32>} : memref<8x128xf32, #tpu.memory_space<vmem>>, vector<8x128xf32>,
    return
  }
  func.func @transform_0(%arg0: i32) -> (i32, i32) {
    %c0_i32 = arith.constant 0 : i32
    %c0_i32_0 = arith.constant 0 : i32
    return %arg0, %c0_i32 : i32, i32
  }
  func.func @transform_1(%arg0: i32) -> (i32, i32) {
    %c0_i32 = arith.constant 0 : i32
    %c0_i32_0 = arith.constant 0 : i32
    %c0_i32_1 = arith.constant 0 : i32
    return %c0_i32, %c0_i32_0 : i32, i32
  }
  func.func @transform_2(%arg0: i32) -> (i32, i32) {
    %c0_i32 = arith.constant 0 : i32
    %c0_i32_0 = arith.constant 0 : i32
    %c0_i32_1 = arith.constant 0 : i32
    return %c0_i32, %c0_i32_0 : i32, i32
  }
  func.func @transform_3(%arg0: i32) -> (i32, i32) {
    %c0_i32 = arith.constant 0 : i32
    %c0_i32_0 = arith.constant 0 : i32
    %c0_i32_1 = arith.constant 0 : i32
    return %c0_i32, %c0_i32_0 : i32, i32
  }
  func.func @transform_4(%arg0: i32) -> (i32, i32) {
    %c0_i32 = arith.constant 0 : i32
    %c0_i32_0 = arith.constant 0 : i32
    %c0_i32_1 = arith.constant 0 : i32
    return %c0_i32, %c0_i32_0 : i32, i32
  }
  func.func @transform_5(%arg0: i32) -> (i32, i32) {
    %c0_i32 = arith.constant 0 : i32
    %c0_i32_0 = arith.constant 0 : i32
    return %arg0, %c0_i32 : i32, i32
  }
}

</mosaic_0001>

<llo_original>
// kernel: dueling_head_forward.1
$region0: #{dueling_head_forward.1}
  #allocation0 [shape = 'u32[]', space=smem, size = 0x4, offset = 0x4, fixed_abs, tag = 'smem constant byte address 0x4 - core index']
  #allocation1 [shape = 'u32[144,128]{1,0:T(1,128)}', space=vmem, size = 0x12000, scoped, tag = 'internal scratch']
  %s0 = inlined_call_operand.vmem [shape: f32[8,3136], index: 0, kind: input, shape index: {}]
  %s1 = inlined_call_operand.hbm [shape: bf16[3136,1024], index: 1, kind: input, shape index: {}]
  %s2 = inlined_call_operand.hbm [shape: f32[1,1024], index: 2, kind: input, shape index: {}]
  %s3 = inlined_call_operand.hbm [shape: bf16[1024,128], index: 3, kind: input, shape index: {}]
  %s4 = inlined_call_operand.hbm [shape: f32[1,128], index: 4, kind: input, shape index: {}]
  %s5 = inlined_call_operand.vmem [shape: f32[8,128], index: 5, kind: output, shape index: {}]
  %s6 = sld [smem:[#allocation0]]
  $region46: #{dueling_head_forward.1} parent=0
    _
  %s8 = ssub.s32 1, %s6
  %s9 = scalar_select 0, %s8, %s6
  $region1: #{dueling_head_forward.1} parent=0
    #allocation2 [shape = 'u8[6422528]{0}', space=vmem, size = 0x620000, scoped, tag = 'input window, operand 1, single buffered']
    #allocation3 [shape = 's32[1]{0}', space=sflag, size = 0x4, scoped, tag = 'scoped memory for dueling_head_forward.1']
    #allocation4 [shape = 'u8[4096]{0}', space=vmem, size = 0x1000, scoped, tag = 'input window, operand 2, single buffered']
    #allocation5 [shape = 's32[1]{0}', space=sflag, size = 0x4, scoped, tag = 'scoped memory for dueling_head_forward.1']
    #allocation6 [shape = 'u8[262144]{0}', space=vmem, size = 0x40000, scoped, tag = 'input window, operand 3, single buffered']
    #allocation7 [shape = 'u8[512]{0}', space=vmem, size = 0x400, scoped, tag = 'input window, operand 4, single buffered']
    #allocation8 [shape = 's32[1]{0}', space=sflag, size = 0x4, scoped, tag = 'scoped memory for dueling_head_forward.1']
    %10 = vsyncpa [#allocation3], 0
    %11 = vsyncpa [#allocation5], 0
    %12 = vsyncpa [#allocation8], 0
    // Predicated region
    $region2: #{dueling_head_forward.1} parent=1 // pred_check
      _
    $region3: #{dueling_head_forward.1} parent=1 // pred_check_branch
      %14 = sbr.rel (0) target = $region5
    $region4: #{dueling_head_forward.1} parent=1 // pred_region
      _
    $region5: #{dueling_head_forward.1} parent=1 // pred_fallthru
      _
    // Predicated region
    $region6: #{dueling_head_forward.1} parent=1 // pred_check
      _
    $region7: #{dueling_head_forward.1} parent=1 // pred_check_branch
      %16 = sbr.rel (0) target = $region9
    $region8: #{dueling_head_forward.1} parent=1 // pred_region
      %s18 = ssub.s32 200704, 200704
      %19 = vsyncadd [#allocation3], %s18
      %s20 = sshll.u32 [#allocation2], 4
      %s21 = int_to_ptr.vmem [resolvable:$true] %s20
      %26 = dma.hbm_to_vmem [thread:$0]  %s1, 200704, %s21, [#allocation3], 512, 512, 32
    $region9: #{dueling_head_forward.1} parent=1 // pred_fallthru
      _
    // Predicated region
    $region10: #{dueling_head_forward.1} parent=1 // pred_check
      _
    $region11: #{dueling_head_forward.1} parent=1 // pred_check_branch
      %28 = sbr.rel (0) target = $region13
    $region12: #{dueling_head_forward.1} parent=1 // pred_region
      %s30 = ssub.s32 128, 128
      %31 = vsyncadd [#allocation5], %s30
      %s33 = sshll.u32 [#allocation4], 4
      %s34 = int_to_ptr.vmem [resolvable:$true] %s33
      %36 = dma.hbm_to_vmem [thread:$0]  %s2, 128, %s34, [#allocation5]
    $region13: #{dueling_head_forward.1} parent=1 // pred_fallthru
      _
    // Predicated region
    $region14: #{dueling_head_forward.1} parent=1 // pred_check
      _
    $region15: #{dueling_head_forward.1} parent=1 // pred_check_branch
      %38 = sbr.rel (0) target = $region17
    $region16: #{dueling_head_forward.1} parent=1 // pred_region
      %s40 = ssub.s32 8192, 8192
      %41 = vsyncadd [#allocation5], %s40
      %s42 = sshll.u32 [#allocation6], 4
      %s43 = int_to_ptr.vmem [resolvable:$true] %s42
      %48 = dma.hbm_to_vmem [thread:$0]  %s3, 8192, %s43, [#allocation5], 64, 64, 4
    $region17: #{dueling_head_forward.1} parent=1 // pred_fallthru
      _
    // Predicated region
    $region18: #{dueling_head_forward.1} parent=1 // pred_check
      _
    $region19: #{dueling_head_forward.1} parent=1 // pred_check_branch
      %50 = sbr.rel (0) target = $region21
    $region20: #{dueling_head_forward.1} parent=1 // pred_region
      %s52 = ssub.s32 16, 16
      %53 = vsyncadd [#allocation8], %s52
      %s55 = sshll.u32 [#allocation7], 4
      %s56 = int_to_ptr.vmem [resolvable:$true] %s55
      %58 = dma.hbm_to_vmem [thread:$0]  %s4, 16, %s56, [#allocation8]
    $region21: #{dueling_head_forward.1} parent=1 // pred_fallthru
      _
    // Predicated region
    $region22: #{dueling_head_forward.1} parent=1 // pred_check
      _
    $region23: #{dueling_head_forward.1} parent=1 // pred_check_branch
      %60 = sbr.rel (0) target = $region25
    $region24: #{dueling_head_forward.1} parent=1 // pred_region
      %61 = dma.done [#allocation3], 200704
    $region25: #{dueling_head_forward.1} parent=1 // pred_fallthru
      _
    // Predicated region
    $region26: #{dueling_head_forward.1} parent=1 // pred_check
      _
    $region27: #{dueling_head_forward.1} parent=1 // pred_check_branch
      %63 = sbr.rel (0) target = $region29
    $region28: #{dueling_head_forward.1} parent=1 // pred_region
      %64 = dma.done [#allocation5], 128
    $region29: #{dueling_head_forward.1} parent=1 // pred_fallthru
      _
    // Predicated region
    $region30: #{dueling_head_forward.1} parent=1 // pred_check
      _
    $region31: #{dueling_head_forward.1} parent=1 // pred_check_branch
      %66 = sbr.rel (0) target = $region33
    $region32: #{dueling_head_forward.1} parent=1 // pred_region
      %67 = dma.done [#allocation5], 8192
    $region33: #{dueling_head_forward.1} parent=1 // pred_fallthru
      _
    // Predicated region
    $region34: #{dueling_head_forward.1} parent=1 // pred_check
      _
    $region35: #{dueling_head_forward.1} parent=1 // pred_check_branch
      %69 = sbr.rel (0) target = $region37
    $region36: #{dueling_head_forward.1} parent=1 // pred_region
      %70 = dma.done [#allocation8], 16
    $region37: #{dueling_head_forward.1} parent=1 // pred_fallthru
      _
    %v72 = vld [vmem:[%s0] sm:$0xff]
    %v73 = vld [vmem:[%s0 + $0x8] sm:$0xff]
    %v74 = vld [vmem:[%s0 + $0x10] sm:$0xff]
    %v75 = vld [vmem:[%s0 + $0x18] sm:$0xff]
    %v76 = vld [vmem:[%s0 + $0x20] sm:$0xff]
    %v77 = vld [vmem:[%s0 + $0x28] sm:$0xff]
    %v78 = vld [vmem:[%s0 + $0x30] sm:$0xff]
    %v79 = vld [vmem:[%s0 + $0x38] sm:$0xff]
    %v80 = vld [vmem:[%s0 + $0x40] sm:$0xff]
    %v81 = vld [vmem:[%s0 + $0x48] sm:$0xff]
    %v82 = vld [vmem:[%s0 + $0x50] sm:$0xff]
    %v83 = vld [vmem:[%s0 + $0x58] sm:$0xff]
    %v84 = vld [vmem:[%s0 + $0x60] sm:$0xff]
    %v85 = vld [vmem:[%s0 + $0x68] sm:$0xff]
    %v86 = vld [vmem:[%s0 + $0x70] sm:$0xff]
    %v87 = vld [vmem:[%s0 + $0x78] sm:$0xff]
    %v88 = vld [vmem:[%s0 + $0x80] sm:$0xff]
    %v89 = vld [vmem:[%s0 + $0x88] sm:$0xff]
    %v90 = vld [vmem:[%s0 + $0x90] sm:$0xff]
    %v91 = vld [vmem:[%s0 + $0x98] sm:$0xff]
    %v92 = vld [vmem:[%s0 + $0xa0] sm:$0xff]
    %v93 = vld [vmem:[%s0 + $0xa8] sm:$0xff]
    %v94 = vld [vmem:[%s0 + $0xb0] sm:$0xff]
    %v95 = vld [vmem:[%s0 + $0xb8] sm:$0xff]
    %v96 = vld [vmem:[%s0 + $0xc0] sm:$0xff]
    %v97 = vpack.c.bf16 %v72, %v72
    %v98 = vpack.c.bf16 %v73, %v73
    %v99 = vpack.c.bf16 %v74, %v74
    %v100 = vpack.c.bf16 %v75, %v75
    %v101 = vpack.c.bf16 %v76, %v76
    %v102 = vpack.c.bf16 %v77, %v77
    %v103 = vpack.c.bf16 %v78, %v78
    %v104 = vpack.c.bf16 %v79, %v79
    %v105 = vpack.c.bf16 %v80, %v80
    %v106 = vpack.c.bf16 %v81, %v81
    %v107 = vpack.c.bf16 %v82, %v82
    %v108 = vpack.c.bf16 %v83, %v83
    %v109 = vpack.c.bf16 %v84, %v84
    %v110 = vpack.c.bf16 %v85, %v85
    %v111 = vpack.c.bf16 %v86, %v86
    %v112 = vpack.c.bf16 %v87, %v87
    %v113 = vpack.c.bf16 %v88, %v88
    %v114 = vpack.c.bf16 %v89, %v89
    %v115 = vpack.c.bf16 %v90, %v90
    %v116 = vpack.c.bf16 %v91, %v91
    %v117 = vpack.c.bf16 %v92, %v92
    %v118 = vpack.c.bf16 %v93, %v93
    %v119 = vpack.c.bf16 %v94, %v94
    %v120 = vpack.c.bf16 %v95, %v95
    %v121 = vpack.c.bf16 %v96, %v96
    %v122 = vld [vmem:[#allocation2] sm:$0xff]
    %v123 = vld [vmem:[#allocation2 + $0x8] sm:$0xff]
    %v124 = vld [vmem:[#allocation2 + $0x10] sm:$0xff]
    %v125 = vld [vmem:[#allocation2 + $0x18] sm:$0xff]
    %v126 = vld [vmem:[#allocation2 + $0x20] sm:$0xff]
    %v127 = vld [vmem:[#allocation2 + $0x28] sm:$0xff]
    %v128 = vld [vmem:[#allocation2 + $0x30] sm:$0xff]
    %v129 = vld [vmem:[#allocation2 + $0x38] sm:$0xff]
    %v130 = vld [vmem:[#allocation2 + $0x40] sm:$0xff]
    %v131 = vld [vmem:[#allocation2 + $0x48] sm:$0xff]
    %v132 = vld [vmem:[#allocation2 + $0x50] sm:$0xff]
    %v133 = vld [vmem:[#allocation2 + $0x58] sm:$0xff]
    %v134 = vld [vmem:[#allocation2 + $0x60] sm:$0xff]
    %v135 = vld [vmem:[#allocation2 + $0x68] sm:$0xff]
    %v136 = vld [vmem:[#allocation2 + $0x70] sm:$0xff]
    %v137 = vld [vmem:[#allocation2 + $0x78] sm:$0xff]
    %v138 = vld [vmem:[#allocation2 + $0x80] sm:$0xff]
    %v139 = vld [vmem:[#allocation2 + $0x88] sm:$0xff]
    %v140 = vld [vmem:[#allocation2 + $0x90] sm:$0xff]
    %v141 = vld [vmem:[#allocation2 + $0x98] sm:$0xff]
    %v142 = vld [vmem:[#allocation2 + $0xa0] sm:$0xff]
    %v143 = vld [vmem:[#allocation2 + $0xa8] sm:$0xff]
    %v144 = vld [vmem:[#allocation2 + $0xb0] sm:$0xff]
    %v145 = vld [vmem:[#allocation2 + $0xb8] sm:$0xff]
    %v146 = vld [vmem:[#allocation2 + $0xc0] sm:$0xff]
    %v147 = vld [vmem:[#allocation2 + $0xc8] sm:$0xff]
    %v148 = vld [vmem:[#allocation2 + $0xd0] sm:$0xff]
    %v149 = vld [vmem:[#allocation2 + $0xd8] sm:$0xff]
    %v150 = vld [vmem:[#allocation2 + $0xe0] sm:$0xff]
    %v151 = vld [vmem:[#allocation2 + $0xe8] sm:$0xff]
    %v152 = vld [vmem:[#allocation2 + $0xf0] sm:$0xff]
    %v153 = vld [vmem:[#allocation2 + $0xf8] sm:$0xff]
    %v154 = vld [vmem:[#allocation2 + $0x100] sm:$0xff]
    %v155 = vld [vmem:[#allocation2 + $0x108] sm:$0xff]
    %v156 = vld [vmem:[#allocation2 + $0x110] sm:$0xff]
    %v157 = vld [vmem:[#allocation2 + $0x118] sm:$0xff]
    %v158 = vld [vmem:[#allocation2 + $0x120] sm:$0xff]
    %v159 = vld [vmem:[#allocation2 + $0x128] sm:$0xff]
    %v160 = vld [vmem:[#allocation2 + $0x130] sm:$0xff]
    %v161 = vld [vmem:[#allocation2 + $0x138] sm:$0xff]
    %v162 = vld [vmem:[#allocation2 + $0x140] sm:$0xff]
    %v163 = vld [vmem:[#allocation2 + $0x148] sm:$0xff]
    %v164 = vld [vmem:[#allocation2 + $0x150] sm:$0xff]
    %v165 = vld [vmem:[#allocation2 + $0x158] sm:$0xff]
    %v166 = vld [vmem:[#allocation2 + $0x160] sm:$0xff]
    %v167 = vld [vmem:[#allocation2 + $0x168] sm:$0xff]
    %v168 = vld [vmem:[#allocation2 + $0x170] sm:$0xff]
    %v169 = vld [vmem:[#allocation2 + $0x178] sm:$0xff]
    %v170 = vld [vmem:[#allocation2 + $0x180] sm:$0xff]
    %v171 = vld [vmem:[#allocation2 + $0x188] sm:$0xff]
    %v172 = vld [vmem:[#allocation2 + $0x190] sm:$0xff]
    %v173 = vld [vmem:[#allocation2 + $0x198] sm:$0xff]
    %v174 = vld [vmem:[#allocation2 + $0x1a0] sm:$0xff]
    %v175 = vld [vmem:[#allocation2 + $0x1a8] sm:$0xff]
    %v176 = vld [vmem:[#allocation2 + $0x1b0] sm:$0xff]
    %v177 = vld [vmem:[#allocation2 + $0x1b8] sm:$0xff]
    %v178 = vld [vmem:[#allocation2 + $0x1c0] sm:$0xff]
    %v179 = vld [vmem:[#allocation2 + $0x1c8] sm:$0xff]
    %v180 = vld [vmem:[#allocation2 + $0x1d0] sm:$0xff]
    %v181 = vld [vmem:[#allocation2 + $0x1d8] sm:$0xff]
    %v182 = vld [vmem:[#allocation2 + $0x1e0] sm:$0xff]
    %v183 = vld [vmem:[#allocation2 + $0x1e8] sm:$0xff]
    %v184 = vld [vmem:[#allocation2 + $0x1f0] sm:$0xff]
    %v185 = vld [vmem:[#allocation2 + $0x1f8] sm:$0xff]
    %v186 = vld [vmem:[#allocation2 + $0x200] sm:$0xff]
    %v187 = vld [vmem:[#allocation2 + $0x208] sm:$0xff]
    %v188 = vld [vmem:[#allocation2 + $0x210] sm:$0xff]
    %v189 = vld [vmem:[#allocation2 + $0x218] sm:$0xff]
    %v190 = vld [vmem:[#allocation2 + $0x220] sm:$0xff]
    %v191 = vld [vmem:[#allocation2 + $0x228] sm:$0xff]
    %v192 = vld [vmem:[#allocation2 + $0x230] sm:$0xff]
    %v193 = vld [vmem:[#allocation2 + $0x238] sm:$0xff]
    %v194 = vld [vmem:[#allocation2 + $0x240] sm:$0xff]
    %v195 = vld [vmem:[#allocation2 + $0x248] sm:$0xff]
    %v196 = vld [vmem:[#allocation2 + $0x250] sm:$0xff]
    %v197 = vld [vmem:[#allocation2 + $0x258] sm:$0xff]
    %v198 = vld [vmem:[#allocation2 + $0x260] sm:$0xff]
    %v199 = vld [vmem:[#allocation2 + $0x268] sm:$0xff]
    %v200 = vld [vmem:[#allocation2 + $0x270] sm:$0xff]
    %v201 = vld [vmem:[#allocation2 + $0x278] sm:$0xff]
    %v202 = vld [vmem:[#allocation2 + $0x280] sm:$0xff]
    %v203 = vld [vmem:[#allocation2 + $0x288] sm:$0xff]
    %v204 = vld [vmem:[#allocation2 + $0x290] sm:$0xff]
    %v205 = vld [vmem:[#allocation2 + $0x298] sm:$0xff]
    %v206 = vld [vmem:[#allocation2 + $0x2a0] sm:$0xff]
    %v207 = vld [vmem:[#allocation2 + $0x2a8] sm:$0xff]
    %v208 = vld [vmem:[#allocation2 + $0x2b0] sm:$0xff]
    %v209 = vld [vmem:[#allocation2 + $0x2b8] sm:$0xff]
    %v210 = vld [vmem:[#allocation2 + $0x2c0] sm:$0xff]
    %v211 = vld [vmem:[#allocation2 + $0x2c8] sm:$0xff]
    %v212 = vld [vmem:[#allocation2 + $0x2d0] sm:$0xff]
    %v213 = vld [vmem:[#allocation2 + $0x2d8] sm:$0xff]
    %v214 = vld [vmem:[#allocation2 + $0x2e0] sm:$0xff]
    %v215 = vld [vmem:[#allocation2 + $0x2e8] sm:$0xff]
    %v216 = vld [vmem:[#allocation2 + $0x2f0] sm:$0xff]
    %v217 = vld [vmem:[#allocation2 + $0x2f8] sm:$0xff]
    %v218 = vld [vmem:[#allocation2 + $0x300] sm:$0xff]
    %v219 = vld [vmem:[#allocation2 + $0x308] sm:$0xff]
    %v220 = vld [vmem:[#allocation2 + $0x310] sm:$0xff]
    %v221 = vld [vmem:[#allocation2 + $0x318] sm:$0xff]
    %v222 = vld [vmem:[#allocation2 + $0x320] sm:$0xff]
    %v223 = vld [vmem:[#allocation2 + $0x328] sm:$0xff]
    %v224 = vld [vmem:[#allocation2 + $0x330] sm:$0xff]
    %v225 = vld [vmem:[#allocation2 + $0x338] sm:$0xff]
    %v226 = vld [vmem:[#allocation2 + $0x340] sm:$0xff]
    %v227 = vld [vmem:[#allocation2 + $0x348] sm:$0xff]
    %v228 = vld [vmem:[#allocation2 + $0x350] sm:$0xff]
    %v229 = vld [vmem:[#allocation2 + $0x358] sm:$0xff]
    %v230 = vld [vmem:[#allocation2 + $0x360] sm:$0xff]
    %v231 = vld [vmem:[#allocation2 + $0x368] sm:$0xff]
    %v232 = vld [vmem:[#allocation2 + $0x370] sm:$0xff]
    %v233 = vld [vmem:[#allocation2 + $0x378] sm:$0xff]
    %v234 = vld [vmem:[#allocation2 + $0x380] sm:$0xff]
    %v235 = vld [vmem:[#allocation2 + $0x388] sm:$0xff]
    %v236 = vld [vmem:[#allocation2 + $0x390] sm:$0xff]
    %v237 = vld [vmem:[#allocation2 + $0x398] sm:$0xff]
    %v238 = vld [vmem:[#allocation2 + $0x3a0] sm:$0xff]
    %v239 = vld [vmem:[#allocation2 + $0x3a8] sm:$0xff]
    %v240 = vld [vmem:[#allocation2 + $0x3b0] sm:$0xff]
    %v241 = vld [vmem:[#allocation2 + $0x3b8] sm:$0xff]
    %v242 = vld [vmem:[#allocation2 + $0x3c0] sm:$0xff]
    %v243 = vld [vmem:[#allocation2 + $0x3c8] sm:$0xff]
    %v244 = vld [vmem:[#allocation2 + $0x3d0] sm:$0xff]
    %v245 = vld [vmem:[#allocation2 + $0x3d8] sm:$0xff]
    %v246 = vld [vmem:[#allocation2 + $0x3e0] sm:$0xff]
    %v247 = vld [vmem:[#allocation2 + $0x3e8] sm:$0xff]
    %v248 = vld [vmem:[#allocation2 + $0x3f0] sm:$0xff]
    %v249 = vld [vmem:[#allocation2 + $0x3f8] sm:$0xff]
    %v250 = vld [vmem:[#allocation2 + $0x400] sm:$0xff]
    %v251 = vld [vmem:[#allocation2 + $0x408] sm:$0xff]
    %v252 = vld [vmem:[#allocation2 + $0x410] sm:$0xff]
    %v253 = vld [vmem:[#allocation2 + $0x418] sm:$0xff]
    %v254 = vld [vmem:[#allocation2 + $0x420] sm:$0xff]
    %v255 = vld [vmem:[#allocation2 + $0x428] sm:$0xff]
    %v256 = vld [vmem:[#allocation2 + $0x430] sm:$0xff]
    %v257 = vld [vmem:[#allocation2 + $0x438] sm:$0xff]
    %v258 = vld [vmem:[#allocation2 + $0x440] sm:$0xff]
    %v259 = vld [vmem:[#allocation2 + $0x448] sm:$0xff]
    %v260 = vld [vmem:[#allocation2 + $0x450] sm:$0xff]
    %v261 = vld [vmem:[#allocation2 + $0x458] sm:$0xff]
    %v262 = vld [vmem:[#allocation2 + $0x460] sm:$0xff]
    %v263 = vld [vmem:[#allocation2 + $0x468] sm:$0xff]
    %v264 = vld [vmem:[#allocation2 + $0x470] sm:$0xff]
    %v265 = vld [vmem:[#allocation2 + $0x478] sm:$0xff]
    %v266 = vld [vmem:[#allocation2 + $0x480] sm:$0xff]
    %v267 = vld [vmem:[#allocation2 + $0x488] sm:$0xff]
    %v268 = vld [vmem:[#allocation2 + $0x490] sm:$0xff]
    %v269 = vld [vmem:[#allocation2 + $0x498] sm:$0xff]
    %v270 = vld [vmem:[#allocation2 + $0x4a0] sm:$0xff]
    %v271 = vld [vmem:[#allocation2 + $0x4a8] sm:$0xff]
    %v272 = vld [vmem:[#allocation2 + $0x4b0] sm:$0xff]
    %v273 = vld [vmem:[#allocation2 + $0x4b8] sm:$0xff]
    %v274 = vld [vmem:[#allocation2 + $0x4c0] sm:$0xff]
    %v275 = vld [vmem:[#allocation2 + $0x4c8] sm:$0xff]
    %v276 = vld [vmem:[#allocation2 + $0x4d0] sm:$0xff]
    %v277 = vld [vmem:[#allocation2 + $0x4d8] sm:$0xff]
    %v278 = vld [vmem:[#allocation2 + $0x4e0] sm:$0xff]
    %v279 = vld [vmem:[#allocation2 + $0x4e8] sm:$0xff]
    %v280 = vld [vmem:[#allocation2 + $0x4f0] sm:$0xff]
    %v281 = vld [vmem:[#allocation2 + $0x4f8] sm:$0xff]
    %v282 = vld [vmem:[#allocation2 + $0x500] sm:$0xff]
    %v283 = vld [vmem:[#allocation2 + $0x508] sm:$0xff]
    %v284 = vld [vmem:[#allocation2 + $0x510] sm:$0xff]
    %v285 = vld [vmem:[#allocation2 + $0x518] sm:$0xff]
    %v286 = vld [vmem:[#allocation2 + $0x520] sm:$0xff]
    %v287 = vld [vmem:[#allocation2 + $0x528] sm:$0xff]
    %v288 = vld [vmem:[#allocation2 + $0x530] sm:$0xff]
    %v289 = vld [vmem:[#allocation2 + $0x538] sm:$0xff]
    %v290 = vld [vmem:[#allocation2 + $0x540] sm:$0xff]
    %v291 = vld [vmem:[#allocation2 + $0x548] sm:$0xff]
    %v292 = vld [vmem:[#allocation2 + $0x550] sm:$0xff]
    %v293 = vld [vmem:[#allocation2 + $0x558] sm:$0xff]
    %v294 = vld [vmem:[#allocation2 + $0x560] sm:$0xff]
    %v295 = vld [vmem:[#allocation2 + $0x568] sm:$0xff]
    %v296 = vld [vmem:[#allocation2 + $0x570] sm:$0xff]
    %v297 = vld [vmem:[#allocation2 + $0x578] sm:$0xff]
    %v298 = vld [vmem:[#allocation2 + $0x580] sm:$0xff]
    %v299 = vld [vmem:[#allocation2 + $0x588] sm:$0xff]
    %v300 = vld [vmem:[#allocation2 + $0x590] sm:$0xff]
    %v301 = vld [vmem:[#allocation2 + $0x598] sm:$0xff]
    %v302 = vld [vmem:[#allocation2 + $0x5a0] sm:$0xff]
    %v303 = vld [vmem:[#allocation2 + $0x5a8] sm:$0xff]
    %v304 = vld [vmem:[#allocation2 + $0x5b0] sm:$0xff]
    %v305 = vld [vmem:[#allocation2 + $0x5b8] sm:$0xff]
    %v306 = vld [vmem:[#allocation2 + $0x5c0] sm:$0xff]
    %v307 = vld [vmem:[#allocation2 + $0x5c8] sm:$0xff]
    %v308 = vld [vmem:[#allocation2 + $0x5d0] sm:$0xff]
    %v309 = vld [vmem:[#allocation2 + $0x5d8] sm:$0xff]
    %v310 = vld [vmem:[#allocation2 + $0x5e0] sm:$0xff]
    %v311 = vld [vmem:[#allocation2 + $0x5e8] sm:$0xff]
    %v312 = vld [vmem:[#allocation2 + $0x5f0] sm:$0xff]
    %v313 = vld [vmem:[#allocation2 + $0x5f8] sm:$0xff]
    %v314 = vld [vmem:[#allocation2 + $0x600] sm:$0xff]
    %v315 = vld [vmem:[#allocation2 + $0x608] sm:$0xff]
    %v316 = vld [vmem:[#allocation2 + $0x610] sm:$0xff]
    %v317 = vld [vmem:[#allocation2 + $0x618] sm:$0xff]
    %v318 = vld [vmem:[#allocation2 + $0x620] sm:$0xff]
    %v319 = vld [vmem:[#allocation2 + $0x628] sm:$0xff]
    %v320 = vld [vmem:[#allocation2 + $0x630] sm:$0xff]
    %v321 = vld [vmem:[#allocation2 + $0x638] sm:$0xff]
    %v322 = vld [vmem:[#allocation2 + $0x640] sm:$0xff]
    %v323 = vld [vmem:[#allocation2 + $0x648] sm:$0xff]
    %v324 = vld [vmem:[#allocation2 + $0x650] sm:$0xff]
    %v325 = vld [vmem:[#allocation2 + $0x658] sm:$0xff]
    %v326 = vld [vmem:[#allocation2 + $0x660] sm:$0xff]
    %v327 = vld [vmem:[#allocation2 + $0x668] sm:$0xff]
    %v328 = vld [vmem:[#allocation2 + $0x670] sm:$0xff]
    %v329 = vld [vmem:[#allocation2 + $0x678] sm:$0xff]
    %v330 = vld [vmem:[#allocation2 + $0x680] sm:$0xff]
    %v331 = vld [vmem:[#allocation2 + $0x688] sm:$0xff]
    %v332 = vld [vmem:[#allocation2 + $0x690] sm:$0xff]
    %v333 = vld [vmem:[#allocation2 + $0x698] sm:$0xff]
    %v334 = vld [vmem:[#allocation2 + $0x6a0] sm:$0xff]
    %v335 = vld [vmem:[#allocation2 + $0x6a8] sm:$0xff]
    %v336 = vld [vmem:[#allocation2 + $0x6b0] sm:$0xff]
    %v337 = vld [vmem:[#allocation2 + $0x6b8] sm:$0xff]
    %v338 = vld [vmem:[#allocation2 + $0x6c0] sm:$0xff]
    %v339 = vld [vmem:[#allocation2 + $0x6c8] sm:$0xff]
    %v340 = vld [vmem:[#allocation2 + $0x6d0] sm:$0xff]
    %v341 = vld [vmem:[#allocation2 + $0x6d8] sm:$0xff]
    %v342 = vld [vmem:[#allocation2 + $0x6e0] sm:$0xff]
    %v343 = vld [vmem:[#allocation2 + $0x6e8] sm:$0xff]
    %v344 = vld [vmem:[#allocation2 + $0x6f0] sm:$0xff]
    %v345 = vld [vmem:[#allocation2 + $0x6f8] sm:$0xff]
    %v346 = vld [vmem:[#allocation2 + $0x700] sm:$0xff]
    %v347 = vld [vmem:[#allocation2 + $0x708] sm:$0xff]
    %v348 = vld [vmem:[#allocation2 + $0x710] sm:$0xff]
    %v349 = vld [vmem:[#allocation2 + $0x718] sm:$0xff]
    %v350 = vld [vmem:[#allocation2 + $0x720] sm:$0xff]
    %v351 = vld [vmem:[#allocation2 + $0x728] sm:$0xff]
    %v352 = vld [vmem:[#allocation2 + $0x730] sm:$0xff]
    %v353 = vld [vmem:[#allocation2 + $0x738] sm:$0xff]
    %v354 = vld [vmem:[#allocation2 + $0x740] sm:$0xff]
    %v355 = vld [vmem:[#allocation2 + $0x748] sm:$0xff]
    %v356 = vld [vmem:[#allocation2 + $0x750] sm:$0xff]
    %v357 = vld [vmem:[#allocation2 + $0x758] sm:$0xff]
    %v358 = vld [vmem:[#allocation2 + $0x760] sm:$0xff]
    %v359 = vld [vmem:[#allocation2 + $0x768] sm:$0xff]
    %v360 = vld [vmem:[#allocation2 + $0x770] sm:$0xff]
    %v361 = vld [vmem:[#allocation2 + $0x778] sm:$0xff]
    %v362 = vld [vmem:[#allocation2 + $0x780] sm:$0xff]
    %v363 = vld [vmem:[#allocation2 + $0x788] sm:$0xff]
    %v364 = vld [vmem:[#allocation2 + $0x790] sm:$0xff]
    %v365 = vld [vmem:[#allocation2 + $0x798] sm:$0xff]
    %v366 = vld [vmem:[#allocation2 + $0x7a0] sm:$0xff]
    %v367 = vld [vmem:[#allocation2 + $0x7a8] sm:$0xff]
    %v368 = vld [vmem:[#allocation2 + $0x7b0] sm:$0xff]
    %v369 = vld [vmem:[#allocation2 + $0x7b8] sm:$0xff]
    %v370 = vld [vmem:[#allocation2 + $0x7c0] sm:$0xff]
    %v371 = vld [vmem:[#allocation2 + $0x7c8] sm:$0xff]
    %v372 = vld [vmem:[#allocation2 + $0x7d0] sm:$0xff]
    %v373 = vld [vmem:[#allocation2 + $0x7d8] sm:$0xff]
    %v374 = vld [vmem:[#allocation2 + $0x7e0] sm:$0xff]
    %v375 = vld [vmem:[#allocation2 + $0x7e8] sm:$0xff]
    %v376 = vld [vmem:[#allocation2 + $0x7f0] sm:$0xff]
    %v377 = vld [vmem:[#allocation2 + $0x7f8] sm:$0xff]
    %v378 = vld [vmem:[#allocation2 + $0x800] sm:$0xff]
    %v379 = vld [vmem:[#allocation2 + $0x808] sm:$0xff]
    %v380 = vld [vmem:[#allocation2 + $0x810] sm:$0xff]
    %v381 = vld [vmem:[#allocation2 + $0x818] sm:$0xff]
    %v382 = vld [vmem:[#allocation2 + $0x820] sm:$0xff]
    %v383 = vld [vmem:[#allocation2 + $0x828] sm:$0xff]
    %v384 = vld [vmem:[#allocation2 + $0x830] sm:$0xff]
    %v385 = vld [vmem:[#allocation2 + $0x838] sm:$0xff]
    %v386 = vld [vmem:[#allocation2 + $0x840] sm:$0xff]
    %v387 = vld [vmem:[#allocation2 + $0x848] sm:$0xff]
    %v388 = vld [vmem:[#allocation2 + $0x850] sm:$0xff]
    %v389 = vld [vmem:[#allocation2 + $0x858] sm:$0xff]
    %v390 = vld [vmem:[#allocation2 + $0x860] sm:$0xff]
    %v391 = vld [vmem:[#allocation2 + $0x868] sm:$0xff]
    %v392 = vld [vmem:[#allocation2 + $0x870] sm:$0xff]
    %v393 = vld [vmem:[#allocation2 + $0x878] sm:$0xff]
    %v394 = vld [vmem:[#allocation2 + $0x880] sm:$0xff]
    %v395 = vld [vmem:[#allocation2 + $0x888] sm:$0xff]
    %v396 = vld [vmem:[#allocation2 + $0x890] sm:$0xff]
    %v397 = vld [vmem:[#allocation2 + $0x898] sm:$0xff]
    %v398 = vld [vmem:[#allocation2 + $0x8a0] sm:$0xff]
    %v399 = vld [vmem:[#allocation2 + $0x8a8] sm:$0xff]
    %v400 = vld [vmem:[#allocation2 + $0x8b0] sm:$0xff]
    %v401 = vld [vmem:[#allocation2 + $0x8b8] sm:$0xff]
    %v402 = vld [vmem:[#allocation2 + $0x8c0] sm:$0xff]
    %v403 = vld [vmem:[#allocation2 + $0x8c8] sm:$0xff]
    %v404 = vld [vmem:[#allocation2 + $0x8d0] sm:$0xff]
    %v405 = vld [vmem:[#allocation2 + $0x8d8] sm:$0xff]
    %v406 = vld [vmem:[#allocation2 + $0x8e0] sm:$0xff]
    %v407 = vld [vmem:[#allocation2 + $0x8e8] sm:$0xff]
    %v408 = vld [vmem:[#allocation2 + $0x8f0] sm:$0xff]
    %v409 = vld [vmem:[#allocation2 + $0x8f8] sm:$0xff]
    %v410 = vld [vmem:[#allocation2 + $0x900] sm:$0xff]
    %v411 = vld [vmem:[#allocation2 + $0x908] sm:$0xff]
    %v412 = vld [vmem:[#allocation2 + $0x910] sm:$0xff]
    %v413 = vld [vmem:[#allocation2 + $0x918] sm:$0xff]
    %v414 = vld [vmem:[#allocation2 + $0x920] sm:$0xff]
    %v415 = vld [vmem:[#allocation2 + $0x928] sm:$0xff]
    %v416 = vld [vmem:[#allocation2 + $0x930] sm:$0xff]
    %v417 = vld [vmem:[#allocation2 + $0x938] sm:$0xff]
    %v418 = vld [vmem:[#allocation2 + $0x940] sm:$0xff]
    %v419 = vld [vmem:[#allocation2 + $0x948] sm:$0xff]
    %v420 = vld [vmem:[#allocation2 + $0x950] sm:$0xff]
    %v421 = vld [vmem:[#allocation2 + $0x958] sm:$0xff]
    %v422 = vld [vmem:[#allocation2 + $0x960] sm:$0xff]
    %v423 = vld [vmem:[#allocation2 + $0x968] sm:$0xff]
    %v424 = vld [vmem:[#allocation2 + $0x970] sm:$0xff]
    %v425 = vld [vmem:[#allocation2 + $0x978] sm:$0xff]
    %v426 = vld [vmem:[#allocation2 + $0x980] sm:$0xff]
    %v427 = vld [vmem:[#allocation2 + $0x988] sm:$0xff]
    %v428 = vld [vmem:[#allocation2 + $0x990] sm:$0xff]
    %v429 = vld [vmem:[#allocation2 + $0x998] sm:$0xff]
    %v430 = vld [vmem:[#allocation2 + $0x9a0] sm:$0xff]
    %v431 = vld [vmem:[#allocation2 + $0x9a8] sm:$0xff]
    %v432 = vld [vmem:[#allocation2 + $0x9b0] sm:$0xff]
    %v433 = vld [vmem:[#allocation2 + $0x9b8] sm:$0xff]
    %v434 = vld [vmem:[#allocation2 + $0x9c0] sm:$0xff]
    %v435 = vld [vmem:[#allocation2 + $0x9c8] sm:$0xff]
    %v436 = vld [vmem:[#allocation2 + $0x9d0] sm:$0xff]
    %v437 = vld [vmem:[#allocation2 + $0x9d8] sm:$0xff]
    %v438 = vld [vmem:[#allocation2 + $0x9e0] sm:$0xff]
    %v439 = vld [vmem:[#allocation2 + $0x9e8] sm:$0xff]
    %v440 = vld [vmem:[#allocation2 + $0x9f0] sm:$0xff]
    %v441 = vld [vmem:[#allocation2 + $0x9f8] sm:$0xff]
    %v442 = vld [vmem:[#allocation2 + $0xa00] sm:$0xff]
    %v443 = vld [vmem:[#allocation2 + $0xa08] sm:$0xff]
    %v444 = vld [vmem:[#allocation2 + $0xa10] sm:$0xff]
    %v445 = vld [vmem:[#allocation2 + $0xa18] sm:$0xff]
    %v446 = vld [vmem:[#allocation2 + $0xa20] sm:$0xff]
    %v447 = vld [vmem:[#allocation2 + $0xa28] sm:$0xff]
    %v448 = vld [vmem:[#allocation2 + $0xa30] sm:$0xff]
    %v449 = vld [vmem:[#allocation2 + $0xa38] sm:$0xff]
    %v450 = vld [vmem:[#allocation2 + $0xa40] sm:$0xff]
    %v451 = vld [vmem:[#allocation2 + $0xa48] sm:$0xff]
    %v452 = vld [vmem:[#allocation2 + $0xa50] sm:$0xff]
    %v453 = vld [vmem:[#allocation2 + $0xa58] sm:$0xff]
    %v454 = vld [vmem:[#allocation2 + $0xa60] sm:$0xff]
    %v455 = vld [vmem:[#allocation2 + $0xa68] sm:$0xff]
    %v456 = vld [vmem:[#allocation2 + $0xa70] sm:$0xff]
    %v457 = vld [vmem:[#allocation2 + $0xa78] sm:$0xff]
    %v458 = vld [vmem:[#allocation2 + $0xa80] sm:$0xff]
    %v459 = vld [vmem:[#allocation2 + $0xa88] sm:$0xff]
    %v460 = vld [vmem:[#allocation2 + $0xa90] sm:$0xff]
    %v461 = vld [vmem:[#allocation2 + $0xa98] sm:$0xff]
    %v462 = vld [vmem:[#allocation2 + $0xaa0] sm:$0xff]
    %v463 = vld [vmem:[#allocation2 + $0xaa8] sm:$0xff]
    %v464 = vld [vmem:[#allocation2 + $0xab0] sm:$0xff]
    %v465 = vld [vmem:[#allocation2 + $0xab8] sm:$0xff]
    %v466 = vld [vmem:[#allocation2 + $0xac0] sm:$0xff]
    %v467 = vld [vmem:[#allocation2 + $0xac8] sm:$0xff]
    %v468 = vld [vmem:[#allocation2 + $0xad0] sm:$0xff]
    %v469 = vld [vmem:[#allocation2 + $0xad8] sm:$0xff]
    %v470 = vld [vmem:[#allocation2 + $0xae0] sm:$0xff]
    %v471 = vld [vmem:[#allocation2 + $0xae8] sm:$0xff]
    %v472 = vld [vmem:[#allocation2 + $0xaf0] sm:$0xff]
    %v473 = vld [vmem:[#allocation2 + $0xaf8] sm:$0xff]
    %v474 = vld [vmem:[#allocation2 + $0xb00] sm:$0xff]
    %v475 = vld [vmem:[#allocation2 + $0xb08] sm:$0xff]
    %v476 = vld [vmem:[#allocation2 + $0xb10] sm:$0xff]
    %v477 = vld [vmem:[#allocation2 + $0xb18] sm:$0xff]
    %v478 = vld [vmem:[#allocation2 + $0xb20] sm:$0xff]
    %v479 = vld [vmem:[#allocation2 + $0xb28] sm:$0xff]
    %v480 = vld [vmem:[#allocation2 + $0xb30] sm:$0xff]
    %v481 = vld [vmem:[#allocation2 + $0xb38] sm:$0xff]
    %v482 = vld [vmem:[#allocation2 + $0xb40] sm:$0xff]
    %v483 = vld [vmem:[#allocation2 + $0xb48] sm:$0xff]
    %v484 = vld [vmem:[#allocation2 + $0xb50] sm:$0xff]
    %v485 = vld [vmem:[#allocation2 + $0xb58] sm:$0xff]
    %v486 = vld [vmem:[#allocation2 + $0xb60] sm:$0xff]
    %v487 = vld [vmem:[#allocation2 + $0xb68] sm:$0xff]
    %v488 = vld [vmem:[#allocation2 + $0xb70] sm:$0xff]
    %v489 = vld [vmem:[#allocation2 + $0xb78] sm:$0xff]
    %v490 = vld [vmem:[#allocation2 + $0xb80] sm:$0xff]
    %v491 = vld [vmem:[#allocation2 + $0xb88] sm:$0xff]
    %v492 = vld [vmem:[#allocation2 + $0xb90] sm:$0xff]
    %v493 = vld [vmem:[#allocation2 + $0xb98] sm:$0xff]
    %v494 = vld [vmem:[#allocation2 + $0xba0] sm:$0xff]
    %v495 = vld [vmem:[#allocation2 + $0xba8] sm:$0xff]
    %v496 = vld [vmem:[#allocation2 + $0xbb0] sm:$0xff]
    %v497 = vld [vmem:[#allocation2 + $0xbb8] sm:$0xff]
    %v498 = vld [vmem:[#allocation2 + $0xbc0] sm:$0xff]
    %v499 = vld [vmem:[#allocation2 + $0xbc8] sm:$0xff]
    %v500 = vld [vmem:[#allocation2 + $0xbd0] sm:$0xff]
    %v501 = vld [vmem:[#allocation2 + $0xbd8] sm:$0xff]
    %v502 = vld [vmem:[#allocation2 + $0xbe0] sm:$0xff]
    %v503 = vld [vmem:[#allocation2 + $0xbe8] sm:$0xff]
    %v504 = vld [vmem:[#allocation2 + $0xbf0] sm:$0xff]
    %v505 = vld [vmem:[#allocation2 + $0xbf8] sm:$0xff]
    %v506 = vld [vmem:[#allocation2 + $0xc00] sm:$0xff]
    %v507 = vld [vmem:[#allocation2 + $0xc08] sm:$0xff]
    %v508 = vld [vmem:[#allocation2 + $0xc10] sm:$0xff]
    %v509 = vld [vmem:[#allocation2 + $0xc18] sm:$0xff]
    %v510 = vld [vmem:[#allocation2 + $0xc20] sm:$0xff]
    %v511 = vld [vmem:[#allocation2 + $0xc28] sm:$0xff]
    %v512 = vld [vmem:[#allocation2 + $0xc30] sm:$0xff]
    %v513 = vld [vmem:[#allocation2 + $0xc38] sm:$0xff]
    %v514 = vld [vmem:[#allocation2 + $0xc40] sm:$0xff]
    %v515 = vld [vmem:[#allocation2 + $0xc48] sm:$0xff]
    %v516 = vld [vmem:[#allocation2 + $0xc50] sm:$0xff]
    %v517 = vld [vmem:[#allocation2 + $0xc58] sm:$0xff]
    %v518 = vld [vmem:[#allocation2 + $0xc60] sm:$0xff]
    %v519 = vld [vmem:[#allocation2 + $0xc68] sm:$0xff]
    %v520 = vld [vmem:[#allocation2 + $0xc70] sm:$0xff]
    %v521 = vld [vmem:[#allocation2 + $0xc78] sm:$0xff]
    %v522 = vld [vmem:[#allocation2 + $0xc80] sm:$0xff]
    %v523 = vld [vmem:[#allocation2 + $0xc88] sm:$0xff]
    %v524 = vld [vmem:[#allocation2 + $0xc90] sm:$0xff]
    %v525 = vld [vmem:[#allocation2 + $0xc98] sm:$0xff]
    %v526 = vld [vmem:[#allocation2 + $0xca0] sm:$0xff]
    %v527 = vld [vmem:[#allocation2 + $0xca8] sm:$0xff]
    %v528 = vld [vmem:[#allocation2 + $0xcb0] sm:$0xff]
    %v529 = vld [vmem:[#allocation2 + $0xcb8] sm:$0xff]
    %v530 = vld [vmem:[#allocation2 + $0xcc0] sm:$0xff]
    %v531 = vld [vmem:[#allocation2 + $0xcc8] sm:$0xff]
    %v532 = vld [vmem:[#allocation2 + $0xcd0] sm:$0xff]
    %v533 = vld [vmem:[#allocation2 + $0xcd8] sm:$0xff]
    %v534 = vld [vmem:[#allocation2 + $0xce0] sm:$0xff]
    %v535 = vld [vmem:[#allocation2 + $0xce8] sm:$0xff]
    %v536 = vld [vmem:[#allocation2 + $0xcf0] sm:$0xff]
    %v537 = vld [vmem:[#allocation2 + $0xcf8] sm:$0xff]
    %v538 = vld [vmem:[#allocation2 + $0xd00] sm:$0xff]
    %v539 = vld [vmem:[#allocation2 + $0xd08] sm:$0xff]
    %v540 = vld [vmem:[#allocation2 + $0xd10] sm:$0xff]
    %v541 = vld [vmem:[#allocation2 + $0xd18] sm:$0xff]
    %v542 = vld [vmem:[#allocation2 + $0xd20] sm:$0xff]
    %v543 = vld [vmem:[#allocation2 + $0xd28] sm:$0xff]
    %v544 = vld [vmem:[#allocation2 + $0xd30] sm:$0xff]
    %v545 = vld [vmem:[#allocation2 + $0xd38] sm:$0xff]
    %v546 = vld [vmem:[#allocation2 + $0xd40] sm:$0xff]
    %v547 = vld [vmem:[#allocation2 + $0xd48] sm:$0xff]
    %v548 = vld [vmem:[#allocation2 + $0xd50] sm:$0xff]
    %v549 = vld [vmem:[#allocation2 + $0xd58] sm:$0xff]
    %v550 = vld [vmem:[#allocation2 + $0xd60] sm:$0xff]
    %v551 = vld [vmem:[#allocation2 + $0xd68] sm:$0xff]
    %v552 = vld [vmem:[#allocation2 + $0xd70] sm:$0xff]
    %v553 = vld [vmem:[#allocation2 + $0xd78] sm:$0xff]
    %v554 = vld [vmem:[#allocation2 + $0xd80] sm:$0xff]
    %v555 = vld [vmem:[#allocation2 + $0xd88] sm:$0xff]
    %v556 = vld [vmem:[#allocation2 + $0xd90] sm:$0xff]
    %v557 = vld [vmem:[#allocation2 + $0xd98] sm:$0xff]
    %v558 = vld [vmem:[#allocation2 + $0xda0] sm:$0xff]
    %v559 = vld [vmem:[#allocation2 + $0xda8] sm:$0xff]
    %v560 = vld [vmem:[#allocation2 + $0xdb0] sm:$0xff]
    %v561 = vld [vmem:[#allocation2 + $0xdb8] sm:$0xff]
    %v562 = vld [vmem:[#allocation2 + $0xdc0] sm:$0xff]
    %v563 = vld [vmem:[#allocation2 + $0xdc8] sm:$0xff]
    %v564 = vld [vmem:[#allocation2 + $0xdd0] sm:$0xff]
    %v565 = vld [vmem:[#allocation2 + $0xdd8] sm:$0xff]
    %v566 = vld [vmem:[#allocation2 + $0xde0] sm:$0xff]
    %v567 = vld [vmem:[#allocation2 + $0xde8] sm:$0xff]
    %v568 = vld [vmem:[#allocation2 + $0xdf0] sm:$0xff]
    %v569 = vld [vmem:[#allocation2 + $0xdf8] sm:$0xff]
    %v570 = vld [vmem:[#allocation2 + $0xe00] sm:$0xff]
    %v571 = vld [vmem:[#allocation2 + $0xe08] sm:$0xff]
    %v572 = vld [vmem:[#allocation2 + $0xe10] sm:$0xff]
    %v573 = vld [vmem:[#allocation2 + $0xe18] sm:$0xff]
    %v574 = vld [vmem:[#allocation2 + $0xe20] sm:$0xff]
    %v575 = vld [vmem:[#allocation2 + $0xe28] sm:$0xff]
    %v576 = vld [vmem:[#allocation2 + $0xe30] sm:$0xff]
    %v577 = vld [vmem:[#allocation2 + $0xe38] sm:$0xff]
    %v578 = vld [vmem:[#allocation2 + $0xe40] sm:$0xff]
    %v579 = vld [vmem:[#allocation2 + $0xe48] sm:$0xff]
    %v580 = vld [vmem:[#allocation2 + $0xe50] sm:$0xff]
    %v581 = vld [vmem:[#allocation2 + $0xe58] sm:$0xff]
    %v582 = vld [vmem:[#allocation2 + $0xe60] sm:$0xff]
    %v583 = vld [vmem:[#allocation2 + $0xe68] sm:$0xff]
    %v584 = vld [vmem:[#allocation2 + $0xe70] sm:$0xff]
    %v585 = vld [vmem:[#allocation2 + $0xe78] sm:$0xff]
    %v586 = vld [vmem:[#allocation2 + $0xe80] sm:$0xff]
    %v587 = vld [vmem:[#allocation2 + $0xe88] sm:$0xff]
    %v588 = vld [vmem:[#allocation2 + $0xe90] sm:$0xff]
    %v589 = vld [vmem:[#allocation2 + $0xe98] sm:$0xff]
    %v590 = vld [vmem:[#allocation2 + $0xea0] sm:$0xff]
    %v591 = vld [vmem:[#allocation2 + $0xea8] sm:$0xff]
    %v592 = vld [vmem:[#allocation2 + $0xeb0] sm:$0xff]
    %v593 = vld [vmem:[#allocation2 + $0xeb8] sm:$0xff]
    %v594 = vld [vmem:[#allocation2 + $0xec0] sm:$0xff]
    %v595 = vld [vmem:[#allocation2 + $0xec8] sm:$0xff]
    %v596 = vld [vmem:[#allocation2 + $0xed0] sm:$0xff]
    %v597 = vld [vmem:[#allocation2 + $0xed8] sm:$0xff]
    %v598 = vld [vmem:[#allocation2 + $0xee0] sm:$0xff]
    %v599 = vld [vmem:[#allocation2 + $0xee8] sm:$0xff]
    %v600 = vld [vmem:[#allocation2 + $0xef0] sm:$0xff]
    %v601 = vld [vmem:[#allocation2 + $0xef8] sm:$0xff]
    %v602 = vld [vmem:[#allocation2 + $0xf00] sm:$0xff]
    %v603 = vld [vmem:[#allocation2 + $0xf08] sm:$0xff]
    %v604 = vld [vmem:[#allocation2 + $0xf10] sm:$0xff]
    %v605 = vld [vmem:[#allocation2 + $0xf18] sm:$0xff]
    %v606 = vld [vmem:[#allocation2 + $0xf20] sm:$0xff]
    %v607 = vld [vmem:[#allocation2 + $0xf28] sm:$0xff]
    %v608 = vld [vmem:[#allocation2 + $0xf30] sm:$0xff]
    %v609 = vld [vmem:[#allocation2 + $0xf38] sm:$0xff]
    %v610 = vld [vmem:[#allocation2 + $0xf40] sm:$0xff]
    %v611 = vld [vmem:[#allocation2 + $0xf48] sm:$0xff]
    %v612 = vld [vmem:[#allocation2 + $0xf50] sm:$0xff]
    %v613 = vld [vmem:[#allocation2 + $0xf58] sm:$0xff]
    %v614 = vld [vmem:[#allocation2 + $0xf60] sm:$0xff]
    %v615 = vld [vmem:[#allocation2 + $0xf68] sm:$0xff]
    %v616 = vld [vmem:[#allocation2 + $0xf70] sm:$0xff]
    %v617 = vld [vmem:[#allocation2 + $0xf78] sm:$0xff]
    %v618 = vld [vmem:[#allocation2 + $0xf80] sm:$0xff]
    %v619 = vld [vmem:[#allocation2 + $0xf88] sm:$0xff]
    %v620 = vld [vmem:[#allocation2 + $0xf90] sm:$0xff]
    %v621 = vld [vmem:[#allocation2 + $0xf98] sm:$0xff]
    %v622 = vld [vmem:[#allocation2 + $0xfa0] sm:$0xff]
    %v623 = vld [vmem:[#allocation2 + $0xfa8] sm:$0xff]
    %v624 = vld [vmem:[#allocation2 + $0xfb0] sm:$0xff]
    %v625 = vld [vmem:[#allocation2 + $0xfb8] sm:$0xff]
    %v626 = vld [vmem:[#allocation2 + $0xfc0] sm:$0xff]
    %v627 = vld [vmem:[#allocation2 + $0xfc8] sm:$0xff]
    %v628 = vld [vmem:[#allocation2 + $0xfd0] sm:$0xff]
    %v629 = vld [vmem:[#allocation2 + $0xfd8] sm:$0xff]
    %v630 = vld [vmem:[#allocation2 + $0xfe0] sm:$0xff]
    %v631 = vld [vmem:[#allocation2 + $0xfe8] sm:$0xff]
    %v632 = vld [vmem:[#allocation2 + $0xff0] sm:$0xff]
    %v633 = vld [vmem:[#allocation2 + $0xff8] sm:$0xff]
    %v634 = vld [vmem:[#allocation2 + $0x1000] sm:$0xff]
    %v635 = vld [vmem:[#allocation2 + $0x1008] sm:$0xff]
    %v636 = vld [vmem:[#allocation2 + $0x1010] sm:$0xff]
    %v637 = vld [vmem:[#allocation2 + $0x1018] sm:$0xff]
    %v638 = vld [vmem:[#allocation2 + $0x1020] sm:$0xff]
    %v639 = vld [vmem:[#allocation2 + $0x1028] sm:$0xff]
    %v640 = vld [vmem:[#allocation2 + $0x1030] sm:$0xff]
    %v641 = vld [vmem:[#allocation2 + $0x1038] sm:$0xff]
    %v642 = vld [vmem:[#allocation2 + $0x1040] sm:$0xff]
    %v643 = vld [vmem:[#allocation2 + $0x1048] sm:$0xff]
    %v644 = vld [vmem:[#allocation2 + $0x1050] sm:$0xff]
    %v645 = vld [vmem:[#allocation2 + $0x1058] sm:$0xff]
    %v646 = vld [vmem:[#allocation2 + $0x1060] sm:$0xff]
    %v647 = vld [vmem:[#allocation2 + $0x1068] sm:$0xff]
    %v648 = vld [vmem:[#allocation2 + $0x1070] sm:$0xff]
    %v649 = vld [vmem:[#allocation2 + $0x1078] sm:$0xff]
    %v650 = vld [vmem:[#allocation2 + $0x1080] sm:$0xff]
    %v651 = vld [vmem:[#allocation2 + $0x1088] sm:$0xff]
    %v652 = vld [vmem:[#allocation2 + $0x1090] sm:$0xff]
    %v653 = vld [vmem:[#allocation2 + $0x1098] sm:$0xff]
    %v654 = vld [vmem:[#allocation2 + $0x10a0] sm:$0xff]
    %v655 = vld [vmem:[#allocation2 + $0x10a8] sm:$0xff]
    %v656 = vld [vmem:[#allocation2 + $0x10b0] sm:$0xff]
    %v657 = vld [vmem:[#allocation2 + $0x10b8] sm:$0xff]
    %v658 = vld [vmem:[#allocation2 + $0x10c0] sm:$0xff]
    %v659 = vld [vmem:[#allocation2 + $0x10c8] sm:$0xff]
    %v660 = vld [vmem:[#allocation2 + $0x10d0] sm:$0xff]
    %v661 = vld [vmem:[#allocation2 + $0x10d8] sm:$0xff]
    %v662 = vld [vmem:[#allocation2 + $0x10e0] sm:$0xff]
    %v663 = vld [vmem:[#allocation2 + $0x10e8] sm:$0xff]
    %v664 = vld [vmem:[#allocation2 + $0x10f0] sm:$0xff]
    %v665 = vld [vmem:[#allocation2 + $0x10f8] sm:$0xff]
    %v666 = vld [vmem:[#allocation2 + $0x1100] sm:$0xff]
    %v667 = vld [vmem:[#allocation2 + $0x1108] sm:$0xff]
    %v668 = vld [vmem:[#allocation2 + $0x1110] sm:$0xff]
    %v669 = vld [vmem:[#allocation2 + $0x1118] sm:$0xff]
    %v670 = vld [vmem:[#allocation2 + $0x1120] sm:$0xff]
    %v671 = vld [vmem:[#allocation2 + $0x1128] sm:$0xff]
    %v672 = vld [vmem:[#allocation2 + $0x1130] sm:$0xff]
    %v673 = vld [vmem:[#allocation2 + $0x1138] sm:$0xff]
    %v674 = vld [vmem:[#allocation2 + $0x1140] sm:$0xff]
    %v675 = vld [vmem:[#allocation2 + $0x1148] sm:$0xff]
    %v676 = vld [vmem:[#allocation2 + $0x1150] sm:$0xff]
    %v677 = vld [vmem:[#allocation2 + $0x1158] sm:$0xff]
    %v678 = vld [vmem:[#allocation2 + $0x1160] sm:$0xff]
    %v679 = vld [vmem:[#allocation2 + $0x1168] sm:$0xff]
    %v680 = vld [vmem:[#allocation2 + $0x1170] sm:$0xff]
    %v681 = vld [vmem:[#allocation2 + $0x1178] sm:$0xff]
    %v682 = vld [vmem:[#allocation2 + $0x1180] sm:$0xff]
    %v683 = vld [vmem:[#allocation2 + $0x1188] sm:$0xff]
    %v684 = vld [vmem:[#allocation2 + $0x1190] sm:$0xff]
    %v685 = vld [vmem:[#allocation2 + $0x1198] sm:$0xff]
    %v686 = vld [vmem:[#allocation2 + $0x11a0] sm:$0xff]
    %v687 = vld [vmem:[#allocation2 + $0x11a8] sm:$0xff]
    %v688 = vld [vmem:[#allocation2 + $0x11b0] sm:$0xff]
    %v689 = vld [vmem:[#allocation2 + $0x11b8] sm:$0xff]
    %v690 = vld [vmem:[#allocation2 + $0x11c0] sm:$0xff]
    %v691 = vld [vmem:[#allocation2 + $0x11c8] sm:$0xff]
    %v692 = vld [vmem:[#allocation2 + $0x11d0] sm:$0xff]
    %v693 = vld [vmem:[#allocation2 + $0x11d8] sm:$0xff]
    %v694 = vld [vmem:[#allocation2 + $0x11e0] sm:$0xff]
    %v695 = vld [vmem:[#allocation2 + $0x11e8] sm:$0xff]
    %v696 = vld [vmem:[#allocation2 + $0x11f0] sm:$0xff]
    %v697 = vld [vmem:[#allocation2 + $0x11f8] sm:$0xff]
    %v698 = vld [vmem:[#allocation2 + $0x1200] sm:$0xff]
    %v699 = vld [vmem:[#allocation2 + $0x1208] sm:$0xff]
    %v700 = vld [vmem:[#allocation2 + $0x1210] sm:$0xff]
    %v701 = vld [vmem:[#allocation2 + $0x1218] sm:$0xff]
    %v702 = vld [vmem:[#allocation2 + $0x1220] sm:$0xff]
    %v703 = vld [vmem:[#allocation2 + $0x1228] sm:$0xff]
    %v704 = vld [vmem:[#allocation2 + $0x1230] sm:$0xff]
    %v705 = vld [vmem:[#allocation2 + $0x1238] sm:$0xff]
    %v706 = vld [vmem:[#allocation2 + $0x1240] sm:$0xff]
    %v707 = vld [vmem:[#allocation2 + $0x1248] sm:$0xff]
    %v708 = vld [vmem:[#allocation2 + $0x1250] sm:$0xff]
    %v709 = vld [vmem:[#allocation2 + $0x1258] sm:$0xff]
    %v710 = vld [vmem:[#allocation2 + $0x1260] sm:$0xff]
    %v711 = vld [vmem:[#allocation2 + $0x1268] sm:$0xff]
    %v712 = vld [vmem:[#allocation2 + $0x1270] sm:$0xff]
    %v713 = vld [vmem:[#allocation2 + $0x1278] sm:$0xff]
    %v714 = vld [vmem:[#allocation2 + $0x1280] sm:$0xff]
    %v715 = vld [vmem:[#allocation2 + $0x1288] sm:$0xff]
    %v716 = vld [vmem:[#allocation2 + $0x1290] sm:$0xff]
    %v717 = vld [vmem:[#allocation2 + $0x1298] sm:$0xff]
    %v718 = vld [vmem:[#allocation2 + $0x12a0] sm:$0xff]
    %v719 = vld [vmem:[#allocation2 + $0x12a8] sm:$0xff]
    %v720 = vld [vmem:[#allocation2 + $0x12b0] sm:$0xff]
    %v721 = vld [vmem:[#allocation2 + $0x12b8] sm:$0xff]
    %v722 = vld [vmem:[#allocation2 + $0x12c0] sm:$0xff]
    %v723 = vld [vmem:[#allocation2 + $0x12c8] sm:$0xff]
    %v724 = vld [vmem:[#allocation2 + $0x12d0] sm:$0xff]
    %v725 = vld [vmem:[#allocation2 + $0x12d8] sm:$0xff]
    %v726 = vld [vmem:[#allocation2 + $0x12e0] sm:$0xff]
    %v727 = vld [vmem:[#allocation2 + $0x12e8] sm:$0xff]
    %v728 = vld [vmem:[#allocation2 + $0x12f0] sm:$0xff]
    %v729 = vld [vmem:[#allocation2 + $0x12f8] sm:$0xff]
    %v730 = vld [vmem:[#allocation2 + $0x1300] sm:$0xff]
    %v731 = vld [vmem:[#allocation2 + $0x1308] sm:$0xff]
    %v732 = vld [vmem:[#allocation2 + $0x1310] sm:$0xff]
    %v733 = vld [vmem:[#allocation2 + $0x1318] sm:$0xff]
    %v734 = vld [vmem:[#allocation2 + $0x1320] sm:$0xff]
    %v735 = vld [vmem:[#allocation2 + $0x1328] sm:$0xff]
    %v736 = vld [vmem:[#allocation2 + $0x1330] sm:$0xff]
    %v737 = vld [vmem:[#allocation2 + $0x1338] sm:$0xff]
    %v738 = vld [vmem:[#allocation2 + $0x1340] sm:$0xff]
    %v739 = vld [vmem:[#allocation2 + $0x1348] sm:$0xff]
    %v740 = vld [vmem:[#allocation2 + $0x1350] sm:$0xff]
    %v741 = vld [vmem:[#allocation2 + $0x1358] sm:$0xff]
    %v742 = vld [vmem:[#allocation2 + $0x1360] sm:$0xff]
    %v743 = vld [vmem:[#allocation2 + $0x1368] sm:$0xff]
    %v744 = vld [vmem:[#allocation2 + $0x1370] sm:$0xff]
    %v745 = vld [vmem:[#allocation2 + $0x1378] sm:$0xff]
    %v746 = vld [vmem:[#allocation2 + $0x1380] sm:$0xff]
    %v747 = vld [vmem:[#allocation2 + $0x1388] sm:$0xff]
    %v748 = vld [vmem:[#allocation2 + $0x1390] sm:$0xff]
    %v749 = vld [vmem:[#allocation2 + $0x1398] sm:$0xff]
    %v750 = vld [vmem:[#allocation2 + $0x13a0] sm:$0xff]
    %v751 = vld [vmem:[#allocation2 + $0x13a8] sm:$0xff]
    %v752 = vld [vmem:[#allocation2 + $0x13b0] sm:$0xff]
    %v753 = vld [vmem:[#allocation2 + $0x13b8] sm:$0xff]
    %v754 = vld [vmem:[#allocation2 + $0x13c0] sm:$0xff]
    %v755 = vld [vmem:[#allocation2 + $0x13c8] sm:$0xff]
    %v756 = vld [vmem:[#allocation2 + $0x13d0] sm:$0xff]
    %v757 = vld [vmem:[#allocation2 + $0x13d8] sm:$0xff]
    %v758 = vld [vmem:[#allocation2 + $0x13e0] sm:$0xff]
    %v759 = vld [vmem:[#allocation2 + $0x13e8] sm:$0xff]
    %v760 = vld [vmem:[#allocation2 + $0x13f0] sm:$0xff]
    %v761 = vld [vmem:[#allocation2 + $0x13f8] sm:$0xff]
    %v762 = vld [vmem:[#allocation2 + $0x1400] sm:$0xff]
    %v763 = vld [vmem:[#allocation2 + $0x1408] sm:$0xff]
    %v764 = vld [vmem:[#allocation2 + $0x1410] sm:$0xff]
    %v765 = vld [vmem:[#allocation2 + $0x1418] sm:$0xff]
    %v766 = vld [vmem:[#allocation2 + $0x1420] sm:$0xff]
    %v767 = vld [vmem:[#allocation2 + $0x1428] sm:$0xff]
    %v768 = vld [vmem:[#allocation2 + $0x1430] sm:$0xff]
    %v769 = vld [vmem:[#allocation2 + $0x1438] sm:$0xff]
    %v770 = vld [vmem:[#allocation2 + $0x1440] sm:$0xff]
    %v771 = vld [vmem:[#allocation2 + $0x1448] sm:$0xff]
    %v772 = vld [vmem:[#allocation2 + $0x1450] sm:$0xff]
    %v773 = vld [vmem:[#allocation2 + $0x1458] sm:$0xff]
    %v774 = vld [vmem:[#allocation2 + $0x1460] sm:$0xff]
    %v775 = vld [vmem:[#allocation2 + $0x1468] sm:$0xff]
    %v776 = vld [vmem:[#allocation2 + $0x1470] sm:$0xff]
    %v777 = vld [vmem:[#allocation2 + $0x1478] sm:$0xff]
    %v778 = vld [vmem:[#allocation2 + $0x1480] sm:$0xff]
    %v779 = vld [vmem:[#allocation2 + $0x1488] sm:$0xff]
    %v780 = vld [vmem:[#allocation2 + $0x1490] sm:$0xff]
    %v781 = vld [vmem:[#allocation2 + $0x1498] sm:$0xff]
    %v782 = vld [vmem:[#allocation2 + $0x14a0] sm:$0xff]
    %v783 = vld [vmem:[#allocation2 + $0x14a8] sm:$0xff]
    %v784 = vld [vmem:[#allocation2 + $0x14b0] sm:$0xff]
    %v785 = vld [vmem:[#allocation2 + $0x14b8] sm:$0xff]
    %v786 = vld [vmem:[#allocation2 + $0x14c0] sm:$0xff]
    %v787 = vld [vmem:[#allocation2 + $0x14c8] sm:$0xff]
    %v788 = vld [vmem:[#allocation2 + $0x14d0] sm:$0xff]
    %v789 = vld [vmem:[#allocation2 + $0x14d8] sm:$0xff]
    %v790 = vld [vmem:[#allocation2 + $0x14e0] sm:$0xff]
    %v791 = vld [vmem:[#allocation2 + $0x14e8] sm:$0xff]
    %v792 = vld [vmem:[#allocation2 + $0x14f0] sm:$0xff]
    %v793 = vld [vmem:[#allocation2 + $0x14f8] sm:$0xff]
    %v794 = vld [vmem:[#allocation2 + $0x1500] sm:$0xff]
    %v795 = vld [vmem:[#allocation2 + $0x1508] sm:$0xff]
    %v796 = vld [vmem:[#allocation2 + $0x1510] sm:$0xff]
    %v797 = vld [vmem:[#allocation2 + $0x1518] sm:$0xff]
    %v798 = vld [vmem:[#allocation2 + $0x1520] sm:$0xff]
    %v799 = vld [vmem:[#allocation2 + $0x1528] sm:$0xff]
    %v800 = vld [vmem:[#allocation2 + $0x1530] sm:$0xff]
    %v801 = vld [vmem:[#allocation2 + $0x1538] sm:$0xff]
    %v802 = vld [vmem:[#allocation2 + $0x1540] sm:$0xff]
    %v803 = vld [vmem:[#allocation2 + $0x1548] sm:$0xff]
    %v804 = vld [vmem:[#allocation2 + $0x1550] sm:$0xff]
    %v805 = vld [vmem:[#allocation2 + $0x1558] sm:$0xff]
    %v806 = vld [vmem:[#allocation2 + $0x1560] sm:$0xff]
    %v807 = vld [vmem:[#allocation2 + $0x1568] sm:$0xff]
    %v808 = vld [vmem:[#allocation2 + $0x1570] sm:$0xff]
    %v809 = vld [vmem:[#allocation2 + $0x1578] sm:$0xff]
    %v810 = vld [vmem:[#allocation2 + $0x1580] sm:$0xff]
    %v811 = vld [vmem:[#allocation2 + $0x1588] sm:$0xff]
    %v812 = vld [vmem:[#allocation2 + $0x1590] sm:$0xff]
    %v813 = vld [vmem:[#allocation2 + $0x1598] sm:$0xff]
    %v814 = vld [vmem:[#allocation2 + $0x15a0] sm:$0xff]
    %v815 = vld [vmem:[#allocation2 + $0x15a8] sm:$0xff]
    %v816 = vld [vmem:[#allocation2 + $0x15b0] sm:$0xff]
    %v817 = vld [vmem:[#allocation2 + $0x15b8] sm:$0xff]
    %v818 = vld [vmem:[#allocation2 + $0x15c0] sm:$0xff]
    %v819 = vld [vmem:[#allocation2 + $0x15c8] sm:$0xff]
    %v820 = vld [vmem:[#allocation2 + $0x15d0] sm:$0xff]
    %v821 = vld [vmem:[#allocation2 + $0x15d8] sm:$0xff]
    %v822 = vld [vmem:[#allocation2 + $0x15e0] sm:$0xff]
    %v823 = vld [vmem:[#allocation2 + $0x15e8] sm:$0xff]
    %v824 = vld [vmem:[#allocation2 + $0x15f0] sm:$0xff]
    %v825 = vld [vmem:[#allocation2 + $0x15f8] sm:$0xff]
    %v826 = vld [vmem:[#allocation2 + $0x1600] sm:$0xff]
    %v827 = vld [vmem:[#allocation2 + $0x1608] sm:$0xff]
    %v828 = vld [vmem:[#allocation2 + $0x1610] sm:$0xff]
    %v829 = vld [vmem:[#allocation2 + $0x1618] sm:$0xff]
    %v830 = vld [vmem:[#allocation2 + $0x1620] sm:$0xff]
    %v831 = vld [vmem:[#allocation2 + $0x1628] sm:$0xff]
    %v832 = vld [vmem:[#allocation2 + $0x1630] sm:$0xff]
    %v833 = vld [vmem:[#allocation2 + $0x1638] sm:$0xff]
    %v834 = vld [vmem:[#allocation2 + $0x1640] sm:$0xff]
    %v835 = vld [vmem:[#allocation2 + $0x1648] sm:$0xff]
    %v836 = vld [vmem:[#allocation2 + $0x1650] sm:$0xff]
    %v837 = vld [vmem:[#allocation2 + $0x1658] sm:$0xff]
    %v838 = vld [vmem:[#allocation2 + $0x1660] sm:$0xff]
    %v839 = vld [vmem:[#allocation2 + $0x1668] sm:$0xff]
    %v840 = vld [vmem:[#allocation2 + $0x1670] sm:$0xff]
    %v841 = vld [vmem:[#allocation2 + $0x1678] sm:$0xff]
    %v842 = vld [vmem:[#allocation2 + $0x1680] sm:$0xff]
    %v843 = vld [vmem:[#allocation2 + $0x1688] sm:$0xff]
    %v844 = vld [vmem:[#allocation2 + $0x1690] sm:$0xff]
    %v845 = vld [vmem:[#allocation2 + $0x1698] sm:$0xff]
    %v846 = vld [vmem:[#allocation2 + $0x16a0] sm:$0xff]
    %v847 = vld [vmem:[#allocation2 + $0x16a8] sm:$0xff]
    %v848 = vld [vmem:[#allocation2 + $0x16b0] sm:$0xff]
    %v849 = vld [vmem:[#allocation2 + $0x16b8] sm:$0xff]
    %v850 = vld [vmem:[#allocation2 + $0x16c0] sm:$0xff]
    %v851 = vld [vmem:[#allocation2 + $0x16c8] sm:$0xff]
    %v852 = vld [vmem:[#allocation2 + $0x16d0] sm:$0xff]
    %v853 = vld [vmem:[#allocation2 + $0x16d8] sm:$0xff]
    %v854 = vld [vmem:[#allocation2 + $0x16e0] sm:$0xff]
    %v855 = vld [vmem:[#allocation2 + $0x16e8] sm:$0xff]
    %v856 = vld [vmem:[#allocation2 + $0x16f0] sm:$0xff]
    %v857 = vld [vmem:[#allocation2 + $0x16f8] sm:$0xff]
    %v858 = vld [vmem:[#allocation2 + $0x1700] sm:$0xff]
    %v859 = vld [vmem:[#allocation2 + $0x1708] sm:$0xff]
    %v860 = vld [vmem:[#allocation2 + $0x1710] sm:$0xff]
    %v861 = vld [vmem:[#allocation2 + $0x1718] sm:$0xff]
    %v862 = vld [vmem:[#allocation2 + $0x1720] sm:$0xff]
    %v863 = vld [vmem:[#allocation2 + $0x1728] sm:$0xff]
    %v864 = vld [vmem:[#allocation2 + $0x1730] sm:$0xff]
    %v865 = vld [vmem:[#allocation2 + $0x1738] sm:$0xff]
    %v866 = vld [vmem:[#allocation2 + $0x1740] sm:$0xff]
    %v867 = vld [vmem:[#allocation2 + $0x1748] sm:$0xff]
    %v868 = vld [vmem:[#allocation2 + $0x1750] sm:$0xff]
    %v869 = vld [vmem:[#allocation2 + $0x1758] sm:$0xff]
    %v870 = vld [vmem:[#allocation2 + $0x1760] sm:$0xff]
    %v871 = vld [vmem:[#allocation2 + $0x1768] sm:$0xff]
    %v872 = vld [vmem:[#allocation2 + $0x1770] sm:$0xff]
    %v873 = vld [vmem:[#allocation2 + $0x1778] sm:$0xff]
    %v874 = vld [vmem:[#allocation2 + $0x1780] sm:$0xff]
    %v875 = vld [vmem:[#allocation2 + $0x1788] sm:$0xff]
    %v876 = vld [vmem:[#allocation2 + $0x1790] sm:$0xff]
    %v877 = vld [vmem:[#allocation2 + $0x1798] sm:$0xff]
    %v878 = vld [vmem:[#allocation2 + $0x17a0] sm:$0xff]
    %v879 = vld [vmem:[#allocation2 + $0x17a8] sm:$0xff]
    %v880 = vld [vmem:[#allocation2 + $0x17b0] sm:$0xff]
    %v881 = vld [vmem:[#allocation2 + $0x17b8] sm:$0xff]
    %v882 = vld [vmem:[#allocation2 + $0x17c0] sm:$0xff]
    %v883 = vld [vmem:[#allocation2 + $0x17c8] sm:$0xff]
    %v884 = vld [vmem:[#allocation2 + $0x17d0] sm:$0xff]
    %v885 = vld [vmem:[#allocation2 + $0x17d8] sm:$0xff]
    %v886 = vld [vmem:[#allocation2 + $0x17e0] sm:$0xff]
    %v887 = vld [vmem:[#allocation2 + $0x17e8] sm:$0xff]
    %v888 = vld [vmem:[#allocation2 + $0x17f0] sm:$0xff]
    %v889 = vld [vmem:[#allocation2 + $0x17f8] sm:$0xff]
    %v890 = vld [vmem:[#allocation2 + $0x1800] sm:$0xff]
    %v891 = vld [vmem:[#allocation2 + $0x1808] sm:$0xff]
    %v892 = vld [vmem:[#allocation2 + $0x1810] sm:$0xff]
    %v893 = vld [vmem:[#allocation2 + $0x1818] sm:$0xff]
    %v894 = vld [vmem:[#allocation2 + $0x1820] sm:$0xff]
    %v895 = vld [vmem:[#allocation2 + $0x1828] sm:$0xff]
    %v896 = vld [vmem:[#allocation2 + $0x1830] sm:$0xff]
    %v897 = vld [vmem:[#allocation2 + $0x1838] sm:$0xff]
    %v898 = vld [vmem:[#allocation2 + $0x1840] sm:$0xff]
    %v899 = vld [vmem:[#allocation2 + $0x1848] sm:$0xff]
    %v900 = vld [vmem:[#allocation2 + $0x1850] sm:$0xff]
    %v901 = vld [vmem:[#allocation2 + $0x1858] sm:$0xff]
    %v902 = vld [vmem:[#allocation2 + $0x1860] sm:$0xff]
    %v903 = vld [vmem:[#allocation2 + $0x1868] sm:$0xff]
    %v904 = vld [vmem:[#allocation2 + $0x1870] sm:$0xff]
    %v905 = vld [vmem:[#allocation2 + $0x1878] sm:$0xff]
    %v906 = vld [vmem:[#allocation2 + $0x1880] sm:$0xff]
    %v907 = vld [vmem:[#allocation2 + $0x1888] sm:$0xff]
    %v908 = vld [vmem:[#allocation2 + $0x1890] sm:$0xff]
    %v909 = vld [vmem:[#allocation2 + $0x1898] sm:$0xff]
    %v910 = vld [vmem:[#allocation2 + $0x18a0] sm:$0xff]
    %v911 = vld [vmem:[#allocation2 + $0x18a8] sm:$0xff]
    %v912 = vld [vmem:[#allocation2 + $0x18b0] sm:$0xff]
    %v913 = vld [vmem:[#allocation2 + $0x18b8] sm:$0xff]
    %v914 = vld [vmem:[#allocation2 + $0x18c0] sm:$0xff]
    %v915 = vld [vmem:[#allocation2 + $0x18c8] sm:$0xff]
    %v916 = vld [vmem:[#allocation2 + $0x18d0] sm:$0xff]
    %v917 = vld [vmem:[#allocation2 + $0x18d8] sm:$0xff]
    %v918 = vld [vmem:[#allocation2 + $0x18e0] sm:$0xff]
    %v919 = vld [vmem:[#allocation2 + $0x18e8] sm:$0xff]
    %v920 = vld [vmem:[#allocation2 + $0x18f0] sm:$0xff]
    %v921 = vld [vmem:[#allocation2 + $0x18f8] sm:$0xff]
    %v922 = vld [vmem:[#allocation2 + $0x1900] sm:$0xff]
    %v923 = vld [vmem:[#allocation2 + $0x1908] sm:$0xff]
    %v924 = vld [vmem:[#allocation2 + $0x1910] sm:$0xff]
    %v925 = vld [vmem:[#allocation2 + $0x1918] sm:$0xff]
    %v926 = vld [vmem:[#allocation2 + $0x1920] sm:$0xff]
    %v927 = vld [vmem:[#allocation2 + $0x1928] sm:$0xff]
    %v928 = vld [vmem:[#allocation2 + $0x1930] sm:$0xff]
    %v929 = vld [vmem:[#allocation2 + $0x1938] sm:$0xff]
    %v930 = vld [vmem:[#allocation2 + $0x1940] sm:$0xff]
    %v931 = vld [vmem:[#allocation2 + $0x1948] sm:$0xff]
    %v932 = vld [vmem:[#allocation2 + $0x1950] sm:$0xff]
    %v933 = vld [vmem:[#allocation2 + $0x1958] sm:$0xff]
    %v934 = vld [vmem:[#allocation2 + $0x1960] sm:$0xff]
    %v935 = vld [vmem:[#allocation2 + $0x1968] sm:$0xff]
    %v936 = vld [vmem:[#allocation2 + $0x1970] sm:$0xff]
    %v937 = vld [vmem:[#allocation2 + $0x1978] sm:$0xff]
    %v938 = vld [vmem:[#allocation2 + $0x1980] sm:$0xff]
    %v939 = vld [vmem:[#allocation2 + $0x1988] sm:$0xff]
    %v940 = vld [vmem:[#allocation2 + $0x1990] sm:$0xff]
    %v941 = vld [vmem:[#allocation2 + $0x1998] sm:$0xff]
    %v942 = vld [vmem:[#allocation2 + $0x19a0] sm:$0xff]
    %v943 = vld [vmem:[#allocation2 + $0x19a8] sm:$0xff]
    %v944 = vld [vmem:[#allocation2 + $0x19b0] sm:$0xff]
    %v945 = vld [vmem:[#allocation2 + $0x19b8] sm:$0xff]
    %v946 = vld [vmem:[#allocation2 + $0x19c0] sm:$0xff]
    %v947 = vld [vmem:[#allocation2 + $0x19c8] sm:$0xff]
    %v948 = vld [vmem:[#allocation2 + $0x19d0] sm:$0xff]
    %v949 = vld [vmem:[#allocation2 + $0x19d8] sm:$0xff]
    %v950 = vld [vmem:[#allocation2 + $0x19e0] sm:$0xff]
    %v951 = vld [vmem:[#allocation2 + $0x19e8] sm:$0xff]
    %v952 = vld [vmem:[#allocation2 + $0x19f0] sm:$0xff]
    %v953 = vld [vmem:[#allocation2 + $0x19f8] sm:$0xff]
    %v954 = vld [vmem:[#allocation2 + $0x1a00] sm:$0xff]
    %v955 = vld [vmem:[#allocation2 + $0x1a08] sm:$0xff]
    %v956 = vld [vmem:[#allocation2 + $0x1a10] sm:$0xff]
    %v957 = vld [vmem:[#allocation2 + $0x1a18] sm:$0xff]
    %v958 = vld [vmem:[#allocation2 + $0x1a20] sm:$0xff]
    %v959 = vld [vmem:[#allocation2 + $0x1a28] sm:$0xff]
    %v960 = vld [vmem:[#allocation2 + $0x1a30] sm:$0xff]
    %v961 = vld [vmem:[#allocation2 + $0x1a38] sm:$0xff]
    %v962 = vld [vmem:[#allocation2 + $0x1a40] sm:$0xff]
    %v963 = vld [vmem:[#allocation2 + $0x1a48] sm:$0xff]
    %v964 = vld [vmem:[#allocation2 + $0x1a50] sm:$0xff]
    %v965 = vld [vmem:[#allocation2 + $0x1a58] sm:$0xff]
    %v966 = vld [vmem:[#allocation2 + $0x1a60] sm:$0xff]
    %v967 = vld [vmem:[#allocation2 + $0x1a68] sm:$0xff]
    %v968 = vld [vmem:[#allocation2 + $0x1a70] sm:$0xff]
    %v969 = vld [vmem:[#allocation2 + $0x1a78] sm:$0xff]
    %v970 = vld [vmem:[#allocation2 + $0x1a80] sm:$0xff]
    %v971 = vld [vmem:[#allocation2 + $0x1a88] sm:$0xff]
    %v972 = vld [vmem:[#allocation2 + $0x1a90] sm:$0xff]
    %v973 = vld [vmem:[#allocation2 + $0x1a98] sm:$0xff]
    %v974 = vld [vmem:[#allocation2 + $0x1aa0] sm:$0xff]
    %v975 = vld [vmem:[#allocation2 + $0x1aa8] sm:$0xff]
    %v976 = vld [vmem:[#allocation2 + $0x1ab0] sm:$0xff]
    %v977 = vld [vmem:[#allocation2 + $0x1ab8] sm:$0xff]
    %v978 = vld [vmem:[#allocation2 + $0x1ac0] sm:$0xff]
    %v979 = vld [vmem:[#allocation2 + $0x1ac8] sm:$0xff]
    %v980 = vld [vmem:[#allocation2 + $0x1ad0] sm:$0xff]
    %v981 = vld [vmem:[#allocation2 + $0x1ad8] sm:$0xff]
    %v982 = vld [vmem:[#allocation2 + $0x1ae0] sm:$0xff]
    %v983 = vld [vmem:[#allocation2 + $0x1ae8] sm:$0xff]
    %v984 = vld [vmem:[#allocation2 + $0x1af0] sm:$0xff]
    %v985 = vld [vmem:[#allocation2 + $0x1af8] sm:$0xff]
    %v986 = vld [vmem:[#allocation2 + $0x1b00] sm:$0xff]
    %v987 = vld [vmem:[#allocation2 + $0x1b08] sm:$0xff]
    %v988 = vld [vmem:[#allocation2 + $0x1b10] sm:$0xff]
    %v989 = vld [vmem:[#allocation2 + $0x1b18] sm:$0xff]
    %v990 = vld [vmem:[#allocation2 + $0x1b20] sm:$0xff]
    %v991 = vld [vmem:[#allocation2 + $0x1b28] sm:$0xff]
    %v992 = vld [vmem:[#allocation2 + $0x1b30] sm:$0xff]
    %v993 = vld [vmem:[#allocation2 + $0x1b38] sm:$0xff]
    %v994 = vld [vmem:[#allocation2 + $0x1b40] sm:$0xff]
    %v995 = vld [vmem:[#allocation2 + $0x1b48] sm:$0xff]
    %v996 = vld [vmem:[#allocation2 + $0x1b50] sm:$0xff]
    %v997 = vld [vmem:[#allocation2 + $0x1b58] sm:$0xff]
    %v998 = vld [vmem:[#allocation2 + $0x1b60] sm:$0xff]
    %v999 = vld [vmem:[#allocation2 + $0x1b68] sm:$0xff]
    %v1000 = vld [vmem:[#allocation2 + $0x1b70] sm:$0xff]
    %v1001 = vld [vmem:[#allocation2 + $0x1b78] sm:$0xff]
    %v1002 = vld [vmem:[#allocation2 + $0x1b80] sm:$0xff]
    %v1003 = vld [vmem:[#allocation2 + $0x1b88] sm:$0xff]
    %v1004 = vld [vmem:[#allocation2 + $0x1b90] sm:$0xff]
    %v1005 = vld [vmem:[#allocation2 + $0x1b98] sm:$0xff]
    %v1006 = vld [vmem:[#allocation2 + $0x1ba0] sm:$0xff]
    %v1007 = vld [vmem:[#allocation2 + $0x1ba8] sm:$0xff]
    %v1008 = vld [vmem:[#allocation2 + $0x1bb0] sm:$0xff]
    %v1009 = vld [vmem:[#allocation2 + $0x1bb8] sm:$0xff]
    %v1010 = vld [vmem:[#allocation2 + $0x1bc0] sm:$0xff]
    %v1011 = vld [vmem:[#allocation2 + $0x1bc8] sm:$0xff]
    %v1012 = vld [vmem:[#allocation2 + $0x1bd0] sm:$0xff]
    %v1013 = vld [vmem:[#allocation2 + $0x1bd8] sm:$0xff]
    %v1014 = vld [vmem:[#allocation2 + $0x1be0] sm:$0xff]
    %v1015 = vld [vmem:[#allocation2 + $0x1be8] sm:$0xff]
    %v1016 = vld [vmem:[#allocation2 + $0x1bf0] sm:$0xff]
    %v1017 = vld [vmem:[#allocation2 + $0x1bf8] sm:$0xff]
    %v1018 = vld [vmem:[#allocation2 + $0x1c00] sm:$0xff]
    %v1019 = vld [vmem:[#allocation2 + $0x1c08] sm:$0xff]
    %v1020 = vld [vmem:[#allocation2 + $0x1c10] sm:$0xff]
    %v1021 = vld [vmem:[#allocation2 + $0x1c18] sm:$0xff]
    %v1022 = vld [vmem:[#allocation2 + $0x1c20] sm:$0xff]
    %v1023 = vld [vmem:[#allocation2 + $0x1c28] sm:$0xff]
    %v1024 = vld [vmem:[#allocation2 + $0x1c30] sm:$0xff]
    %v1025 = vld [vmem:[#allocation2 + $0x1c38] sm:$0xff]
    %v1026 = vld [vmem:[#allocation2 + $0x1c40] sm:$0xff]
    %v1027 = vld [vmem:[#allocation2 + $0x1c48] sm:$0xff]
    %v1028 = vld [vmem:[#allocation2 + $0x1c50] sm:$0xff]
    %v1029 = vld [vmem:[#allocation2 + $0x1c58] sm:$0xff]
    %v1030 = vld [vmem:[#allocation2 + $0x1c60] sm:$0xff]
    %v1031 = vld [vmem:[#allocation2 + $0x1c68] sm:$0xff]
    %v1032 = vld [vmem:[#allocation2 + $0x1c70] sm:$0xff]
    %v1033 = vld [vmem:[#allocation2 + $0x1c78] sm:$0xff]
    %v1034 = vld [vmem:[#allocation2 + $0x1c80] sm:$0xff]
    %v1035 = vld [vmem:[#allocation2 + $0x1c88] sm:$0xff]
    %v1036 = vld [vmem:[#allocation2 + $0x1c90] sm:$0xff]
    %v1037 = vld [vmem:[#allocation2 + $0x1c98] sm:$0xff]
    %v1038 = vld [vmem:[#allocation2 + $0x1ca0] sm:$0xff]
    %v1039 = vld [vmem:[#allocation2 + $0x1ca8] sm:$0xff]
    %v1040 = vld [vmem:[#allocation2 + $0x1cb0] sm:$0xff]
    %v1041 = vld [vmem:[#allocation2 + $0x1cb8] sm:$0xff]
    %v1042 = vld [vmem:[#allocation2 + $0x1cc0] sm:$0xff]
    %v1043 = vld [vmem:[#allocation2 + $0x1cc8] sm:$0xff]
    %v1044 = vld [vmem:[#allocation2 + $0x1cd0] sm:$0xff]
    %v1045 = vld [vmem:[#allocation2 + $0x1cd8] sm:$0xff]
    %v1046 = vld [vmem:[#allocation2 + $0x1ce0] sm:$0xff]
    %v1047 = vld [vmem:[#allocation2 + $0x1ce8] sm:$0xff]
    %v1048 = vld [vmem:[#allocation2 + $0x1cf0] sm:$0xff]
    %v1049 = vld [vmem:[#allocation2 + $0x1cf8] sm:$0xff]
    %v1050 = vld [vmem:[#allocation2 + $0x1d00] sm:$0xff]
    %v1051 = vld [vmem:[#allocation2 + $0x1d08] sm:$0xff]
    %v1052 = vld [vmem:[#allocation2 + $0x1d10] sm:$0xff]
    %v1053 = vld [vmem:[#allocation2 + $0x1d18] sm:$0xff]
    %v1054 = vld [vmem:[#allocation2 + $0x1d20] sm:$0xff]
    %v1055 = vld [vmem:[#allocation2 + $0x1d28] sm:$0xff]
    %v1056 = vld [vmem:[#allocation2 + $0x1d30] sm:$0xff]
    %v1057 = vld [vmem:[#allocation2 + $0x1d38] sm:$0xff]
    %v1058 = vld [vmem:[#allocation2 + $0x1d40] sm:$0xff]
    %v1059 = vld [vmem:[#allocation2 + $0x1d48] sm:$0xff]
    %v1060 = vld [vmem:[#allocation2 + $0x1d50] sm:$0xff]
    %v1061 = vld [vmem:[#allocation2 + $0x1d58] sm:$0xff]
    %v1062 = vld [vmem:[#allocation2 + $0x1d60] sm:$0xff]
    %v1063 = vld [vmem:[#allocation2 + $0x1d68] sm:$0xff]
    %v1064 = vld [vmem:[#allocation2 + $0x1d70] sm:$0xff]
    %v1065 = vld [vmem:[#allocation2 + $0x1d78] sm:$0xff]
    %v1066 = vld [vmem:[#allocation2 + $0x1d80] sm:$0xff]
    %v1067 = vld [vmem:[#allocation2 + $0x1d88] sm:$0xff]
    %v1068 = vld [vmem:[#allocation2 + $0x1d90] sm:$0xff]
    %v1069 = vld [vmem:[#allocation2 + $0x1d98] sm:$0xff]
    %v1070 = vld [vmem:[#allocation2 + $0x1da0] sm:$0xff]
    %v1071 = vld [vmem:[#allocation2 + $0x1da8] sm:$0xff]
    %v1072 = vld [vmem:[#allocation2 + $0x1db0] sm:$0xff]
    %v1073 = vld [vmem:[#allocation2 + $0x1db8] sm:$0xff]
    %v1074 = vld [vmem:[#allocation2 + $0x1dc0] sm:$0xff]
    %v1075 = vld [vmem:[#allocation2 + $0x1dc8] sm:$0xff]
    %v1076 = vld [vmem:[#allocation2 + $0x1dd0] sm:$0xff]
    %v1077 = vld [vmem:[#allocation2 + $0x1dd8] sm:$0xff]
    %v1078 = vld [vmem:[#allocation2 + $0x1de0] sm:$0xff]
    %v1079 = vld [vmem:[#allocation2 + $0x1de8] sm:$0xff]
    %v1080 = vld [vmem:[#allocation2 + $0x1df0] sm:$0xff]
    %v1081 = vld [vmem:[#allocation2 + $0x1df8] sm:$0xff]
    %v1082 = vld [vmem:[#allocation2 + $0x1e00] sm:$0xff]
    %v1083 = vld [vmem:[#allocation2 + $0x1e08] sm:$0xff]
    %v1084 = vld [vmem:[#allocation2 + $0x1e10] sm:$0xff]
    %v1085 = vld [vmem:[#allocation2 + $0x1e18] sm:$0xff]
    %v1086 = vld [vmem:[#allocation2 + $0x1e20] sm:$0xff]
    %v1087 = vld [vmem:[#allocation2 + $0x1e28] sm:$0xff]
    %v1088 = vld [vmem:[#allocation2 + $0x1e30] sm:$0xff]
    %v1089 = vld [vmem:[#allocation2 + $0x1e38] sm:$0xff]
    %v1090 = vld [vmem:[#allocation2 + $0x1e40] sm:$0xff]
    %v1091 = vld [vmem:[#allocation2 + $0x1e48] sm:$0xff]
    %v1092 = vld [vmem:[#allocation2 + $0x1e50] sm:$0xff]
    %v1093 = vld [vmem:[#allocation2 + $0x1e58] sm:$0xff]
    %v1094 = vld [vmem:[#allocation2 + $0x1e60] sm:$0xff]
    %v1095 = vld [vmem:[#allocation2 + $0x1e68] sm:$0xff]
    %v1096 = vld [vmem:[#allocation2 + $0x1e70] sm:$0xff]
    %v1097 = vld [vmem:[#allocation2 + $0x1e78] sm:$0xff]
    %v1098 = vld [vmem:[#allocation2 + $0x1e80] sm:$0xff]
    %v1099 = vld [vmem:[#allocation2 + $0x1e88] sm:$0xff]
    %v1100 = vld [vmem:[#allocation2 + $0x1e90] sm:$0xff]
    %v1101 = vld [vmem:[#allocation2 + $0x1e98] sm:$0xff]
    %v1102 = vld [vmem:[#allocation2 + $0x1ea0] sm:$0xff]
    %v1103 = vld [vmem:[#allocation2 + $0x1ea8] sm:$0xff]
    %v1104 = vld [vmem:[#allocation2 + $0x1eb0] sm:$0xff]
    %v1105 = vld [vmem:[#allocation2 + $0x1eb8] sm:$0xff]
    %v1106 = vld [vmem:[#allocation2 + $0x1ec0] sm:$0xff]
    %v1107 = vld [vmem:[#allocation2 + $0x1ec8] sm:$0xff]
    %v1108 = vld [vmem:[#allocation2 + $0x1ed0] sm:$0xff]
    %v1109 = vld [vmem:[#allocation2 + $0x1ed8] sm:$0xff]
    %v1110 = vld [vmem:[#allocation2 + $0x1ee0] sm:$0xff]
    %v1111 = vld [vmem:[#allocation2 + $0x1ee8] sm:$0xff]
    %v1112 = vld [vmem:[#allocation2 + $0x1ef0] sm:$0xff]
    %v1113 = vld [vmem:[#allocation2 + $0x1ef8] sm:$0xff]
    %v1114 = vld [vmem:[#allocation2 + $0x1f00] sm:$0xff]
    %v1115 = vld [vmem:[#allocation2 + $0x1f08] sm:$0xff]
    %v1116 = vld [vmem:[#allocation2 + $0x1f10] sm:$0xff]
    %v1117 = vld [vmem:[#allocation2 + $0x1f18] sm:$0xff]
    %v1118 = vld [vmem:[#allocation2 + $0x1f20] sm:$0xff]
    %v1119 = vld [vmem:[#allocation2 + $0x1f28] sm:$0xff]
    %v1120 = vld [vmem:[#allocation2 + $0x1f30] sm:$0xff]
    %v1121 = vld [vmem:[#allocation2 + $0x1f38] sm:$0xff]
    %v1122 = vld [vmem:[#allocation2 + $0x1f40] sm:$0xff]
    %v1123 = vld [vmem:[#allocation2 + $0x1f48] sm:$0xff]
    %v1124 = vld [vmem:[#allocation2 + $0x1f50] sm:$0xff]
    %v1125 = vld [vmem:[#allocation2 + $0x1f58] sm:$0xff]
    %v1126 = vld [vmem:[#allocation2 + $0x1f60] sm:$0xff]
    %v1127 = vld [vmem:[#allocation2 + $0x1f68] sm:$0xff]
    %v1128 = vld [vmem:[#allocation2 + $0x1f70] sm:$0xff]
    %v1129 = vld [vmem:[#allocation2 + $0x1f78] sm:$0xff]
    %v1130 = vld [vmem:[#allocation2 + $0x1f80] sm:$0xff]
    %v1131 = vld [vmem:[#allocation2 + $0x1f88] sm:$0xff]
    %v1132 = vld [vmem:[#allocation2 + $0x1f90] sm:$0xff]
    %v1133 = vld [vmem:[#allocation2 + $0x1f98] sm:$0xff]
    %v1134 = vld [vmem:[#allocation2 + $0x1fa0] sm:$0xff]
    %v1135 = vld [vmem:[#allocation2 + $0x1fa8] sm:$0xff]
    %v1136 = vld [vmem:[#allocation2 + $0x1fb0] sm:$0xff]
    %v1137 = vld [vmem:[#allocation2 + $0x1fb8] sm:$0xff]
    %v1138 = vld [vmem:[#allocation2 + $0x1fc0] sm:$0xff]
    %v1139 = vld [vmem:[#allocation2 + $0x1fc8] sm:$0xff]
    %v1140 = vld [vmem:[#allocation2 + $0x1fd0] sm:$0xff]
    %v1141 = vld [vmem:[#allocation2 + $0x1fd8] sm:$0xff]
    %v1142 = vld [vmem:[#allocation2 + $0x1fe0] sm:$0xff]
    %v1143 = vld [vmem:[#allocation2 + $0x1fe8] sm:$0xff]
    %v1144 = vld [vmem:[#allocation2 + $0x1ff0] sm:$0xff]
    %v1145 = vld [vmem:[#allocation2 + $0x1ff8] sm:$0xff]
    %v1146 = vld [vmem:[#allocation2 + $0x2000] sm:$0xff]
    %v1147 = vld [vmem:[#allocation2 + $0x2008] sm:$0xff]
    %v1148 = vld [vmem:[#allocation2 + $0x2010] sm:$0xff]
    %v1149 = vld [vmem:[#allocation2 + $0x2018] sm:$0xff]
    %v1150 = vld [vmem:[#allocation2 + $0x2020] sm:$0xff]
    %v1151 = vld [vmem:[#allocation2 + $0x2028] sm:$0xff]
    %v1152 = vld [vmem:[#allocation2 + $0x2030] sm:$0xff]
    %v1153 = vld [vmem:[#allocation2 + $0x2038] sm:$0xff]
    %v1154 = vld [vmem:[#allocation2 + $0x2040] sm:$0xff]
    %v1155 = vld [vmem:[#allocation2 + $0x2048] sm:$0xff]
    %v1156 = vld [vmem:[#allocation2 + $0x2050] sm:$0xff]
    %v1157 = vld [vmem:[#allocation2 + $0x2058] sm:$0xff]
    %v1158 = vld [vmem:[#allocation2 + $0x2060] sm:$0xff]
    %v1159 = vld [vmem:[#allocation2 + $0x2068] sm:$0xff]
    %v1160 = vld [vmem:[#allocation2 + $0x2070] sm:$0xff]
    %v1161 = vld [vmem:[#allocation2 + $0x2078] sm:$0xff]
    %v1162 = vld [vmem:[#allocation2 + $0x2080] sm:$0xff]
    %v1163 = vld [vmem:[#allocation2 + $0x2088] sm:$0xff]
    %v1164 = vld [vmem:[#allocation2 + $0x2090] sm:$0xff]
    %v1165 = vld [vmem:[#allocation2 + $0x2098] sm:$0xff]
    %v1166 = vld [vmem:[#allocation2 + $0x20a0] sm:$0xff]
    %v1167 = vld [vmem:[#allocation2 + $0x20a8] sm:$0xff]
    %v1168 = vld [vmem:[#allocation2 + $0x20b0] sm:$0xff]
    %v1169 = vld [vmem:[#allocation2 + $0x20b8] sm:$0xff]
    %v1170 = vld [vmem:[#allocation2 + $0x20c0] sm:$0xff]
    %v1171 = vld [vmem:[#allocation2 + $0x20c8] sm:$0xff]
    %v1172 = vld [vmem:[#allocation2 + $0x20d0] sm:$0xff]
    %v1173 = vld [vmem:[#allocation2 + $0x20d8] sm:$0xff]
    %v1174 = vld [vmem:[#allocation2 + $0x20e0] sm:$0xff]
    %v1175 = vld [vmem:[#allocation2 + $0x20e8] sm:$0xff]
    %v1176 = vld [vmem:[#allocation2 + $0x20f0] sm:$0xff]
    %v1177 = vld [vmem:[#allocation2 + $0x20f8] sm:$0xff]
    %v1178 = vld [vmem:[#allocation2 + $0x2100] sm:$0xff]
    %v1179 = vld [vmem:[#allocation2 + $0x2108] sm:$0xff]
    %v1180 = vld [vmem:[#allocation2 + $0x2110] sm:$0xff]
    %v1181 = vld [vmem:[#allocation2 + $0x2118] sm:$0xff]
    %v1182 = vld [vmem:[#allocation2 + $0x2120] sm:$0xff]
    %v1183 = vld [vmem:[#allocation2 + $0x2128] sm:$0xff]
    %v1184 = vld [vmem:[#allocation2 + $0x2130] sm:$0xff]
    %v1185 = vld [vmem:[#allocation2 + $0x2138] sm:$0xff]
    %v1186 = vld [vmem:[#allocation2 + $0x2140] sm:$0xff]
    %v1187 = vld [vmem:[#allocation2 + $0x2148] sm:$0xff]
    %v1188 = vld [vmem:[#allocation2 + $0x2150] sm:$0xff]
    %v1189 = vld [vmem:[#allocation2 + $0x2158] sm:$0xff]
    %v1190 = vld [vmem:[#allocation2 + $0x2160] sm:$0xff]
    %v1191 = vld [vmem:[#allocation2 + $0x2168] sm:$0xff]
    %v1192 = vld [vmem:[#allocation2 + $0x2170] sm:$0xff]
    %v1193 = vld [vmem:[#allocation2 + $0x2178] sm:$0xff]
    %v1194 = vld [vmem:[#allocation2 + $0x2180] sm:$0xff]
    %v1195 = vld [vmem:[#allocation2 + $0x2188] sm:$0xff]
    %v1196 = vld [vmem:[#allocation2 + $0x2190] sm:$0xff]
    %v1197 = vld [vmem:[#allocation2 + $0x2198] sm:$0xff]
    %v1198 = vld [vmem:[#allocation2 + $0x21a0] sm:$0xff]
    %v1199 = vld [vmem:[#allocation2 + $0x21a8] sm:$0xff]
    %v1200 = vld [vmem:[#allocation2 + $0x21b0] sm:$0xff]
    %v1201 = vld [vmem:[#allocation2 + $0x21b8] sm:$0xff]
    %v1202 = vld [vmem:[#allocation2 + $0x21c0] sm:$0xff]
    %v1203 = vld [vmem:[#allocation2 + $0x21c8] sm:$0xff]
    %v1204 = vld [vmem:[#allocation2 + $0x21d0] sm:$0xff]
    %v1205 = vld [vmem:[#allocation2 + $0x21d8] sm:$0xff]
    %v1206 = vld [vmem:[#allocation2 + $0x21e0] sm:$0xff]
    %v1207 = vld [vmem:[#allocation2 + $0x21e8] sm:$0xff]
    %v1208 = vld [vmem:[#allocation2 + $0x21f0] sm:$0xff]
    %v1209 = vld [vmem:[#allocation2 + $0x21f8] sm:$0xff]
    %v1210 = vld [vmem:[#allocation2 + $0x2200] sm:$0xff]
    %v1211 = vld [vmem:[#allocation2 + $0x2208] sm:$0xff]
    %v1212 = vld [vmem:[#allocation2 + $0x2210] sm:$0xff]
    %v1213 = vld [vmem:[#allocation2 + $0x2218] sm:$0xff]
    %v1214 = vld [vmem:[#allocation2 + $0x2220] sm:$0xff]
    %v1215 = vld [vmem:[#allocation2 + $0x2228] sm:$0xff]
    %v1216 = vld [vmem:[#allocation2 + $0x2230] sm:$0xff]
    %v1217 = vld [vmem:[#allocation2 + $0x2238] sm:$0xff]
    %v1218 = vld [vmem:[#allocation2 + $0x2240] sm:$0xff]
    %v1219 = vld [vmem:[#allocation2 + $0x2248] sm:$0xff]
    %v1220 = vld [vmem:[#allocation2 + $0x2250] sm:$0xff]
    %v1221 = vld [vmem:[#allocation2 + $0x2258] sm:$0xff]
    %v1222 = vld [vmem:[#allocation2 + $0x2260] sm:$0xff]
    %v1223 = vld [vmem:[#allocation2 + $0x2268] sm:$0xff]
    %v1224 = vld [vmem:[#allocation2 + $0x2270] sm:$0xff]
    %v1225 = vld [vmem:[#allocation2 + $0x2278] sm:$0xff]
    %v1226 = vld [vmem:[#allocation2 + $0x2280] sm:$0xff]
    %v1227 = vld [vmem:[#allocation2 + $0x2288] sm:$0xff]
    %v1228 = vld [vmem:[#allocation2 + $0x2290] sm:$0xff]
    %v1229 = vld [vmem:[#allocation2 + $0x2298] sm:$0xff]
    %v1230 = vld [vmem:[#allocation2 + $0x22a0] sm:$0xff]
    %v1231 = vld [vmem:[#allocation2 + $0x22a8] sm:$0xff]
    %v1232 = vld [vmem:[#allocation2 + $0x22b0] sm:$0xff]
    %v1233 = vld [vmem:[#allocation2 + $0x22b8] sm:$0xff]
    %v1234 = vld [vmem:[#allocation2 + $0x22c0] sm:$0xff]
    %v1235 = vld [vmem:[#allocation2 + $0x22c8] sm:$0xff]
    %v1236 = vld [vmem:[#allocation2 + $0x22d0] sm:$0xff]
    %v1237 = vld [vmem:[#allocation2 + $0x22d8] sm:$0xff]
    %v1238 = vld [vmem:[#allocation2 + $0x22e0] sm:$0xff]
    %v1239 = vld [vmem:[#allocation2 + $0x22e8] sm:$0xff]
    %v1240 = vld [vmem:[#allocation2 + $0x22f0] sm:$0xff]
    %v1241 = vld [vmem:[#allocation2 + $0x22f8] sm:$0xff]
    %v1242 = vld [vmem:[#allocation2 + $0x2300] sm:$0xff]
    %v1243 = vld [vmem:[#allocation2 + $0x2308] sm:$0xff]
    %v1244 = vld [vmem:[#allocation2 + $0x2310] sm:$0xff]
    %v1245 = vld [vmem:[#allocation2 + $0x2318] sm:$0xff]
    %v1246 = vld [vmem:[#allocation2 + $0x2320] sm:$0xff]
    %v1247 = vld [vmem:[#allocation2 + $0x2328] sm:$0xff]
    %v1248 = vld [vmem:[#allocation2 + $0x2330] sm:$0xff]
    %v1249 = vld [vmem:[#allocation2 + $0x2338] sm:$0xff]
    %v1250 = vld [vmem:[#allocation2 + $0x2340] sm:$0xff]
    %v1251 = vld [vmem:[#allocation2 + $0x2348] sm:$0xff]
    %v1252 = vld [vmem:[#allocation2 + $0x2350] sm:$0xff]
    %v1253 = vld [vmem:[#allocation2 + $0x2358] sm:$0xff]
    %v1254 = vld [vmem:[#allocation2 + $0x2360] sm:$0xff]
    %v1255 = vld [vmem:[#allocation2 + $0x2368] sm:$0xff]
    %v1256 = vld [vmem:[#allocation2 + $0x2370] sm:$0xff]
    %v1257 = vld [vmem:[#allocation2 + $0x2378] sm:$0xff]
    %v1258 = vld [vmem:[#allocation2 + $0x2380] sm:$0xff]
    %v1259 = vld [vmem:[#allocation2 + $0x2388] sm:$0xff]
    %v1260 = vld [vmem:[#allocation2 + $0x2390] sm:$0xff]
    %v1261 = vld [vmem:[#allocation2 + $0x2398] sm:$0xff]
    %v1262 = vld [vmem:[#allocation2 + $0x23a0] sm:$0xff]
    %v1263 = vld [vmem:[#allocation2 + $0x23a8] sm:$0xff]
    %v1264 = vld [vmem:[#allocation2 + $0x23b0] sm:$0xff]
    %v1265 = vld [vmem:[#allocation2 + $0x23b8] sm:$0xff]
    %v1266 = vld [vmem:[#allocation2 + $0x23c0] sm:$0xff]
    %v1267 = vld [vmem:[#allocation2 + $0x23c8] sm:$0xff]
    %v1268 = vld [vmem:[#allocation2 + $0x23d0] sm:$0xff]
    %v1269 = vld [vmem:[#allocation2 + $0x23d8] sm:$0xff]
    %v1270 = vld [vmem:[#allocation2 + $0x23e0] sm:$0xff]
    %v1271 = vld [vmem:[#allocation2 + $0x23e8] sm:$0xff]
    %v1272 = vld [vmem:[#allocation2 + $0x23f0] sm:$0xff]
    %v1273 = vld [vmem:[#allocation2 + $0x23f8] sm:$0xff]
    %v1274 = vld [vmem:[#allocation2 + $0x2400] sm:$0xff]
    %v1275 = vld [vmem:[#allocation2 + $0x2408] sm:$0xff]
    %v1276 = vld [vmem:[#allocation2 + $0x2410] sm:$0xff]
    %v1277 = vld [vmem:[#allocation2 + $0x2418] sm:$0xff]
    %v1278 = vld [vmem:[#allocation2 + $0x2420] sm:$0xff]
    %v1279 = vld [vmem:[#allocation2 + $0x2428] sm:$0xff]
    %v1280 = vld [vmem:[#allocation2 + $0x2430] sm:$0xff]
    %v1281 = vld [vmem:[#allocation2 + $0x2438] sm:$0xff]
    %v1282 = vld [vmem:[#allocation2 + $0x2440] sm:$0xff]
    %v1283 = vld [vmem:[#allocation2 + $0x2448] sm:$0xff]
    %v1284 = vld [vmem:[#allocation2 + $0x2450] sm:$0xff]
    %v1285 = vld [vmem:[#allocation2 + $0x2458] sm:$0xff]
    %v1286 = vld [vmem:[#allocation2 + $0x2460] sm:$0xff]
    %v1287 = vld [vmem:[#allocation2 + $0x2468] sm:$0xff]
    %v1288 = vld [vmem:[#allocation2 + $0x2470] sm:$0xff]
    %v1289 = vld [vmem:[#allocation2 + $0x2478] sm:$0xff]
    %v1290 = vld [vmem:[#allocation2 + $0x2480] sm:$0xff]
    %v1291 = vld [vmem:[#allocation2 + $0x2488] sm:$0xff]
    %v1292 = vld [vmem:[#allocation2 + $0x2490] sm:$0xff]
    %v1293 = vld [vmem:[#allocation2 + $0x2498] sm:$0xff]
    %v1294 = vld [vmem:[#allocation2 + $0x24a0] sm:$0xff]
    %v1295 = vld [vmem:[#allocation2 + $0x24a8] sm:$0xff]
    %v1296 = vld [vmem:[#allocation2 + $0x24b0] sm:$0xff]
    %v1297 = vld [vmem:[#allocation2 + $0x24b8] sm:$0xff]
    %v1298 = vld [vmem:[#allocation2 + $0x24c0] sm:$0xff]
    %v1299 = vld [vmem:[#allocation2 + $0x24c8] sm:$0xff]
    %v1300 = vld [vmem:[#allocation2 + $0x24d0] sm:$0xff]
    %v1301 = vld [vmem:[#allocation2 + $0x24d8] sm:$0xff]
    %v1302 = vld [vmem:[#allocation2 + $0x24e0] sm:$0xff]
    %v1303 = vld [vmem:[#allocation2 + $0x24e8] sm:$0xff]
    %v1304 = vld [vmem:[#allocation2 + $0x24f0] sm:$0xff]
    %v1305 = vld [vmem:[#allocation2 + $0x24f8] sm:$0xff]
    %v1306 = vld [vmem:[#allocation2 + $0x2500] sm:$0xff]
    %v1307 = vld [vmem:[#allocation2 + $0x2508] sm:$0xff]
    %v1308 = vld [vmem:[#allocation2 + $0x2510] sm:$0xff]
    %v1309 = vld [vmem:[#allocation2 + $0x2518] sm:$0xff]
    %v1310 = vld [vmem:[#allocation2 + $0x2520] sm:$0xff]
    %v1311 = vld [vmem:[#allocation2 + $0x2528] sm:$0xff]
    %v1312 = vld [vmem:[#allocation2 + $0x2530] sm:$0xff]
    %v1313 = vld [vmem:[#allocation2 + $0x2538] sm:$0xff]
    %v1314 = vld [vmem:[#allocation2 + $0x2540] sm:$0xff]
    %v1315 = vld [vmem:[#allocation2 + $0x2548] sm:$0xff]
    %v1316 = vld [vmem:[#allocation2 + $0x2550] sm:$0xff]
    %v1317 = vld [vmem:[#allocation2 + $0x2558] sm:$0xff]
    %v1318 = vld [vmem:[#allocation2 + $0x2560] sm:$0xff]
    %v1319 = vld [vmem:[#allocation2 + $0x2568] sm:$0xff]
    %v1320 = vld [vmem:[#allocation2 + $0x2570] sm:$0xff]
    %v1321 = vld [vmem:[#allocation2 + $0x2578] sm:$0xff]
    %v1322 = vld [vmem:[#allocation2 + $0x2580] sm:$0xff]
    %v1323 = vld [vmem:[#allocation2 + $0x2588] sm:$0xff]
    %v1324 = vld [vmem:[#allocation2 + $0x2590] sm:$0xff]
    %v1325 = vld [vmem:[#allocation2 + $0x2598] sm:$0xff]
    %v1326 = vld [vmem:[#allocation2 + $0x25a0] sm:$0xff]
    %v1327 = vld [vmem:[#allocation2 + $0x25a8] sm:$0xff]
    %v1328 = vld [vmem:[#allocation2 + $0x25b0] sm:$0xff]
    %v1329 = vld [vmem:[#allocation2 + $0x25b8] sm:$0xff]
    %v1330 = vld [vmem:[#allocation2 + $0x25c0] sm:$0xff]
    %v1331 = vld [vmem:[#allocation2 + $0x25c8] sm:$0xff]
    %v1332 = vld [vmem:[#allocation2 + $0x25d0] sm:$0xff]
    %v1333 = vld [vmem:[#allocation2 + $0x25d8] sm:$0xff]
    %v1334 = vld [vmem:[#allocation2 + $0x25e0] sm:$0xff]
    %v1335 = vld [vmem:[#allocation2 + $0x25e8] sm:$0xff]
    %v1336 = vld [vmem:[#allocation2 + $0x25f0] sm:$0xff]
    %v1337 = vld [vmem:[#allocation2 + $0x25f8] sm:$0xff]
    %v1338 = vld [vmem:[#allocation2 + $0x2600] sm:$0xff]
    %v1339 = vld [vmem:[#allocation2 + $0x2608] sm:$0xff]
    %v1340 = vld [vmem:[#allocation2 + $0x2610] sm:$0xff]
    %v1341 = vld [vmem:[#allocation2 + $0x2618] sm:$0xff]
    %v1342 = vld [vmem:[#allocation2 + $0x2620] sm:$0xff]
    %v1343 = vld [vmem:[#allocation2 + $0x2628] sm:$0xff]
    %v1344 = vld [vmem:[#allocation2 + $0x2630] sm:$0xff]
    %v1345 = vld [vmem:[#allocation2 + $0x2638] sm:$0xff]
    %v1346 = vld [vmem:[#allocation2 + $0x2640] sm:$0xff]
    %v1347 = vld [vmem:[#allocation2 + $0x2648] sm:$0xff]
    %v1348 = vld [vmem:[#allocation2 + $0x2650] sm:$0xff]
    %v1349 = vld [vmem:[#allocation2 + $0x2658] sm:$0xff]
    %v1350 = vld [vmem:[#allocation2 + $0x2660] sm:$0xff]
    %v1351 = vld [vmem:[#allocation2 + $0x2668] sm:$0xff]
    %v1352 = vld [vmem:[#allocation2 + $0x2670] sm:$0xff]
    %v1353 = vld [vmem:[#allocation2 + $0x2678] sm:$0xff]
    %v1354 = vld [vmem:[#allocation2 + $0x2680] sm:$0xff]
    %v1355 = vld [vmem:[#allocation2 + $0x2688] sm:$0xff]
    %v1356 = vld [vmem:[#allocation2 + $0x2690] sm:$0xff]
    %v1357 = vld [vmem:[#allocation2 + $0x2698] sm:$0xff]
    %v1358 = vld [vmem:[#allocation2 + $0x26a0] sm:$0xff]
    %v1359 = vld [vmem:[#allocation2 + $0x26a8] sm:$0xff]
    %v1360 = vld [vmem:[#allocation2 + $0x26b0] sm:$0xff]
    %v1361 = vld [vmem:[#allocation2 + $0x26b8] sm:$0xff]
    %v1362 = vld [vmem:[#allocation2 + $0x26c0] sm:$0xff]
    %v1363 = vld [vmem:[#allocation2 + $0x26c8] sm:$0xff]
    %v1364 = vld [vmem:[#allocation2 + $0x26d0] sm:$0xff]
    %v1365 = vld [vmem:[#allocation2 + $0x26d8] sm:$0xff]
    %v1366 = vld [vmem:[#allocation2 + $0x26e0] sm:$0xff]
    %v1367 = vld [vmem:[#allocation2 + $0x26e8] sm:$0xff]
    %v1368 = vld [vmem:[#allocation2 + $0x26f0] sm:$0xff]
    %v1369 = vld [vmem:[#allocation2 + $0x26f8] sm:$0xff]
    %v1370 = vld [vmem:[#allocation2 + $0x2700] sm:$0xff]
    %v1371 = vld [vmem:[#allocation2 + $0x2708] sm:$0xff]
    %v1372 = vld [vmem:[#allocation2 + $0x2710] sm:$0xff]
    %v1373 = vld [vmem:[#allocation2 + $0x2718] sm:$0xff]
    %v1374 = vld [vmem:[#allocation2 + $0x2720] sm:$0xff]
    %v1375 = vld [vmem:[#allocation2 + $0x2728] sm:$0xff]
    %v1376 = vld [vmem:[#allocation2 + $0x2730] sm:$0xff]
    %v1377 = vld [vmem:[#allocation2 + $0x2738] sm:$0xff]
    %v1378 = vld [vmem:[#allocation2 + $0x2740] sm:$0xff]
    %v1379 = vld [vmem:[#allocation2 + $0x2748] sm:$0xff]
    %v1380 = vld [vmem:[#allocation2 + $0x2750] sm:$0xff]
    %v1381 = vld [vmem:[#allocation2 + $0x2758] sm:$0xff]
    %v1382 = vld [vmem:[#allocation2 + $0x2760] sm:$0xff]
    %v1383 = vld [vmem:[#allocation2 + $0x2768] sm:$0xff]
    %v1384 = vld [vmem:[#allocation2 + $0x2770] sm:$0xff]
    %v1385 = vld [vmem:[#allocation2 + $0x2778] sm:$0xff]
    %v1386 = vld [vmem:[#allocation2 + $0x2780] sm:$0xff]
    %v1387 = vld [vmem:[#allocation2 + $0x2788] sm:$0xff]
    %v1388 = vld [vmem:[#allocation2 + $0x2790] sm:$0xff]
    %v1389 = vld [vmem:[#allocation2 + $0x2798] sm:$0xff]
    %v1390 = vld [vmem:[#allocation2 + $0x27a0] sm:$0xff]
    %v1391 = vld [vmem:[#allocation2 + $0x27a8] sm:$0xff]
    %v1392 = vld [vmem:[#allocation2 + $0x27b0] sm:$0xff]
    %v1393 = vld [vmem:[#allocation2 + $0x27b8] sm:$0xff]
    %v1394 = vld [vmem:[#allocation2 + $0x27c0] sm:$0xff]
    %v1395 = vld [vmem:[#allocation2 + $0x27c8] sm:$0xff]
    %v1396 = vld [vmem:[#allocation2 + $0x27d0] sm:$0xff]
    %v1397 = vld [vmem:[#allocation2 + $0x27d8] sm:$0xff]
    %v1398 = vld [vmem:[#allocation2 + $0x27e0] sm:$0xff]
    %v1399 = vld [vmem:[#allocation2 + $0x27e8] sm:$0xff]
    %v1400 = vld [vmem:[#allocation2 + $0x27f0] sm:$0xff]
    %v1401 = vld [vmem:[#allocation2 + $0x27f8] sm:$0xff]
    %v1402 = vld [vmem:[#allocation2 + $0x2800] sm:$0xff]
    %v1403 = vld [vmem:[#allocation2 + $0x2808] sm:$0xff]
    %v1404 = vld [vmem:[#allocation2 + $0x2810] sm:$0xff]
    %v1405 = vld [vmem:[#allocation2 + $0x2818] sm:$0xff]
    %v1406 = vld [vmem:[#allocation2 + $0x2820] sm:$0xff]
    %v1407 = vld [vmem:[#allocation2 + $0x2828] sm:$0xff]
    %v1408 = vld [vmem:[#allocation2 + $0x2830] sm:$0xff]
    %v1409 = vld [vmem:[#allocation2 + $0x2838] sm:$0xff]
    %v1410 = vld [vmem:[#allocation2 + $0x2840] sm:$0xff]
    %v1411 = vld [vmem:[#allocation2 + $0x2848] sm:$0xff]
    %v1412 = vld [vmem:[#allocation2 + $0x2850] sm:$0xff]
    %v1413 = vld [vmem:[#allocation2 + $0x2858] sm:$0xff]
    %v1414 = vld [vmem:[#allocation2 + $0x2860] sm:$0xff]
    %v1415 = vld [vmem:[#allocation2 + $0x2868] sm:$0xff]
    %v1416 = vld [vmem:[#allocation2 + $0x2870] sm:$0xff]
    %v1417 = vld [vmem:[#allocation2 + $0x2878] sm:$0xff]
    %v1418 = vld [vmem:[#allocation2 + $0x2880] sm:$0xff]
    %v1419 = vld [vmem:[#allocation2 + $0x2888] sm:$0xff]
    %v1420 = vld [vmem:[#allocation2 + $0x2890] sm:$0xff]
    %v1421 = vld [vmem:[#allocation2 + $0x2898] sm:$0xff]
    %v1422 = vld [vmem:[#allocation2 + $0x28a0] sm:$0xff]
    %v1423 = vld [vmem:[#allocation2 + $0x28a8] sm:$0xff]
    %v1424 = vld [vmem:[#allocation2 + $0x28b0] sm:$0xff]
    %v1425 = vld [vmem:[#allocation2 + $0x28b8] sm:$0xff]
    %v1426 = vld [vmem:[#allocation2 + $0x28c0] sm:$0xff]
    %v1427 = vld [vmem:[#allocation2 + $0x28c8] sm:$0xff]
    %v1428 = vld [vmem:[#allocation2 + $0x28d0] sm:$0xff]
    %v1429 = vld [vmem:[#allocation2 + $0x28d8] sm:$0xff]
    %v1430 = vld [vmem:[#allocation2 + $0x28e0] sm:$0xff]
    %v1431 = vld [vmem:[#allocation2 + $0x28e8] sm:$0xff]
    %v1432 = vld [vmem:[#allocation2 + $0x28f0] sm:$0xff]
    %v1433 = vld [vmem:[#allocation2 + $0x28f8] sm:$0xff]
    %v1434 = vld [vmem:[#allocation2 + $0x2900] sm:$0xff]
    %v1435 = vld [vmem:[#allocation2 + $0x2908] sm:$0xff]
    %v1436 = vld [vmem:[#allocation2 + $0x2910] sm:$0xff]
    %v1437 = vld [vmem:[#allocation2 + $0x2918] sm:$0xff]
    %v1438 = vld [vmem:[#allocation2 + $0x2920] sm:$0xff]
    %v1439 = vld [vmem:[#allocation2 + $0x2928] sm:$0xff]
    %v1440 = vld [vmem:[#allocation2 + $0x2930] sm:$0xff]
    %v1441 = vld [vmem:[#allocation2 + $0x2938] sm:$0xff]
    %v1442 = vld [vmem:[#allocation2 + $0x2940] sm:$0xff]
    %v1443 = vld [vmem:[#allocation2 + $0x2948] sm:$0xff]
    %v1444 = vld [vmem:[#allocation2 + $0x2950] sm:$0xff]
    %v1445 = vld [vmem:[#allocation2 + $0x2958] sm:$0xff]
    %v1446 = vld [vmem:[#allocation2 + $0x2960] sm:$0xff]
    %v1447 = vld [vmem:[#allocation2 + $0x2968] sm:$0xff]
    %v1448 = vld [vmem:[#allocation2 + $0x2970] sm:$0xff]
    %v1449 = vld [vmem:[#allocation2 + $0x2978] sm:$0xff]
    %v1450 = vld [vmem:[#allocation2 + $0x2980] sm:$0xff]
    %v1451 = vld [vmem:[#allocation2 + $0x2988] sm:$0xff]
    %v1452 = vld [vmem:[#allocation2 + $0x2990] sm:$0xff]
    %v1453 = vld [vmem:[#allocation2 + $0x2998] sm:$0xff]
    %v1454 = vld [vmem:[#allocation2 + $0x29a0] sm:$0xff]
    %v1455 = vld [vmem:[#allocation2 + $0x29a8] sm:$0xff]
    %v1456 = vld [vmem:[#allocation2 + $0x29b0] sm:$0xff]
    %v1457 = vld [vmem:[#allocation2 + $0x29b8] sm:$0xff]
    %v1458 = vld [vmem:[#allocation2 + $0x29c0] sm:$0xff]
    %v1459 = vld [vmem:[#allocation2 + $0x29c8] sm:$0xff]
    %v1460 = vld [vmem:[#allocation2 + $0x29d0] sm:$0xff]
    %v1461 = vld [vmem:[#allocation2 + $0x29d8] sm:$0xff]
    %v1462 = vld [vmem:[#allocation2 + $0x29e0] sm:$0xff]
    %v1463 = vld [vmem:[#allocation2 + $0x29e8] sm:$0xff]
    %v1464 = vld [vmem:[#allocation2 + $0x29f0] sm:$0xff]
    %v1465 = vld [vmem:[#allocation2 + $0x29f8] sm:$0xff]
    %v1466 = vld [vmem:[#allocation2 + $0x2a00] sm:$0xff]
    %v1467 = vld [vmem:[#allocation2 + $0x2a08] sm:$0xff]
    %v1468 = vld [vmem:[#allocation2 + $0x2a10] sm:$0xff]
    %v1469 = vld [vmem:[#allocation2 + $0x2a18] sm:$0xff]
    %v1470 = vld [vmem:[#allocation2 + $0x2a20] sm:$0xff]
    %v1471 = vld [vmem:[#allocation2 + $0x2a28] sm:$0xff]
    %v1472 = vld [vmem:[#allocation2 + $0x2a30] sm:$0xff]
    %v1473 = vld [vmem:[#allocation2 + $0x2a38] sm:$0xff]
    %v1474 = vld [vmem:[#allocation2 + $0x2a40] sm:$0xff]
    %v1475 = vld [vmem:[#allocation2 + $0x2a48] sm:$0xff]
    %v1476 = vld [vmem:[#allocation2 + $0x2a50] sm:$0xff]
    %v1477 = vld [vmem:[#allocation2 + $0x2a58] sm:$0xff]
    %v1478 = vld [vmem:[#allocation2 + $0x2a60] sm:$0xff]
    %v1479 = vld [vmem:[#allocation2 + $0x2a68] sm:$0xff]
    %v1480 = vld [vmem:[#allocation2 + $0x2a70] sm:$0xff]
    %v1481 = vld [vmem:[#allocation2 + $0x2a78] sm:$0xff]
    %v1482 = vld [vmem:[#allocation2 + $0x2a80] sm:$0xff]
    %v1483 = vld [vmem:[#allocation2 + $0x2a88] sm:$0xff]
    %v1484 = vld [vmem:[#allocation2 + $0x2a90] sm:$0xff]
    %v1485 = vld [vmem:[#allocation2 + $0x2a98] sm:$0xff]
    %v1486 = vld [vmem:[#allocation2 + $0x2aa0] sm:$0xff]
    %v1487 = vld [vmem:[#allocation2 + $0x2aa8] sm:$0xff]
    %v1488 = vld [vmem:[#allocation2 + $0x2ab0] sm:$0xff]
    %v1489 = vld [vmem:[#allocation2 + $0x2ab8] sm:$0xff]
    %v1490 = vld [vmem:[#allocation2 + $0x2ac0] sm:$0xff]
    %v1491 = vld [vmem:[#allocation2 + $0x2ac8] sm:$0xff]
    %v1492 = vld [vmem:[#allocation2 + $0x2ad0] sm:$0xff]
    %v1493 = vld [vmem:[#allocation2 + $0x2ad8] sm:$0xff]
    %v1494 = vld [vmem:[#allocation2 + $0x2ae0] sm:$0xff]
    %v1495 = vld [vmem:[#allocation2 + $0x2ae8] sm:$0xff]
    %v1496 = vld [vmem:[#allocation2 + $0x2af0] sm:$0xff]
    %v1497 = vld [vmem:[#allocation2 + $0x2af8] sm:$0xff]
    %v1498 = vld [vmem:[#allocation2 + $0x2b00] sm:$0xff]
    %v1499 = vld [vmem:[#allocation2 + $0x2b08] sm:$0xff]
    %v1500 = vld [vmem:[#allocation2 + $0x2b10] sm:$0xff]
    %v1501 = vld [vmem:[#allocation2 + $0x2b18] sm:$0xff]
    %v1502 = vld [vmem:[#allocation2 + $0x2b20] sm:$0xff]
    %v1503 = vld [vmem:[#allocation2 + $0x2b28] sm:$0xff]
    %v1504 = vld [vmem:[#allocation2 + $0x2b30] sm:$0xff]
    %v1505 = vld [vmem:[#allocation2 + $0x2b38] sm:$0xff]
    %v1506 = vld [vmem:[#allocation2 + $0x2b40] sm:$0xff]
    %v1507 = vld [vmem:[#allocation2 + $0x2b48] sm:$0xff]
    %v1508 = vld [vmem:[#allocation2 + $0x2b50] sm:$0xff]
    %v1509 = vld [vmem:[#allocation2 + $0x2b58] sm:$0xff]
    %v1510 = vld [vmem:[#allocation2 + $0x2b60] sm:$0xff]
    %v1511 = vld [vmem:[#allocation2 + $0x2b68] sm:$0xff]
    %v1512 = vld [vmem:[#allocation2 + $0x2b70] sm:$0xff]
    %v1513 = vld [vmem:[#allocation2 + $0x2b78] sm:$0xff]
    %v1514 = vld [vmem:[#allocation2 + $0x2b80] sm:$0xff]
    %v1515 = vld [vmem:[#allocation2 + $0x2b88] sm:$0xff]
    %v1516 = vld [vmem:[#allocation2 + $0x2b90] sm:$0xff]
    %v1517 = vld [vmem:[#allocation2 + $0x2b98] sm:$0xff]
    %v1518 = vld [vmem:[#allocation2 + $0x2ba0] sm:$0xff]
    %v1519 = vld [vmem:[#allocation2 + $0x2ba8] sm:$0xff]
    %v1520 = vld [vmem:[#allocation2 + $0x2bb0] sm:$0xff]
    %v1521 = vld [vmem:[#allocation2 + $0x2bb8] sm:$0xff]
    %v1522 = vld [vmem:[#allocation2 + $0x2bc0] sm:$0xff]
    %v1523 = vld [vmem:[#allocation2 + $0x2bc8] sm:$0xff]
    %v1524 = vld [vmem:[#allocation2 + $0x2bd0] sm:$0xff]
    %v1525 = vld [vmem:[#allocation2 + $0x2bd8] sm:$0xff]
    %v1526 = vld [vmem:[#allocation2 + $0x2be0] sm:$0xff]
    %v1527 = vld [vmem:[#allocation2 + $0x2be8] sm:$0xff]
    %v1528 = vld [vmem:[#allocation2 + $0x2bf0] sm:$0xff]
    %v1529 = vld [vmem:[#allocation2 + $0x2bf8] sm:$0xff]
    %v1530 = vld [vmem:[#allocation2 + $0x2c00] sm:$0xff]
    %v1531 = vld [vmem:[#allocation2 + $0x2c08] sm:$0xff]
    %v1532 = vld [vmem:[#allocation2 + $0x2c10] sm:$0xff]
    %v1533 = vld [vmem:[#allocation2 + $0x2c18] sm:$0xff]
    %v1534 = vld [vmem:[#allocation2 + $0x2c20] sm:$0xff]
    %v1535 = vld [vmem:[#allocation2 + $0x2c28] sm:$0xff]
    %v1536 = vld [vmem:[#allocation2 + $0x2c30] sm:$0xff]
    %v1537 = vld [vmem:[#allocation2 + $0x2c38] sm:$0xff]
    %v1538 = vld [vmem:[#allocation2 + $0x2c40] sm:$0xff]
    %v1539 = vld [vmem:[#allocation2 + $0x2c48] sm:$0xff]
    %v1540 = vld [vmem:[#allocation2 + $0x2c50] sm:$0xff]
    %v1541 = vld [vmem:[#allocation2 + $0x2c58] sm:$0xff]
    %v1542 = vld [vmem:[#allocation2 + $0x2c60] sm:$0xff]
    %v1543 = vld [vmem:[#allocation2 + $0x2c68] sm:$0xff]
    %v1544 = vld [vmem:[#allocation2 + $0x2c70] sm:$0xff]
    %v1545 = vld [vmem:[#allocation2 + $0x2c78] sm:$0xff]
    %v1546 = vld [vmem:[#allocation2 + $0x2c80] sm:$0xff]
    %v1547 = vld [vmem:[#allocation2 + $0x2c88] sm:$0xff]
    %v1548 = vld [vmem:[#allocation2 + $0x2c90] sm:$0xff]
    %v1549 = vld [vmem:[#allocation2 + $0x2c98] sm:$0xff]
    %v1550 = vld [vmem:[#allocation2 + $0x2ca0] sm:$0xff]
    %v1551 = vld [vmem:[#allocation2 + $0x2ca8] sm:$0xff]
    %v1552 = vld [vmem:[#allocation2 + $0x2cb0] sm:$0xff]
    %v1553 = vld [vmem:[#allocation2 + $0x2cb8] sm:$0xff]
    %v1554 = vld [vmem:[#allocation2 + $0x2cc0] sm:$0xff]
    %v1555 = vld [vmem:[#allocation2 + $0x2cc8] sm:$0xff]
    %v1556 = vld [vmem:[#allocation2 + $0x2cd0] sm:$0xff]
    %v1557 = vld [vmem:[#allocation2 + $0x2cd8] sm:$0xff]
    %v1558 = vld [vmem:[#allocation2 + $0x2ce0] sm:$0xff]
    %v1559 = vld [vmem:[#allocation2 + $0x2ce8] sm:$0xff]
    %v1560 = vld [vmem:[#allocation2 + $0x2cf0] sm:$0xff]
    %v1561 = vld [vmem:[#allocation2 + $0x2cf8] sm:$0xff]
    %v1562 = vld [vmem:[#allocation2 + $0x2d00] sm:$0xff]
    %v1563 = vld [vmem:[#allocation2 + $0x2d08] sm:$0xff]
    %v1564 = vld [vmem:[#allocation2 + $0x2d10] sm:$0xff]
    %v1565 = vld [vmem:[#allocation2 + $0x2d18] sm:$0xff]
    %v1566 = vld [vmem:[#allocation2 + $0x2d20] sm:$0xff]
    %v1567 = vld [vmem:[#allocation2 + $0x2d28] sm:$0xff]
    %v1568 = vld [vmem:[#allocation2 + $0x2d30] sm:$0xff]
    %v1569 = vld [vmem:[#allocation2 + $0x2d38] sm:$0xff]
    %v1570 = vld [vmem:[#allocation2 + $0x2d40] sm:$0xff]
    %v1571 = vld [vmem:[#allocation2 + $0x2d48] sm:$0xff]
    %v1572 = vld [vmem:[#allocation2 + $0x2d50] sm:$0xff]
    %v1573 = vld [vmem:[#allocation2 + $0x2d58] sm:$0xff]
    %v1574 = vld [vmem:[#allocation2 + $0x2d60] sm:$0xff]
    %v1575 = vld [vmem:[#allocation2 + $0x2d68] sm:$0xff]
    %v1576 = vld [vmem:[#allocation2 + $0x2d70] sm:$0xff]
    %v1577 = vld [vmem:[#allocation2 + $0x2d78] sm:$0xff]
    %v1578 = vld [vmem:[#allocation2 + $0x2d80] sm:$0xff]
    %v1579 = vld [vmem:[#allocation2 + $0x2d88] sm:$0xff]
    %v1580 = vld [vmem:[#allocation2 + $0x2d90] sm:$0xff]
    %v1581 = vld [vmem:[#allocation2 + $0x2d98] sm:$0xff]
    %v1582 = vld [vmem:[#allocation2 + $0x2da0] sm:$0xff]
    %v1583 = vld [vmem:[#allocation2 + $0x2da8] sm:$0xff]
    %v1584 = vld [vmem:[#allocation2 + $0x2db0] sm:$0xff]
    %v1585 = vld [vmem:[#allocation2 + $0x2db8] sm:$0xff]
    %v1586 = vld [vmem:[#allocation2 + $0x2dc0] sm:$0xff]
    %v1587 = vld [vmem:[#allocation2 + $0x2dc8] sm:$0xff]
    %v1588 = vld [vmem:[#allocation2 + $0x2dd0] sm:$0xff]
    %v1589 = vld [vmem:[#allocation2 + $0x2dd8] sm:$0xff]
    %v1590 = vld [vmem:[#allocation2 + $0x2de0] sm:$0xff]
    %v1591 = vld [vmem:[#allocation2 + $0x2de8] sm:$0xff]
    %v1592 = vld [vmem:[#allocation2 + $0x2df0] sm:$0xff]
    %v1593 = vld [vmem:[#allocation2 + $0x2df8] sm:$0xff]
    %v1594 = vld [vmem:[#allocation2 + $0x2e00] sm:$0xff]
    %v1595 = vld [vmem:[#allocation2 + $0x2e08] sm:$0xff]
    %v1596 = vld [vmem:[#allocation2 + $0x2e10] sm:$0xff]
    %v1597 = vld [vmem:[#allocation2 + $0x2e18] sm:$0xff]
    %v1598 = vld [vmem:[#allocation2 + $0x2e20] sm:$0xff]
    %v1599 = vld [vmem:[#allocation2 + $0x2e28] sm:$0xff]
    %v1600 = vld [vmem:[#allocation2 + $0x2e30] sm:$0xff]
    %v1601 = vld [vmem:[#allocation2 + $0x2e38] sm:$0xff]
    %v1602 = vld [vmem:[#allocation2 + $0x2e40] sm:$0xff]
    %v1603 = vld [vmem:[#allocation2 + $0x2e48] sm:$0xff]
    %v1604 = vld [vmem:[#allocation2 + $0x2e50] sm:$0xff]
    %v1605 = vld [vmem:[#allocation2 + $0x2e58] sm:$0xff]
    %v1606 = vld [vmem:[#allocation2 + $0x2e60] sm:$0xff]
    %v1607 = vld [vmem:[#allocation2 + $0x2e68] sm:$0xff]
    %v1608 = vld [vmem:[#allocation2 + $0x2e70] sm:$0xff]
    %v1609 = vld [vmem:[#allocation2 + $0x2e78] sm:$0xff]
    %v1610 = vld [vmem:[#allocation2 + $0x2e80] sm:$0xff]
    %v1611 = vld [vmem:[#allocation2 + $0x2e88] sm:$0xff]
    %v1612 = vld [vmem:[#allocation2 + $0x2e90] sm:$0xff]
    %v1613 = vld [vmem:[#allocation2 + $0x2e98] sm:$0xff]
    %v1614 = vld [vmem:[#allocation2 + $0x2ea0] sm:$0xff]
    %v1615 = vld [vmem:[#allocation2 + $0x2ea8] sm:$0xff]
    %v1616 = vld [vmem:[#allocation2 + $0x2eb0] sm:$0xff]
    %v1617 = vld [vmem:[#allocation2 + $0x2eb8] sm:$0xff]
    %v1618 = vld [vmem:[#allocation2 + $0x2ec0] sm:$0xff]
    %v1619 = vld [vmem:[#allocation2 + $0x2ec8] sm:$0xff]
    %v1620 = vld [vmem:[#allocation2 + $0x2ed0] sm:$0xff]
    %v1621 = vld [vmem:[#allocation2 + $0x2ed8] sm:$0xff]
    %v1622 = vld [vmem:[#allocation2 + $0x2ee0] sm:$0xff]
    %v1623 = vld [vmem:[#allocation2 + $0x2ee8] sm:$0xff]
    %v1624 = vld [vmem:[#allocation2 + $0x2ef0] sm:$0xff]
    %v1625 = vld [vmem:[#allocation2 + $0x2ef8] sm:$0xff]
    %v1626 = vld [vmem:[#allocation2 + $0x2f00] sm:$0xff]
    %v1627 = vld [vmem:[#allocation2 + $0x2f08] sm:$0xff]
    %v1628 = vld [vmem:[#allocation2 + $0x2f10] sm:$0xff]
    %v1629 = vld [vmem:[#allocation2 + $0x2f18] sm:$0xff]
    %v1630 = vld [vmem:[#allocation2 + $0x2f20] sm:$0xff]
    %v1631 = vld [vmem:[#allocation2 + $0x2f28] sm:$0xff]
    %v1632 = vld [vmem:[#allocation2 + $0x2f30] sm:$0xff]
    %v1633 = vld [vmem:[#allocation2 + $0x2f38] sm:$0xff]
    %v1634 = vld [vmem:[#allocation2 + $0x2f40] sm:$0xff]
    %v1635 = vld [vmem:[#allocation2 + $0x2f48] sm:$0xff]
    %v1636 = vld [vmem:[#allocation2 + $0x2f50] sm:$0xff]
    %v1637 = vld [vmem:[#allocation2 + $0x2f58] sm:$0xff]
    %v1638 = vld [vmem:[#allocation2 + $0x2f60] sm:$0xff]
    %v1639 = vld [vmem:[#allocation2 + $0x2f68] sm:$0xff]
    %v1640 = vld [vmem:[#allocation2 + $0x2f70] sm:$0xff]
    %v1641 = vld [vmem:[#allocation2 + $0x2f78] sm:$0xff]
    %v1642 = vld [vmem:[#allocation2 + $0x2f80] sm:$0xff]
    %v1643 = vld [vmem:[#allocation2 + $0x2f88] sm:$0xff]
    %v1644 = vld [vmem:[#allocation2 + $0x2f90] sm:$0xff]
    %v1645 = vld [vmem:[#allocation2 + $0x2f98] sm:$0xff]
    %v1646 = vld [vmem:[#allocation2 + $0x2fa0] sm:$0xff]
    %v1647 = vld [vmem:[#allocation2 + $0x2fa8] sm:$0xff]
    %v1648 = vld [vmem:[#allocation2 + $0x2fb0] sm:$0xff]
    %v1649 = vld [vmem:[#allocation2 + $0x2fb8] sm:$0xff]
    %v1650 = vld [vmem:[#allocation2 + $0x2fc0] sm:$0xff]
    %v1651 = vld [vmem:[#allocation2 + $0x2fc8] sm:$0xff]
    %v1652 = vld [vmem:[#allocation2 + $0x2fd0] sm:$0xff]
    %v1653 = vld [vmem:[#allocation2 + $0x2fd8] sm:$0xff]
    %v1654 = vld [vmem:[#allocation2 + $0x2fe0] sm:$0xff]
    %v1655 = vld [vmem:[#allocation2 + $0x2fe8] sm:$0xff]
    %v1656 = vld [vmem:[#allocation2 + $0x2ff0] sm:$0xff]
    %v1657 = vld [vmem:[#allocation2 + $0x2ff8] sm:$0xff]
    %v1658 = vld [vmem:[#allocation2 + $0x3000] sm:$0xff]
    %v1659 = vld [vmem:[#allocation2 + $0x3008] sm:$0xff]
    %v1660 = vld [vmem:[#allocation2 + $0x3010] sm:$0xff]
    %v1661 = vld [vmem:[#allocation2 + $0x3018] sm:$0xff]
    %v1662 = vld [vmem:[#allocation2 + $0x3020] sm:$0xff]
    %v1663 = vld [vmem:[#allocation2 + $0x3028] sm:$0xff]
    %v1664 = vld [vmem:[#allocation2 + $0x3030] sm:$0xff]
    %v1665 = vld [vmem:[#allocation2 + $0x3038] sm:$0xff]
    %v1666 = vld [vmem:[#allocation2 + $0x3040] sm:$0xff]
    %v1667 = vld [vmem:[#allocation2 + $0x3048] sm:$0xff]
    %v1668 = vld [vmem:[#allocation2 + $0x3050] sm:$0xff]
    %v1669 = vld [vmem:[#allocation2 + $0x3058] sm:$0xff]
    %v1670 = vld [vmem:[#allocation2 + $0x3060] sm:$0xff]
    %v1671 = vld [vmem:[#allocation2 + $0x3068] sm:$0xff]
    %v1672 = vld [vmem:[#allocation2 + $0x3070] sm:$0xff]
    %v1673 = vld [vmem:[#allocation2 + $0x3078] sm:$0xff]
    %v1674 = vld [vmem:[#allocation2 + $0x3080] sm:$0xff]
    %v1675 = vld [vmem:[#allocation2 + $0x3088] sm:$0xff]
    %v1676 = vld [vmem:[#allocation2 + $0x3090] sm:$0xff]
    %v1677 = vld [vmem:[#allocation2 + $0x3098] sm:$0xff]
    %v1678 = vld [vmem:[#allocation2 + $0x30a0] sm:$0xff]
    %v1679 = vld [vmem:[#allocation2 + $0x30a8] sm:$0xff]
    %v1680 = vld [vmem:[#allocation2 + $0x30b0] sm:$0xff]
    %v1681 = vld [vmem:[#allocation2 + $0x30b8] sm:$0xff]
    %v1682 = vld [vmem:[#allocation2 + $0x30c0] sm:$0xff]
    %v1683 = vld [vmem:[#allocation2 + $0x30c8] sm:$0xff]
    %v1684 = vld [vmem:[#allocation2 + $0x30d0] sm:$0xff]
    %v1685 = vld [vmem:[#allocation2 + $0x30d8] sm:$0xff]
    %v1686 = vld [vmem:[#allocation2 + $0x30e0] sm:$0xff]
    %v1687 = vld [vmem:[#allocation2 + $0x30e8] sm:$0xff]
    %v1688 = vld [vmem:[#allocation2 + $0x30f0] sm:$0xff]
    %v1689 = vld [vmem:[#allocation2 + $0x30f8] sm:$0xff]
    %v1690 = vld [vmem:[#allocation4] sm:$0xff]
    %v1692 = vlaneseq
    %v1693 = vshrl.u32 %v1692, 7
    %v1694 = vsub.s32 0, %v1693
    %v1695 = vrot.slane %v1690, %v1694
    %v1696 = vlaneseq
    %v1697 = vshrl.u32 %v1696, 7
    %v1698 = vsub.s32 1, %v1697
    %v1699 = vrot.slane %v1690, %v1698
    %v1700 = vlaneseq
    %v1701 = vshrl.u32 %v1700, 7
    %v1702 = vsub.s32 2, %v1701
    %v1703 = vrot.slane %v1690, %v1702
    %v1704 = vlaneseq
    %v1705 = vshrl.u32 %v1704, 7
    %v1706 = vsub.s32 3, %v1705
    %v1707 = vrot.slane %v1690, %v1706
    %v1708 = vlaneseq
    %v1709 = vshrl.u32 %v1708, 7
    %v1710 = vsub.s32 4, %v1709
    %v1711 = vrot.slane %v1690, %v1710
    %v1712 = vlaneseq
    %v1713 = vshrl.u32 %v1712, 7
    %v1714 = vsub.s32 5, %v1713
    %v1715 = vrot.slane %v1690, %v1714
    %v1716 = vlaneseq
    %v1717 = vshrl.u32 %v1716, 7
    %v1718 = vsub.s32 6, %v1717
    %v1719 = vrot.slane %v1690, %v1718
    %v1720 = vlaneseq
    %v1721 = vshrl.u32 %v1720, 7
    %v1722 = vsub.s32 7, %v1721
    %v1723 = vrot.slane %v1690, %v1722
    %v3300 = vunpack.c.l.b16 %v122
    %v3301 = vunpack.c.h.b16 %v122
    %v3302 = vunpack.c.l.b16 %v123
    %v3303 = vunpack.c.h.b16 %v123
    %v3304 = vunpack.c.l.b16 %v124
    %v3305 = vunpack.c.h.b16 %v124
    %v3306 = vunpack.c.l.b16 %v125
    %v3307 = vunpack.c.h.b16 %v125
    %v3308 = vunpack.c.l.b16 %v126
    %v3309 = vunpack.c.h.b16 %v126
    %v3310 = vunpack.c.l.b16 %v127
    %v3311 = vunpack.c.h.b16 %v127
    %v3312 = vunpack.c.l.b16 %v128
    %v3313 = vunpack.c.h.b16 %v128
    %v3314 = vunpack.c.l.b16 %v129
    %v3315 = vunpack.c.h.b16 %v129
    %v3316 = vunpack.c.l.b16 %v130
    %v3317 = vunpack.c.h.b16 %v130
    %v3318 = vunpack.c.l.b16 %v131
    %v3319 = vunpack.c.h.b16 %v131
    %v3320 = vunpack.c.l.b16 %v132
    %v3321 = vunpack.c.h.b16 %v132
    %v3322 = vunpack.c.l.b16 %v133
    %v3323 = vunpack.c.h.b16 %v133
    %v3324 = vunpack.c.l.b16 %v134
    %v3325 = vunpack.c.h.b16 %v134
    %v3326 = vunpack.c.l.b16 %v135
    %v3327 = vunpack.c.h.b16 %v135
    %v3328 = vunpack.c.l.b16 %v136
    %v3329 = vunpack.c.h.b16 %v136
    %v3330 = vunpack.c.l.b16 %v137
    %v3331 = vunpack.c.h.b16 %v137
    %v3332 = vunpack.c.l.b16 %v138
    %v3333 = vunpack.c.h.b16 %v138
    %v3334 = vunpack.c.l.b16 %v139
    %v3335 = vunpack.c.h.b16 %v139
    %v3336 = vunpack.c.l.b16 %v140
    %v3337 = vunpack.c.h.b16 %v140
    %v3338 = vunpack.c.l.b16 %v141
    %v3339 = vunpack.c.h.b16 %v141
    %v3340 = vunpack.c.l.b16 %v142
    %v3341 = vunpack.c.h.b16 %v142
    %v3342 = vunpack.c.l.b16 %v143
    %v3343 = vunpack.c.h.b16 %v143
    %v3344 = vunpack.c.l.b16 %v144
    %v3345 = vunpack.c.h.b16 %v144
    %v3346 = vunpack.c.l.b16 %v145
    %v3347 = vunpack.c.h.b16 %v145
    %v3348 = vunpack.c.l.b16 %v146
    %v3349 = vunpack.c.h.b16 %v146
    %v3350 = vunpack.c.l.b16 %v147
    %v3351 = vunpack.c.h.b16 %v147
    %v3352 = vunpack.c.l.b16 %v148
    %v3353 = vunpack.c.h.b16 %v148
    %v3354 = vunpack.c.l.b16 %v149
    %v3355 = vunpack.c.h.b16 %v149
    %v3356 = vunpack.c.l.b16 %v150
    %v3357 = vunpack.c.h.b16 %v150
    %v3358 = vunpack.c.l.b16 %v151
    %v3359 = vunpack.c.h.b16 %v151
    %v3360 = vunpack.c.l.b16 %v152
    %v3361 = vunpack.c.h.b16 %v152
    %v3362 = vunpack.c.l.b16 %v153
    %v3363 = vunpack.c.h.b16 %v153
    %v3364 = vunpack.c.l.b16 %v154
    %v3365 = vunpack.c.h.b16 %v154
    %v3366 = vunpack.c.l.b16 %v155
    %v3367 = vunpack.c.h.b16 %v155
    %v3368 = vunpack.c.l.b16 %v156
    %v3369 = vunpack.c.h.b16 %v156
    %v3370 = vunpack.c.l.b16 %v157
    %v3371 = vunpack.c.h.b16 %v157
    %v3372 = vunpack.c.l.b16 %v158
    %v3373 = vunpack.c.h.b16 %v158
    %v3374 = vunpack.c.l.b16 %v159
    %v3375 = vunpack.c.h.b16 %v159
    %v3376 = vunpack.c.l.b16 %v160
    %v3377 = vunpack.c.h.b16 %v160
    %v3378 = vunpack.c.l.b16 %v161
    %v3379 = vunpack.c.h.b16 %v161
    %v3380 = vunpack.c.l.b16 %v162
    %v3381 = vunpack.c.h.b16 %v162
    %v3382 = vunpack.c.l.b16 %v163
    %v3383 = vunpack.c.h.b16 %v163
    %v3384 = vunpack.c.l.b16 %v164
    %v3385 = vunpack.c.h.b16 %v164
    %v3386 = vunpack.c.l.b16 %v165
    %v3387 = vunpack.c.h.b16 %v165
    %v3388 = vunpack.c.l.b16 %v166
    %v3389 = vunpack.c.h.b16 %v166
    %v3390 = vunpack.c.l.b16 %v167
    %v3391 = vunpack.c.h.b16 %v167
    %v3392 = vunpack.c.l.b16 %v168
    %v3393 = vunpack.c.h.b16 %v168
    %v3394 = vunpack.c.l.b16 %v169
    %v3395 = vunpack.c.h.b16 %v169
    %v3396 = vunpack.c.l.b16 %v170
    %v3397 = vunpack.c.h.b16 %v170
    %v3398 = vunpack.c.l.b16 %v171
    %v3399 = vunpack.c.h.b16 %v171
    %v3400 = vunpack.c.l.b16 %v172
    %v3401 = vunpack.c.h.b16 %v172
    %v3402 = vunpack.c.l.b16 %v173
    %v3403 = vunpack.c.h.b16 %v173
    %v3404 = vunpack.c.l.b16 %v174
    %v3405 = vunpack.c.h.b16 %v174
    %v3406 = vunpack.c.l.b16 %v175
    %v3407 = vunpack.c.h.b16 %v175
    %v3408 = vunpack.c.l.b16 %v176
    %v3409 = vunpack.c.h.b16 %v176
    %v3410 = vunpack.c.l.b16 %v177
    %v3411 = vunpack.c.h.b16 %v177
    %v3412 = vunpack.c.l.b16 %v178
    %v3413 = vunpack.c.h.b16 %v178
    %v3414 = vunpack.c.l.b16 %v179
    %v3415 = vunpack.c.h.b16 %v179
    %v3416 = vunpack.c.l.b16 %v180
    %v3417 = vunpack.c.h.b16 %v180
    %v3418 = vunpack.c.l.b16 %v181
    %v3419 = vunpack.c.h.b16 %v181
    %v3420 = vunpack.c.l.b16 %v182
    %v3421 = vunpack.c.h.b16 %v182
    %v3422 = vunpack.c.l.b16 %v183
    %v3423 = vunpack.c.h.b16 %v183
    %v3424 = vunpack.c.l.b16 %v184
    %v3425 = vunpack.c.h.b16 %v184
    %v3426 = vunpack.c.l.b16 %v185
    %v3427 = vunpack.c.h.b16 %v185
    %v3428 = vunpack.c.l.b16 %v186
    %v3429 = vunpack.c.h.b16 %v186
    %v3430 = vunpack.c.l.b16 %v187
    %v3431 = vunpack.c.h.b16 %v187
    %v3432 = vunpack.c.l.b16 %v188
    %v3433 = vunpack.c.h.b16 %v188
    %v3434 = vunpack.c.l.b16 %v189
    %v3435 = vunpack.c.h.b16 %v189
    %v3436 = vunpack.c.l.b16 %v190
    %v3437 = vunpack.c.h.b16 %v190
    %v3438 = vunpack.c.l.b16 %v191
    %v3439 = vunpack.c.h.b16 %v191
    %v3440 = vunpack.c.l.b16 %v192
    %v3441 = vunpack.c.h.b16 %v192
    %v3442 = vunpack.c.l.b16 %v193
    %v3443 = vunpack.c.h.b16 %v193
    %v3444 = vunpack.c.l.b16 %v194
    %v3445 = vunpack.c.h.b16 %v194
    %v3446 = vunpack.c.l.b16 %v195
    %v3447 = vunpack.c.h.b16 %v195
    %v3448 = vunpack.c.l.b16 %v196
    %v3449 = vunpack.c.h.b16 %v196
    %v3450 = vunpack.c.l.b16 %v197
    %v3451 = vunpack.c.h.b16 %v197
    %v3452 = vunpack.c.l.b16 %v198
    %v3453 = vunpack.c.h.b16 %v198
    %v3454 = vunpack.c.l.b16 %v199
    %v3455 = vunpack.c.h.b16 %v199
    %v3456 = vunpack.c.l.b16 %v200
    %v3457 = vunpack.c.h.b16 %v200
    %v3458 = vunpack.c.l.b16 %v201
    %v3459 = vunpack.c.h.b16 %v201
    %v3460 = vunpack.c.l.b16 %v202
    %v3461 = vunpack.c.h.b16 %v202
    %v3462 = vunpack.c.l.b16 %v203
    %v3463 = vunpack.c.h.b16 %v203
    %v3464 = vunpack.c.l.b16 %v204
    %v3465 = vunpack.c.h.b16 %v204
    %v3466 = vunpack.c.l.b16 %v205
    %v3467 = vunpack.c.h.b16 %v205
    %v3468 = vunpack.c.l.b16 %v206
    %v3469 = vunpack.c.h.b16 %v206
    %v3470 = vunpack.c.l.b16 %v207
    %v3471 = vunpack.c.h.b16 %v207
    %v3472 = vunpack.c.l.b16 %v208
    %v3473 = vunpack.c.h.b16 %v208
    %v3474 = vunpack.c.l.b16 %v209
    %v3475 = vunpack.c.h.b16 %v209
    %v3476 = vunpack.c.l.b16 %v210
    %v3477 = vunpack.c.h.b16 %v210
    %v3478 = vunpack.c.l.b16 %v211
    %v3479 = vunpack.c.h.b16 %v211
    %v3480 = vunpack.c.l.b16 %v212
    %v3481 = vunpack.c.h.b16 %v212
    %v3482 = vunpack.c.l.b16 %v213
    %v3483 = vunpack.c.h.b16 %v213
    %v3484 = vunpack.c.l.b16 %v214
    %v3485 = vunpack.c.h.b16 %v214
    %v3486 = vunpack.c.l.b16 %v215
    %v3487 = vunpack.c.h.b16 %v215
    %v3488 = vunpack.c.l.b16 %v216
    %v3489 = vunpack.c.h.b16 %v216
    %v3490 = vunpack.c.l.b16 %v217
    %v3491 = vunpack.c.h.b16 %v217
    %v3492 = vunpack.c.l.b16 %v218
    %v3493 = vunpack.c.h.b16 %v218
    %v3494 = vunpack.c.l.b16 %v219
    %v3495 = vunpack.c.h.b16 %v219
    %v3496 = vunpack.c.l.b16 %v220
    %v3497 = vunpack.c.h.b16 %v220
    %v3498 = vunpack.c.l.b16 %v221
    %v3499 = vunpack.c.h.b16 %v221
    %v3500 = vunpack.c.l.b16 %v222
    %v3501 = vunpack.c.h.b16 %v222
    %v3502 = vunpack.c.l.b16 %v223
    %v3503 = vunpack.c.h.b16 %v223
    %v3504 = vunpack.c.l.b16 %v224
    %v3505 = vunpack.c.h.b16 %v224
    %v3506 = vunpack.c.l.b16 %v225
    %v3507 = vunpack.c.h.b16 %v225
    %v3508 = vunpack.c.l.b16 %v226
    %v3509 = vunpack.c.h.b16 %v226
    %v3510 = vunpack.c.l.b16 %v227
    %v3511 = vunpack.c.h.b16 %v227
    %v3512 = vunpack.c.l.b16 %v228
    %v3513 = vunpack.c.h.b16 %v228
    %v3514 = vunpack.c.l.b16 %v229
    %v3515 = vunpack.c.h.b16 %v229
    %v3516 = vunpack.c.l.b16 %v230
    %v3517 = vunpack.c.h.b16 %v230
    %v3518 = vunpack.c.l.b16 %v231
    %v3519 = vunpack.c.h.b16 %v231
    %v3520 = vunpack.c.l.b16 %v232
    %v3521 = vunpack.c.h.b16 %v232
    %v3522 = vunpack.c.l.b16 %v233
    %v3523 = vunpack.c.h.b16 %v233
    %v3524 = vunpack.c.l.b16 %v234
    %v3525 = vunpack.c.h.b16 %v234
    %v3526 = vunpack.c.l.b16 %v235
    %v3527 = vunpack.c.h.b16 %v235
    %v3528 = vunpack.c.l.b16 %v236
    %v3529 = vunpack.c.h.b16 %v236
    %v3530 = vunpack.c.l.b16 %v237
    %v3531 = vunpack.c.h.b16 %v237
    %v3532 = vunpack.c.l.b16 %v238
    %v3533 = vunpack.c.h.b16 %v238
    %v3534 = vunpack.c.l.b16 %v239
    %v3535 = vunpack.c.h.b16 %v239
    %v3536 = vunpack.c.l.b16 %v240
    %v3537 = vunpack.c.h.b16 %v240
    %v3538 = vunpack.c.l.b16 %v241
    %v3539 = vunpack.c.h.b16 %v241
    %v3540 = vunpack.c.l.b16 %v242
    %v3541 = vunpack.c.h.b16 %v242
    %v3542 = vunpack.c.l.b16 %v243
    %v3543 = vunpack.c.h.b16 %v243
    %v3544 = vunpack.c.l.b16 %v244
    %v3545 = vunpack.c.h.b16 %v244
    %v3546 = vunpack.c.l.b16 %v245
    %v3547 = vunpack.c.h.b16 %v245
    %v3548 = vunpack.c.l.b16 %v246
    %v3549 = vunpack.c.h.b16 %v246
    %v3550 = vunpack.c.l.b16 %v247
    %v3551 = vunpack.c.h.b16 %v247
    %v3552 = vunpack.c.l.b16 %v248
    %v3553 = vunpack.c.h.b16 %v248
    %v3554 = vunpack.c.l.b16 %v249
    %v3555 = vunpack.c.h.b16 %v249
    %v3556 = vunpack.c.l.b16 %v250
    %v3557 = vunpack.c.h.b16 %v250
    %v3558 = vunpack.c.l.b16 %v251
    %v3559 = vunpack.c.h.b16 %v251
    %v3560 = vunpack.c.l.b16 %v252
    %v3561 = vunpack.c.h.b16 %v252
    %v3562 = vunpack.c.l.b16 %v253
    %v3563 = vunpack.c.h.b16 %v253
    %v3564 = vunpack.c.l.b16 %v254
    %v3565 = vunpack.c.h.b16 %v254
    %v3566 = vunpack.c.l.b16 %v255
    %v3567 = vunpack.c.h.b16 %v255
    %v3568 = vunpack.c.l.b16 %v256
    %v3569 = vunpack.c.h.b16 %v256
    %v3570 = vunpack.c.l.b16 %v257
    %v3571 = vunpack.c.h.b16 %v257
    %v3572 = vunpack.c.l.b16 %v258
    %v3573 = vunpack.c.h.b16 %v258
    %v3574 = vunpack.c.l.b16 %v259
    %v3575 = vunpack.c.h.b16 %v259
    %v3576 = vunpack.c.l.b16 %v260
    %v3577 = vunpack.c.h.b16 %v260
    %v3578 = vunpack.c.l.b16 %v261
    %v3579 = vunpack.c.h.b16 %v261
    %v3580 = vunpack.c.l.b16 %v262
    %v3581 = vunpack.c.h.b16 %v262
    %v3582 = vunpack.c.l.b16 %v263
    %v3583 = vunpack.c.h.b16 %v263
    %v3584 = vunpack.c.l.b16 %v264
    %v3585 = vunpack.c.h.b16 %v264
    %v3586 = vunpack.c.l.b16 %v265
    %v3587 = vunpack.c.h.b16 %v265
    %v3588 = vunpack.c.l.b16 %v266
    %v3589 = vunpack.c.h.b16 %v266
    %v3590 = vunpack.c.l.b16 %v267
    %v3591 = vunpack.c.h.b16 %v267
    %v3592 = vunpack.c.l.b16 %v268
    %v3593 = vunpack.c.h.b16 %v268
    %v3594 = vunpack.c.l.b16 %v269
    %v3595 = vunpack.c.h.b16 %v269
    %v3596 = vunpack.c.l.b16 %v270
    %v3597 = vunpack.c.h.b16 %v270
    %v3598 = vunpack.c.l.b16 %v271
    %v3599 = vunpack.c.h.b16 %v271
    %v3600 = vunpack.c.l.b16 %v272
    %v3601 = vunpack.c.h.b16 %v272
    %v3602 = vunpack.c.l.b16 %v273
    %v3603 = vunpack.c.h.b16 %v273
    %v3604 = vunpack.c.l.b16 %v274
    %v3605 = vunpack.c.h.b16 %v274
    %v3606 = vunpack.c.l.b16 %v275
    %v3607 = vunpack.c.h.b16 %v275
    %v3608 = vunpack.c.l.b16 %v276
    %v3609 = vunpack.c.h.b16 %v276
    %v3610 = vunpack.c.l.b16 %v277
    %v3611 = vunpack.c.h.b16 %v277
    %v3612 = vunpack.c.l.b16 %v278
    %v3613 = vunpack.c.h.b16 %v278
    %v3614 = vunpack.c.l.b16 %v279
    %v3615 = vunpack.c.h.b16 %v279
    %v3616 = vunpack.c.l.b16 %v280
    %v3617 = vunpack.c.h.b16 %v280
    %v3618 = vunpack.c.l.b16 %v281
    %v3619 = vunpack.c.h.b16 %v281
    %v3620 = vunpack.c.l.b16 %v282
    %v3621 = vunpack.c.h.b16 %v282
    %v3622 = vunpack.c.l.b16 %v283
    %v3623 = vunpack.c.h.b16 %v283
    %v3624 = vunpack.c.l.b16 %v284
    %v3625 = vunpack.c.h.b16 %v284
    %v3626 = vunpack.c.l.b16 %v285
    %v3627 = vunpack.c.h.b16 %v285
    %v3628 = vunpack.c.l.b16 %v286
    %v3629 = vunpack.c.h.b16 %v286
    %v3630 = vunpack.c.l.b16 %v287
    %v3631 = vunpack.c.h.b16 %v287
    %v3632 = vunpack.c.l.b16 %v288
    %v3633 = vunpack.c.h.b16 %v288
    %v3634 = vunpack.c.l.b16 %v289
    %v3635 = vunpack.c.h.b16 %v289
    %v3636 = vunpack.c.l.b16 %v290
    %v3637 = vunpack.c.h.b16 %v290
    %v3638 = vunpack.c.l.b16 %v291
    %v3639 = vunpack.c.h.b16 %v291
    %v3640 = vunpack.c.l.b16 %v292
    %v3641 = vunpack.c.h.b16 %v292
    %v3642 = vunpack.c.l.b16 %v293
    %v3643 = vunpack.c.h.b16 %v293
    %v3644 = vunpack.c.l.b16 %v294
    %v3645 = vunpack.c.h.b16 %v294
    %v3646 = vunpack.c.l.b16 %v295
    %v3647 = vunpack.c.h.b16 %v295
    %v3648 = vunpack.c.l.b16 %v296
    %v3649 = vunpack.c.h.b16 %v296
    %v3650 = vunpack.c.l.b16 %v297
    %v3651 = vunpack.c.h.b16 %v297
    %v3652 = vunpack.c.l.b16 %v298
    %v3653 = vunpack.c.h.b16 %v298
    %v3654 = vunpack.c.l.b16 %v299
    %v3655 = vunpack.c.h.b16 %v299
    %v3656 = vunpack.c.l.b16 %v300
    %v3657 = vunpack.c.h.b16 %v300
    %v3658 = vunpack.c.l.b16 %v301
    %v3659 = vunpack.c.h.b16 %v301
    %v3660 = vunpack.c.l.b16 %v302
    %v3661 = vunpack.c.h.b16 %v302
    %v3662 = vunpack.c.l.b16 %v303
    %v3663 = vunpack.c.h.b16 %v303
    %v3664 = vunpack.c.l.b16 %v304
    %v3665 = vunpack.c.h.b16 %v304
    %v3666 = vunpack.c.l.b16 %v305
    %v3667 = vunpack.c.h.b16 %v305
    %v3668 = vunpack.c.l.b16 %v306
    %v3669 = vunpack.c.h.b16 %v306
    %v3670 = vunpack.c.l.b16 %v307
    %v3671 = vunpack.c.h.b16 %v307
    %v3672 = vunpack.c.l.b16 %v308
    %v3673 = vunpack.c.h.b16 %v308
    %v3674 = vunpack.c.l.b16 %v309
    %v3675 = vunpack.c.h.b16 %v309
    %v3676 = vunpack.c.l.b16 %v310
    %v3677 = vunpack.c.h.b16 %v310
    %v3678 = vunpack.c.l.b16 %v311
    %v3679 = vunpack.c.h.b16 %v311
    %v3680 = vunpack.c.l.b16 %v312
    %v3681 = vunpack.c.h.b16 %v312
    %v3682 = vunpack.c.l.b16 %v313
    %v3683 = vunpack.c.h.b16 %v313
    %v3684 = vunpack.c.l.b16 %v314
    %v3685 = vunpack.c.h.b16 %v314
    %v3686 = vunpack.c.l.b16 %v315
    %v3687 = vunpack.c.h.b16 %v315
    %v3688 = vunpack.c.l.b16 %v316
    %v3689 = vunpack.c.h.b16 %v316
    %v3690 = vunpack.c.l.b16 %v317
    %v3691 = vunpack.c.h.b16 %v317
    %v3692 = vunpack.c.l.b16 %v318
    %v3693 = vunpack.c.h.b16 %v318
    %v3694 = vunpack.c.l.b16 %v319
    %v3695 = vunpack.c.h.b16 %v319
    %v3696 = vunpack.c.l.b16 %v320
    %v3697 = vunpack.c.h.b16 %v320
    %v3698 = vunpack.c.l.b16 %v321
    %v3699 = vunpack.c.h.b16 %v321
    %v3700 = vunpack.c.l.b16 %v322
    %v3701 = vunpack.c.h.b16 %v322
    %v3702 = vunpack.c.l.b16 %v323
    %v3703 = vunpack.c.h.b16 %v323
    %v3704 = vunpack.c.l.b16 %v324
    %v3705 = vunpack.c.h.b16 %v324
    %v3706 = vunpack.c.l.b16 %v325
    %v3707 = vunpack.c.h.b16 %v325
    %v3708 = vunpack.c.l.b16 %v326
    %v3709 = vunpack.c.h.b16 %v326
    %v3710 = vunpack.c.l.b16 %v327
    %v3711 = vunpack.c.h.b16 %v327
    %v3712 = vunpack.c.l.b16 %v328
    %v3713 = vunpack.c.h.b16 %v328
    %v3714 = vunpack.c.l.b16 %v329
    %v3715 = vunpack.c.h.b16 %v329
    %v3716 = vunpack.c.l.b16 %v330
    %v3717 = vunpack.c.h.b16 %v330
    %v3718 = vunpack.c.l.b16 %v331
    %v3719 = vunpack.c.h.b16 %v331
    %v3720 = vunpack.c.l.b16 %v332
    %v3721 = vunpack.c.h.b16 %v332
    %v3722 = vunpack.c.l.b16 %v333
    %v3723 = vunpack.c.h.b16 %v333
    %v3724 = vunpack.c.l.b16 %v334
    %v3725 = vunpack.c.h.b16 %v334
    %v3726 = vunpack.c.l.b16 %v335
    %v3727 = vunpack.c.h.b16 %v335
    %v3728 = vunpack.c.l.b16 %v336
    %v3729 = vunpack.c.h.b16 %v336
    %v3730 = vunpack.c.l.b16 %v337
    %v3731 = vunpack.c.h.b16 %v337
    %v3732 = vunpack.c.l.b16 %v338
    %v3733 = vunpack.c.h.b16 %v338
    %v3734 = vunpack.c.l.b16 %v339
    %v3735 = vunpack.c.h.b16 %v339
    %v3736 = vunpack.c.l.b16 %v340
    %v3737 = vunpack.c.h.b16 %v340
    %v3738 = vunpack.c.l.b16 %v341
    %v3739 = vunpack.c.h.b16 %v341
    %v3740 = vunpack.c.l.b16 %v342
    %v3741 = vunpack.c.h.b16 %v342
    %v3742 = vunpack.c.l.b16 %v343
    %v3743 = vunpack.c.h.b16 %v343
    %v3744 = vunpack.c.l.b16 %v344
    %v3745 = vunpack.c.h.b16 %v344
    %v3746 = vunpack.c.l.b16 %v345
    %v3747 = vunpack.c.h.b16 %v345
    %v3748 = vunpack.c.l.b16 %v346
    %v3749 = vunpack.c.h.b16 %v346
    %v3750 = vunpack.c.l.b16 %v347
    %v3751 = vunpack.c.h.b16 %v347
    %v3752 = vunpack.c.l.b16 %v348
    %v3753 = vunpack.c.h.b16 %v348
    %v3754 = vunpack.c.l.b16 %v349
    %v3755 = vunpack.c.h.b16 %v349
    %v3756 = vunpack.c.l.b16 %v350
    %v3757 = vunpack.c.h.b16 %v350
    %v3758 = vunpack.c.l.b16 %v351
    %v3759 = vunpack.c.h.b16 %v351
    %v3760 = vunpack.c.l.b16 %v352
    %v3761 = vunpack.c.h.b16 %v352
    %v3762 = vunpack.c.l.b16 %v353
    %v3763 = vunpack.c.h.b16 %v353
    %v3764 = vunpack.c.l.b16 %v354
    %v3765 = vunpack.c.h.b16 %v354
    %v3766 = vunpack.c.l.b16 %v355
    %v3767 = vunpack.c.h.b16 %v355
    %v3768 = vunpack.c.l.b16 %v356
    %v3769 = vunpack.c.h.b16 %v356
    %v3770 = vunpack.c.l.b16 %v357
    %v3771 = vunpack.c.h.b16 %v357
    %v3772 = vunpack.c.l.b16 %v358
    %v3773 = vunpack.c.h.b16 %v358
    %v3774 = vunpack.c.l.b16 %v359
    %v3775 = vunpack.c.h.b16 %v359
    %v3776 = vunpack.c.l.b16 %v360
    %v3777 = vunpack.c.h.b16 %v360
    %v3778 = vunpack.c.l.b16 %v361
    %v3779 = vunpack.c.h.b16 %v361
    %v3780 = vunpack.c.l.b16 %v362
    %v3781 = vunpack.c.h.b16 %v362
    %v3782 = vunpack.c.l.b16 %v363
    %v3783 = vunpack.c.h.b16 %v363
    %v3784 = vunpack.c.l.b16 %v364
    %v3785 = vunpack.c.h.b16 %v364
    %v3786 = vunpack.c.l.b16 %v365
    %v3787 = vunpack.c.h.b16 %v365
    %v3788 = vunpack.c.l.b16 %v366
    %v3789 = vunpack.c.h.b16 %v366
    %v3790 = vunpack.c.l.b16 %v367
    %v3791 = vunpack.c.h.b16 %v367
    %v3792 = vunpack.c.l.b16 %v368
    %v3793 = vunpack.c.h.b16 %v368
    %v3794 = vunpack.c.l.b16 %v369
    %v3795 = vunpack.c.h.b16 %v369
    %v3796 = vunpack.c.l.b16 %v370
    %v3797 = vunpack.c.h.b16 %v370
    %v3798 = vunpack.c.l.b16 %v371
    %v3799 = vunpack.c.h.b16 %v371
    %v3800 = vunpack.c.l.b16 %v372
    %v3801 = vunpack.c.h.b16 %v372
    %v3802 = vunpack.c.l.b16 %v373
    %v3803 = vunpack.c.h.b16 %v373
    %v3804 = vunpack.c.l.b16 %v374
    %v3805 = vunpack.c.h.b16 %v374
    %v3806 = vunpack.c.l.b16 %v375
    %v3807 = vunpack.c.h.b16 %v375
    %v3808 = vunpack.c.l.b16 %v376
    %v3809 = vunpack.c.h.b16 %v376
    %v3810 = vunpack.c.l.b16 %v377
    %v3811 = vunpack.c.h.b16 %v377
    %v3812 = vunpack.c.l.b16 %v378
    %v3813 = vunpack.c.h.b16 %v378
    %v3814 = vunpack.c.l.b16 %v379
    %v3815 = vunpack.c.h.b16 %v379
    %v3816 = vunpack.c.l.b16 %v380
    %v3817 = vunpack.c.h.b16 %v380
    %v3818 = vunpack.c.l.b16 %v381
    %v3819 = vunpack.c.h.b16 %v381
    %v3820 = vunpack.c.l.b16 %v382
    %v3821 = vunpack.c.h.b16 %v382
    %v3822 = vunpack.c.l.b16 %v383
    %v3823 = vunpack.c.h.b16 %v383
    %v3824 = vunpack.c.l.b16 %v384
    %v3825 = vunpack.c.h.b16 %v384
    %v3826 = vunpack.c.l.b16 %v385
    %v3827 = vunpack.c.h.b16 %v385
    %v3828 = vunpack.c.l.b16 %v386
    %v3829 = vunpack.c.h.b16 %v386
    %v3830 = vunpack.c.l.b16 %v387
    %v3831 = vunpack.c.h.b16 %v387
    %v3832 = vunpack.c.l.b16 %v388
    %v3833 = vunpack.c.h.b16 %v388
    %v3834 = vunpack.c.l.b16 %v389
    %v3835 = vunpack.c.h.b16 %v389
    %v3836 = vunpack.c.l.b16 %v390
    %v3837 = vunpack.c.h.b16 %v390
    %v3838 = vunpack.c.l.b16 %v391
    %v3839 = vunpack.c.h.b16 %v391
    %v3840 = vunpack.c.l.b16 %v392
    %v3841 = vunpack.c.h.b16 %v392
    %v3842 = vunpack.c.l.b16 %v393
    %v3843 = vunpack.c.h.b16 %v393
    %v3844 = vunpack.c.l.b16 %v394
    %v3845 = vunpack.c.h.b16 %v394
    %v3846 = vunpack.c.l.b16 %v395
    %v3847 = vunpack.c.h.b16 %v395
    %v3848 = vunpack.c.l.b16 %v396
    %v3849 = vunpack.c.h.b16 %v396
    %v3850 = vunpack.c.l.b16 %v397
    %v3851 = vunpack.c.h.b16 %v397
    %v3852 = vunpack.c.l.b16 %v398
    %v3853 = vunpack.c.h.b16 %v398
    %v3854 = vunpack.c.l.b16 %v399
    %v3855 = vunpack.c.h.b16 %v399
    %v3856 = vunpack.c.l.b16 %v400
    %v3857 = vunpack.c.h.b16 %v400
    %v3858 = vunpack.c.l.b16 %v401
    %v3859 = vunpack.c.h.b16 %v401
    %v3860 = vunpack.c.l.b16 %v402
    %v3861 = vunpack.c.h.b16 %v402
    %v3862 = vunpack.c.l.b16 %v403
    %v3863 = vunpack.c.h.b16 %v403
    %v3864 = vunpack.c.l.b16 %v404
    %v3865 = vunpack.c.h.b16 %v404
    %v3866 = vunpack.c.l.b16 %v405
    %v3867 = vunpack.c.h.b16 %v405
    %v3868 = vunpack.c.l.b16 %v406
    %v3869 = vunpack.c.h.b16 %v406
    %v3870 = vunpack.c.l.b16 %v407
    %v3871 = vunpack.c.h.b16 %v407
    %v3872 = vunpack.c.l.b16 %v408
    %v3873 = vunpack.c.h.b16 %v408
    %v3874 = vunpack.c.l.b16 %v409
    %v3875 = vunpack.c.h.b16 %v409
    %v3876 = vunpack.c.l.b16 %v410
    %v3877 = vunpack.c.h.b16 %v410
    %v3878 = vunpack.c.l.b16 %v411
    %v3879 = vunpack.c.h.b16 %v411
    %v3880 = vunpack.c.l.b16 %v412
    %v3881 = vunpack.c.h.b16 %v412
    %v3882 = vunpack.c.l.b16 %v413
    %v3883 = vunpack.c.h.b16 %v413
    %v3884 = vunpack.c.l.b16 %v414
    %v3885 = vunpack.c.h.b16 %v414
    %v3886 = vunpack.c.l.b16 %v415
    %v3887 = vunpack.c.h.b16 %v415
    %v3888 = vunpack.c.l.b16 %v416
    %v3889 = vunpack.c.h.b16 %v416
    %v3890 = vunpack.c.l.b16 %v417
    %v3891 = vunpack.c.h.b16 %v417
    %v3892 = vunpack.c.l.b16 %v418
    %v3893 = vunpack.c.h.b16 %v418
    %v3894 = vunpack.c.l.b16 %v419
    %v3895 = vunpack.c.h.b16 %v419
    %v3896 = vunpack.c.l.b16 %v420
    %v3897 = vunpack.c.h.b16 %v420
    %v3898 = vunpack.c.l.b16 %v421
    %v3899 = vunpack.c.h.b16 %v421
    %v3900 = vunpack.c.l.b16 %v422
    %v3901 = vunpack.c.h.b16 %v422
    %v3902 = vunpack.c.l.b16 %v423
    %v3903 = vunpack.c.h.b16 %v423
    %v3904 = vunpack.c.l.b16 %v424
    %v3905 = vunpack.c.h.b16 %v424
    %v3906 = vunpack.c.l.b16 %v425
    %v3907 = vunpack.c.h.b16 %v425
    %v3908 = vunpack.c.l.b16 %v426
    %v3909 = vunpack.c.h.b16 %v426
    %v3910 = vunpack.c.l.b16 %v427
    %v3911 = vunpack.c.h.b16 %v427
    %v3912 = vunpack.c.l.b16 %v428
    %v3913 = vunpack.c.h.b16 %v428
    %v3914 = vunpack.c.l.b16 %v429
    %v3915 = vunpack.c.h.b16 %v429
    %v3916 = vunpack.c.l.b16 %v430
    %v3917 = vunpack.c.h.b16 %v430
    %v3918 = vunpack.c.l.b16 %v431
    %v3919 = vunpack.c.h.b16 %v431
    %v3920 = vunpack.c.l.b16 %v432
    %v3921 = vunpack.c.h.b16 %v432
    %v3922 = vunpack.c.l.b16 %v433
    %v3923 = vunpack.c.h.b16 %v433
    %v3924 = vunpack.c.l.b16 %v434
    %v3925 = vunpack.c.h.b16 %v434
    %v3926 = vunpack.c.l.b16 %v435
    %v3927 = vunpack.c.h.b16 %v435
    %v3928 = vunpack.c.l.b16 %v436
    %v3929 = vunpack.c.h.b16 %v436
    %v3930 = vunpack.c.l.b16 %v437
    %v3931 = vunpack.c.h.b16 %v437
    %v3932 = vunpack.c.l.b16 %v438
    %v3933 = vunpack.c.h.b16 %v438
    %v3934 = vunpack.c.l.b16 %v439
    %v3935 = vunpack.c.h.b16 %v439
    %v3936 = vunpack.c.l.b16 %v440
    %v3937 = vunpack.c.h.b16 %v440
    %v3938 = vunpack.c.l.b16 %v441
    %v3939 = vunpack.c.h.b16 %v441
    %v3940 = vunpack.c.l.b16 %v442
    %v3941 = vunpack.c.h.b16 %v442
    %v3942 = vunpack.c.l.b16 %v443
    %v3943 = vunpack.c.h.b16 %v443
    %v3944 = vunpack.c.l.b16 %v444
    %v3945 = vunpack.c.h.b16 %v444
    %v3946 = vunpack.c.l.b16 %v445
    %v3947 = vunpack.c.h.b16 %v445
    %v3948 = vunpack.c.l.b16 %v446
    %v3949 = vunpack.c.h.b16 %v446
    %v3950 = vunpack.c.l.b16 %v447
    %v3951 = vunpack.c.h.b16 %v447
    %v3952 = vunpack.c.l.b16 %v448
    %v3953 = vunpack.c.h.b16 %v448
    %v3954 = vunpack.c.l.b16 %v449
    %v3955 = vunpack.c.h.b16 %v449
    %v3956 = vunpack.c.l.b16 %v450
    %v3957 = vunpack.c.h.b16 %v450
    %v3958 = vunpack.c.l.b16 %v451
    %v3959 = vunpack.c.h.b16 %v451
    %v3960 = vunpack.c.l.b16 %v452
    %v3961 = vunpack.c.h.b16 %v452
    %v3962 = vunpack.c.l.b16 %v453
    %v3963 = vunpack.c.h.b16 %v453
    %v3964 = vunpack.c.l.b16 %v454
    %v3965 = vunpack.c.h.b16 %v454
    %v3966 = vunpack.c.l.b16 %v455
    %v3967 = vunpack.c.h.b16 %v455
    %v3968 = vunpack.c.l.b16 %v456
    %v3969 = vunpack.c.h.b16 %v456
    %v3970 = vunpack.c.l.b16 %v457
    %v3971 = vunpack.c.h.b16 %v457
    %v3972 = vunpack.c.l.b16 %v458
    %v3973 = vunpack.c.h.b16 %v458
    %v3974 = vunpack.c.l.b16 %v459
    %v3975 = vunpack.c.h.b16 %v459
    %v3976 = vunpack.c.l.b16 %v460
    %v3977 = vunpack.c.h.b16 %v460
    %v3978 = vunpack.c.l.b16 %v461
    %v3979 = vunpack.c.h.b16 %v461
    %v3980 = vunpack.c.l.b16 %v462
    %v3981 = vunpack.c.h.b16 %v462
    %v3982 = vunpack.c.l.b16 %v463
    %v3983 = vunpack.c.h.b16 %v463
    %v3984 = vunpack.c.l.b16 %v464
    %v3985 = vunpack.c.h.b16 %v464
    %v3986 = vunpack.c.l.b16 %v465
    %v3987 = vunpack.c.h.b16 %v465
    %v3988 = vunpack.c.l.b16 %v466
    %v3989 = vunpack.c.h.b16 %v466
    %v3990 = vunpack.c.l.b16 %v467
    %v3991 = vunpack.c.h.b16 %v467
    %v3992 = vunpack.c.l.b16 %v468
    %v3993 = vunpack.c.h.b16 %v468
    %v3994 = vunpack.c.l.b16 %v469
    %v3995 = vunpack.c.h.b16 %v469
    %v3996 = vunpack.c.l.b16 %v470
    %v3997 = vunpack.c.h.b16 %v470
    %v3998 = vunpack.c.l.b16 %v471
    %v3999 = vunpack.c.h.b16 %v471
    %v4000 = vunpack.c.l.b16 %v472
    %v4001 = vunpack.c.h.b16 %v472
    %v4002 = vunpack.c.l.b16 %v473
    %v4003 = vunpack.c.h.b16 %v473
    %v4004 = vunpack.c.l.b16 %v474
    %v4005 = vunpack.c.h.b16 %v474
    %v4006 = vunpack.c.l.b16 %v475
    %v4007 = vunpack.c.h.b16 %v475
    %v4008 = vunpack.c.l.b16 %v476
    %v4009 = vunpack.c.h.b16 %v476
    %v4010 = vunpack.c.l.b16 %v477
    %v4011 = vunpack.c.h.b16 %v477
    %v4012 = vunpack.c.l.b16 %v478
    %v4013 = vunpack.c.h.b16 %v478
    %v4014 = vunpack.c.l.b16 %v479
    %v4015 = vunpack.c.h.b16 %v479
    %v4016 = vunpack.c.l.b16 %v480
    %v4017 = vunpack.c.h.b16 %v480
    %v4018 = vunpack.c.l.b16 %v481
    %v4019 = vunpack.c.h.b16 %v481
    %v4020 = vunpack.c.l.b16 %v482
    %v4021 = vunpack.c.h.b16 %v482
    %v4022 = vunpack.c.l.b16 %v483
    %v4023 = vunpack.c.h.b16 %v483
    %v4024 = vunpack.c.l.b16 %v484
    %v4025 = vunpack.c.h.b16 %v484
    %v4026 = vunpack.c.l.b16 %v485
    %v4027 = vunpack.c.h.b16 %v485
    %v4028 = vunpack.c.l.b16 %v486
    %v4029 = vunpack.c.h.b16 %v486
    %v4030 = vunpack.c.l.b16 %v487
    %v4031 = vunpack.c.h.b16 %v487
    %v4032 = vunpack.c.l.b16 %v488
    %v4033 = vunpack.c.h.b16 %v488
    %v4034 = vunpack.c.l.b16 %v489
    %v4035 = vunpack.c.h.b16 %v489
    %v4036 = vunpack.c.l.b16 %v490
    %v4037 = vunpack.c.h.b16 %v490
    %v4038 = vunpack.c.l.b16 %v491
    %v4039 = vunpack.c.h.b16 %v491
    %v4040 = vunpack.c.l.b16 %v492
    %v4041 = vunpack.c.h.b16 %v492
    %v4042 = vunpack.c.l.b16 %v493
    %v4043 = vunpack.c.h.b16 %v493
    %v4044 = vunpack.c.l.b16 %v494
    %v4045 = vunpack.c.h.b16 %v494
    %v4046 = vunpack.c.l.b16 %v495
    %v4047 = vunpack.c.h.b16 %v495
    %v4048 = vunpack.c.l.b16 %v496
    %v4049 = vunpack.c.h.b16 %v496
    %v4050 = vunpack.c.l.b16 %v497
    %v4051 = vunpack.c.h.b16 %v497
    %v4052 = vunpack.c.l.b16 %v498
    %v4053 = vunpack.c.h.b16 %v498
    %v4054 = vunpack.c.l.b16 %v499
    %v4055 = vunpack.c.h.b16 %v499
    %v4056 = vunpack.c.l.b16 %v500
    %v4057 = vunpack.c.h.b16 %v500
    %v4058 = vunpack.c.l.b16 %v501
    %v4059 = vunpack.c.h.b16 %v501
    %v4060 = vunpack.c.l.b16 %v502
    %v4061 = vunpack.c.h.b16 %v502
    %v4062 = vunpack.c.l.b16 %v503
    %v4063 = vunpack.c.h.b16 %v503
    %v4064 = vunpack.c.l.b16 %v504
    %v4065 = vunpack.c.h.b16 %v504
    %v4066 = vunpack.c.l.b16 %v505
    %v4067 = vunpack.c.h.b16 %v505
    %v4068 = vunpack.c.l.b16 %v506
    %v4069 = vunpack.c.h.b16 %v506
    %v4070 = vunpack.c.l.b16 %v507
    %v4071 = vunpack.c.h.b16 %v507
    %v4072 = vunpack.c.l.b16 %v508
    %v4073 = vunpack.c.h.b16 %v508
    %v4074 = vunpack.c.l.b16 %v509
    %v4075 = vunpack.c.h.b16 %v509
    %v4076 = vunpack.c.l.b16 %v510
    %v4077 = vunpack.c.h.b16 %v510
    %v4078 = vunpack.c.l.b16 %v511
    %v4079 = vunpack.c.h.b16 %v511
    %v4080 = vunpack.c.l.b16 %v512
    %v4081 = vunpack.c.h.b16 %v512
    %v4082 = vunpack.c.l.b16 %v513
    %v4083 = vunpack.c.h.b16 %v513
    %v4084 = vunpack.c.l.b16 %v514
    %v4085 = vunpack.c.h.b16 %v514
    %v4086 = vunpack.c.l.b16 %v515
    %v4087 = vunpack.c.h.b16 %v515
    %v4088 = vunpack.c.l.b16 %v516
    %v4089 = vunpack.c.h.b16 %v516
    %v4090 = vunpack.c.l.b16 %v517
    %v4091 = vunpack.c.h.b16 %v517
    %v4092 = vunpack.c.l.b16 %v518
    %v4093 = vunpack.c.h.b16 %v518
    %v4094 = vunpack.c.l.b16 %v519
    %v4095 = vunpack.c.h.b16 %v519
    %v4096 = vunpack.c.l.b16 %v520
    %v4097 = vunpack.c.h.b16 %v520
    %v4098 = vunpack.c.l.b16 %v521
    %v4099 = vunpack.c.h.b16 %v521
    %v4100 = vunpack.c.l.b16 %v522
    %v4101 = vunpack.c.h.b16 %v522
    %v4102 = vunpack.c.l.b16 %v523
    %v4103 = vunpack.c.h.b16 %v523
    %v4104 = vunpack.c.l.b16 %v524
    %v4105 = vunpack.c.h.b16 %v524
    %v4106 = vunpack.c.l.b16 %v525
    %v4107 = vunpack.c.h.b16 %v525
    %v4108 = vunpack.c.l.b16 %v526
    %v4109 = vunpack.c.h.b16 %v526
    %v4110 = vunpack.c.l.b16 %v527
    %v4111 = vunpack.c.h.b16 %v527
    %v4112 = vunpack.c.l.b16 %v528
    %v4113 = vunpack.c.h.b16 %v528
    %v4114 = vunpack.c.l.b16 %v529
    %v4115 = vunpack.c.h.b16 %v529
    %v4116 = vunpack.c.l.b16 %v530
    %v4117 = vunpack.c.h.b16 %v530
    %v4118 = vunpack.c.l.b16 %v531
    %v4119 = vunpack.c.h.b16 %v531
    %v4120 = vunpack.c.l.b16 %v532
    %v4121 = vunpack.c.h.b16 %v532
    %v4122 = vunpack.c.l.b16 %v533
    %v4123 = vunpack.c.h.b16 %v533
    %v4124 = vunpack.c.l.b16 %v534
    %v4125 = vunpack.c.h.b16 %v534
    %v4126 = vunpack.c.l.b16 %v535
    %v4127 = vunpack.c.h.b16 %v535
    %v4128 = vunpack.c.l.b16 %v536
    %v4129 = vunpack.c.h.b16 %v536
    %v4130 = vunpack.c.l.b16 %v537
    %v4131 = vunpack.c.h.b16 %v537
    %v4132 = vunpack.c.l.b16 %v538
    %v4133 = vunpack.c.h.b16 %v538
    %v4134 = vunpack.c.l.b16 %v539
    %v4135 = vunpack.c.h.b16 %v539
    %v4136 = vunpack.c.l.b16 %v540
    %v4137 = vunpack.c.h.b16 %v540
    %v4138 = vunpack.c.l.b16 %v541
    %v4139 = vunpack.c.h.b16 %v541
    %v4140 = vunpack.c.l.b16 %v542
    %v4141 = vunpack.c.h.b16 %v542
    %v4142 = vunpack.c.l.b16 %v543
    %v4143 = vunpack.c.h.b16 %v543
    %v4144 = vunpack.c.l.b16 %v544
    %v4145 = vunpack.c.h.b16 %v544
    %v4146 = vunpack.c.l.b16 %v545
    %v4147 = vunpack.c.h.b16 %v545
    %v4148 = vunpack.c.l.b16 %v546
    %v4149 = vunpack.c.h.b16 %v546
    %v4150 = vunpack.c.l.b16 %v547
    %v4151 = vunpack.c.h.b16 %v547
    %v4152 = vunpack.c.l.b16 %v548
    %v4153 = vunpack.c.h.b16 %v548
    %v4154 = vunpack.c.l.b16 %v549
    %v4155 = vunpack.c.h.b16 %v549
    %v4156 = vunpack.c.l.b16 %v550
    %v4157 = vunpack.c.h.b16 %v550
    %v4158 = vunpack.c.l.b16 %v551
    %v4159 = vunpack.c.h.b16 %v551
    %v4160 = vunpack.c.l.b16 %v552
    %v4161 = vunpack.c.h.b16 %v552
    %v4162 = vunpack.c.l.b16 %v553
    %v4163 = vunpack.c.h.b16 %v553
    %v4164 = vunpack.c.l.b16 %v554
    %v4165 = vunpack.c.h.b16 %v554
    %v4166 = vunpack.c.l.b16 %v555
    %v4167 = vunpack.c.h.b16 %v555
    %v4168 = vunpack.c.l.b16 %v556
    %v4169 = vunpack.c.h.b16 %v556
    %v4170 = vunpack.c.l.b16 %v557
    %v4171 = vunpack.c.h.b16 %v557
    %v4172 = vunpack.c.l.b16 %v558
    %v4173 = vunpack.c.h.b16 %v558
    %v4174 = vunpack.c.l.b16 %v559
    %v4175 = vunpack.c.h.b16 %v559
    %v4176 = vunpack.c.l.b16 %v560
    %v4177 = vunpack.c.h.b16 %v560
    %v4178 = vunpack.c.l.b16 %v561
    %v4179 = vunpack.c.h.b16 %v561
    %v4180 = vunpack.c.l.b16 %v562
    %v4181 = vunpack.c.h.b16 %v562
    %v4182 = vunpack.c.l.b16 %v563
    %v4183 = vunpack.c.h.b16 %v563
    %v4184 = vunpack.c.l.b16 %v564
    %v4185 = vunpack.c.h.b16 %v564
    %v4186 = vunpack.c.l.b16 %v565
    %v4187 = vunpack.c.h.b16 %v565
    %v4188 = vunpack.c.l.b16 %v566
    %v4189 = vunpack.c.h.b16 %v566
    %v4190 = vunpack.c.l.b16 %v567
    %v4191 = vunpack.c.h.b16 %v567
    %v4192 = vunpack.c.l.b16 %v568
    %v4193 = vunpack.c.h.b16 %v568
    %v4194 = vunpack.c.l.b16 %v569
    %v4195 = vunpack.c.h.b16 %v569
    %v4196 = vunpack.c.l.b16 %v570
    %v4197 = vunpack.c.h.b16 %v570
    %v4198 = vunpack.c.l.b16 %v571
    %v4199 = vunpack.c.h.b16 %v571
    %v4200 = vunpack.c.l.b16 %v572
    %v4201 = vunpack.c.h.b16 %v572
    %v4202 = vunpack.c.l.b16 %v573
    %v4203 = vunpack.c.h.b16 %v573
    %v4204 = vunpack.c.l.b16 %v574
    %v4205 = vunpack.c.h.b16 %v574
    %v4206 = vunpack.c.l.b16 %v575
    %v4207 = vunpack.c.h.b16 %v575
    %v4208 = vunpack.c.l.b16 %v576
    %v4209 = vunpack.c.h.b16 %v576
    %v4210 = vunpack.c.l.b16 %v577
    %v4211 = vunpack.c.h.b16 %v577
    %v4212 = vunpack.c.l.b16 %v578
    %v4213 = vunpack.c.h.b16 %v578
    %v4214 = vunpack.c.l.b16 %v579
    %v4215 = vunpack.c.h.b16 %v579
    %v4216 = vunpack.c.l.b16 %v580
    %v4217 = vunpack.c.h.b16 %v580
    %v4218 = vunpack.c.l.b16 %v581
    %v4219 = vunpack.c.h.b16 %v581
    %v4220 = vunpack.c.l.b16 %v582
    %v4221 = vunpack.c.h.b16 %v582
    %v4222 = vunpack.c.l.b16 %v583
    %v4223 = vunpack.c.h.b16 %v583
    %v4224 = vunpack.c.l.b16 %v584
    %v4225 = vunpack.c.h.b16 %v584
    %v4226 = vunpack.c.l.b16 %v585
    %v4227 = vunpack.c.h.b16 %v585
    %v4228 = vunpack.c.l.b16 %v586
    %v4229 = vunpack.c.h.b16 %v586
    %v4230 = vunpack.c.l.b16 %v587
    %v4231 = vunpack.c.h.b16 %v587
    %v4232 = vunpack.c.l.b16 %v588
    %v4233 = vunpack.c.h.b16 %v588
    %v4234 = vunpack.c.l.b16 %v589
    %v4235 = vunpack.c.h.b16 %v589
    %v4236 = vunpack.c.l.b16 %v590
    %v4237 = vunpack.c.h.b16 %v590
    %v4238 = vunpack.c.l.b16 %v591
    %v4239 = vunpack.c.h.b16 %v591
    %v4240 = vunpack.c.l.b16 %v592
    %v4241 = vunpack.c.h.b16 %v592
    %v4242 = vunpack.c.l.b16 %v593
    %v4243 = vunpack.c.h.b16 %v593
    %v4244 = vunpack.c.l.b16 %v594
    %v4245 = vunpack.c.h.b16 %v594
    %v4246 = vunpack.c.l.b16 %v595
    %v4247 = vunpack.c.h.b16 %v595
    %v4248 = vunpack.c.l.b16 %v596
    %v4249 = vunpack.c.h.b16 %v596
    %v4250 = vunpack.c.l.b16 %v597
    %v4251 = vunpack.c.h.b16 %v597
    %v4252 = vunpack.c.l.b16 %v598
    %v4253 = vunpack.c.h.b16 %v598
    %v4254 = vunpack.c.l.b16 %v599
    %v4255 = vunpack.c.h.b16 %v599
    %v4256 = vunpack.c.l.b16 %v600
    %v4257 = vunpack.c.h.b16 %v600
    %v4258 = vunpack.c.l.b16 %v601
    %v4259 = vunpack.c.h.b16 %v601
    %v4260 = vunpack.c.l.b16 %v602
    %v4261 = vunpack.c.h.b16 %v602
    %v4262 = vunpack.c.l.b16 %v603
    %v4263 = vunpack.c.h.b16 %v603
    %v4264 = vunpack.c.l.b16 %v604
    %v4265 = vunpack.c.h.b16 %v604
    %v4266 = vunpack.c.l.b16 %v605
    %v4267 = vunpack.c.h.b16 %v605
    %v4268 = vunpack.c.l.b16 %v606
    %v4269 = vunpack.c.h.b16 %v606
    %v4270 = vunpack.c.l.b16 %v607
    %v4271 = vunpack.c.h.b16 %v607
    %v4272 = vunpack.c.l.b16 %v608
    %v4273 = vunpack.c.h.b16 %v608
    %v4274 = vunpack.c.l.b16 %v609
    %v4275 = vunpack.c.h.b16 %v609
    %v4276 = vunpack.c.l.b16 %v610
    %v4277 = vunpack.c.h.b16 %v610
    %v4278 = vunpack.c.l.b16 %v611
    %v4279 = vunpack.c.h.b16 %v611
    %v4280 = vunpack.c.l.b16 %v612
    %v4281 = vunpack.c.h.b16 %v612
    %v4282 = vunpack.c.l.b16 %v613
    %v4283 = vunpack.c.h.b16 %v613
    %v4284 = vunpack.c.l.b16 %v614
    %v4285 = vunpack.c.h.b16 %v614
    %v4286 = vunpack.c.l.b16 %v615
    %v4287 = vunpack.c.h.b16 %v615
    %v4288 = vunpack.c.l.b16 %v616
    %v4289 = vunpack.c.h.b16 %v616
    %v4290 = vunpack.c.l.b16 %v617
    %v4291 = vunpack.c.h.b16 %v617
    %v4292 = vunpack.c.l.b16 %v618
    %v4293 = vunpack.c.h.b16 %v618
    %v4294 = vunpack.c.l.b16 %v619
    %v4295 = vunpack.c.h.b16 %v619
    %v4296 = vunpack.c.l.b16 %v620
    %v4297 = vunpack.c.h.b16 %v620
    %v4298 = vunpack.c.l.b16 %v621
    %v4299 = vunpack.c.h.b16 %v621
    %v4300 = vunpack.c.l.b16 %v622
    %v4301 = vunpack.c.h.b16 %v622
    %v4302 = vunpack.c.l.b16 %v623
    %v4303 = vunpack.c.h.b16 %v623
    %v4304 = vunpack.c.l.b16 %v624
    %v4305 = vunpack.c.h.b16 %v624
    %v4306 = vunpack.c.l.b16 %v625
    %v4307 = vunpack.c.h.b16 %v625
    %v4308 = vunpack.c.l.b16 %v626
    %v4309 = vunpack.c.h.b16 %v626
    %v4310 = vunpack.c.l.b16 %v627
    %v4311 = vunpack.c.h.b16 %v627
    %v4312 = vunpack.c.l.b16 %v628
    %v4313 = vunpack.c.h.b16 %v628
    %v4314 = vunpack.c.l.b16 %v629
    %v4315 = vunpack.c.h.b16 %v629
    %v4316 = vunpack.c.l.b16 %v630
    %v4317 = vunpack.c.h.b16 %v630
    %v4318 = vunpack.c.l.b16 %v631
    %v4319 = vunpack.c.h.b16 %v631
    %v4320 = vunpack.c.l.b16 %v632
    %v4321 = vunpack.c.h.b16 %v632
    %v4322 = vunpack.c.l.b16 %v633
    %v4323 = vunpack.c.h.b16 %v633
    %v4324 = vunpack.c.l.b16 %v634
    %v4325 = vunpack.c.h.b16 %v634
    %v4326 = vunpack.c.l.b16 %v635
    %v4327 = vunpack.c.h.b16 %v635
    %v4328 = vunpack.c.l.b16 %v636
    %v4329 = vunpack.c.h.b16 %v636
    %v4330 = vunpack.c.l.b16 %v637
    %v4331 = vunpack.c.h.b16 %v637
    %v4332 = vunpack.c.l.b16 %v638
    %v4333 = vunpack.c.h.b16 %v638
    %v4334 = vunpack.c.l.b16 %v639
    %v4335 = vunpack.c.h.b16 %v639
    %v4336 = vunpack.c.l.b16 %v640
    %v4337 = vunpack.c.h.b16 %v640
    %v4338 = vunpack.c.l.b16 %v641
    %v4339 = vunpack.c.h.b16 %v641
    %v4340 = vunpack.c.l.b16 %v642
    %v4341 = vunpack.c.h.b16 %v642
    %v4342 = vunpack.c.l.b16 %v643
    %v4343 = vunpack.c.h.b16 %v643
    %v4344 = vunpack.c.l.b16 %v644
    %v4345 = vunpack.c.h.b16 %v644
    %v4346 = vunpack.c.l.b16 %v645
    %v4347 = vunpack.c.h.b16 %v645
    %v4348 = vunpack.c.l.b16 %v646
    %v4349 = vunpack.c.h.b16 %v646
    %v4350 = vunpack.c.l.b16 %v647
    %v4351 = vunpack.c.h.b16 %v647
    %v4352 = vunpack.c.l.b16 %v648
    %v4353 = vunpack.c.h.b16 %v648
    %v4354 = vunpack.c.l.b16 %v649
    %v4355 = vunpack.c.h.b16 %v649
    %v4356 = vunpack.c.l.b16 %v650
    %v4357 = vunpack.c.h.b16 %v650
    %v4358 = vunpack.c.l.b16 %v651
    %v4359 = vunpack.c.h.b16 %v651
    %v4360 = vunpack.c.l.b16 %v652
    %v4361 = vunpack.c.h.b16 %v652
    %v4362 = vunpack.c.l.b16 %v653
    %v4363 = vunpack.c.h.b16 %v653
    %v4364 = vunpack.c.l.b16 %v654
    %v4365 = vunpack.c.h.b16 %v654
    %v4366 = vunpack.c.l.b16 %v655
    %v4367 = vunpack.c.h.b16 %v655
    %v4368 = vunpack.c.l.b16 %v656
    %v4369 = vunpack.c.h.b16 %v656
    %v4370 = vunpack.c.l.b16 %v657
    %v4371 = vunpack.c.h.b16 %v657
    %v4372 = vunpack.c.l.b16 %v658
    %v4373 = vunpack.c.h.b16 %v658
    %v4374 = vunpack.c.l.b16 %v659
    %v4375 = vunpack.c.h.b16 %v659
    %v4376 = vunpack.c.l.b16 %v660
    %v4377 = vunpack.c.h.b16 %v660
    %v4378 = vunpack.c.l.b16 %v661
    %v4379 = vunpack.c.h.b16 %v661
    %v4380 = vunpack.c.l.b16 %v662
    %v4381 = vunpack.c.h.b16 %v662
    %v4382 = vunpack.c.l.b16 %v663
    %v4383 = vunpack.c.h.b16 %v663
    %v4384 = vunpack.c.l.b16 %v664
    %v4385 = vunpack.c.h.b16 %v664
    %v4386 = vunpack.c.l.b16 %v665
    %v4387 = vunpack.c.h.b16 %v665
    %v4388 = vunpack.c.l.b16 %v666
    %v4389 = vunpack.c.h.b16 %v666
    %v4390 = vunpack.c.l.b16 %v667
    %v4391 = vunpack.c.h.b16 %v667
    %v4392 = vunpack.c.l.b16 %v668
    %v4393 = vunpack.c.h.b16 %v668
    %v4394 = vunpack.c.l.b16 %v669
    %v4395 = vunpack.c.h.b16 %v669
    %v4396 = vunpack.c.l.b16 %v670
    %v4397 = vunpack.c.h.b16 %v670
    %v4398 = vunpack.c.l.b16 %v671
    %v4399 = vunpack.c.h.b16 %v671
    %v4400 = vunpack.c.l.b16 %v672
    %v4401 = vunpack.c.h.b16 %v672
    %v4402 = vunpack.c.l.b16 %v673
    %v4403 = vunpack.c.h.b16 %v673
    %v4404 = vunpack.c.l.b16 %v674
    %v4405 = vunpack.c.h.b16 %v674
    %v4406 = vunpack.c.l.b16 %v675
    %v4407 = vunpack.c.h.b16 %v675
    %v4408 = vunpack.c.l.b16 %v676
    %v4409 = vunpack.c.h.b16 %v676
    %v4410 = vunpack.c.l.b16 %v677
    %v4411 = vunpack.c.h.b16 %v677
    %v4412 = vunpack.c.l.b16 %v678
    %v4413 = vunpack.c.h.b16 %v678
    %v4414 = vunpack.c.l.b16 %v679
    %v4415 = vunpack.c.h.b16 %v679
    %v4416 = vunpack.c.l.b16 %v680
    %v4417 = vunpack.c.h.b16 %v680
    %v4418 = vunpack.c.l.b16 %v681
    %v4419 = vunpack.c.h.b16 %v681
    %v4420 = vunpack.c.l.b16 %v682
    %v4421 = vunpack.c.h.b16 %v682
    %v4422 = vunpack.c.l.b16 %v683
    %v4423 = vunpack.c.h.b16 %v683
    %v4424 = vunpack.c.l.b16 %v684
    %v4425 = vunpack.c.h.b16 %v684
    %v4426 = vunpack.c.l.b16 %v685
    %v4427 = vunpack.c.h.b16 %v685
    %v4428 = vunpack.c.l.b16 %v686
    %v4429 = vunpack.c.h.b16 %v686
    %v4430 = vunpack.c.l.b16 %v687
    %v4431 = vunpack.c.h.b16 %v687
    %v4432 = vunpack.c.l.b16 %v688
    %v4433 = vunpack.c.h.b16 %v688
    %v4434 = vunpack.c.l.b16 %v689
    %v4435 = vunpack.c.h.b16 %v689
    %v4436 = vunpack.c.l.b16 %v690
    %v4437 = vunpack.c.h.b16 %v690
    %v4438 = vunpack.c.l.b16 %v691
    %v4439 = vunpack.c.h.b16 %v691
    %v4440 = vunpack.c.l.b16 %v692
    %v4441 = vunpack.c.h.b16 %v692
    %v4442 = vunpack.c.l.b16 %v693
    %v4443 = vunpack.c.h.b16 %v693
    %v4444 = vunpack.c.l.b16 %v694
    %v4445 = vunpack.c.h.b16 %v694
    %v4446 = vunpack.c.l.b16 %v695
    %v4447 = vunpack.c.h.b16 %v695
    %v4448 = vunpack.c.l.b16 %v696
    %v4449 = vunpack.c.h.b16 %v696
    %v4450 = vunpack.c.l.b16 %v697
    %v4451 = vunpack.c.h.b16 %v697
    %v4452 = vunpack.c.l.b16 %v698
    %v4453 = vunpack.c.h.b16 %v698
    %v4454 = vunpack.c.l.b16 %v699
    %v4455 = vunpack.c.h.b16 %v699
    %v4456 = vunpack.c.l.b16 %v700
    %v4457 = vunpack.c.h.b16 %v700
    %v4458 = vunpack.c.l.b16 %v701
    %v4459 = vunpack.c.h.b16 %v701
    %v4460 = vunpack.c.l.b16 %v702
    %v4461 = vunpack.c.h.b16 %v702
    %v4462 = vunpack.c.l.b16 %v703
    %v4463 = vunpack.c.h.b16 %v703
    %v4464 = vunpack.c.l.b16 %v704
    %v4465 = vunpack.c.h.b16 %v704
    %v4466 = vunpack.c.l.b16 %v705
    %v4467 = vunpack.c.h.b16 %v705
    %v4468 = vunpack.c.l.b16 %v706
    %v4469 = vunpack.c.h.b16 %v706
    %v4470 = vunpack.c.l.b16 %v707
    %v4471 = vunpack.c.h.b16 %v707
    %v4472 = vunpack.c.l.b16 %v708
    %v4473 = vunpack.c.h.b16 %v708
    %v4474 = vunpack.c.l.b16 %v709
    %v4475 = vunpack.c.h.b16 %v709
    %v4476 = vunpack.c.l.b16 %v710
    %v4477 = vunpack.c.h.b16 %v710
    %v4478 = vunpack.c.l.b16 %v711
    %v4479 = vunpack.c.h.b16 %v711
    %v4480 = vunpack.c.l.b16 %v712
    %v4481 = vunpack.c.h.b16 %v712
    %v4482 = vunpack.c.l.b16 %v713
    %v4483 = vunpack.c.h.b16 %v713
    %v4484 = vunpack.c.l.b16 %v714
    %v4485 = vunpack.c.h.b16 %v714
    %v4486 = vunpack.c.l.b16 %v715
    %v4487 = vunpack.c.h.b16 %v715
    %v4488 = vunpack.c.l.b16 %v716
    %v4489 = vunpack.c.h.b16 %v716
    %v4490 = vunpack.c.l.b16 %v717
    %v4491 = vunpack.c.h.b16 %v717
    %v4492 = vunpack.c.l.b16 %v718
    %v4493 = vunpack.c.h.b16 %v718
    %v4494 = vunpack.c.l.b16 %v719
    %v4495 = vunpack.c.h.b16 %v719
    %v4496 = vunpack.c.l.b16 %v720
    %v4497 = vunpack.c.h.b16 %v720
    %v4498 = vunpack.c.l.b16 %v721
    %v4499 = vunpack.c.h.b16 %v721
    %v4500 = vunpack.c.l.b16 %v722
    %v4501 = vunpack.c.h.b16 %v722
    %v4502 = vunpack.c.l.b16 %v723
    %v4503 = vunpack.c.h.b16 %v723
    %v4504 = vunpack.c.l.b16 %v724
    %v4505 = vunpack.c.h.b16 %v724
    %v4506 = vunpack.c.l.b16 %v725
    %v4507 = vunpack.c.h.b16 %v725
    %v4508 = vunpack.c.l.b16 %v726
    %v4509 = vunpack.c.h.b16 %v726
    %v4510 = vunpack.c.l.b16 %v727
    %v4511 = vunpack.c.h.b16 %v727
    %v4512 = vunpack.c.l.b16 %v728
    %v4513 = vunpack.c.h.b16 %v728
    %v4514 = vunpack.c.l.b16 %v729
    %v4515 = vunpack.c.h.b16 %v729
    %v4516 = vunpack.c.l.b16 %v730
    %v4517 = vunpack.c.h.b16 %v730
    %v4518 = vunpack.c.l.b16 %v731
    %v4519 = vunpack.c.h.b16 %v731
    %v4520 = vunpack.c.l.b16 %v732
    %v4521 = vunpack.c.h.b16 %v732
    %v4522 = vunpack.c.l.b16 %v733
    %v4523 = vunpack.c.h.b16 %v733
    %v4524 = vunpack.c.l.b16 %v734
    %v4525 = vunpack.c.h.b16 %v734
    %v4526 = vunpack.c.l.b16 %v735
    %v4527 = vunpack.c.h.b16 %v735
    %v4528 = vunpack.c.l.b16 %v736
    %v4529 = vunpack.c.h.b16 %v736
    %v4530 = vunpack.c.l.b16 %v737
    %v4531 = vunpack.c.h.b16 %v737
    %v4532 = vunpack.c.l.b16 %v738
    %v4533 = vunpack.c.h.b16 %v738
    %v4534 = vunpack.c.l.b16 %v739
    %v4535 = vunpack.c.h.b16 %v739
    %v4536 = vunpack.c.l.b16 %v740
    %v4537 = vunpack.c.h.b16 %v740
    %v4538 = vunpack.c.l.b16 %v741
    %v4539 = vunpack.c.h.b16 %v741
    %v4540 = vunpack.c.l.b16 %v742
    %v4541 = vunpack.c.h.b16 %v742
    %v4542 = vunpack.c.l.b16 %v743
    %v4543 = vunpack.c.h.b16 %v743
    %v4544 = vunpack.c.l.b16 %v744
    %v4545 = vunpack.c.h.b16 %v744
    %v4546 = vunpack.c.l.b16 %v745
    %v4547 = vunpack.c.h.b16 %v745
    %v4548 = vunpack.c.l.b16 %v746
    %v4549 = vunpack.c.h.b16 %v746
    %v4550 = vunpack.c.l.b16 %v747
    %v4551 = vunpack.c.h.b16 %v747
    %v4552 = vunpack.c.l.b16 %v748
    %v4553 = vunpack.c.h.b16 %v748
    %v4554 = vunpack.c.l.b16 %v749
    %v4555 = vunpack.c.h.b16 %v749
    %v4556 = vunpack.c.l.b16 %v750
    %v4557 = vunpack.c.h.b16 %v750
    %v4558 = vunpack.c.l.b16 %v751
    %v4559 = vunpack.c.h.b16 %v751
    %v4560 = vunpack.c.l.b16 %v752
    %v4561 = vunpack.c.h.b16 %v752
    %v4562 = vunpack.c.l.b16 %v753
    %v4563 = vunpack.c.h.b16 %v753
    %v4564 = vunpack.c.l.b16 %v754
    %v4565 = vunpack.c.h.b16 %v754
    %v4566 = vunpack.c.l.b16 %v755
    %v4567 = vunpack.c.h.b16 %v755
    %v4568 = vunpack.c.l.b16 %v756
    %v4569 = vunpack.c.h.b16 %v756
    %v4570 = vunpack.c.l.b16 %v757
    %v4571 = vunpack.c.h.b16 %v757
    %v4572 = vunpack.c.l.b16 %v758
    %v4573 = vunpack.c.h.b16 %v758
    %v4574 = vunpack.c.l.b16 %v759
    %v4575 = vunpack.c.h.b16 %v759
    %v4576 = vunpack.c.l.b16 %v760
    %v4577 = vunpack.c.h.b16 %v760
    %v4578 = vunpack.c.l.b16 %v761
    %v4579 = vunpack.c.h.b16 %v761
    %v4580 = vunpack.c.l.b16 %v762
    %v4581 = vunpack.c.h.b16 %v762
    %v4582 = vunpack.c.l.b16 %v763
    %v4583 = vunpack.c.h.b16 %v763
    %v4584 = vunpack.c.l.b16 %v764
    %v4585 = vunpack.c.h.b16 %v764
    %v4586 = vunpack.c.l.b16 %v765
    %v4587 = vunpack.c.h.b16 %v765
    %v4588 = vunpack.c.l.b16 %v766
    %v4589 = vunpack.c.h.b16 %v766
    %v4590 = vunpack.c.l.b16 %v767
    %v4591 = vunpack.c.h.b16 %v767
    %v4592 = vunpack.c.l.b16 %v768
    %v4593 = vunpack.c.h.b16 %v768
    %v4594 = vunpack.c.l.b16 %v769
    %v4595 = vunpack.c.h.b16 %v769
    %v4596 = vunpack.c.l.b16 %v770
    %v4597 = vunpack.c.h.b16 %v770
    %v4598 = vunpack.c.l.b16 %v771
    %v4599 = vunpack.c.h.b16 %v771
    %v4600 = vunpack.c.l.b16 %v772
    %v4601 = vunpack.c.h.b16 %v772
    %v4602 = vunpack.c.l.b16 %v773
    %v4603 = vunpack.c.h.b16 %v773
    %v4604 = vunpack.c.l.b16 %v774
    %v4605 = vunpack.c.h.b16 %v774
    %v4606 = vunpack.c.l.b16 %v775
    %v4607 = vunpack.c.h.b16 %v775
    %v4608 = vunpack.c.l.b16 %v776
    %v4609 = vunpack.c.h.b16 %v776
    %v4610 = vunpack.c.l.b16 %v777
    %v4611 = vunpack.c.h.b16 %v777
    %v4612 = vunpack.c.l.b16 %v778
    %v4613 = vunpack.c.h.b16 %v778
    %v4614 = vunpack.c.l.b16 %v779
    %v4615 = vunpack.c.h.b16 %v779
    %v4616 = vunpack.c.l.b16 %v780
    %v4617 = vunpack.c.h.b16 %v780
    %v4618 = vunpack.c.l.b16 %v781
    %v4619 = vunpack.c.h.b16 %v781
    %v4620 = vunpack.c.l.b16 %v782
    %v4621 = vunpack.c.h.b16 %v782
    %v4622 = vunpack.c.l.b16 %v783
    %v4623 = vunpack.c.h.b16 %v783
    %v4624 = vunpack.c.l.b16 %v784
    %v4625 = vunpack.c.h.b16 %v784
    %v4626 = vunpack.c.l.b16 %v785
    %v4627 = vunpack.c.h.b16 %v785
    %v4628 = vunpack.c.l.b16 %v786
    %v4629 = vunpack.c.h.b16 %v786
    %v4630 = vunpack.c.l.b16 %v787
    %v4631 = vunpack.c.h.b16 %v787
    %v4632 = vunpack.c.l.b16 %v788
    %v4633 = vunpack.c.h.b16 %v788
    %v4634 = vunpack.c.l.b16 %v789
    %v4635 = vunpack.c.h.b16 %v789
    %v4636 = vunpack.c.l.b16 %v790
    %v4637 = vunpack.c.h.b16 %v790
    %v4638 = vunpack.c.l.b16 %v791
    %v4639 = vunpack.c.h.b16 %v791
    %v4640 = vunpack.c.l.b16 %v792
    %v4641 = vunpack.c.h.b16 %v792
    %v4642 = vunpack.c.l.b16 %v793
    %v4643 = vunpack.c.h.b16 %v793
    %v4644 = vunpack.c.l.b16 %v794
    %v4645 = vunpack.c.h.b16 %v794
    %v4646 = vunpack.c.l.b16 %v795
    %v4647 = vunpack.c.h.b16 %v795
    %v4648 = vunpack.c.l.b16 %v796
    %v4649 = vunpack.c.h.b16 %v796
    %v4650 = vunpack.c.l.b16 %v797
    %v4651 = vunpack.c.h.b16 %v797
    %v4652 = vunpack.c.l.b16 %v798
    %v4653 = vunpack.c.h.b16 %v798
    %v4654 = vunpack.c.l.b16 %v799
    %v4655 = vunpack.c.h.b16 %v799
    %v4656 = vunpack.c.l.b16 %v800
    %v4657 = vunpack.c.h.b16 %v800
    %v4658 = vunpack.c.l.b16 %v801
    %v4659 = vunpack.c.h.b16 %v801
    %v4660 = vunpack.c.l.b16 %v802
    %v4661 = vunpack.c.h.b16 %v802
    %v4662 = vunpack.c.l.b16 %v803
    %v4663 = vunpack.c.h.b16 %v803
    %v4664 = vunpack.c.l.b16 %v804
    %v4665 = vunpack.c.h.b16 %v804
    %v4666 = vunpack.c.l.b16 %v805
    %v4667 = vunpack.c.h.b16 %v805
    %v4668 = vunpack.c.l.b16 %v806
    %v4669 = vunpack.c.h.b16 %v806
    %v4670 = vunpack.c.l.b16 %v807
    %v4671 = vunpack.c.h.b16 %v807
    %v4672 = vunpack.c.l.b16 %v808
    %v4673 = vunpack.c.h.b16 %v808
    %v4674 = vunpack.c.l.b16 %v809
    %v4675 = vunpack.c.h.b16 %v809
    %v4676 = vunpack.c.l.b16 %v810
    %v4677 = vunpack.c.h.b16 %v810
    %v4678 = vunpack.c.l.b16 %v811
    %v4679 = vunpack.c.h.b16 %v811
    %v4680 = vunpack.c.l.b16 %v812
    %v4681 = vunpack.c.h.b16 %v812
    %v4682 = vunpack.c.l.b16 %v813
    %v4683 = vunpack.c.h.b16 %v813
    %v4684 = vunpack.c.l.b16 %v814
    %v4685 = vunpack.c.h.b16 %v814
    %v4686 = vunpack.c.l.b16 %v815
    %v4687 = vunpack.c.h.b16 %v815
    %v4688 = vunpack.c.l.b16 %v816
    %v4689 = vunpack.c.h.b16 %v816
    %v4690 = vunpack.c.l.b16 %v817
    %v4691 = vunpack.c.h.b16 %v817
    %v4692 = vunpack.c.l.b16 %v818
    %v4693 = vunpack.c.h.b16 %v818
    %v4694 = vunpack.c.l.b16 %v819
    %v4695 = vunpack.c.h.b16 %v819
    %v4696 = vunpack.c.l.b16 %v820
    %v4697 = vunpack.c.h.b16 %v820
    %v4698 = vunpack.c.l.b16 %v821
    %v4699 = vunpack.c.h.b16 %v821
    %v4700 = vunpack.c.l.b16 %v822
    %v4701 = vunpack.c.h.b16 %v822
    %v4702 = vunpack.c.l.b16 %v823
    %v4703 = vunpack.c.h.b16 %v823
    %v4704 = vunpack.c.l.b16 %v824
    %v4705 = vunpack.c.h.b16 %v824
    %v4706 = vunpack.c.l.b16 %v825
    %v4707 = vunpack.c.h.b16 %v825
    %v4708 = vunpack.c.l.b16 %v826
    %v4709 = vunpack.c.h.b16 %v826
    %v4710 = vunpack.c.l.b16 %v827
    %v4711 = vunpack.c.h.b16 %v827
    %v4712 = vunpack.c.l.b16 %v828
    %v4713 = vunpack.c.h.b16 %v828
    %v4714 = vunpack.c.l.b16 %v829
    %v4715 = vunpack.c.h.b16 %v829
    %v4716 = vunpack.c.l.b16 %v830
    %v4717 = vunpack.c.h.b16 %v830
    %v4718 = vunpack.c.l.b16 %v831
    %v4719 = vunpack.c.h.b16 %v831
    %v4720 = vunpack.c.l.b16 %v832
    %v4721 = vunpack.c.h.b16 %v832
    %v4722 = vunpack.c.l.b16 %v833
    %v4723 = vunpack.c.h.b16 %v833
    %v4724 = vunpack.c.l.b16 %v834
    %v4725 = vunpack.c.h.b16 %v834
    %v4726 = vunpack.c.l.b16 %v835
    %v4727 = vunpack.c.h.b16 %v835
    %v4728 = vunpack.c.l.b16 %v836
    %v4729 = vunpack.c.h.b16 %v836
    %v4730 = vunpack.c.l.b16 %v837
    %v4731 = vunpack.c.h.b16 %v837
    %v4732 = vunpack.c.l.b16 %v838
    %v4733 = vunpack.c.h.b16 %v838
    %v4734 = vunpack.c.l.b16 %v839
    %v4735 = vunpack.c.h.b16 %v839
    %v4736 = vunpack.c.l.b16 %v840
    %v4737 = vunpack.c.h.b16 %v840
    %v4738 = vunpack.c.l.b16 %v841
    %v4739 = vunpack.c.h.b16 %v841
    %v4740 = vunpack.c.l.b16 %v842
    %v4741 = vunpack.c.h.b16 %v842
    %v4742 = vunpack.c.l.b16 %v843
    %v4743 = vunpack.c.h.b16 %v843
    %v4744 = vunpack.c.l.b16 %v844
    %v4745 = vunpack.c.h.b16 %v844
    %v4746 = vunpack.c.l.b16 %v845
    %v4747 = vunpack.c.h.b16 %v845
    %v4748 = vunpack.c.l.b16 %v846
    %v4749 = vunpack.c.h.b16 %v846
    %v4750 = vunpack.c.l.b16 %v847
    %v4751 = vunpack.c.h.b16 %v847
    %v4752 = vunpack.c.l.b16 %v848
    %v4753 = vunpack.c.h.b16 %v848
    %v4754 = vunpack.c.l.b16 %v849
    %v4755 = vunpack.c.h.b16 %v849
    %v4756 = vunpack.c.l.b16 %v850
    %v4757 = vunpack.c.h.b16 %v850
    %v4758 = vunpack.c.l.b16 %v851
    %v4759 = vunpack.c.h.b16 %v851
    %v4760 = vunpack.c.l.b16 %v852
    %v4761 = vunpack.c.h.b16 %v852
    %v4762 = vunpack.c.l.b16 %v853
    %v4763 = vunpack.c.h.b16 %v853
    %v4764 = vunpack.c.l.b16 %v854
    %v4765 = vunpack.c.h.b16 %v854
    %v4766 = vunpack.c.l.b16 %v855
    %v4767 = vunpack.c.h.b16 %v855
    %v4768 = vunpack.c.l.b16 %v856
    %v4769 = vunpack.c.h.b16 %v856
    %v4770 = vunpack.c.l.b16 %v857
    %v4771 = vunpack.c.h.b16 %v857
    %v4772 = vunpack.c.l.b16 %v858
    %v4773 = vunpack.c.h.b16 %v858
    %v4774 = vunpack.c.l.b16 %v859
    %v4775 = vunpack.c.h.b16 %v859
    %v4776 = vunpack.c.l.b16 %v860
    %v4777 = vunpack.c.h.b16 %v860
    %v4778 = vunpack.c.l.b16 %v861
    %v4779 = vunpack.c.h.b16 %v861
    %v4780 = vunpack.c.l.b16 %v862
    %v4781 = vunpack.c.h.b16 %v862
    %v4782 = vunpack.c.l.b16 %v863
    %v4783 = vunpack.c.h.b16 %v863
    %v4784 = vunpack.c.l.b16 %v864
    %v4785 = vunpack.c.h.b16 %v864
    %v4786 = vunpack.c.l.b16 %v865
    %v4787 = vunpack.c.h.b16 %v865
    %v4788 = vunpack.c.l.b16 %v866
    %v4789 = vunpack.c.h.b16 %v866
    %v4790 = vunpack.c.l.b16 %v867
    %v4791 = vunpack.c.h.b16 %v867
    %v4792 = vunpack.c.l.b16 %v868
    %v4793 = vunpack.c.h.b16 %v868
    %v4794 = vunpack.c.l.b16 %v869
    %v4795 = vunpack.c.h.b16 %v869
    %v4796 = vunpack.c.l.b16 %v870
    %v4797 = vunpack.c.h.b16 %v870
    %v4798 = vunpack.c.l.b16 %v871
    %v4799 = vunpack.c.h.b16 %v871
    %v4800 = vunpack.c.l.b16 %v872
    %v4801 = vunpack.c.h.b16 %v872
    %v4802 = vunpack.c.l.b16 %v873
    %v4803 = vunpack.c.h.b16 %v873
    %v4804 = vunpack.c.l.b16 %v874
    %v4805 = vunpack.c.h.b16 %v874
    %v4806 = vunpack.c.l.b16 %v875
    %v4807 = vunpack.c.h.b16 %v875
    %v4808 = vunpack.c.l.b16 %v876
    %v4809 = vunpack.c.h.b16 %v876
    %v4810 = vunpack.c.l.b16 %v877
    %v4811 = vunpack.c.h.b16 %v877
    %v4812 = vunpack.c.l.b16 %v878
    %v4813 = vunpack.c.h.b16 %v878
    %v4814 = vunpack.c.l.b16 %v879
    %v4815 = vunpack.c.h.b16 %v879
    %v4816 = vunpack.c.l.b16 %v880
    %v4817 = vunpack.c.h.b16 %v880
    %v4818 = vunpack.c.l.b16 %v881
    %v4819 = vunpack.c.h.b16 %v881
    %v4820 = vunpack.c.l.b16 %v882
    %v4821 = vunpack.c.h.b16 %v882
    %v4822 = vunpack.c.l.b16 %v883
    %v4823 = vunpack.c.h.b16 %v883
    %v4824 = vunpack.c.l.b16 %v884
    %v4825 = vunpack.c.h.b16 %v884
    %v4826 = vunpack.c.l.b16 %v885
    %v4827 = vunpack.c.h.b16 %v885
    %v4828 = vunpack.c.l.b16 %v886
    %v4829 = vunpack.c.h.b16 %v886
    %v4830 = vunpack.c.l.b16 %v887
    %v4831 = vunpack.c.h.b16 %v887
    %v4832 = vunpack.c.l.b16 %v888
    %v4833 = vunpack.c.h.b16 %v888
    %v4834 = vunpack.c.l.b16 %v889
    %v4835 = vunpack.c.h.b16 %v889
    %v4836 = vunpack.c.l.b16 %v890
    %v4837 = vunpack.c.h.b16 %v890
    %v4838 = vunpack.c.l.b16 %v891
    %v4839 = vunpack.c.h.b16 %v891
    %v4840 = vunpack.c.l.b16 %v892
    %v4841 = vunpack.c.h.b16 %v892
    %v4842 = vunpack.c.l.b16 %v893
    %v4843 = vunpack.c.h.b16 %v893
    %v4844 = vunpack.c.l.b16 %v894
    %v4845 = vunpack.c.h.b16 %v894
    %v4846 = vunpack.c.l.b16 %v895
    %v4847 = vunpack.c.h.b16 %v895
    %v4848 = vunpack.c.l.b16 %v896
    %v4849 = vunpack.c.h.b16 %v896
    %v4850 = vunpack.c.l.b16 %v897
    %v4851 = vunpack.c.h.b16 %v897
    %v4852 = vunpack.c.l.b16 %v898
    %v4853 = vunpack.c.h.b16 %v898
    %v4854 = vunpack.c.l.b16 %v899
    %v4855 = vunpack.c.h.b16 %v899
    %v4856 = vunpack.c.l.b16 %v900
    %v4857 = vunpack.c.h.b16 %v900
    %v4858 = vunpack.c.l.b16 %v901
    %v4859 = vunpack.c.h.b16 %v901
    %v4860 = vunpack.c.l.b16 %v902
    %v4861 = vunpack.c.h.b16 %v902
    %v4862 = vunpack.c.l.b16 %v903
    %v4863 = vunpack.c.h.b16 %v903
    %v4864 = vunpack.c.l.b16 %v904
    %v4865 = vunpack.c.h.b16 %v904
    %v4866 = vunpack.c.l.b16 %v905
    %v4867 = vunpack.c.h.b16 %v905
    %v4868 = vunpack.c.l.b16 %v906
    %v4869 = vunpack.c.h.b16 %v906
    %v4870 = vunpack.c.l.b16 %v907
    %v4871 = vunpack.c.h.b16 %v907
    %v4872 = vunpack.c.l.b16 %v908
    %v4873 = vunpack.c.h.b16 %v908
    %v4874 = vunpack.c.l.b16 %v909
    %v4875 = vunpack.c.h.b16 %v909
    %v4876 = vunpack.c.l.b16 %v910
    %v4877 = vunpack.c.h.b16 %v910
    %v4878 = vunpack.c.l.b16 %v911
    %v4879 = vunpack.c.h.b16 %v911
    %v4880 = vunpack.c.l.b16 %v912
    %v4881 = vunpack.c.h.b16 %v912
    %v4882 = vunpack.c.l.b16 %v913
    %v4883 = vunpack.c.h.b16 %v913
    %v4884 = vunpack.c.l.b16 %v914
    %v4885 = vunpack.c.h.b16 %v914
    %v4886 = vunpack.c.l.b16 %v915
    %v4887 = vunpack.c.h.b16 %v915
    %v4888 = vunpack.c.l.b16 %v916
    %v4889 = vunpack.c.h.b16 %v916
    %v4890 = vunpack.c.l.b16 %v917
    %v4891 = vunpack.c.h.b16 %v917
    %v4892 = vunpack.c.l.b16 %v918
    %v4893 = vunpack.c.h.b16 %v918
    %v4894 = vunpack.c.l.b16 %v919
    %v4895 = vunpack.c.h.b16 %v919
    %v4896 = vunpack.c.l.b16 %v920
    %v4897 = vunpack.c.h.b16 %v920
    %v4898 = vunpack.c.l.b16 %v921
    %v4899 = vunpack.c.h.b16 %v921
    %v4900 = vunpack.c.l.b16 %v922
    %v4901 = vunpack.c.h.b16 %v922
    %v4902 = vunpack.c.l.b16 %v923
    %v4903 = vunpack.c.h.b16 %v923
    %v4904 = vunpack.c.l.b16 %v924
    %v4905 = vunpack.c.h.b16 %v924
    %v4906 = vunpack.c.l.b16 %v925
    %v4907 = vunpack.c.h.b16 %v925
    %v4908 = vunpack.c.l.b16 %v926
    %v4909 = vunpack.c.h.b16 %v926
    %v4910 = vunpack.c.l.b16 %v927
    %v4911 = vunpack.c.h.b16 %v927
    %v4912 = vunpack.c.l.b16 %v928
    %v4913 = vunpack.c.h.b16 %v928
    %v4914 = vunpack.c.l.b16 %v929
    %v4915 = vunpack.c.h.b16 %v929
    %v4916 = vunpack.c.l.b16 %v930
    %v4917 = vunpack.c.h.b16 %v930
    %v4918 = vunpack.c.l.b16 %v931
    %v4919 = vunpack.c.h.b16 %v931
    %v4920 = vunpack.c.l.b16 %v932
    %v4921 = vunpack.c.h.b16 %v932
    %v4922 = vunpack.c.l.b16 %v933
    %v4923 = vunpack.c.h.b16 %v933
    %v4924 = vunpack.c.l.b16 %v934
    %v4925 = vunpack.c.h.b16 %v934
    %v4926 = vunpack.c.l.b16 %v935
    %v4927 = vunpack.c.h.b16 %v935
    %v4928 = vunpack.c.l.b16 %v936
    %v4929 = vunpack.c.h.b16 %v936
    %v4930 = vunpack.c.l.b16 %v937
    %v4931 = vunpack.c.h.b16 %v937
    %v4932 = vunpack.c.l.b16 %v938
    %v4933 = vunpack.c.h.b16 %v938
    %v4934 = vunpack.c.l.b16 %v939
    %v4935 = vunpack.c.h.b16 %v939
    %v4936 = vunpack.c.l.b16 %v940
    %v4937 = vunpack.c.h.b16 %v940
    %v4938 = vunpack.c.l.b16 %v941
    %v4939 = vunpack.c.h.b16 %v941
    %v4940 = vunpack.c.l.b16 %v942
    %v4941 = vunpack.c.h.b16 %v942
    %v4942 = vunpack.c.l.b16 %v943
    %v4943 = vunpack.c.h.b16 %v943
    %v4944 = vunpack.c.l.b16 %v944
    %v4945 = vunpack.c.h.b16 %v944
    %v4946 = vunpack.c.l.b16 %v945
    %v4947 = vunpack.c.h.b16 %v945
    %v4948 = vunpack.c.l.b16 %v946
    %v4949 = vunpack.c.h.b16 %v946
    %v4950 = vunpack.c.l.b16 %v947
    %v4951 = vunpack.c.h.b16 %v947
    %v4952 = vunpack.c.l.b16 %v948
    %v4953 = vunpack.c.h.b16 %v948
    %v4954 = vunpack.c.l.b16 %v949
    %v4955 = vunpack.c.h.b16 %v949
    %v4956 = vunpack.c.l.b16 %v950
    %v4957 = vunpack.c.h.b16 %v950
    %v4958 = vunpack.c.l.b16 %v951
    %v4959 = vunpack.c.h.b16 %v951
    %v4960 = vunpack.c.l.b16 %v952
    %v4961 = vunpack.c.h.b16 %v952
    %v4962 = vunpack.c.l.b16 %v953
    %v4963 = vunpack.c.h.b16 %v953
    %v4964 = vunpack.c.l.b16 %v954
    %v4965 = vunpack.c.h.b16 %v954
    %v4966 = vunpack.c.l.b16 %v955
    %v4967 = vunpack.c.h.b16 %v955
    %v4968 = vunpack.c.l.b16 %v956
    %v4969 = vunpack.c.h.b16 %v956
    %v4970 = vunpack.c.l.b16 %v957
    %v4971 = vunpack.c.h.b16 %v957
    %v4972 = vunpack.c.l.b16 %v958
    %v4973 = vunpack.c.h.b16 %v958
    %v4974 = vunpack.c.l.b16 %v959
    %v4975 = vunpack.c.h.b16 %v959
    %v4976 = vunpack.c.l.b16 %v960
    %v4977 = vunpack.c.h.b16 %v960
    %v4978 = vunpack.c.l.b16 %v961
    %v4979 = vunpack.c.h.b16 %v961
    %v4980 = vunpack.c.l.b16 %v962
    %v4981 = vunpack.c.h.b16 %v962
    %v4982 = vunpack.c.l.b16 %v963
    %v4983 = vunpack.c.h.b16 %v963
    %v4984 = vunpack.c.l.b16 %v964
    %v4985 = vunpack.c.h.b16 %v964
    %v4986 = vunpack.c.l.b16 %v965
    %v4987 = vunpack.c.h.b16 %v965
    %v4988 = vunpack.c.l.b16 %v966
    %v4989 = vunpack.c.h.b16 %v966
    %v4990 = vunpack.c.l.b16 %v967
    %v4991 = vunpack.c.h.b16 %v967
    %v4992 = vunpack.c.l.b16 %v968
    %v4993 = vunpack.c.h.b16 %v968
    %v4994 = vunpack.c.l.b16 %v969
    %v4995 = vunpack.c.h.b16 %v969
    %v4996 = vunpack.c.l.b16 %v970
    %v4997 = vunpack.c.h.b16 %v970
    %v4998 = vunpack.c.l.b16 %v971
    %v4999 = vunpack.c.h.b16 %v971
    %v5000 = vunpack.c.l.b16 %v972
    %v5001 = vunpack.c.h.b16 %v972
    %v5002 = vunpack.c.l.b16 %v973
    %v5003 = vunpack.c.h.b16 %v973
    %v5004 = vunpack.c.l.b16 %v974
    %v5005 = vunpack.c.h.b16 %v974
    %v5006 = vunpack.c.l.b16 %v975
    %v5007 = vunpack.c.h.b16 %v975
    %v5008 = vunpack.c.l.b16 %v976
    %v5009 = vunpack.c.h.b16 %v976
    %v5010 = vunpack.c.l.b16 %v977
    %v5011 = vunpack.c.h.b16 %v977
    %v5012 = vunpack.c.l.b16 %v978
    %v5013 = vunpack.c.h.b16 %v978
    %v5014 = vunpack.c.l.b16 %v979
    %v5015 = vunpack.c.h.b16 %v979
    %v5016 = vunpack.c.l.b16 %v980
    %v5017 = vunpack.c.h.b16 %v980
    %v5018 = vunpack.c.l.b16 %v981
    %v5019 = vunpack.c.h.b16 %v981
    %v5020 = vunpack.c.l.b16 %v982
    %v5021 = vunpack.c.h.b16 %v982
    %v5022 = vunpack.c.l.b16 %v983
    %v5023 = vunpack.c.h.b16 %v983
    %v5024 = vunpack.c.l.b16 %v984
    %v5025 = vunpack.c.h.b16 %v984
    %v5026 = vunpack.c.l.b16 %v985
    %v5027 = vunpack.c.h.b16 %v985
    %v5028 = vunpack.c.l.b16 %v986
    %v5029 = vunpack.c.h.b16 %v986
    %v5030 = vunpack.c.l.b16 %v987
    %v5031 = vunpack.c.h.b16 %v987
    %v5032 = vunpack.c.l.b16 %v988
    %v5033 = vunpack.c.h.b16 %v988
    %v5034 = vunpack.c.l.b16 %v989
    %v5035 = vunpack.c.h.b16 %v989
    %v5036 = vunpack.c.l.b16 %v990
    %v5037 = vunpack.c.h.b16 %v990
    %v5038 = vunpack.c.l.b16 %v991
    %v5039 = vunpack.c.h.b16 %v991
    %v5040 = vunpack.c.l.b16 %v992
    %v5041 = vunpack.c.h.b16 %v992
    %v5042 = vunpack.c.l.b16 %v993
    %v5043 = vunpack.c.h.b16 %v993
    %v5044 = vunpack.c.l.b16 %v994
    %v5045 = vunpack.c.h.b16 %v994
    %v5046 = vunpack.c.l.b16 %v995
    %v5047 = vunpack.c.h.b16 %v995
    %v5048 = vunpack.c.l.b16 %v996
    %v5049 = vunpack.c.h.b16 %v996
    %v5050 = vunpack.c.l.b16 %v997
    %v5051 = vunpack.c.h.b16 %v997
    %v5052 = vunpack.c.l.b16 %v998
    %v5053 = vunpack.c.h.b16 %v998
    %v5054 = vunpack.c.l.b16 %v999
    %v5055 = vunpack.c.h.b16 %v999
    %v5056 = vunpack.c.l.b16 %v1000
    %v5057 = vunpack.c.h.b16 %v1000
    %v5058 = vunpack.c.l.b16 %v1001
    %v5059 = vunpack.c.h.b16 %v1001
    %v5060 = vunpack.c.l.b16 %v1002
    %v5061 = vunpack.c.h.b16 %v1002
    %v5062 = vunpack.c.l.b16 %v1003
    %v5063 = vunpack.c.h.b16 %v1003
    %v5064 = vunpack.c.l.b16 %v1004
    %v5065 = vunpack.c.h.b16 %v1004
    %v5066 = vunpack.c.l.b16 %v1005
    %v5067 = vunpack.c.h.b16 %v1005
    %v5068 = vunpack.c.l.b16 %v1006
    %v5069 = vunpack.c.h.b16 %v1006
    %v5070 = vunpack.c.l.b16 %v1007
    %v5071 = vunpack.c.h.b16 %v1007
    %v5072 = vunpack.c.l.b16 %v1008
    %v5073 = vunpack.c.h.b16 %v1008
    %v5074 = vunpack.c.l.b16 %v1009
    %v5075 = vunpack.c.h.b16 %v1009
    %v5076 = vunpack.c.l.b16 %v1010
    %v5077 = vunpack.c.h.b16 %v1010
    %v5078 = vunpack.c.l.b16 %v1011
    %v5079 = vunpack.c.h.b16 %v1011
    %v5080 = vunpack.c.l.b16 %v1012
    %v5081 = vunpack.c.h.b16 %v1012
    %v5082 = vunpack.c.l.b16 %v1013
    %v5083 = vunpack.c.h.b16 %v1013
    %v5084 = vunpack.c.l.b16 %v1014
    %v5085 = vunpack.c.h.b16 %v1014
    %v5086 = vunpack.c.l.b16 %v1015
    %v5087 = vunpack.c.h.b16 %v1015
    %v5088 = vunpack.c.l.b16 %v1016
    %v5089 = vunpack.c.h.b16 %v1016
    %v5090 = vunpack.c.l.b16 %v1017
    %v5091 = vunpack.c.h.b16 %v1017
    %v5092 = vunpack.c.l.b16 %v1018
    %v5093 = vunpack.c.h.b16 %v1018
    %v5094 = vunpack.c.l.b16 %v1019
    %v5095 = vunpack.c.h.b16 %v1019
    %v5096 = vunpack.c.l.b16 %v1020
    %v5097 = vunpack.c.h.b16 %v1020
    %v5098 = vunpack.c.l.b16 %v1021
    %v5099 = vunpack.c.h.b16 %v1021
    %v5100 = vunpack.c.l.b16 %v1022
    %v5101 = vunpack.c.h.b16 %v1022
    %v5102 = vunpack.c.l.b16 %v1023
    %v5103 = vunpack.c.h.b16 %v1023
    %v5104 = vunpack.c.l.b16 %v1024
    %v5105 = vunpack.c.h.b16 %v1024
    %v5106 = vunpack.c.l.b16 %v1025
    %v5107 = vunpack.c.h.b16 %v1025
    %v5108 = vunpack.c.l.b16 %v1026
    %v5109 = vunpack.c.h.b16 %v1026
    %v5110 = vunpack.c.l.b16 %v1027
    %v5111 = vunpack.c.h.b16 %v1027
    %v5112 = vunpack.c.l.b16 %v1028
    %v5113 = vunpack.c.h.b16 %v1028
    %v5114 = vunpack.c.l.b16 %v1029
    %v5115 = vunpack.c.h.b16 %v1029
    %v5116 = vunpack.c.l.b16 %v1030
    %v5117 = vunpack.c.h.b16 %v1030
    %v5118 = vunpack.c.l.b16 %v1031
    %v5119 = vunpack.c.h.b16 %v1031
    %v5120 = vunpack.c.l.b16 %v1032
    %v5121 = vunpack.c.h.b16 %v1032
    %v5122 = vunpack.c.l.b16 %v1033
    %v5123 = vunpack.c.h.b16 %v1033
    %v5124 = vunpack.c.l.b16 %v1034
    %v5125 = vunpack.c.h.b16 %v1034
    %v5126 = vunpack.c.l.b16 %v1035
    %v5127 = vunpack.c.h.b16 %v1035
    %v5128 = vunpack.c.l.b16 %v1036
    %v5129 = vunpack.c.h.b16 %v1036
    %v5130 = vunpack.c.l.b16 %v1037
    %v5131 = vunpack.c.h.b16 %v1037
    %v5132 = vunpack.c.l.b16 %v1038
    %v5133 = vunpack.c.h.b16 %v1038
    %v5134 = vunpack.c.l.b16 %v1039
    %v5135 = vunpack.c.h.b16 %v1039
    %v5136 = vunpack.c.l.b16 %v1040
    %v5137 = vunpack.c.h.b16 %v1040
    %v5138 = vunpack.c.l.b16 %v1041
    %v5139 = vunpack.c.h.b16 %v1041
    %v5140 = vunpack.c.l.b16 %v1042
    %v5141 = vunpack.c.h.b16 %v1042
    %v5142 = vunpack.c.l.b16 %v1043
    %v5143 = vunpack.c.h.b16 %v1043
    %v5144 = vunpack.c.l.b16 %v1044
    %v5145 = vunpack.c.h.b16 %v1044
    %v5146 = vunpack.c.l.b16 %v1045
    %v5147 = vunpack.c.h.b16 %v1045
    %v5148 = vunpack.c.l.b16 %v1046
    %v5149 = vunpack.c.h.b16 %v1046
    %v5150 = vunpack.c.l.b16 %v1047
    %v5151 = vunpack.c.h.b16 %v1047
    %v5152 = vunpack.c.l.b16 %v1048
    %v5153 = vunpack.c.h.b16 %v1048
    %v5154 = vunpack.c.l.b16 %v1049
    %v5155 = vunpack.c.h.b16 %v1049
    %v5156 = vunpack.c.l.b16 %v1050
    %v5157 = vunpack.c.h.b16 %v1050
    %v5158 = vunpack.c.l.b16 %v1051
    %v5159 = vunpack.c.h.b16 %v1051
    %v5160 = vunpack.c.l.b16 %v1052
    %v5161 = vunpack.c.h.b16 %v1052
    %v5162 = vunpack.c.l.b16 %v1053
    %v5163 = vunpack.c.h.b16 %v1053
    %v5164 = vunpack.c.l.b16 %v1054
    %v5165 = vunpack.c.h.b16 %v1054
    %v5166 = vunpack.c.l.b16 %v1055
    %v5167 = vunpack.c.h.b16 %v1055
    %v5168 = vunpack.c.l.b16 %v1056
    %v5169 = vunpack.c.h.b16 %v1056
    %v5170 = vunpack.c.l.b16 %v1057
    %v5171 = vunpack.c.h.b16 %v1057
    %v5172 = vunpack.c.l.b16 %v1058
    %v5173 = vunpack.c.h.b16 %v1058
    %v5174 = vunpack.c.l.b16 %v1059
    %v5175 = vunpack.c.h.b16 %v1059
    %v5176 = vunpack.c.l.b16 %v1060
    %v5177 = vunpack.c.h.b16 %v1060
    %v5178 = vunpack.c.l.b16 %v1061
    %v5179 = vunpack.c.h.b16 %v1061
    %v5180 = vunpack.c.l.b16 %v1062
    %v5181 = vunpack.c.h.b16 %v1062
    %v5182 = vunpack.c.l.b16 %v1063
    %v5183 = vunpack.c.h.b16 %v1063
    %v5184 = vunpack.c.l.b16 %v1064
    %v5185 = vunpack.c.h.b16 %v1064
    %v5186 = vunpack.c.l.b16 %v1065
    %v5187 = vunpack.c.h.b16 %v1065
    %v5188 = vunpack.c.l.b16 %v1066
    %v5189 = vunpack.c.h.b16 %v1066
    %v5190 = vunpack.c.l.b16 %v1067
    %v5191 = vunpack.c.h.b16 %v1067
    %v5192 = vunpack.c.l.b16 %v1068
    %v5193 = vunpack.c.h.b16 %v1068
    %v5194 = vunpack.c.l.b16 %v1069
    %v5195 = vunpack.c.h.b16 %v1069
    %v5196 = vunpack.c.l.b16 %v1070
    %v5197 = vunpack.c.h.b16 %v1070
    %v5198 = vunpack.c.l.b16 %v1071
    %v5199 = vunpack.c.h.b16 %v1071
    %v5200 = vunpack.c.l.b16 %v1072
    %v5201 = vunpack.c.h.b16 %v1072
    %v5202 = vunpack.c.l.b16 %v1073
    %v5203 = vunpack.c.h.b16 %v1073
    %v5204 = vunpack.c.l.b16 %v1074
    %v5205 = vunpack.c.h.b16 %v1074
    %v5206 = vunpack.c.l.b16 %v1075
    %v5207 = vunpack.c.h.b16 %v1075
    %v5208 = vunpack.c.l.b16 %v1076
    %v5209 = vunpack.c.h.b16 %v1076
    %v5210 = vunpack.c.l.b16 %v1077
    %v5211 = vunpack.c.h.b16 %v1077
    %v5212 = vunpack.c.l.b16 %v1078
    %v5213 = vunpack.c.h.b16 %v1078
    %v5214 = vunpack.c.l.b16 %v1079
    %v5215 = vunpack.c.h.b16 %v1079
    %v5216 = vunpack.c.l.b16 %v1080
    %v5217 = vunpack.c.h.b16 %v1080
    %v5218 = vunpack.c.l.b16 %v1081
    %v5219 = vunpack.c.h.b16 %v1081
    %v5220 = vunpack.c.l.b16 %v1082
    %v5221 = vunpack.c.h.b16 %v1082
    %v5222 = vunpack.c.l.b16 %v1083
    %v5223 = vunpack.c.h.b16 %v1083
    %v5224 = vunpack.c.l.b16 %v1084
    %v5225 = vunpack.c.h.b16 %v1084
    %v5226 = vunpack.c.l.b16 %v1085
    %v5227 = vunpack.c.h.b16 %v1085
    %v5228 = vunpack.c.l.b16 %v1086
    %v5229 = vunpack.c.h.b16 %v1086
    %v5230 = vunpack.c.l.b16 %v1087
    %v5231 = vunpack.c.h.b16 %v1087
    %v5232 = vunpack.c.l.b16 %v1088
    %v5233 = vunpack.c.h.b16 %v1088
    %v5234 = vunpack.c.l.b16 %v1089
    %v5235 = vunpack.c.h.b16 %v1089
    %v5236 = vunpack.c.l.b16 %v1090
    %v5237 = vunpack.c.h.b16 %v1090
    %v5238 = vunpack.c.l.b16 %v1091
    %v5239 = vunpack.c.h.b16 %v1091
    %v5240 = vunpack.c.l.b16 %v1092
    %v5241 = vunpack.c.h.b16 %v1092
    %v5242 = vunpack.c.l.b16 %v1093
    %v5243 = vunpack.c.h.b16 %v1093
    %v5244 = vunpack.c.l.b16 %v1094
    %v5245 = vunpack.c.h.b16 %v1094
    %v5246 = vunpack.c.l.b16 %v1095
    %v5247 = vunpack.c.h.b16 %v1095
    %v5248 = vunpack.c.l.b16 %v1096
    %v5249 = vunpack.c.h.b16 %v1096
    %v5250 = vunpack.c.l.b16 %v1097
    %v5251 = vunpack.c.h.b16 %v1097
    %v5252 = vunpack.c.l.b16 %v1098
    %v5253 = vunpack.c.h.b16 %v1098
    %v5254 = vunpack.c.l.b16 %v1099
    %v5255 = vunpack.c.h.b16 %v1099
    %v5256 = vunpack.c.l.b16 %v1100
    %v5257 = vunpack.c.h.b16 %v1100
    %v5258 = vunpack.c.l.b16 %v1101
    %v5259 = vunpack.c.h.b16 %v1101
    %v5260 = vunpack.c.l.b16 %v1102
    %v5261 = vunpack.c.h.b16 %v1102
    %v5262 = vunpack.c.l.b16 %v1103
    %v5263 = vunpack.c.h.b16 %v1103
    %v5264 = vunpack.c.l.b16 %v1104
    %v5265 = vunpack.c.h.b16 %v1104
    %v5266 = vunpack.c.l.b16 %v1105
    %v5267 = vunpack.c.h.b16 %v1105
    %v5268 = vunpack.c.l.b16 %v1106
    %v5269 = vunpack.c.h.b16 %v1106
    %v5270 = vunpack.c.l.b16 %v1107
    %v5271 = vunpack.c.h.b16 %v1107
    %v5272 = vunpack.c.l.b16 %v1108
    %v5273 = vunpack.c.h.b16 %v1108
    %v5274 = vunpack.c.l.b16 %v1109
    %v5275 = vunpack.c.h.b16 %v1109
    %v5276 = vunpack.c.l.b16 %v1110
    %v5277 = vunpack.c.h.b16 %v1110
    %v5278 = vunpack.c.l.b16 %v1111
    %v5279 = vunpack.c.h.b16 %v1111
    %v5280 = vunpack.c.l.b16 %v1112
    %v5281 = vunpack.c.h.b16 %v1112
    %v5282 = vunpack.c.l.b16 %v1113
    %v5283 = vunpack.c.h.b16 %v1113
    %v5284 = vunpack.c.l.b16 %v1114
    %v5285 = vunpack.c.h.b16 %v1114
    %v5286 = vunpack.c.l.b16 %v1115
    %v5287 = vunpack.c.h.b16 %v1115
    %v5288 = vunpack.c.l.b16 %v1116
    %v5289 = vunpack.c.h.b16 %v1116
    %v5290 = vunpack.c.l.b16 %v1117
    %v5291 = vunpack.c.h.b16 %v1117
    %v5292 = vunpack.c.l.b16 %v1118
    %v5293 = vunpack.c.h.b16 %v1118
    %v5294 = vunpack.c.l.b16 %v1119
    %v5295 = vunpack.c.h.b16 %v1119
    %v5296 = vunpack.c.l.b16 %v1120
    %v5297 = vunpack.c.h.b16 %v1120
    %v5298 = vunpack.c.l.b16 %v1121
    %v5299 = vunpack.c.h.b16 %v1121
    %v5300 = vunpack.c.l.b16 %v1122
    %v5301 = vunpack.c.h.b16 %v1122
    %v5302 = vunpack.c.l.b16 %v1123
    %v5303 = vunpack.c.h.b16 %v1123
    %v5304 = vunpack.c.l.b16 %v1124
    %v5305 = vunpack.c.h.b16 %v1124
    %v5306 = vunpack.c.l.b16 %v1125
    %v5307 = vunpack.c.h.b16 %v1125
    %v5308 = vunpack.c.l.b16 %v1126
    %v5309 = vunpack.c.h.b16 %v1126
    %v5310 = vunpack.c.l.b16 %v1127
    %v5311 = vunpack.c.h.b16 %v1127
    %v5312 = vunpack.c.l.b16 %v1128
    %v5313 = vunpack.c.h.b16 %v1128
    %v5314 = vunpack.c.l.b16 %v1129
    %v5315 = vunpack.c.h.b16 %v1129
    %v5316 = vunpack.c.l.b16 %v1130
    %v5317 = vunpack.c.h.b16 %v1130
    %v5318 = vunpack.c.l.b16 %v1131
    %v5319 = vunpack.c.h.b16 %v1131
    %v5320 = vunpack.c.l.b16 %v1132
    %v5321 = vunpack.c.h.b16 %v1132
    %v5322 = vunpack.c.l.b16 %v1133
    %v5323 = vunpack.c.h.b16 %v1133
    %v5324 = vunpack.c.l.b16 %v1134
    %v5325 = vunpack.c.h.b16 %v1134
    %v5326 = vunpack.c.l.b16 %v1135
    %v5327 = vunpack.c.h.b16 %v1135
    %v5328 = vunpack.c.l.b16 %v1136
    %v5329 = vunpack.c.h.b16 %v1136
    %v5330 = vunpack.c.l.b16 %v1137
    %v5331 = vunpack.c.h.b16 %v1137
    %v5332 = vunpack.c.l.b16 %v1138
    %v5333 = vunpack.c.h.b16 %v1138
    %v5334 = vunpack.c.l.b16 %v1139
    %v5335 = vunpack.c.h.b16 %v1139
    %v5336 = vunpack.c.l.b16 %v1140
    %v5337 = vunpack.c.h.b16 %v1140
    %v5338 = vunpack.c.l.b16 %v1141
    %v5339 = vunpack.c.h.b16 %v1141
    %v5340 = vunpack.c.l.b16 %v1142
    %v5341 = vunpack.c.h.b16 %v1142
    %v5342 = vunpack.c.l.b16 %v1143
    %v5343 = vunpack.c.h.b16 %v1143
    %v5344 = vunpack.c.l.b16 %v1144
    %v5345 = vunpack.c.h.b16 %v1144
    %v5346 = vunpack.c.l.b16 %v1145
    %v5347 = vunpack.c.h.b16 %v1145
    %v5348 = vunpack.c.l.b16 %v1146
    %v5349 = vunpack.c.h.b16 %v1146
    %v5350 = vunpack.c.l.b16 %v1147
    %v5351 = vunpack.c.h.b16 %v1147
    %v5352 = vunpack.c.l.b16 %v1148
    %v5353 = vunpack.c.h.b16 %v1148
    %v5354 = vunpack.c.l.b16 %v1149
    %v5355 = vunpack.c.h.b16 %v1149
    %v5356 = vunpack.c.l.b16 %v1150
    %v5357 = vunpack.c.h.b16 %v1150
    %v5358 = vunpack.c.l.b16 %v1151
    %v5359 = vunpack.c.h.b16 %v1151
    %v5360 = vunpack.c.l.b16 %v1152
    %v5361 = vunpack.c.h.b16 %v1152
    %v5362 = vunpack.c.l.b16 %v1153
    %v5363 = vunpack.c.h.b16 %v1153
    %v5364 = vunpack.c.l.b16 %v1154
    %v5365 = vunpack.c.h.b16 %v1154
    %v5366 = vunpack.c.l.b16 %v1155
    %v5367 = vunpack.c.h.b16 %v1155
    %v5368 = vunpack.c.l.b16 %v1156
    %v5369 = vunpack.c.h.b16 %v1156
    %v5370 = vunpack.c.l.b16 %v1157
    %v5371 = vunpack.c.h.b16 %v1157
    %v5372 = vunpack.c.l.b16 %v1158
    %v5373 = vunpack.c.h.b16 %v1158
    %v5374 = vunpack.c.l.b16 %v1159
    %v5375 = vunpack.c.h.b16 %v1159
    %v5376 = vunpack.c.l.b16 %v1160
    %v5377 = vunpack.c.h.b16 %v1160
    %v5378 = vunpack.c.l.b16 %v1161
    %v5379 = vunpack.c.h.b16 %v1161
    %v5380 = vunpack.c.l.b16 %v1162
    %v5381 = vunpack.c.h.b16 %v1162
    %v5382 = vunpack.c.l.b16 %v1163
    %v5383 = vunpack.c.h.b16 %v1163
    %v5384 = vunpack.c.l.b16 %v1164
    %v5385 = vunpack.c.h.b16 %v1164
    %v5386 = vunpack.c.l.b16 %v1165
    %v5387 = vunpack.c.h.b16 %v1165
    %v5388 = vunpack.c.l.b16 %v1166
    %v5389 = vunpack.c.h.b16 %v1166
    %v5390 = vunpack.c.l.b16 %v1167
    %v5391 = vunpack.c.h.b16 %v1167
    %v5392 = vunpack.c.l.b16 %v1168
    %v5393 = vunpack.c.h.b16 %v1168
    %v5394 = vunpack.c.l.b16 %v1169
    %v5395 = vunpack.c.h.b16 %v1169
    %v5396 = vunpack.c.l.b16 %v1170
    %v5397 = vunpack.c.h.b16 %v1170
    %v5398 = vunpack.c.l.b16 %v1171
    %v5399 = vunpack.c.h.b16 %v1171
    %v5400 = vunpack.c.l.b16 %v1172
    %v5401 = vunpack.c.h.b16 %v1172
    %v5402 = vunpack.c.l.b16 %v1173
    %v5403 = vunpack.c.h.b16 %v1173
    %v5404 = vunpack.c.l.b16 %v1174
    %v5405 = vunpack.c.h.b16 %v1174
    %v5406 = vunpack.c.l.b16 %v1175
    %v5407 = vunpack.c.h.b16 %v1175
    %v5408 = vunpack.c.l.b16 %v1176
    %v5409 = vunpack.c.h.b16 %v1176
    %v5410 = vunpack.c.l.b16 %v1177
    %v5411 = vunpack.c.h.b16 %v1177
    %v5412 = vunpack.c.l.b16 %v1178
    %v5413 = vunpack.c.h.b16 %v1178
    %v5414 = vunpack.c.l.b16 %v1179
    %v5415 = vunpack.c.h.b16 %v1179
    %v5416 = vunpack.c.l.b16 %v1180
    %v5417 = vunpack.c.h.b16 %v1180
    %v5418 = vunpack.c.l.b16 %v1181
    %v5419 = vunpack.c.h.b16 %v1181
    %v5420 = vunpack.c.l.b16 %v1182
    %v5421 = vunpack.c.h.b16 %v1182
    %v5422 = vunpack.c.l.b16 %v1183
    %v5423 = vunpack.c.h.b16 %v1183
    %v5424 = vunpack.c.l.b16 %v1184
    %v5425 = vunpack.c.h.b16 %v1184
    %v5426 = vunpack.c.l.b16 %v1185
    %v5427 = vunpack.c.h.b16 %v1185
    %v5428 = vunpack.c.l.b16 %v1186
    %v5429 = vunpack.c.h.b16 %v1186
    %v5430 = vunpack.c.l.b16 %v1187
    %v5431 = vunpack.c.h.b16 %v1187
    %v5432 = vunpack.c.l.b16 %v1188
    %v5433 = vunpack.c.h.b16 %v1188
    %v5434 = vunpack.c.l.b16 %v1189
    %v5435 = vunpack.c.h.b16 %v1189
    %v5436 = vunpack.c.l.b16 %v1190
    %v5437 = vunpack.c.h.b16 %v1190
    %v5438 = vunpack.c.l.b16 %v1191
    %v5439 = vunpack.c.h.b16 %v1191
    %v5440 = vunpack.c.l.b16 %v1192
    %v5441 = vunpack.c.h.b16 %v1192
    %v5442 = vunpack.c.l.b16 %v1193
    %v5443 = vunpack.c.h.b16 %v1193
    %v5444 = vunpack.c.l.b16 %v1194
    %v5445 = vunpack.c.h.b16 %v1194
    %v5446 = vunpack.c.l.b16 %v1195
    %v5447 = vunpack.c.h.b16 %v1195
    %v5448 = vunpack.c.l.b16 %v1196
    %v5449 = vunpack.c.h.b16 %v1196
    %v5450 = vunpack.c.l.b16 %v1197
    %v5451 = vunpack.c.h.b16 %v1197
    %v5452 = vunpack.c.l.b16 %v1198
    %v5453 = vunpack.c.h.b16 %v1198
    %v5454 = vunpack.c.l.b16 %v1199
    %v5455 = vunpack.c.h.b16 %v1199
    %v5456 = vunpack.c.l.b16 %v1200
    %v5457 = vunpack.c.h.b16 %v1200
    %v5458 = vunpack.c.l.b16 %v1201
    %v5459 = vunpack.c.h.b16 %v1201
    %v5460 = vunpack.c.l.b16 %v1202
    %v5461 = vunpack.c.h.b16 %v1202
    %v5462 = vunpack.c.l.b16 %v1203
    %v5463 = vunpack.c.h.b16 %v1203
    %v5464 = vunpack.c.l.b16 %v1204
    %v5465 = vunpack.c.h.b16 %v1204
    %v5466 = vunpack.c.l.b16 %v1205
    %v5467 = vunpack.c.h.b16 %v1205
    %v5468 = vunpack.c.l.b16 %v1206
    %v5469 = vunpack.c.h.b16 %v1206
    %v5470 = vunpack.c.l.b16 %v1207
    %v5471 = vunpack.c.h.b16 %v1207
    %v5472 = vunpack.c.l.b16 %v1208
    %v5473 = vunpack.c.h.b16 %v1208
    %v5474 = vunpack.c.l.b16 %v1209
    %v5475 = vunpack.c.h.b16 %v1209
    %v5476 = vunpack.c.l.b16 %v1210
    %v5477 = vunpack.c.h.b16 %v1210
    %v5478 = vunpack.c.l.b16 %v1211
    %v5479 = vunpack.c.h.b16 %v1211
    %v5480 = vunpack.c.l.b16 %v1212
    %v5481 = vunpack.c.h.b16 %v1212
    %v5482 = vunpack.c.l.b16 %v1213
    %v5483 = vunpack.c.h.b16 %v1213
    %v5484 = vunpack.c.l.b16 %v1214
    %v5485 = vunpack.c.h.b16 %v1214
    %v5486 = vunpack.c.l.b16 %v1215
    %v5487 = vunpack.c.h.b16 %v1215
    %v5488 = vunpack.c.l.b16 %v1216
    %v5489 = vunpack.c.h.b16 %v1216
    %v5490 = vunpack.c.l.b16 %v1217
    %v5491 = vunpack.c.h.b16 %v1217
    %v5492 = vunpack.c.l.b16 %v1218
    %v5493 = vunpack.c.h.b16 %v1218
    %v5494 = vunpack.c.l.b16 %v1219
    %v5495 = vunpack.c.h.b16 %v1219
    %v5496 = vunpack.c.l.b16 %v1220
    %v5497 = vunpack.c.h.b16 %v1220
    %v5498 = vunpack.c.l.b16 %v1221
    %v5499 = vunpack.c.h.b16 %v1221
    %v5500 = vunpack.c.l.b16 %v1222
    %v5501 = vunpack.c.h.b16 %v1222
    %v5502 = vunpack.c.l.b16 %v1223
    %v5503 = vunpack.c.h.b16 %v1223
    %v5504 = vunpack.c.l.b16 %v1224
    %v5505 = vunpack.c.h.b16 %v1224
    %v5506 = vunpack.c.l.b16 %v1225
    %v5507 = vunpack.c.h.b16 %v1225
    %v5508 = vunpack.c.l.b16 %v1226
    %v5509 = vunpack.c.h.b16 %v1226
    %v5510 = vunpack.c.l.b16 %v1227
    %v5511 = vunpack.c.h.b16 %v1227
    %v5512 = vunpack.c.l.b16 %v1228
    %v5513 = vunpack.c.h.b16 %v1228
    %v5514 = vunpack.c.l.b16 %v1229
    %v5515 = vunpack.c.h.b16 %v1229
    %v5516 = vunpack.c.l.b16 %v1230
    %v5517 = vunpack.c.h.b16 %v1230
    %v5518 = vunpack.c.l.b16 %v1231
    %v5519 = vunpack.c.h.b16 %v1231
    %v5520 = vunpack.c.l.b16 %v1232
    %v5521 = vunpack.c.h.b16 %v1232
    %v5522 = vunpack.c.l.b16 %v1233
    %v5523 = vunpack.c.h.b16 %v1233
    %v5524 = vunpack.c.l.b16 %v1234
    %v5525 = vunpack.c.h.b16 %v1234
    %v5526 = vunpack.c.l.b16 %v1235
    %v5527 = vunpack.c.h.b16 %v1235
    %v5528 = vunpack.c.l.b16 %v1236
    %v5529 = vunpack.c.h.b16 %v1236
    %v5530 = vunpack.c.l.b16 %v1237
    %v5531 = vunpack.c.h.b16 %v1237
    %v5532 = vunpack.c.l.b16 %v1238
    %v5533 = vunpack.c.h.b16 %v1238
    %v5534 = vunpack.c.l.b16 %v1239
    %v5535 = vunpack.c.h.b16 %v1239
    %v5536 = vunpack.c.l.b16 %v1240
    %v5537 = vunpack.c.h.b16 %v1240
    %v5538 = vunpack.c.l.b16 %v1241
    %v5539 = vunpack.c.h.b16 %v1241
    %v5540 = vunpack.c.l.b16 %v1242
    %v5541 = vunpack.c.h.b16 %v1242
    %v5542 = vunpack.c.l.b16 %v1243
    %v5543 = vunpack.c.h.b16 %v1243
    %v5544 = vunpack.c.l.b16 %v1244
    %v5545 = vunpack.c.h.b16 %v1244
    %v5546 = vunpack.c.l.b16 %v1245
    %v5547 = vunpack.c.h.b16 %v1245
    %v5548 = vunpack.c.l.b16 %v1246
    %v5549 = vunpack.c.h.b16 %v1246
    %v5550 = vunpack.c.l.b16 %v1247
    %v5551 = vunpack.c.h.b16 %v1247
    %v5552 = vunpack.c.l.b16 %v1248
    %v5553 = vunpack.c.h.b16 %v1248
    %v5554 = vunpack.c.l.b16 %v1249
    %v5555 = vunpack.c.h.b16 %v1249
    %v5556 = vunpack.c.l.b16 %v1250
    %v5557 = vunpack.c.h.b16 %v1250
    %v5558 = vunpack.c.l.b16 %v1251
    %v5559 = vunpack.c.h.b16 %v1251
    %v5560 = vunpack.c.l.b16 %v1252
    %v5561 = vunpack.c.h.b16 %v1252
    %v5562 = vunpack.c.l.b16 %v1253
    %v5563 = vunpack.c.h.b16 %v1253
    %v5564 = vunpack.c.l.b16 %v1254
    %v5565 = vunpack.c.h.b16 %v1254
    %v5566 = vunpack.c.l.b16 %v1255
    %v5567 = vunpack.c.h.b16 %v1255
    %v5568 = vunpack.c.l.b16 %v1256
    %v5569 = vunpack.c.h.b16 %v1256
    %v5570 = vunpack.c.l.b16 %v1257
    %v5571 = vunpack.c.h.b16 %v1257
    %v5572 = vunpack.c.l.b16 %v1258
    %v5573 = vunpack.c.h.b16 %v1258
    %v5574 = vunpack.c.l.b16 %v1259
    %v5575 = vunpack.c.h.b16 %v1259
    %v5576 = vunpack.c.l.b16 %v1260
    %v5577 = vunpack.c.h.b16 %v1260
    %v5578 = vunpack.c.l.b16 %v1261
    %v5579 = vunpack.c.h.b16 %v1261
    %v5580 = vunpack.c.l.b16 %v1262
    %v5581 = vunpack.c.h.b16 %v1262
    %v5582 = vunpack.c.l.b16 %v1263
    %v5583 = vunpack.c.h.b16 %v1263
    %v5584 = vunpack.c.l.b16 %v1264
    %v5585 = vunpack.c.h.b16 %v1264
    %v5586 = vunpack.c.l.b16 %v1265
    %v5587 = vunpack.c.h.b16 %v1265
    %v5588 = vunpack.c.l.b16 %v1266
    %v5589 = vunpack.c.h.b16 %v1266
    %v5590 = vunpack.c.l.b16 %v1267
    %v5591 = vunpack.c.h.b16 %v1267
    %v5592 = vunpack.c.l.b16 %v1268
    %v5593 = vunpack.c.h.b16 %v1268
    %v5594 = vunpack.c.l.b16 %v1269
    %v5595 = vunpack.c.h.b16 %v1269
    %v5596 = vunpack.c.l.b16 %v1270
    %v5597 = vunpack.c.h.b16 %v1270
    %v5598 = vunpack.c.l.b16 %v1271
    %v5599 = vunpack.c.h.b16 %v1271
    %v5600 = vunpack.c.l.b16 %v1272
    %v5601 = vunpack.c.h.b16 %v1272
    %v5602 = vunpack.c.l.b16 %v1273
    %v5603 = vunpack.c.h.b16 %v1273
    %v5604 = vunpack.c.l.b16 %v1274
    %v5605 = vunpack.c.h.b16 %v1274
    %v5606 = vunpack.c.l.b16 %v1275
    %v5607 = vunpack.c.h.b16 %v1275
    %v5608 = vunpack.c.l.b16 %v1276
    %v5609 = vunpack.c.h.b16 %v1276
    %v5610 = vunpack.c.l.b16 %v1277
    %v5611 = vunpack.c.h.b16 %v1277
    %v5612 = vunpack.c.l.b16 %v1278
    %v5613 = vunpack.c.h.b16 %v1278
    %v5614 = vunpack.c.l.b16 %v1279
    %v5615 = vunpack.c.h.b16 %v1279
    %v5616 = vunpack.c.l.b16 %v1280
    %v5617 = vunpack.c.h.b16 %v1280
    %v5618 = vunpack.c.l.b16 %v1281
    %v5619 = vunpack.c.h.b16 %v1281
    %v5620 = vunpack.c.l.b16 %v1282
    %v5621 = vunpack.c.h.b16 %v1282
    %v5622 = vunpack.c.l.b16 %v1283
    %v5623 = vunpack.c.h.b16 %v1283
    %v5624 = vunpack.c.l.b16 %v1284
    %v5625 = vunpack.c.h.b16 %v1284
    %v5626 = vunpack.c.l.b16 %v1285
    %v5627 = vunpack.c.h.b16 %v1285
    %v5628 = vunpack.c.l.b16 %v1286
    %v5629 = vunpack.c.h.b16 %v1286
    %v5630 = vunpack.c.l.b16 %v1287
    %v5631 = vunpack.c.h.b16 %v1287
    %v5632 = vunpack.c.l.b16 %v1288
    %v5633 = vunpack.c.h.b16 %v1288
    %v5634 = vunpack.c.l.b16 %v1289
    %v5635 = vunpack.c.h.b16 %v1289
    %v5636 = vunpack.c.l.b16 %v1290
    %v5637 = vunpack.c.h.b16 %v1290
    %v5638 = vunpack.c.l.b16 %v1291
    %v5639 = vunpack.c.h.b16 %v1291
    %v5640 = vunpack.c.l.b16 %v1292
    %v5641 = vunpack.c.h.b16 %v1292
    %v5642 = vunpack.c.l.b16 %v1293
    %v5643 = vunpack.c.h.b16 %v1293
    %v5644 = vunpack.c.l.b16 %v1294
    %v5645 = vunpack.c.h.b16 %v1294
    %v5646 = vunpack.c.l.b16 %v1295
    %v5647 = vunpack.c.h.b16 %v1295
    %v5648 = vunpack.c.l.b16 %v1296
    %v5649 = vunpack.c.h.b16 %v1296
    %v5650 = vunpack.c.l.b16 %v1297
    %v5651 = vunpack.c.h.b16 %v1297
    %v5652 = vunpack.c.l.b16 %v1298
    %v5653 = vunpack.c.h.b16 %v1298
    %v5654 = vunpack.c.l.b16 %v1299
    %v5655 = vunpack.c.h.b16 %v1299
    %v5656 = vunpack.c.l.b16 %v1300
    %v5657 = vunpack.c.h.b16 %v1300
    %v5658 = vunpack.c.l.b16 %v1301
    %v5659 = vunpack.c.h.b16 %v1301
    %v5660 = vunpack.c.l.b16 %v1302
    %v5661 = vunpack.c.h.b16 %v1302
    %v5662 = vunpack.c.l.b16 %v1303
    %v5663 = vunpack.c.h.b16 %v1303
    %v5664 = vunpack.c.l.b16 %v1304
    %v5665 = vunpack.c.h.b16 %v1304
    %v5666 = vunpack.c.l.b16 %v1305
    %v5667 = vunpack.c.h.b16 %v1305
    %v5668 = vunpack.c.l.b16 %v1306
    %v5669 = vunpack.c.h.b16 %v1306
    %v5670 = vunpack.c.l.b16 %v1307
    %v5671 = vunpack.c.h.b16 %v1307
    %v5672 = vunpack.c.l.b16 %v1308
    %v5673 = vunpack.c.h.b16 %v1308
    %v5674 = vunpack.c.l.b16 %v1309
    %v5675 = vunpack.c.h.b16 %v1309
    %v5676 = vunpack.c.l.b16 %v1310
    %v5677 = vunpack.c.h.b16 %v1310
    %v5678 = vunpack.c.l.b16 %v1311
    %v5679 = vunpack.c.h.b16 %v1311
    %v5680 = vunpack.c.l.b16 %v1312
    %v5681 = vunpack.c.h.b16 %v1312
    %v5682 = vunpack.c.l.b16 %v1313
    %v5683 = vunpack.c.h.b16 %v1313
    %v5684 = vunpack.c.l.b16 %v1314
    %v5685 = vunpack.c.h.b16 %v1314
    %v5686 = vunpack.c.l.b16 %v1315
    %v5687 = vunpack.c.h.b16 %v1315
    %v5688 = vunpack.c.l.b16 %v1316
    %v5689 = vunpack.c.h.b16 %v1316
    %v5690 = vunpack.c.l.b16 %v1317
    %v5691 = vunpack.c.h.b16 %v1317
    %v5692 = vunpack.c.l.b16 %v1318
    %v5693 = vunpack.c.h.b16 %v1318
    %v5694 = vunpack.c.l.b16 %v1319
    %v5695 = vunpack.c.h.b16 %v1319
    %v5696 = vunpack.c.l.b16 %v1320
    %v5697 = vunpack.c.h.b16 %v1320
    %v5698 = vunpack.c.l.b16 %v1321
    %v5699 = vunpack.c.h.b16 %v1321
    %v5700 = vunpack.c.l.b16 %v1322
    %v5701 = vunpack.c.h.b16 %v1322
    %v5702 = vunpack.c.l.b16 %v1323
    %v5703 = vunpack.c.h.b16 %v1323
    %v5704 = vunpack.c.l.b16 %v1324
    %v5705 = vunpack.c.h.b16 %v1324
    %v5706 = vunpack.c.l.b16 %v1325
    %v5707 = vunpack.c.h.b16 %v1325
    %v5708 = vunpack.c.l.b16 %v1326
    %v5709 = vunpack.c.h.b16 %v1326
    %v5710 = vunpack.c.l.b16 %v1327
    %v5711 = vunpack.c.h.b16 %v1327
    %v5712 = vunpack.c.l.b16 %v1328
    %v5713 = vunpack.c.h.b16 %v1328
    %v5714 = vunpack.c.l.b16 %v1329
    %v5715 = vunpack.c.h.b16 %v1329
    %v5716 = vunpack.c.l.b16 %v1330
    %v5717 = vunpack.c.h.b16 %v1330
    %v5718 = vunpack.c.l.b16 %v1331
    %v5719 = vunpack.c.h.b16 %v1331
    %v5720 = vunpack.c.l.b16 %v1332
    %v5721 = vunpack.c.h.b16 %v1332
    %v5722 = vunpack.c.l.b16 %v1333
    %v5723 = vunpack.c.h.b16 %v1333
    %v5724 = vunpack.c.l.b16 %v1334
    %v5725 = vunpack.c.h.b16 %v1334
    %v5726 = vunpack.c.l.b16 %v1335
    %v5727 = vunpack.c.h.b16 %v1335
    %v5728 = vunpack.c.l.b16 %v1336
    %v5729 = vunpack.c.h.b16 %v1336
    %v5730 = vunpack.c.l.b16 %v1337
    %v5731 = vunpack.c.h.b16 %v1337
    %v5732 = vunpack.c.l.b16 %v1338
    %v5733 = vunpack.c.h.b16 %v1338
    %v5734 = vunpack.c.l.b16 %v1339
    %v5735 = vunpack.c.h.b16 %v1339
    %v5736 = vunpack.c.l.b16 %v1340
    %v5737 = vunpack.c.h.b16 %v1340
    %v5738 = vunpack.c.l.b16 %v1341
    %v5739 = vunpack.c.h.b16 %v1341
    %v5740 = vunpack.c.l.b16 %v1342
    %v5741 = vunpack.c.h.b16 %v1342
    %v5742 = vunpack.c.l.b16 %v1343
    %v5743 = vunpack.c.h.b16 %v1343
    %v5744 = vunpack.c.l.b16 %v1344
    %v5745 = vunpack.c.h.b16 %v1344
    %v5746 = vunpack.c.l.b16 %v1345
    %v5747 = vunpack.c.h.b16 %v1345
    %v5748 = vunpack.c.l.b16 %v1346
    %v5749 = vunpack.c.h.b16 %v1346
    %v5750 = vunpack.c.l.b16 %v1347
    %v5751 = vunpack.c.h.b16 %v1347
    %v5752 = vunpack.c.l.b16 %v1348
    %v5753 = vunpack.c.h.b16 %v1348
    %v5754 = vunpack.c.l.b16 %v1349
    %v5755 = vunpack.c.h.b16 %v1349
    %v5756 = vunpack.c.l.b16 %v1350
    %v5757 = vunpack.c.h.b16 %v1350
    %v5758 = vunpack.c.l.b16 %v1351
    %v5759 = vunpack.c.h.b16 %v1351
    %v5760 = vunpack.c.l.b16 %v1352
    %v5761 = vunpack.c.h.b16 %v1352
    %v5762 = vunpack.c.l.b16 %v1353
    %v5763 = vunpack.c.h.b16 %v1353
    %v5764 = vunpack.c.l.b16 %v1354
    %v5765 = vunpack.c.h.b16 %v1354
    %v5766 = vunpack.c.l.b16 %v1355
    %v5767 = vunpack.c.h.b16 %v1355
    %v5768 = vunpack.c.l.b16 %v1356
    %v5769 = vunpack.c.h.b16 %v1356
    %v5770 = vunpack.c.l.b16 %v1357
    %v5771 = vunpack.c.h.b16 %v1357
    %v5772 = vunpack.c.l.b16 %v1358
    %v5773 = vunpack.c.h.b16 %v1358
    %v5774 = vunpack.c.l.b16 %v1359
    %v5775 = vunpack.c.h.b16 %v1359
    %v5776 = vunpack.c.l.b16 %v1360
    %v5777 = vunpack.c.h.b16 %v1360
    %v5778 = vunpack.c.l.b16 %v1361
    %v5779 = vunpack.c.h.b16 %v1361
    %v5780 = vunpack.c.l.b16 %v1362
    %v5781 = vunpack.c.h.b16 %v1362
    %v5782 = vunpack.c.l.b16 %v1363
    %v5783 = vunpack.c.h.b16 %v1363
    %v5784 = vunpack.c.l.b16 %v1364
    %v5785 = vunpack.c.h.b16 %v1364
    %v5786 = vunpack.c.l.b16 %v1365
    %v5787 = vunpack.c.h.b16 %v1365
    %v5788 = vunpack.c.l.b16 %v1366
    %v5789 = vunpack.c.h.b16 %v1366
    %v5790 = vunpack.c.l.b16 %v1367
    %v5791 = vunpack.c.h.b16 %v1367
    %v5792 = vunpack.c.l.b16 %v1368
    %v5793 = vunpack.c.h.b16 %v1368
    %v5794 = vunpack.c.l.b16 %v1369
    %v5795 = vunpack.c.h.b16 %v1369
    %v5796 = vunpack.c.l.b16 %v1370
    %v5797 = vunpack.c.h.b16 %v1370
    %v5798 = vunpack.c.l.b16 %v1371
    %v5799 = vunpack.c.h.b16 %v1371
    %v5800 = vunpack.c.l.b16 %v1372
    %v5801 = vunpack.c.h.b16 %v1372
    %v5802 = vunpack.c.l.b16 %v1373
    %v5803 = vunpack.c.h.b16 %v1373
    %v5804 = vunpack.c.l.b16 %v1374
    %v5805 = vunpack.c.h.b16 %v1374
    %v5806 = vunpack.c.l.b16 %v1375
    %v5807 = vunpack.c.h.b16 %v1375
    %v5808 = vunpack.c.l.b16 %v1376
    %v5809 = vunpack.c.h.b16 %v1376
    %v5810 = vunpack.c.l.b16 %v1377
    %v5811 = vunpack.c.h.b16 %v1377
    %v5812 = vunpack.c.l.b16 %v1378
    %v5813 = vunpack.c.h.b16 %v1378
    %v5814 = vunpack.c.l.b16 %v1379
    %v5815 = vunpack.c.h.b16 %v1379
    %v5816 = vunpack.c.l.b16 %v1380
    %v5817 = vunpack.c.h.b16 %v1380
    %v5818 = vunpack.c.l.b16 %v1381
    %v5819 = vunpack.c.h.b16 %v1381
    %v5820 = vunpack.c.l.b16 %v1382
    %v5821 = vunpack.c.h.b16 %v1382
    %v5822 = vunpack.c.l.b16 %v1383
    %v5823 = vunpack.c.h.b16 %v1383
    %v5824 = vunpack.c.l.b16 %v1384
    %v5825 = vunpack.c.h.b16 %v1384
    %v5826 = vunpack.c.l.b16 %v1385
    %v5827 = vunpack.c.h.b16 %v1385
    %v5828 = vunpack.c.l.b16 %v1386
    %v5829 = vunpack.c.h.b16 %v1386
    %v5830 = vunpack.c.l.b16 %v1387
    %v5831 = vunpack.c.h.b16 %v1387
    %v5832 = vunpack.c.l.b16 %v1388
    %v5833 = vunpack.c.h.b16 %v1388
    %v5834 = vunpack.c.l.b16 %v1389
    %v5835 = vunpack.c.h.b16 %v1389
    %v5836 = vunpack.c.l.b16 %v1390
    %v5837 = vunpack.c.h.b16 %v1390
    %v5838 = vunpack.c.l.b16 %v1391
    %v5839 = vunpack.c.h.b16 %v1391
    %v5840 = vunpack.c.l.b16 %v1392
    %v5841 = vunpack.c.h.b16 %v1392
    %v5842 = vunpack.c.l.b16 %v1393
    %v5843 = vunpack.c.h.b16 %v1393
    %v5844 = vunpack.c.l.b16 %v1394
    %v5845 = vunpack.c.h.b16 %v1394
    %v5846 = vunpack.c.l.b16 %v1395
    %v5847 = vunpack.c.h.b16 %v1395
    %v5848 = vunpack.c.l.b16 %v1396
    %v5849 = vunpack.c.h.b16 %v1396
    %v5850 = vunpack.c.l.b16 %v1397
    %v5851 = vunpack.c.h.b16 %v1397
    %v5852 = vunpack.c.l.b16 %v1398
    %v5853 = vunpack.c.h.b16 %v1398
    %v5854 = vunpack.c.l.b16 %v1399
    %v5855 = vunpack.c.h.b16 %v1399
    %v5856 = vunpack.c.l.b16 %v1400
    %v5857 = vunpack.c.h.b16 %v1400
    %v5858 = vunpack.c.l.b16 %v1401
    %v5859 = vunpack.c.h.b16 %v1401
    %v5860 = vunpack.c.l.b16 %v1402
    %v5861 = vunpack.c.h.b16 %v1402
    %v5862 = vunpack.c.l.b16 %v1403
    %v5863 = vunpack.c.h.b16 %v1403
    %v5864 = vunpack.c.l.b16 %v1404
    %v5865 = vunpack.c.h.b16 %v1404
    %v5866 = vunpack.c.l.b16 %v1405
    %v5867 = vunpack.c.h.b16 %v1405
    %v5868 = vunpack.c.l.b16 %v1406
    %v5869 = vunpack.c.h.b16 %v1406
    %v5870 = vunpack.c.l.b16 %v1407
    %v5871 = vunpack.c.h.b16 %v1407
    %v5872 = vunpack.c.l.b16 %v1408
    %v5873 = vunpack.c.h.b16 %v1408
    %v5874 = vunpack.c.l.b16 %v1409
    %v5875 = vunpack.c.h.b16 %v1409
    %v5876 = vunpack.c.l.b16 %v1410
    %v5877 = vunpack.c.h.b16 %v1410
    %v5878 = vunpack.c.l.b16 %v1411
    %v5879 = vunpack.c.h.b16 %v1411
    %v5880 = vunpack.c.l.b16 %v1412
    %v5881 = vunpack.c.h.b16 %v1412
    %v5882 = vunpack.c.l.b16 %v1413
    %v5883 = vunpack.c.h.b16 %v1413
    %v5884 = vunpack.c.l.b16 %v1414
    %v5885 = vunpack.c.h.b16 %v1414
    %v5886 = vunpack.c.l.b16 %v1415
    %v5887 = vunpack.c.h.b16 %v1415
    %v5888 = vunpack.c.l.b16 %v1416
    %v5889 = vunpack.c.h.b16 %v1416
    %v5890 = vunpack.c.l.b16 %v1417
    %v5891 = vunpack.c.h.b16 %v1417
    %v5892 = vunpack.c.l.b16 %v1418
    %v5893 = vunpack.c.h.b16 %v1418
    %v5894 = vunpack.c.l.b16 %v1419
    %v5895 = vunpack.c.h.b16 %v1419
    %v5896 = vunpack.c.l.b16 %v1420
    %v5897 = vunpack.c.h.b16 %v1420
    %v5898 = vunpack.c.l.b16 %v1421
    %v5899 = vunpack.c.h.b16 %v1421
    %v5900 = vunpack.c.l.b16 %v1422
    %v5901 = vunpack.c.h.b16 %v1422
    %v5902 = vunpack.c.l.b16 %v1423
    %v5903 = vunpack.c.h.b16 %v1423
    %v5904 = vunpack.c.l.b16 %v1424
    %v5905 = vunpack.c.h.b16 %v1424
    %v5906 = vunpack.c.l.b16 %v1425
    %v5907 = vunpack.c.h.b16 %v1425
    %v5908 = vunpack.c.l.b16 %v1426
    %v5909 = vunpack.c.h.b16 %v1426
    %v5910 = vunpack.c.l.b16 %v1427
    %v5911 = vunpack.c.h.b16 %v1427
    %v5912 = vunpack.c.l.b16 %v1428
    %v5913 = vunpack.c.h.b16 %v1428
    %v5914 = vunpack.c.l.b16 %v1429
    %v5915 = vunpack.c.h.b16 %v1429
    %v5916 = vunpack.c.l.b16 %v1430
    %v5917 = vunpack.c.h.b16 %v1430
    %v5918 = vunpack.c.l.b16 %v1431
    %v5919 = vunpack.c.h.b16 %v1431
    %v5920 = vunpack.c.l.b16 %v1432
    %v5921 = vunpack.c.h.b16 %v1432
    %v5922 = vunpack.c.l.b16 %v1433
    %v5923 = vunpack.c.h.b16 %v1433
    %v5924 = vunpack.c.l.b16 %v1434
    %v5925 = vunpack.c.h.b16 %v1434
    %v5926 = vunpack.c.l.b16 %v1435
    %v5927 = vunpack.c.h.b16 %v1435
    %v5928 = vunpack.c.l.b16 %v1436
    %v5929 = vunpack.c.h.b16 %v1436
    %v5930 = vunpack.c.l.b16 %v1437
    %v5931 = vunpack.c.h.b16 %v1437
    %v5932 = vunpack.c.l.b16 %v1438
    %v5933 = vunpack.c.h.b16 %v1438
    %v5934 = vunpack.c.l.b16 %v1439
    %v5935 = vunpack.c.h.b16 %v1439
    %v5936 = vunpack.c.l.b16 %v1440
    %v5937 = vunpack.c.h.b16 %v1440
    %v5938 = vunpack.c.l.b16 %v1441
    %v5939 = vunpack.c.h.b16 %v1441
    %v5940 = vunpack.c.l.b16 %v1442
    %v5941 = vunpack.c.h.b16 %v1442
    %v5942 = vunpack.c.l.b16 %v1443
    %v5943 = vunpack.c.h.b16 %v1443
    %v5944 = vunpack.c.l.b16 %v1444
    %v5945 = vunpack.c.h.b16 %v1444
    %v5946 = vunpack.c.l.b16 %v1445
    %v5947 = vunpack.c.h.b16 %v1445
    %v5948 = vunpack.c.l.b16 %v1446
    %v5949 = vunpack.c.h.b16 %v1446
    %v5950 = vunpack.c.l.b16 %v1447
    %v5951 = vunpack.c.h.b16 %v1447
    %v5952 = vunpack.c.l.b16 %v1448
    %v5953 = vunpack.c.h.b16 %v1448
    %v5954 = vunpack.c.l.b16 %v1449
    %v5955 = vunpack.c.h.b16 %v1449
    %v5956 = vunpack.c.l.b16 %v1450
    %v5957 = vunpack.c.h.b16 %v1450
    %v5958 = vunpack.c.l.b16 %v1451
    %v5959 = vunpack.c.h.b16 %v1451
    %v5960 = vunpack.c.l.b16 %v1452
    %v5961 = vunpack.c.h.b16 %v1452
    %v5962 = vunpack.c.l.b16 %v1453
    %v5963 = vunpack.c.h.b16 %v1453
    %v5964 = vunpack.c.l.b16 %v1454
    %v5965 = vunpack.c.h.b16 %v1454
    %v5966 = vunpack.c.l.b16 %v1455
    %v5967 = vunpack.c.h.b16 %v1455
    %v5968 = vunpack.c.l.b16 %v1456
    %v5969 = vunpack.c.h.b16 %v1456
    %v5970 = vunpack.c.l.b16 %v1457
    %v5971 = vunpack.c.h.b16 %v1457
    %v5972 = vunpack.c.l.b16 %v1458
    %v5973 = vunpack.c.h.b16 %v1458
    %v5974 = vunpack.c.l.b16 %v1459
    %v5975 = vunpack.c.h.b16 %v1459
    %v5976 = vunpack.c.l.b16 %v1460
    %v5977 = vunpack.c.h.b16 %v1460
    %v5978 = vunpack.c.l.b16 %v1461
    %v5979 = vunpack.c.h.b16 %v1461
    %v5980 = vunpack.c.l.b16 %v1462
    %v5981 = vunpack.c.h.b16 %v1462
    %v5982 = vunpack.c.l.b16 %v1463
    %v5983 = vunpack.c.h.b16 %v1463
    %v5984 = vunpack.c.l.b16 %v1464
    %v5985 = vunpack.c.h.b16 %v1464
    %v5986 = vunpack.c.l.b16 %v1465
    %v5987 = vunpack.c.h.b16 %v1465
    %v5988 = vunpack.c.l.b16 %v1466
    %v5989 = vunpack.c.h.b16 %v1466
    %v5990 = vunpack.c.l.b16 %v1467
    %v5991 = vunpack.c.h.b16 %v1467
    %v5992 = vunpack.c.l.b16 %v1468
    %v5993 = vunpack.c.h.b16 %v1468
    %v5994 = vunpack.c.l.b16 %v1469
    %v5995 = vunpack.c.h.b16 %v1469
    %v5996 = vunpack.c.l.b16 %v1470
    %v5997 = vunpack.c.h.b16 %v1470
    %v5998 = vunpack.c.l.b16 %v1471
    %v5999 = vunpack.c.h.b16 %v1471
    %v6000 = vunpack.c.l.b16 %v1472
    %v6001 = vunpack.c.h.b16 %v1472
    %v6002 = vunpack.c.l.b16 %v1473
    %v6003 = vunpack.c.h.b16 %v1473
    %v6004 = vunpack.c.l.b16 %v1474
    %v6005 = vunpack.c.h.b16 %v1474
    %v6006 = vunpack.c.l.b16 %v1475
    %v6007 = vunpack.c.h.b16 %v1475
    %v6008 = vunpack.c.l.b16 %v1476
    %v6009 = vunpack.c.h.b16 %v1476
    %v6010 = vunpack.c.l.b16 %v1477
    %v6011 = vunpack.c.h.b16 %v1477
    %v6012 = vunpack.c.l.b16 %v1478
    %v6013 = vunpack.c.h.b16 %v1478
    %v6014 = vunpack.c.l.b16 %v1479
    %v6015 = vunpack.c.h.b16 %v1479
    %v6016 = vunpack.c.l.b16 %v1480
    %v6017 = vunpack.c.h.b16 %v1480
    %v6018 = vunpack.c.l.b16 %v1481
    %v6019 = vunpack.c.h.b16 %v1481
    %v6020 = vunpack.c.l.b16 %v1482
    %v6021 = vunpack.c.h.b16 %v1482
    %v6022 = vunpack.c.l.b16 %v1483
    %v6023 = vunpack.c.h.b16 %v1483
    %v6024 = vunpack.c.l.b16 %v1484
    %v6025 = vunpack.c.h.b16 %v1484
    %v6026 = vunpack.c.l.b16 %v1485
    %v6027 = vunpack.c.h.b16 %v1485
    %v6028 = vunpack.c.l.b16 %v1486
    %v6029 = vunpack.c.h.b16 %v1486
    %v6030 = vunpack.c.l.b16 %v1487
    %v6031 = vunpack.c.h.b16 %v1487
    %v6032 = vunpack.c.l.b16 %v1488
    %v6033 = vunpack.c.h.b16 %v1488
    %v6034 = vunpack.c.l.b16 %v1489
    %v6035 = vunpack.c.h.b16 %v1489
    %v6036 = vunpack.c.l.b16 %v1490
    %v6037 = vunpack.c.h.b16 %v1490
    %v6038 = vunpack.c.l.b16 %v1491
    %v6039 = vunpack.c.h.b16 %v1491
    %v6040 = vunpack.c.l.b16 %v1492
    %v6041 = vunpack.c.h.b16 %v1492
    %v6042 = vunpack.c.l.b16 %v1493
    %v6043 = vunpack.c.h.b16 %v1493
    %v6044 = vunpack.c.l.b16 %v1494
    %v6045 = vunpack.c.h.b16 %v1494
    %v6046 = vunpack.c.l.b16 %v1495
    %v6047 = vunpack.c.h.b16 %v1495
    %v6048 = vunpack.c.l.b16 %v1496
    %v6049 = vunpack.c.h.b16 %v1496
    %v6050 = vunpack.c.l.b16 %v1497
    %v6051 = vunpack.c.h.b16 %v1497
    %v6052 = vunpack.c.l.b16 %v1498
    %v6053 = vunpack.c.h.b16 %v1498
    %v6054 = vunpack.c.l.b16 %v1499
    %v6055 = vunpack.c.h.b16 %v1499
    %v6056 = vunpack.c.l.b16 %v1500
    %v6057 = vunpack.c.h.b16 %v1500
    %v6058 = vunpack.c.l.b16 %v1501
    %v6059 = vunpack.c.h.b16 %v1501
    %v6060 = vunpack.c.l.b16 %v1502
    %v6061 = vunpack.c.h.b16 %v1502
    %v6062 = vunpack.c.l.b16 %v1503
    %v6063 = vunpack.c.h.b16 %v1503
    %v6064 = vunpack.c.l.b16 %v1504
    %v6065 = vunpack.c.h.b16 %v1504
    %v6066 = vunpack.c.l.b16 %v1505
    %v6067 = vunpack.c.h.b16 %v1505
    %v6068 = vunpack.c.l.b16 %v1506
    %v6069 = vunpack.c.h.b16 %v1506
    %v6070 = vunpack.c.l.b16 %v1507
    %v6071 = vunpack.c.h.b16 %v1507
    %v6072 = vunpack.c.l.b16 %v1508
    %v6073 = vunpack.c.h.b16 %v1508
    %v6074 = vunpack.c.l.b16 %v1509
    %v6075 = vunpack.c.h.b16 %v1509
    %v6076 = vunpack.c.l.b16 %v1510
    %v6077 = vunpack.c.h.b16 %v1510
    %v6078 = vunpack.c.l.b16 %v1511
    %v6079 = vunpack.c.h.b16 %v1511
    %v6080 = vunpack.c.l.b16 %v1512
    %v6081 = vunpack.c.h.b16 %v1512
    %v6082 = vunpack.c.l.b16 %v1513
    %v6083 = vunpack.c.h.b16 %v1513
    %v6084 = vunpack.c.l.b16 %v1514
    %v6085 = vunpack.c.h.b16 %v1514
    %v6086 = vunpack.c.l.b16 %v1515
    %v6087 = vunpack.c.h.b16 %v1515
    %v6088 = vunpack.c.l.b16 %v1516
    %v6089 = vunpack.c.h.b16 %v1516
    %v6090 = vunpack.c.l.b16 %v1517
    %v6091 = vunpack.c.h.b16 %v1517
    %v6092 = vunpack.c.l.b16 %v1518
    %v6093 = vunpack.c.h.b16 %v1518
    %v6094 = vunpack.c.l.b16 %v1519
    %v6095 = vunpack.c.h.b16 %v1519
    %v6096 = vunpack.c.l.b16 %v1520
    %v6097 = vunpack.c.h.b16 %v1520
    %v6098 = vunpack.c.l.b16 %v1521
    %v6099 = vunpack.c.h.b16 %v1521
    %v6100 = vunpack.c.l.b16 %v1522
    %v6101 = vunpack.c.h.b16 %v1522
    %v6102 = vunpack.c.l.b16 %v1523
    %v6103 = vunpack.c.h.b16 %v1523
    %v6104 = vunpack.c.l.b16 %v1524
    %v6105 = vunpack.c.h.b16 %v1524
    %v6106 = vunpack.c.l.b16 %v1525
    %v6107 = vunpack.c.h.b16 %v1525
    %v6108 = vunpack.c.l.b16 %v1526
    %v6109 = vunpack.c.h.b16 %v1526
    %v6110 = vunpack.c.l.b16 %v1527
    %v6111 = vunpack.c.h.b16 %v1527
    %v6112 = vunpack.c.l.b16 %v1528
    %v6113 = vunpack.c.h.b16 %v1528
    %v6114 = vunpack.c.l.b16 %v1529
    %v6115 = vunpack.c.h.b16 %v1529
    %v6116 = vunpack.c.l.b16 %v1530
    %v6117 = vunpack.c.h.b16 %v1530
    %v6118 = vunpack.c.l.b16 %v1531
    %v6119 = vunpack.c.h.b16 %v1531
    %v6120 = vunpack.c.l.b16 %v1532
    %v6121 = vunpack.c.h.b16 %v1532
    %v6122 = vunpack.c.l.b16 %v1533
    %v6123 = vunpack.c.h.b16 %v1533
    %v6124 = vunpack.c.l.b16 %v1534
    %v6125 = vunpack.c.h.b16 %v1534
    %v6126 = vunpack.c.l.b16 %v1535
    %v6127 = vunpack.c.h.b16 %v1535
    %v6128 = vunpack.c.l.b16 %v1536
    %v6129 = vunpack.c.h.b16 %v1536
    %v6130 = vunpack.c.l.b16 %v1537
    %v6131 = vunpack.c.h.b16 %v1537
    %v6132 = vunpack.c.l.b16 %v1538
    %v6133 = vunpack.c.h.b16 %v1538
    %v6134 = vunpack.c.l.b16 %v1539
    %v6135 = vunpack.c.h.b16 %v1539
    %v6136 = vunpack.c.l.b16 %v1540
    %v6137 = vunpack.c.h.b16 %v1540
    %v6138 = vunpack.c.l.b16 %v1541
    %v6139 = vunpack.c.h.b16 %v1541
    %v6140 = vunpack.c.l.b16 %v1542
    %v6141 = vunpack.c.h.b16 %v1542
    %v6142 = vunpack.c.l.b16 %v1543
    %v6143 = vunpack.c.h.b16 %v1543
    %v6144 = vunpack.c.l.b16 %v1544
    %v6145 = vunpack.c.h.b16 %v1544
    %v6146 = vunpack.c.l.b16 %v1545
    %v6147 = vunpack.c.h.b16 %v1545
    %v6148 = vunpack.c.l.b16 %v1546
    %v6149 = vunpack.c.h.b16 %v1546
    %v6150 = vunpack.c.l.b16 %v1547
    %v6151 = vunpack.c.h.b16 %v1547
    %v6152 = vunpack.c.l.b16 %v1548
    %v6153 = vunpack.c.h.b16 %v1548
    %v6154 = vunpack.c.l.b16 %v1549
    %v6155 = vunpack.c.h.b16 %v1549
    %v6156 = vunpack.c.l.b16 %v1550
    %v6157 = vunpack.c.h.b16 %v1550
    %v6158 = vunpack.c.l.b16 %v1551
    %v6159 = vunpack.c.h.b16 %v1551
    %v6160 = vunpack.c.l.b16 %v1552
    %v6161 = vunpack.c.h.b16 %v1552
    %v6162 = vunpack.c.l.b16 %v1553
    %v6163 = vunpack.c.h.b16 %v1553
    %v6164 = vunpack.c.l.b16 %v1554
    %v6165 = vunpack.c.h.b16 %v1554
    %v6166 = vunpack.c.l.b16 %v1555
    %v6167 = vunpack.c.h.b16 %v1555
    %v6168 = vunpack.c.l.b16 %v1556
    %v6169 = vunpack.c.h.b16 %v1556
    %v6170 = vunpack.c.l.b16 %v1557
    %v6171 = vunpack.c.h.b16 %v1557
    %v6172 = vunpack.c.l.b16 %v1558
    %v6173 = vunpack.c.h.b16 %v1558
    %v6174 = vunpack.c.l.b16 %v1559
    %v6175 = vunpack.c.h.b16 %v1559
    %v6176 = vunpack.c.l.b16 %v1560
    %v6177 = vunpack.c.h.b16 %v1560
    %v6178 = vunpack.c.l.b16 %v1561
    %v6179 = vunpack.c.h.b16 %v1561
    %v6180 = vunpack.c.l.b16 %v1562
    %v6181 = vunpack.c.h.b16 %v1562
    %v6182 = vunpack.c.l.b16 %v1563
    %v6183 = vunpack.c.h.b16 %v1563
    %v6184 = vunpack.c.l.b16 %v1564
    %v6185 = vunpack.c.h.b16 %v1564
    %v6186 = vunpack.c.l.b16 %v1565
    %v6187 = vunpack.c.h.b16 %v1565
    %v6188 = vunpack.c.l.b16 %v1566
    %v6189 = vunpack.c.h.b16 %v1566
    %v6190 = vunpack.c.l.b16 %v1567
    %v6191 = vunpack.c.h.b16 %v1567
    %v6192 = vunpack.c.l.b16 %v1568
    %v6193 = vunpack.c.h.b16 %v1568
    %v6194 = vunpack.c.l.b16 %v1569
    %v6195 = vunpack.c.h.b16 %v1569
    %v6196 = vunpack.c.l.b16 %v1570
    %v6197 = vunpack.c.h.b16 %v1570
    %v6198 = vunpack.c.l.b16 %v1571
    %v6199 = vunpack.c.h.b16 %v1571
    %v6200 = vunpack.c.l.b16 %v1572
    %v6201 = vunpack.c.h.b16 %v1572
    %v6202 = vunpack.c.l.b16 %v1573
    %v6203 = vunpack.c.h.b16 %v1573
    %v6204 = vunpack.c.l.b16 %v1574
    %v6205 = vunpack.c.h.b16 %v1574
    %v6206 = vunpack.c.l.b16 %v1575
    %v6207 = vunpack.c.h.b16 %v1575
    %v6208 = vunpack.c.l.b16 %v1576
    %v6209 = vunpack.c.h.b16 %v1576
    %v6210 = vunpack.c.l.b16 %v1577
    %v6211 = vunpack.c.h.b16 %v1577
    %v6212 = vunpack.c.l.b16 %v1578
    %v6213 = vunpack.c.h.b16 %v1578
    %v6214 = vunpack.c.l.b16 %v1579
    %v6215 = vunpack.c.h.b16 %v1579
    %v6216 = vunpack.c.l.b16 %v1580
    %v6217 = vunpack.c.h.b16 %v1580
    %v6218 = vunpack.c.l.b16 %v1581
    %v6219 = vunpack.c.h.b16 %v1581
    %v6220 = vunpack.c.l.b16 %v1582
    %v6221 = vunpack.c.h.b16 %v1582
    %v6222 = vunpack.c.l.b16 %v1583
    %v6223 = vunpack.c.h.b16 %v1583
    %v6224 = vunpack.c.l.b16 %v1584
    %v6225 = vunpack.c.h.b16 %v1584
    %v6226 = vunpack.c.l.b16 %v1585
    %v6227 = vunpack.c.h.b16 %v1585
    %v6228 = vunpack.c.l.b16 %v1586
    %v6229 = vunpack.c.h.b16 %v1586
    %v6230 = vunpack.c.l.b16 %v1587
    %v6231 = vunpack.c.h.b16 %v1587
    %v6232 = vunpack.c.l.b16 %v1588
    %v6233 = vunpack.c.h.b16 %v1588
    %v6234 = vunpack.c.l.b16 %v1589
    %v6235 = vunpack.c.h.b16 %v1589
    %v6236 = vunpack.c.l.b16 %v1590
    %v6237 = vunpack.c.h.b16 %v1590
    %v6238 = vunpack.c.l.b16 %v1591
    %v6239 = vunpack.c.h.b16 %v1591
    %v6240 = vunpack.c.l.b16 %v1592
    %v6241 = vunpack.c.h.b16 %v1592
    %v6242 = vunpack.c.l.b16 %v1593
    %v6243 = vunpack.c.h.b16 %v1593
    %v6244 = vunpack.c.l.b16 %v1594
    %v6245 = vunpack.c.h.b16 %v1594
    %v6246 = vunpack.c.l.b16 %v1595
    %v6247 = vunpack.c.h.b16 %v1595
    %v6248 = vunpack.c.l.b16 %v1596
    %v6249 = vunpack.c.h.b16 %v1596
    %v6250 = vunpack.c.l.b16 %v1597
    %v6251 = vunpack.c.h.b16 %v1597
    %v6252 = vunpack.c.l.b16 %v1598
    %v6253 = vunpack.c.h.b16 %v1598
    %v6254 = vunpack.c.l.b16 %v1599
    %v6255 = vunpack.c.h.b16 %v1599
    %v6256 = vunpack.c.l.b16 %v1600
    %v6257 = vunpack.c.h.b16 %v1600
    %v6258 = vunpack.c.l.b16 %v1601
    %v6259 = vunpack.c.h.b16 %v1601
    %v6260 = vunpack.c.l.b16 %v1602
    %v6261 = vunpack.c.h.b16 %v1602
    %v6262 = vunpack.c.l.b16 %v1603
    %v6263 = vunpack.c.h.b16 %v1603
    %v6264 = vunpack.c.l.b16 %v1604
    %v6265 = vunpack.c.h.b16 %v1604
    %v6266 = vunpack.c.l.b16 %v1605
    %v6267 = vunpack.c.h.b16 %v1605
    %v6268 = vunpack.c.l.b16 %v1606
    %v6269 = vunpack.c.h.b16 %v1606
    %v6270 = vunpack.c.l.b16 %v1607
    %v6271 = vunpack.c.h.b16 %v1607
    %v6272 = vunpack.c.l.b16 %v1608
    %v6273 = vunpack.c.h.b16 %v1608
    %v6274 = vunpack.c.l.b16 %v1609
    %v6275 = vunpack.c.h.b16 %v1609
    %v6276 = vunpack.c.l.b16 %v1610
    %v6277 = vunpack.c.h.b16 %v1610
    %v6278 = vunpack.c.l.b16 %v1611
    %v6279 = vunpack.c.h.b16 %v1611
    %v6280 = vunpack.c.l.b16 %v1612
    %v6281 = vunpack.c.h.b16 %v1612
    %v6282 = vunpack.c.l.b16 %v1613
    %v6283 = vunpack.c.h.b16 %v1613
    %v6284 = vunpack.c.l.b16 %v1614
    %v6285 = vunpack.c.h.b16 %v1614
    %v6286 = vunpack.c.l.b16 %v1615
    %v6287 = vunpack.c.h.b16 %v1615
    %v6288 = vunpack.c.l.b16 %v1616
    %v6289 = vunpack.c.h.b16 %v1616
    %v6290 = vunpack.c.l.b16 %v1617
    %v6291 = vunpack.c.h.b16 %v1617
    %v6292 = vunpack.c.l.b16 %v1618
    %v6293 = vunpack.c.h.b16 %v1618
    %v6294 = vunpack.c.l.b16 %v1619
    %v6295 = vunpack.c.h.b16 %v1619
    %v6296 = vunpack.c.l.b16 %v1620
    %v6297 = vunpack.c.h.b16 %v1620
    %v6298 = vunpack.c.l.b16 %v1621
    %v6299 = vunpack.c.h.b16 %v1621
    %v6300 = vunpack.c.l.b16 %v1622
    %v6301 = vunpack.c.h.b16 %v1622
    %v6302 = vunpack.c.l.b16 %v1623
    %v6303 = vunpack.c.h.b16 %v1623
    %v6304 = vunpack.c.l.b16 %v1624
    %v6305 = vunpack.c.h.b16 %v1624
    %v6306 = vunpack.c.l.b16 %v1625
    %v6307 = vunpack.c.h.b16 %v1625
    %v6308 = vunpack.c.l.b16 %v1626
    %v6309 = vunpack.c.h.b16 %v1626
    %v6310 = vunpack.c.l.b16 %v1627
    %v6311 = vunpack.c.h.b16 %v1627
    %v6312 = vunpack.c.l.b16 %v1628
    %v6313 = vunpack.c.h.b16 %v1628
    %v6314 = vunpack.c.l.b16 %v1629
    %v6315 = vunpack.c.h.b16 %v1629
    %v6316 = vunpack.c.l.b16 %v1630
    %v6317 = vunpack.c.h.b16 %v1630
    %v6318 = vunpack.c.l.b16 %v1631
    %v6319 = vunpack.c.h.b16 %v1631
    %v6320 = vunpack.c.l.b16 %v1632
    %v6321 = vunpack.c.h.b16 %v1632
    %v6322 = vunpack.c.l.b16 %v1633
    %v6323 = vunpack.c.h.b16 %v1633
    %v6324 = vunpack.c.l.b16 %v1634
    %v6325 = vunpack.c.h.b16 %v1634
    %v6326 = vunpack.c.l.b16 %v1635
    %v6327 = vunpack.c.h.b16 %v1635
    %v6328 = vunpack.c.l.b16 %v1636
    %v6329 = vunpack.c.h.b16 %v1636
    %v6330 = vunpack.c.l.b16 %v1637
    %v6331 = vunpack.c.h.b16 %v1637
    %v6332 = vunpack.c.l.b16 %v1638
    %v6333 = vunpack.c.h.b16 %v1638
    %v6334 = vunpack.c.l.b16 %v1639
    %v6335 = vunpack.c.h.b16 %v1639
    %v6336 = vunpack.c.l.b16 %v1640
    %v6337 = vunpack.c.h.b16 %v1640
    %v6338 = vunpack.c.l.b16 %v1641
    %v6339 = vunpack.c.h.b16 %v1641
    %v6340 = vunpack.c.l.b16 %v1642
    %v6341 = vunpack.c.h.b16 %v1642
    %v6342 = vunpack.c.l.b16 %v1643
    %v6343 = vunpack.c.h.b16 %v1643
    %v6344 = vunpack.c.l.b16 %v1644
    %v6345 = vunpack.c.h.b16 %v1644
    %v6346 = vunpack.c.l.b16 %v1645
    %v6347 = vunpack.c.h.b16 %v1645
    %v6348 = vunpack.c.l.b16 %v1646
    %v6349 = vunpack.c.h.b16 %v1646
    %v6350 = vunpack.c.l.b16 %v1647
    %v6351 = vunpack.c.h.b16 %v1647
    %v6352 = vunpack.c.l.b16 %v1648
    %v6353 = vunpack.c.h.b16 %v1648
    %v6354 = vunpack.c.l.b16 %v1649
    %v6355 = vunpack.c.h.b16 %v1649
    %v6356 = vunpack.c.l.b16 %v1650
    %v6357 = vunpack.c.h.b16 %v1650
    %v6358 = vunpack.c.l.b16 %v1651
    %v6359 = vunpack.c.h.b16 %v1651
    %v6360 = vunpack.c.l.b16 %v1652
    %v6361 = vunpack.c.h.b16 %v1652
    %v6362 = vunpack.c.l.b16 %v1653
    %v6363 = vunpack.c.h.b16 %v1653
    %v6364 = vunpack.c.l.b16 %v1654
    %v6365 = vunpack.c.h.b16 %v1654
    %v6366 = vunpack.c.l.b16 %v1655
    %v6367 = vunpack.c.h.b16 %v1655
    %v6368 = vunpack.c.l.b16 %v1656
    %v6369 = vunpack.c.h.b16 %v1656
    %v6370 = vunpack.c.l.b16 %v1657
    %v6371 = vunpack.c.h.b16 %v1657
    %v6372 = vunpack.c.l.b16 %v1658
    %v6373 = vunpack.c.h.b16 %v1658
    %v6374 = vunpack.c.l.b16 %v1659
    %v6375 = vunpack.c.h.b16 %v1659
    %v6376 = vunpack.c.l.b16 %v1660
    %v6377 = vunpack.c.h.b16 %v1660
    %v6378 = vunpack.c.l.b16 %v1661
    %v6379 = vunpack.c.h.b16 %v1661
    %v6380 = vunpack.c.l.b16 %v1662
    %v6381 = vunpack.c.h.b16 %v1662
    %v6382 = vunpack.c.l.b16 %v1663
    %v6383 = vunpack.c.h.b16 %v1663
    %v6384 = vunpack.c.l.b16 %v1664
    %v6385 = vunpack.c.h.b16 %v1664
    %v6386 = vunpack.c.l.b16 %v1665
    %v6387 = vunpack.c.h.b16 %v1665
    %v6388 = vunpack.c.l.b16 %v1666
    %v6389 = vunpack.c.h.b16 %v1666
    %v6390 = vunpack.c.l.b16 %v1667
    %v6391 = vunpack.c.h.b16 %v1667
    %v6392 = vunpack.c.l.b16 %v1668
    %v6393 = vunpack.c.h.b16 %v1668
    %v6394 = vunpack.c.l.b16 %v1669
    %v6395 = vunpack.c.h.b16 %v1669
    %v6396 = vunpack.c.l.b16 %v1670
    %v6397 = vunpack.c.h.b16 %v1670
    %v6398 = vunpack.c.l.b16 %v1671
    %v6399 = vunpack.c.h.b16 %v1671
    %v6400 = vunpack.c.l.b16 %v1672
    %v6401 = vunpack.c.h.b16 %v1672
    %v6402 = vunpack.c.l.b16 %v1673
    %v6403 = vunpack.c.h.b16 %v1673
    %v6404 = vunpack.c.l.b16 %v1674
    %v6405 = vunpack.c.h.b16 %v1674
    %v6406 = vunpack.c.l.b16 %v1675
    %v6407 = vunpack.c.h.b16 %v1675
    %v6408 = vunpack.c.l.b16 %v1676
    %v6409 = vunpack.c.h.b16 %v1676
    %v6410 = vunpack.c.l.b16 %v1677
    %v6411 = vunpack.c.h.b16 %v1677
    %v6412 = vunpack.c.l.b16 %v1678
    %v6413 = vunpack.c.h.b16 %v1678
    %v6414 = vunpack.c.l.b16 %v1679
    %v6415 = vunpack.c.h.b16 %v1679
    %v6416 = vunpack.c.l.b16 %v1680
    %v6417 = vunpack.c.h.b16 %v1680
    %v6418 = vunpack.c.l.b16 %v1681
    %v6419 = vunpack.c.h.b16 %v1681
    %v6420 = vunpack.c.l.b16 %v1682
    %v6421 = vunpack.c.h.b16 %v1682
    %v6422 = vunpack.c.l.b16 %v1683
    %v6423 = vunpack.c.h.b16 %v1683
    %v6424 = vunpack.c.l.b16 %v1684
    %v6425 = vunpack.c.h.b16 %v1684
    %v6426 = vunpack.c.l.b16 %v1685
    %v6427 = vunpack.c.h.b16 %v1685
    %v6428 = vunpack.c.l.b16 %v1686
    %v6429 = vunpack.c.h.b16 %v1686
    %v6430 = vunpack.c.l.b16 %v1687
    %v6431 = vunpack.c.h.b16 %v1687
    %v6432 = vunpack.c.l.b16 %v1688
    %v6433 = vunpack.c.h.b16 %v1688
    %v6434 = vunpack.c.l.b16 %v1689
    %v6435 = vunpack.c.h.b16 %v1689
    %v6436 = vpack.c.b16 %v3308, %v3300
    %v6437 = vpack.c.b16 %v3309, %v3301
    %v6438 = vpack.c.b16 %v3310, %v3302
    %v6439 = vpack.c.b16 %v3311, %v3303
    %v6440 = vpack.c.b16 %v3312, %v3304
    %v6441 = vpack.c.b16 %v3313, %v3305
    %v6442 = vpack.c.b16 %v3314, %v3306
    %v6443 = vpack.c.b16 %v3315, %v3307
    %v6444 = vpack.c.b16 %v3324, %v3316
    %v6445 = vpack.c.b16 %v3325, %v3317
    %v6446 = vpack.c.b16 %v3326, %v3318
    %v6447 = vpack.c.b16 %v3327, %v3319
    %v6448 = vpack.c.b16 %v3328, %v3320
    %v6449 = vpack.c.b16 %v3329, %v3321
    %v6450 = vpack.c.b16 %v3330, %v3322
    %v6451 = vpack.c.b16 %v3331, %v3323
    %v6452 = vpack.c.b16 %v3340, %v3332
    %v6453 = vpack.c.b16 %v3341, %v3333
    %v6454 = vpack.c.b16 %v3342, %v3334
    %v6455 = vpack.c.b16 %v3343, %v3335
    %v6456 = vpack.c.b16 %v3344, %v3336
    %v6457 = vpack.c.b16 %v3345, %v3337
    %v6458 = vpack.c.b16 %v3346, %v3338
    %v6459 = vpack.c.b16 %v3347, %v3339
    %v6460 = vpack.c.b16 %v3356, %v3348
    %v6461 = vpack.c.b16 %v3357, %v3349
    %v6462 = vpack.c.b16 %v3358, %v3350
    %v6463 = vpack.c.b16 %v3359, %v3351
    %v6464 = vpack.c.b16 %v3360, %v3352
    %v6465 = vpack.c.b16 %v3361, %v3353
    %v6466 = vpack.c.b16 %v3362, %v3354
    %v6467 = vpack.c.b16 %v3363, %v3355
    %v6468 = vpack.c.b16 %v3372, %v3364
    %v6469 = vpack.c.b16 %v3373, %v3365
    %v6470 = vpack.c.b16 %v3374, %v3366
    %v6471 = vpack.c.b16 %v3375, %v3367
    %v6472 = vpack.c.b16 %v3376, %v3368
    %v6473 = vpack.c.b16 %v3377, %v3369
    %v6474 = vpack.c.b16 %v3378, %v3370
    %v6475 = vpack.c.b16 %v3379, %v3371
    %v6476 = vpack.c.b16 %v3388, %v3380
    %v6477 = vpack.c.b16 %v3389, %v3381
    %v6478 = vpack.c.b16 %v3390, %v3382
    %v6479 = vpack.c.b16 %v3391, %v3383
    %v6480 = vpack.c.b16 %v3392, %v3384
    %v6481 = vpack.c.b16 %v3393, %v3385
    %v6482 = vpack.c.b16 %v3394, %v3386
    %v6483 = vpack.c.b16 %v3395, %v3387
    %v6484 = vpack.c.b16 %v3404, %v3396
    %v6485 = vpack.c.b16 %v3405, %v3397
    %v6486 = vpack.c.b16 %v3406, %v3398
    %v6487 = vpack.c.b16 %v3407, %v3399
    %v6488 = vpack.c.b16 %v3408, %v3400
    %v6489 = vpack.c.b16 %v3409, %v3401
    %v6490 = vpack.c.b16 %v3410, %v3402
    %v6491 = vpack.c.b16 %v3411, %v3403
    %v6492 = vpack.c.b16 %v3420, %v3412
    %v6493 = vpack.c.b16 %v3421, %v3413
    %v6494 = vpack.c.b16 %v3422, %v3414
    %v6495 = vpack.c.b16 %v3423, %v3415
    %v6496 = vpack.c.b16 %v3424, %v3416
    %v6497 = vpack.c.b16 %v3425, %v3417
    %v6498 = vpack.c.b16 %v3426, %v3418
    %v6499 = vpack.c.b16 %v3427, %v3419
    %v6500 = vpack.c.b16 %v3436, %v3428
    %v6501 = vpack.c.b16 %v3437, %v3429
    %v6502 = vpack.c.b16 %v3438, %v3430
    %v6503 = vpack.c.b16 %v3439, %v3431
    %v6504 = vpack.c.b16 %v3440, %v3432
    %v6505 = vpack.c.b16 %v3441, %v3433
    %v6506 = vpack.c.b16 %v3442, %v3434
    %v6507 = vpack.c.b16 %v3443, %v3435
    %v6508 = vpack.c.b16 %v3452, %v3444
    %v6509 = vpack.c.b16 %v3453, %v3445
    %v6510 = vpack.c.b16 %v3454, %v3446
    %v6511 = vpack.c.b16 %v3455, %v3447
    %v6512 = vpack.c.b16 %v3456, %v3448
    %v6513 = vpack.c.b16 %v3457, %v3449
    %v6514 = vpack.c.b16 %v3458, %v3450
    %v6515 = vpack.c.b16 %v3459, %v3451
    %v6516 = vpack.c.b16 %v3468, %v3460
    %v6517 = vpack.c.b16 %v3469, %v3461
    %v6518 = vpack.c.b16 %v3470, %v3462
    %v6519 = vpack.c.b16 %v3471, %v3463
    %v6520 = vpack.c.b16 %v3472, %v3464
    %v6521 = vpack.c.b16 %v3473, %v3465
    %v6522 = vpack.c.b16 %v3474, %v3466
    %v6523 = vpack.c.b16 %v3475, %v3467
    %v6524 = vpack.c.b16 %v3484, %v3476
    %v6525 = vpack.c.b16 %v3485, %v3477
    %v6526 = vpack.c.b16 %v3486, %v3478
    %v6527 = vpack.c.b16 %v3487, %v3479
    %v6528 = vpack.c.b16 %v3488, %v3480
    %v6529 = vpack.c.b16 %v3489, %v3481
    %v6530 = vpack.c.b16 %v3490, %v3482
    %v6531 = vpack.c.b16 %v3491, %v3483
    %v6532 = vpack.c.b16 %v3500, %v3492
    %v6533 = vpack.c.b16 %v3501, %v3493
    %v6534 = vpack.c.b16 %v3502, %v3494
    %v6535 = vpack.c.b16 %v3503, %v3495
    %v6536 = vpack.c.b16 %v3504, %v3496
    %v6537 = vpack.c.b16 %v3505, %v3497
    %v6538 = vpack.c.b16 %v3506, %v3498
    %v6539 = vpack.c.b16 %v3507, %v3499
    %v6540 = vpack.c.b16 %v3516, %v3508
    %v6541 = vpack.c.b16 %v3517, %v3509
    %v6542 = vpack.c.b16 %v3518, %v3510
    %v6543 = vpack.c.b16 %v3519, %v3511
    %v6544 = vpack.c.b16 %v3520, %v3512
    %v6545 = vpack.c.b16 %v3521, %v3513
    %v6546 = vpack.c.b16 %v3522, %v3514
    %v6547 = vpack.c.b16 %v3523, %v3515
    %v6548 = vpack.c.b16 %v3532, %v3524
    %v6549 = vpack.c.b16 %v3533, %v3525
    %v6550 = vpack.c.b16 %v3534, %v3526
    %v6551 = vpack.c.b16 %v3535, %v3527
    %v6552 = vpack.c.b16 %v3536, %v3528
    %v6553 = vpack.c.b16 %v3537, %v3529
    %v6554 = vpack.c.b16 %v3538, %v3530
    %v6555 = vpack.c.b16 %v3539, %v3531
    %v6556 = vpack.c.b16 %v3548, %v3540
    %v6557 = vpack.c.b16 %v3549, %v3541
    %v6558 = vpack.c.b16 %v3550, %v3542
    %v6559 = vpack.c.b16 %v3551, %v3543
    %v6560 = vpack.c.b16 %v3552, %v3544
    %v6561 = vpack.c.b16 %v3553, %v3545
    %v6562 = vpack.c.b16 %v3554, %v3546
    %v6563 = vpack.c.b16 %v3555, %v3547
    %v6564 = vpack.c.b16 %v3564, %v3556
    %v6565 = vpack.c.b16 %v3565, %v3557
    %v6566 = vpack.c.b16 %v3566, %v3558
    %v6567 = vpack.c.b16 %v3567, %v3559
    %v6568 = vpack.c.b16 %v3568, %v3560
    %v6569 = vpack.c.b16 %v3569, %v3561
    %v6570 = vpack.c.b16 %v3570, %v3562
    %v6571 = vpack.c.b16 %v3571, %v3563
    %v6572 = vpack.c.b16 %v3580, %v3572
    %v6573 = vpack.c.b16 %v3581, %v3573
    %v6574 = vpack.c.b16 %v3582, %v3574
    %v6575 = vpack.c.b16 %v3583, %v3575
    %v6576 = vpack.c.b16 %v3584, %v3576
    %v6577 = vpack.c.b16 %v3585, %v3577
    %v6578 = vpack.c.b16 %v3586, %v3578
    %v6579 = vpack.c.b16 %v3587, %v3579
    %v6580 = vpack.c.b16 %v3596, %v3588
    %v6581 = vpack.c.b16 %v3597, %v3589
    %v6582 = vpack.c.b16 %v3598, %v3590
    %v6583 = vpack.c.b16 %v3599, %v3591
    %v6584 = vpack.c.b16 %v3600, %v3592
    %v6585 = vpack.c.b16 %v3601, %v3593
    %v6586 = vpack.c.b16 %v3602, %v3594
    %v6587 = vpack.c.b16 %v3603, %v3595
    %v6588 = vpack.c.b16 %v3612, %v3604
    %v6589 = vpack.c.b16 %v3613, %v3605
    %v6590 = vpack.c.b16 %v3614, %v3606
    %v6591 = vpack.c.b16 %v3615, %v3607
    %v6592 = vpack.c.b16 %v3616, %v3608
    %v6593 = vpack.c.b16 %v3617, %v3609
    %v6594 = vpack.c.b16 %v3618, %v3610
    %v6595 = vpack.c.b16 %v3619, %v3611
    %v6596 = vpack.c.b16 %v3628, %v3620
    %v6597 = vpack.c.b16 %v3629, %v3621
    %v6598 = vpack.c.b16 %v3630, %v3622
    %v6599 = vpack.c.b16 %v3631, %v3623
    %v6600 = vpack.c.b16 %v3632, %v3624
    %v6601 = vpack.c.b16 %v3633, %v3625
    %v6602 = vpack.c.b16 %v3634, %v3626
    %v6603 = vpack.c.b16 %v3635, %v3627
    %v6604 = vpack.c.b16 %v3644, %v3636
    %v6605 = vpack.c.b16 %v3645, %v3637
    %v6606 = vpack.c.b16 %v3646, %v3638
    %v6607 = vpack.c.b16 %v3647, %v3639
    %v6608 = vpack.c.b16 %v3648, %v3640
    %v6609 = vpack.c.b16 %v3649, %v3641
    %v6610 = vpack.c.b16 %v3650, %v3642
    %v6611 = vpack.c.b16 %v3651, %v3643
    %v6612 = vpack.c.b16 %v3660, %v3652
    %v6613 = vpack.c.b16 %v3661, %v3653
    %v6614 = vpack.c.b16 %v3662, %v3654
    %v6615 = vpack.c.b16 %v3663, %v3655
    %v6616 = vpack.c.b16 %v3664, %v3656
    %v6617 = vpack.c.b16 %v3665, %v3657
    %v6618 = vpack.c.b16 %v3666, %v3658
    %v6619 = vpack.c.b16 %v3667, %v3659
    %v6620 = vpack.c.b16 %v3676, %v3668
    %v6621 = vpack.c.b16 %v3677, %v3669
    %v6622 = vpack.c.b16 %v3678, %v3670
    %v6623 = vpack.c.b16 %v3679, %v3671
    %v6624 = vpack.c.b16 %v3680, %v3672
    %v6625 = vpack.c.b16 %v3681, %v3673
    %v6626 = vpack.c.b16 %v3682, %v3674
    %v6627 = vpack.c.b16 %v3683, %v3675
    %v6628 = vpack.c.b16 %v3692, %v3684
    %v6629 = vpack.c.b16 %v3693, %v3685
    %v6630 = vpack.c.b16 %v3694, %v3686
    %v6631 = vpack.c.b16 %v3695, %v3687
    %v6632 = vpack.c.b16 %v3696, %v3688
    %v6633 = vpack.c.b16 %v3697, %v3689
    %v6634 = vpack.c.b16 %v3698, %v3690
    %v6635 = vpack.c.b16 %v3699, %v3691
    %v6636 = vpack.c.b16 %v3708, %v3700
    %v6637 = vpack.c.b16 %v3709, %v3701
    %v6638 = vpack.c.b16 %v3710, %v3702
    %v6639 = vpack.c.b16 %v3711, %v3703
    %v6640 = vpack.c.b16 %v3712, %v3704
    %v6641 = vpack.c.b16 %v3713, %v3705
    %v6642 = vpack.c.b16 %v3714, %v3706
    %v6643 = vpack.c.b16 %v3715, %v3707
    %v6644 = vpack.c.b16 %v3724, %v3716
    %v6645 = vpack.c.b16 %v3725, %v3717
    %v6646 = vpack.c.b16 %v3726, %v3718
    %v6647 = vpack.c.b16 %v3727, %v3719
    %v6648 = vpack.c.b16 %v3728, %v3720
    %v6649 = vpack.c.b16 %v3729, %v3721
    %v6650 = vpack.c.b16 %v3730, %v3722
    %v6651 = vpack.c.b16 %v3731, %v3723
    %v6652 = vpack.c.b16 %v3740, %v3732
    %v6653 = vpack.c.b16 %v3741, %v3733
    %v6654 = vpack.c.b16 %v3742, %v3734
    %v6655 = vpack.c.b16 %v3743, %v3735
    %v6656 = vpack.c.b16 %v3744, %v3736
    %v6657 = vpack.c.b16 %v3745, %v3737
    %v6658 = vpack.c.b16 %v3746, %v3738
    %v6659 = vpack.c.b16 %v3747, %v3739
    %v6660 = vpack.c.b16 %v3756, %v3748
    %v6661 = vpack.c.b16 %v3757, %v3749
    %v6662 = vpack.c.b16 %v3758, %v3750
    %v6663 = vpack.c.b16 %v3759, %v3751
    %v6664 = vpack.c.b16 %v3760, %v3752
    %v6665 = vpack.c.b16 %v3761, %v3753
    %v6666 = vpack.c.b16 %v3762, %v3754
    %v6667 = vpack.c.b16 %v3763, %v3755
    %v6668 = vpack.c.b16 %v3772, %v3764
    %v6669 = vpack.c.b16 %v3773, %v3765
    %v6670 = vpack.c.b16 %v3774, %v3766
    %v6671 = vpack.c.b16 %v3775, %v3767
    %v6672 = vpack.c.b16 %v3776, %v3768
    %v6673 = vpack.c.b16 %v3777, %v3769
    %v6674 = vpack.c.b16 %v3778, %v3770
    %v6675 = vpack.c.b16 %v3779, %v3771
    %v6676 = vpack.c.b16 %v3788, %v3780
    %v6677 = vpack.c.b16 %v3789, %v3781
    %v6678 = vpack.c.b16 %v3790, %v3782
    %v6679 = vpack.c.b16 %v3791, %v3783
    %v6680 = vpack.c.b16 %v3792, %v3784
    %v6681 = vpack.c.b16 %v3793, %v3785
    %v6682 = vpack.c.b16 %v3794, %v3786
    %v6683 = vpack.c.b16 %v3795, %v3787
    %v6684 = vpack.c.b16 %v3804, %v3796
    %v6685 = vpack.c.b16 %v3805, %v3797
    %v6686 = vpack.c.b16 %v3806, %v3798
    %v6687 = vpack.c.b16 %v3807, %v3799
    %v6688 = vpack.c.b16 %v3808, %v3800
    %v6689 = vpack.c.b16 %v3809, %v3801
    %v6690 = vpack.c.b16 %v3810, %v3802
    %v6691 = vpack.c.b16 %v3811, %v3803
    %v6692 = vpack.c.b16 %v3820, %v3812
    %v6693 = vpack.c.b16 %v3821, %v3813
    %v6694 = vpack.c.b16 %v3822, %v3814
    %v6695 = vpack.c.b16 %v3823, %v3815
    %v6696 = vpack.c.b16 %v3824, %v3816
    %v6697 = vpack.c.b16 %v3825, %v3817
    %v6698 = vpack.c.b16 %v3826, %v3818
    %v6699 = vpack.c.b16 %v3827, %v3819
    %v6700 = vpack.c.b16 %v3836, %v3828
    %v6701 = vpack.c.b16 %v3837, %v3829
    %v6702 = vpack.c.b16 %v3838, %v3830
    %v6703 = vpack.c.b16 %v3839, %v3831
    %v6704 = vpack.c.b16 %v3840, %v3832
    %v6705 = vpack.c.b16 %v3841, %v3833
    %v6706 = vpack.c.b16 %v3842, %v3834
    %v6707 = vpack.c.b16 %v3843, %v3835
    %v6708 = vpack.c.b16 %v3852, %v3844
    %v6709 = vpack.c.b16 %v3853, %v3845
    %v6710 = vpack.c.b16 %v3854, %v3846
    %v6711 = vpack.c.b16 %v3855, %v3847
    %v6712 = vpack.c.b16 %v3856, %v3848
    %v6713 = vpack.c.b16 %v3857, %v3849
    %v6714 = vpack.c.b16 %v3858, %v3850
    %v6715 = vpack.c.b16 %v3859, %v3851
    %v6716 = vpack.c.b16 %v3868, %v3860
    %v6717 = vpack.c.b16 %v3869, %v3861
    %v6718 = vpack.c.b16 %v3870, %v3862
    %v6719 = vpack.c.b16 %v3871, %v3863
    %v6720 = vpack.c.b16 %v3872, %v3864
    %v6721 = vpack.c.b16 %v3873, %v3865
    %v6722 = vpack.c.b16 %v3874, %v3866
    %v6723 = vpack.c.b16 %v3875, %v3867
    %v6724 = vpack.c.b16 %v3884, %v3876
    %v6725 = vpack.c.b16 %v3885, %v3877
    %v6726 = vpack.c.b16 %v3886, %v3878
    %v6727 = vpack.c.b16 %v3887, %v3879
    %v6728 = vpack.c.b16 %v3888, %v3880
    %v6729 = vpack.c.b16 %v3889, %v3881
    %v6730 = vpack.c.b16 %v3890, %v3882
    %v6731 = vpack.c.b16 %v3891, %v3883
    %v6732 = vpack.c.b16 %v3900, %v3892
    %v6733 = vpack.c.b16 %v3901, %v3893
    %v6734 = vpack.c.b16 %v3902, %v3894
    %v6735 = vpack.c.b16 %v3903, %v3895
    %v6736 = vpack.c.b16 %v3904, %v3896
    %v6737 = vpack.c.b16 %v3905, %v3897
    %v6738 = vpack.c.b16 %v3906, %v3898
    %v6739 = vpack.c.b16 %v3907, %v3899
    %v6740 = vpack.c.b16 %v3916, %v3908
    %v6741 = vpack.c.b16 %v3917, %v3909
    %v6742 = vpack.c.b16 %v3918, %v3910
    %v6743 = vpack.c.b16 %v3919, %v3911
    %v6744 = vpack.c.b16 %v3920, %v3912
    %v6745 = vpack.c.b16 %v3921, %v3913
    %v6746 = vpack.c.b16 %v3922, %v3914
    %v6747 = vpack.c.b16 %v3923, %v3915
    %v6748 = vpack.c.b16 %v3932, %v3924
    %v6749 = vpack.c.b16 %v3933, %v3925
    %v6750 = vpack.c.b16 %v3934, %v3926
    %v6751 = vpack.c.b16 %v3935, %v3927
    %v6752 = vpack.c.b16 %v3936, %v3928
    %v6753 = vpack.c.b16 %v3937, %v3929
    %v6754 = vpack.c.b16 %v3938, %v3930
    %v6755 = vpack.c.b16 %v3939, %v3931
    %v6756 = vpack.c.b16 %v3948, %v3940
    %v6757 = vpack.c.b16 %v3949, %v3941
    %v6758 = vpack.c.b16 %v3950, %v3942
    %v6759 = vpack.c.b16 %v3951, %v3943
    %v6760 = vpack.c.b16 %v3952, %v3944
    %v6761 = vpack.c.b16 %v3953, %v3945
    %v6762 = vpack.c.b16 %v3954, %v3946
    %v6763 = vpack.c.b16 %v3955, %v3947
    %v6764 = vpack.c.b16 %v3964, %v3956
    %v6765 = vpack.c.b16 %v3965, %v3957
    %v6766 = vpack.c.b16 %v3966, %v3958
    %v6767 = vpack.c.b16 %v3967, %v3959
    %v6768 = vpack.c.b16 %v3968, %v3960
    %v6769 = vpack.c.b16 %v3969, %v3961
    %v6770 = vpack.c.b16 %v3970, %v3962
    %v6771 = vpack.c.b16 %v3971, %v3963
    %v6772 = vpack.c.b16 %v3980, %v3972
    %v6773 = vpack.c.b16 %v3981, %v3973
    %v6774 = vpack.c.b16 %v3982, %v3974
    %v6775 = vpack.c.b16 %v3983, %v3975
    %v6776 = vpack.c.b16 %v3984, %v3976
    %v6777 = vpack.c.b16 %v3985, %v3977
    %v6778 = vpack.c.b16 %v3986, %v3978
    %v6779 = vpack.c.b16 %v3987, %v3979
    %v6780 = vpack.c.b16 %v3996, %v3988
    %v6781 = vpack.c.b16 %v3997, %v3989
    %v6782 = vpack.c.b16 %v3998, %v3990
    %v6783 = vpack.c.b16 %v3999, %v3991
    %v6784 = vpack.c.b16 %v4000, %v3992
    %v6785 = vpack.c.b16 %v4001, %v3993
    %v6786 = vpack.c.b16 %v4002, %v3994
    %v6787 = vpack.c.b16 %v4003, %v3995
    %v6788 = vpack.c.b16 %v4012, %v4004
    %v6789 = vpack.c.b16 %v4013, %v4005
    %v6790 = vpack.c.b16 %v4014, %v4006
    %v6791 = vpack.c.b16 %v4015, %v4007
    %v6792 = vpack.c.b16 %v4016, %v4008
    %v6793 = vpack.c.b16 %v4017, %v4009
    %v6794 = vpack.c.b16 %v4018, %v4010
    %v6795 = vpack.c.b16 %v4019, %v4011
    %v6796 = vpack.c.b16 %v4028, %v4020
    %v6797 = vpack.c.b16 %v4029, %v4021
    %v6798 = vpack.c.b16 %v4030, %v4022
    %v6799 = vpack.c.b16 %v4031, %v4023
    %v6800 = vpack.c.b16 %v4032, %v4024
    %v6801 = vpack.c.b16 %v4033, %v4025
    %v6802 = vpack.c.b16 %v4034, %v4026
    %v6803 = vpack.c.b16 %v4035, %v4027
    %v6804 = vpack.c.b16 %v4044, %v4036
    %v6805 = vpack.c.b16 %v4045, %v4037
    %v6806 = vpack.c.b16 %v4046, %v4038
    %v6807 = vpack.c.b16 %v4047, %v4039
    %v6808 = vpack.c.b16 %v4048, %v4040
    %v6809 = vpack.c.b16 %v4049, %v4041
    %v6810 = vpack.c.b16 %v4050, %v4042
    %v6811 = vpack.c.b16 %v4051, %v4043
    %v6812 = vpack.c.b16 %v4060, %v4052
    %v6813 = vpack.c.b16 %v4061, %v4053
    %v6814 = vpack.c.b16 %v4062, %v4054
    %v6815 = vpack.c.b16 %v4063, %v4055
    %v6816 = vpack.c.b16 %v4064, %v4056
    %v6817 = vpack.c.b16 %v4065, %v4057
    %v6818 = vpack.c.b16 %v4066, %v4058
    %v6819 = vpack.c.b16 %v4067, %v4059
    %v6820 = vpack.c.b16 %v4076, %v4068
    %v6821 = vpack.c.b16 %v4077, %v4069
    %v6822 = vpack.c.b16 %v4078, %v4070
    %v6823 = vpack.c.b16 %v4079, %v4071
    %v6824 = vpack.c.b16 %v4080, %v4072
    %v6825 = vpack.c.b16 %v4081, %v4073
    %v6826 = vpack.c.b16 %v4082, %v4074
    %v6827 = vpack.c.b16 %v4083, %v4075
    %v6828 = vpack.c.b16 %v4092, %v4084
    %v6829 = vpack.c.b16 %v4093, %v4085
    %v6830 = vpack.c.b16 %v4094, %v4086
    %v6831 = vpack.c.b16 %v4095, %v4087
    %v6832 = vpack.c.b16 %v4096, %v4088
    %v6833 = vpack.c.b16 %v4097, %v4089
    %v6834 = vpack.c.b16 %v4098, %v4090
    %v6835 = vpack.c.b16 %v4099, %v4091
    %v6836 = vpack.c.b16 %v4108, %v4100
    %v6837 = vpack.c.b16 %v4109, %v4101
    %v6838 = vpack.c.b16 %v4110, %v4102
    %v6839 = vpack.c.b16 %v4111, %v4103
    %v6840 = vpack.c.b16 %v4112, %v4104
    %v6841 = vpack.c.b16 %v4113, %v4105
    %v6842 = vpack.c.b16 %v4114, %v4106
    %v6843 = vpack.c.b16 %v4115, %v4107
    %v6844 = vpack.c.b16 %v4124, %v4116
    %v6845 = vpack.c.b16 %v4125, %v4117
    %v6846 = vpack.c.b16 %v4126, %v4118
    %v6847 = vpack.c.b16 %v4127, %v4119
    %v6848 = vpack.c.b16 %v4128, %v4120
    %v6849 = vpack.c.b16 %v4129, %v4121
    %v6850 = vpack.c.b16 %v4130, %v4122
    %v6851 = vpack.c.b16 %v4131, %v4123
    %v6852 = vpack.c.b16 %v4140, %v4132
    %v6853 = vpack.c.b16 %v4141, %v4133
    %v6854 = vpack.c.b16 %v4142, %v4134
    %v6855 = vpack.c.b16 %v4143, %v4135
    %v6856 = vpack.c.b16 %v4144, %v4136
    %v6857 = vpack.c.b16 %v4145, %v4137
    %v6858 = vpack.c.b16 %v4146, %v4138
    %v6859 = vpack.c.b16 %v4147, %v4139
    %v6860 = vpack.c.b16 %v4156, %v4148
    %v6861 = vpack.c.b16 %v4157, %v4149
    %v6862 = vpack.c.b16 %v4158, %v4150
    %v6863 = vpack.c.b16 %v4159, %v4151
    %v6864 = vpack.c.b16 %v4160, %v4152
    %v6865 = vpack.c.b16 %v4161, %v4153
    %v6866 = vpack.c.b16 %v4162, %v4154
    %v6867 = vpack.c.b16 %v4163, %v4155
    %v6868 = vpack.c.b16 %v4172, %v4164
    %v6869 = vpack.c.b16 %v4173, %v4165
    %v6870 = vpack.c.b16 %v4174, %v4166
    %v6871 = vpack.c.b16 %v4175, %v4167
    %v6872 = vpack.c.b16 %v4176, %v4168
    %v6873 = vpack.c.b16 %v4177, %v4169
    %v6874 = vpack.c.b16 %v4178, %v4170
    %v6875 = vpack.c.b16 %v4179, %v4171
    %v6876 = vpack.c.b16 %v4188, %v4180
    %v6877 = vpack.c.b16 %v4189, %v4181
    %v6878 = vpack.c.b16 %v4190, %v4182
    %v6879 = vpack.c.b16 %v4191, %v4183
    %v6880 = vpack.c.b16 %v4192, %v4184
    %v6881 = vpack.c.b16 %v4193, %v4185
    %v6882 = vpack.c.b16 %v4194, %v4186
    %v6883 = vpack.c.b16 %v4195, %v4187
    %v6884 = vpack.c.b16 %v4204, %v4196
    %v6885 = vpack.c.b16 %v4205, %v4197
    %v6886 = vpack.c.b16 %v4206, %v4198
    %v6887 = vpack.c.b16 %v4207, %v4199
    %v6888 = vpack.c.b16 %v4208, %v4200
    %v6889 = vpack.c.b16 %v4209, %v4201
    %v6890 = vpack.c.b16 %v4210, %v4202
    %v6891 = vpack.c.b16 %v4211, %v4203
    %v6892 = vpack.c.b16 %v4220, %v4212
    %v6893 = vpack.c.b16 %v4221, %v4213
    %v6894 = vpack.c.b16 %v4222, %v4214
    %v6895 = vpack.c.b16 %v4223, %v4215
    %v6896 = vpack.c.b16 %v4224, %v4216
    %v6897 = vpack.c.b16 %v4225, %v4217
    %v6898 = vpack.c.b16 %v4226, %v4218
    %v6899 = vpack.c.b16 %v4227, %v4219
    %v6900 = vpack.c.b16 %v4236, %v4228
    %v6901 = vpack.c.b16 %v4237, %v4229
    %v6902 = vpack.c.b16 %v4238, %v4230
    %v6903 = vpack.c.b16 %v4239, %v4231
    %v6904 = vpack.c.b16 %v4240, %v4232
    %v6905 = vpack.c.b16 %v4241, %v4233
    %v6906 = vpack.c.b16 %v4242, %v4234
    %v6907 = vpack.c.b16 %v4243, %v4235
    %v6908 = vpack.c.b16 %v4252, %v4244
    %v6909 = vpack.c.b16 %v4253, %v4245
    %v6910 = vpack.c.b16 %v4254, %v4246
    %v6911 = vpack.c.b16 %v4255, %v4247
    %v6912 = vpack.c.b16 %v4256, %v4248
    %v6913 = vpack.c.b16 %v4257, %v4249
    %v6914 = vpack.c.b16 %v4258, %v4250
    %v6915 = vpack.c.b16 %v4259, %v4251
    %v6916 = vpack.c.b16 %v4268, %v4260
    %v6917 = vpack.c.b16 %v4269, %v4261
    %v6918 = vpack.c.b16 %v4270, %v4262
    %v6919 = vpack.c.b16 %v4271, %v4263
    %v6920 = vpack.c.b16 %v4272, %v4264
    %v6921 = vpack.c.b16 %v4273, %v4265
    %v6922 = vpack.c.b16 %v4274, %v4266
    %v6923 = vpack.c.b16 %v4275, %v4267
    %v6924 = vpack.c.b16 %v4284, %v4276
    %v6925 = vpack.c.b16 %v4285, %v4277
    %v6926 = vpack.c.b16 %v4286, %v4278
    %v6927 = vpack.c.b16 %v4287, %v4279
    %v6928 = vpack.c.b16 %v4288, %v4280
    %v6929 = vpack.c.b16 %v4289, %v4281
    %v6930 = vpack.c.b16 %v4290, %v4282
    %v6931 = vpack.c.b16 %v4291, %v4283
    %v6932 = vpack.c.b16 %v4300, %v4292
    %v6933 = vpack.c.b16 %v4301, %v4293
    %v6934 = vpack.c.b16 %v4302, %v4294
    %v6935 = vpack.c.b16 %v4303, %v4295
    %v6936 = vpack.c.b16 %v4304, %v4296
    %v6937 = vpack.c.b16 %v4305, %v4297
    %v6938 = vpack.c.b16 %v4306, %v4298
    %v6939 = vpack.c.b16 %v4307, %v4299
    %v6940 = vpack.c.b16 %v4316, %v4308
    %v6941 = vpack.c.b16 %v4317, %v4309
    %v6942 = vpack.c.b16 %v4318, %v4310
    %v6943 = vpack.c.b16 %v4319, %v4311
    %v6944 = vpack.c.b16 %v4320, %v4312
    %v6945 = vpack.c.b16 %v4321, %v4313
    %v6946 = vpack.c.b16 %v4322, %v4314
    %v6947 = vpack.c.b16 %v4323, %v4315
    %v6948 = vpack.c.b16 %v4332, %v4324
    %v6949 = vpack.c.b16 %v4333, %v4325
    %v6950 = vpack.c.b16 %v4334, %v4326
    %v6951 = vpack.c.b16 %v4335, %v4327
    %v6952 = vpack.c.b16 %v4336, %v4328
    %v6953 = vpack.c.b16 %v4337, %v4329
    %v6954 = vpack.c.b16 %v4338, %v4330
    %v6955 = vpack.c.b16 %v4339, %v4331
    %v6956 = vpack.c.b16 %v4348, %v4340
    %v6957 = vpack.c.b16 %v4349, %v4341
    %v6958 = vpack.c.b16 %v4350, %v4342
    %v6959 = vpack.c.b16 %v4351, %v4343
    %v6960 = vpack.c.b16 %v4352, %v4344
    %v6961 = vpack.c.b16 %v4353, %v4345
    %v6962 = vpack.c.b16 %v4354, %v4346
    %v6963 = vpack.c.b16 %v4355, %v4347
    %v6964 = vpack.c.b16 %v4364, %v4356
    %v6965 = vpack.c.b16 %v4365, %v4357
    %v6966 = vpack.c.b16 %v4366, %v4358
    %v6967 = vpack.c.b16 %v4367, %v4359
    %v6968 = vpack.c.b16 %v4368, %v4360
    %v6969 = vpack.c.b16 %v4369, %v4361
    %v6970 = vpack.c.b16 %v4370, %v4362
    %v6971 = vpack.c.b16 %v4371, %v4363
    %v6972 = vpack.c.b16 %v4380, %v4372
    %v6973 = vpack.c.b16 %v4381, %v4373
    %v6974 = vpack.c.b16 %v4382, %v4374
    %v6975 = vpack.c.b16 %v4383, %v4375
    %v6976 = vpack.c.b16 %v4384, %v4376
    %v6977 = vpack.c.b16 %v4385, %v4377
    %v6978 = vpack.c.b16 %v4386, %v4378
    %v6979 = vpack.c.b16 %v4387, %v4379
    %v6980 = vpack.c.b16 %v4396, %v4388
    %v6981 = vpack.c.b16 %v4397, %v4389
    %v6982 = vpack.c.b16 %v4398, %v4390
    %v6983 = vpack.c.b16 %v4399, %v4391
    %v6984 = vpack.c.b16 %v4400, %v4392
    %v6985 = vpack.c.b16 %v4401, %v4393
    %v6986 = vpack.c.b16 %v4402, %v4394
    %v6987 = vpack.c.b16 %v4403, %v4395
    %v6988 = vpack.c.b16 %v4412, %v4404
    %v6989 = vpack.c.b16 %v4413, %v4405
    %v6990 = vpack.c.b16 %v4414, %v4406
    %v6991 = vpack.c.b16 %v4415, %v4407
    %v6992 = vpack.c.b16 %v4416, %v4408
    %v6993 = vpack.c.b16 %v4417, %v4409
    %v6994 = vpack.c.b16 %v4418, %v4410
    %v6995 = vpack.c.b16 %v4419, %v4411
    %v6996 = vpack.c.b16 %v4428, %v4420
    %v6997 = vpack.c.b16 %v4429, %v4421
    %v6998 = vpack.c.b16 %v4430, %v4422
    %v6999 = vpack.c.b16 %v4431, %v4423
    %v7000 = vpack.c.b16 %v4432, %v4424
    %v7001 = vpack.c.b16 %v4433, %v4425
    %v7002 = vpack.c.b16 %v4434, %v4426
    %v7003 = vpack.c.b16 %v4435, %v4427
    %v7004 = vpack.c.b16 %v4444, %v4436
    %v7005 = vpack.c.b16 %v4445, %v4437
    %v7006 = vpack.c.b16 %v4446, %v4438
    %v7007 = vpack.c.b16 %v4447, %v4439
    %v7008 = vpack.c.b16 %v4448, %v4440
    %v7009 = vpack.c.b16 %v4449, %v4441
    %v7010 = vpack.c.b16 %v4450, %v4442
    %v7011 = vpack.c.b16 %v4451, %v4443
    %v7012 = vpack.c.b16 %v4460, %v4452
    %v7013 = vpack.c.b16 %v4461, %v4453
    %v7014 = vpack.c.b16 %v4462, %v4454
    %v7015 = vpack.c.b16 %v4463, %v4455
    %v7016 = vpack.c.b16 %v4464, %v4456
    %v7017 = vpack.c.b16 %v4465, %v4457
    %v7018 = vpack.c.b16 %v4466, %v4458
    %v7019 = vpack.c.b16 %v4467, %v4459
    %v7020 = vpack.c.b16 %v4476, %v4468
    %v7021 = vpack.c.b16 %v4477, %v4469
    %v7022 = vpack.c.b16 %v4478, %v4470
    %v7023 = vpack.c.b16 %v4479, %v4471
    %v7024 = vpack.c.b16 %v4480, %v4472
    %v7025 = vpack.c.b16 %v4481, %v4473
    %v7026 = vpack.c.b16 %v4482, %v4474
    %v7027 = vpack.c.b16 %v4483, %v4475
    %v7028 = vpack.c.b16 %v4492, %v4484
    %v7029 = vpack.c.b16 %v4493, %v4485
    %v7030 = vpack.c.b16 %v4494, %v4486
    %v7031 = vpack.c.b16 %v4495, %v4487
    %v7032 = vpack.c.b16 %v4496, %v4488
    %v7033 = vpack.c.b16 %v4497, %v4489
    %v7034 = vpack.c.b16 %v4498, %v4490
    %v7035 = vpack.c.b16 %v4499, %v4491
    %v7036 = vpack.c.b16 %v4508, %v4500
    %v7037 = vpack.c.b16 %v4509, %v4501
    %v7038 = vpack.c.b16 %v4510, %v4502
    %v7039 = vpack.c.b16 %v4511, %v4503
    %v7040 = vpack.c.b16 %v4512, %v4504
    %v7041 = vpack.c.b16 %v4513, %v4505
    %v7042 = vpack.c.b16 %v4514, %v4506
    %v7043 = vpack.c.b16 %v4515, %v4507
    %v7044 = vpack.c.b16 %v4524, %v4516
    %v7045 = vpack.c.b16 %v4525, %v4517
    %v7046 = vpack.c.b16 %v4526, %v4518
    %v7047 = vpack.c.b16 %v4527, %v4519
    %v7048 = vpack.c.b16 %v4528, %v4520
    %v7049 = vpack.c.b16 %v4529, %v4521
    %v7050 = vpack.c.b16 %v4530, %v4522
    %v7051 = vpack.c.b16 %v4531, %v4523
    %v7052 = vpack.c.b16 %v4540, %v4532
    %v7053 = vpack.c.b16 %v4541, %v4533
    %v7054 = vpack.c.b16 %v4542, %v4534
    %v7055 = vpack.c.b16 %v4543, %v4535
    %v7056 = vpack.c.b16 %v4544, %v4536
    %v7057 = vpack.c.b16 %v4545, %v4537
    %v7058 = vpack.c.b16 %v4546, %v4538
    %v7059 = vpack.c.b16 %v4547, %v4539
    %v7060 = vpack.c.b16 %v4556, %v4548
    %v7061 = vpack.c.b16 %v4557, %v4549
    %v7062 = vpack.c.b16 %v4558, %v4550
    %v7063 = vpack.c.b16 %v4559, %v4551
    %v7064 = vpack.c.b16 %v4560, %v4552
    %v7065 = vpack.c.b16 %v4561, %v4553
    %v7066 = vpack.c.b16 %v4562, %v4554
    %v7067 = vpack.c.b16 %v4563, %v4555
    %v7068 = vpack.c.b16 %v4572, %v4564
    %v7069 = vpack.c.b16 %v4573, %v4565
    %v7070 = vpack.c.b16 %v4574, %v4566
    %v7071 = vpack.c.b16 %v4575, %v4567
    %v7072 = vpack.c.b16 %v4576, %v4568
    %v7073 = vpack.c.b16 %v4577, %v4569
    %v7074 = vpack.c.b16 %v4578, %v4570
    %v7075 = vpack.c.b16 %v4579, %v4571
    %v7076 = vpack.c.b16 %v4588, %v4580
    %v7077 = vpack.c.b16 %v4589, %v4581
    %v7078 = vpack.c.b16 %v4590, %v4582
    %v7079 = vpack.c.b16 %v4591, %v4583
    %v7080 = vpack.c.b16 %v4592, %v4584
    %v7081 = vpack.c.b16 %v4593, %v4585
    %v7082 = vpack.c.b16 %v4594, %v4586
    %v7083 = vpack.c.b16 %v4595, %v4587
    %v7084 = vpack.c.b16 %v4604, %v4596
    %v7085 = vpack.c.b16 %v4605, %v4597
    %v7086 = vpack.c.b16 %v4606, %v4598
    %v7087 = vpack.c.b16 %v4607, %v4599
    %v7088 = vpack.c.b16 %v4608, %v4600
    %v7089 = vpack.c.b16 %v4609, %v4601
    %v7090 = vpack.c.b16 %v4610, %v4602
    %v7091 = vpack.c.b16 %v4611, %v4603
    %v7092 = vpack.c.b16 %v4620, %v4612
    %v7093 = vpack.c.b16 %v4621, %v4613
    %v7094 = vpack.c.b16 %v4622, %v4614
    %v7095 = vpack.c.b16 %v4623, %v4615
    %v7096 = vpack.c.b16 %v4624, %v4616
    %v7097 = vpack.c.b16 %v4625, %v4617
    %v7098 = vpack.c.b16 %v4626, %v4618
    %v7099 = vpack.c.b16 %v4627, %v4619
    %v7100 = vpack.c.b16 %v4636, %v4628
    %v7101 = vpack.c.b16 %v4637, %v4629
    %v7102 = vpack.c.b16 %v4638, %v4630
    %v7103 = vpack.c.b16 %v4639, %v4631
    %v7104 = vpack.c.b16 %v4640, %v4632
    %v7105 = vpack.c.b16 %v4641, %v4633
    %v7106 = vpack.c.b16 %v4642, %v4634
    %v7107 = vpack.c.b16 %v4643, %v4635
    %v7108 = vpack.c.b16 %v4652, %v4644
    %v7109 = vpack.c.b16 %v4653, %v4645
    %v7110 = vpack.c.b16 %v4654, %v4646
    %v7111 = vpack.c.b16 %v4655, %v4647
    %v7112 = vpack.c.b16 %v4656, %v4648
    %v7113 = vpack.c.b16 %v4657, %v4649
    %v7114 = vpack.c.b16 %v4658, %v4650
    %v7115 = vpack.c.b16 %v4659, %v4651
    %v7116 = vpack.c.b16 %v4668, %v4660
    %v7117 = vpack.c.b16 %v4669, %v4661
    %v7118 = vpack.c.b16 %v4670, %v4662
    %v7119 = vpack.c.b16 %v4671, %v4663
    %v7120 = vpack.c.b16 %v4672, %v4664
    %v7121 = vpack.c.b16 %v4673, %v4665
    %v7122 = vpack.c.b16 %v4674, %v4666
    %v7123 = vpack.c.b16 %v4675, %v4667
    %v7124 = vpack.c.b16 %v4684, %v4676
    %v7125 = vpack.c.b16 %v4685, %v4677
    %v7126 = vpack.c.b16 %v4686, %v4678
    %v7127 = vpack.c.b16 %v4687, %v4679
    %v7128 = vpack.c.b16 %v4688, %v4680
    %v7129 = vpack.c.b16 %v4689, %v4681
    %v7130 = vpack.c.b16 %v4690, %v4682
    %v7131 = vpack.c.b16 %v4691, %v4683
    %v7132 = vpack.c.b16 %v4700, %v4692
    %v7133 = vpack.c.b16 %v4701, %v4693
    %v7134 = vpack.c.b16 %v4702, %v4694
    %v7135 = vpack.c.b16 %v4703, %v4695
    %v7136 = vpack.c.b16 %v4704, %v4696
    %v7137 = vpack.c.b16 %v4705, %v4697
    %v7138 = vpack.c.b16 %v4706, %v4698
    %v7139 = vpack.c.b16 %v4707, %v4699
    %v7140 = vpack.c.b16 %v4716, %v4708
    %v7141 = vpack.c.b16 %v4717, %v4709
    %v7142 = vpack.c.b16 %v4718, %v4710
    %v7143 = vpack.c.b16 %v4719, %v4711
    %v7144 = vpack.c.b16 %v4720, %v4712
    %v7145 = vpack.c.b16 %v4721, %v4713
    %v7146 = vpack.c.b16 %v4722, %v4714
    %v7147 = vpack.c.b16 %v4723, %v4715
    %v7148 = vpack.c.b16 %v4732, %v4724
    %v7149 = vpack.c.b16 %v4733, %v4725
    %v7150 = vpack.c.b16 %v4734, %v4726
    %v7151 = vpack.c.b16 %v4735, %v4727
    %v7152 = vpack.c.b16 %v4736, %v4728
    %v7153 = vpack.c.b16 %v4737, %v4729
    %v7154 = vpack.c.b16 %v4738, %v4730
    %v7155 = vpack.c.b16 %v4739, %v4731
    %v7156 = vpack.c.b16 %v4748, %v4740
    %v7157 = vpack.c.b16 %v4749, %v4741
    %v7158 = vpack.c.b16 %v4750, %v4742
    %v7159 = vpack.c.b16 %v4751, %v4743
    %v7160 = vpack.c.b16 %v4752, %v4744
    %v7161 = vpack.c.b16 %v4753, %v4745
    %v7162 = vpack.c.b16 %v4754, %v4746
    %v7163 = vpack.c.b16 %v4755, %v4747
    %v7164 = vpack.c.b16 %v4764, %v4756
    %v7165 = vpack.c.b16 %v4765, %v4757
    %v7166 = vpack.c.b16 %v4766, %v4758
    %v7167 = vpack.c.b16 %v4767, %v4759
    %v7168 = vpack.c.b16 %v4768, %v4760
    %v7169 = vpack.c.b16 %v4769, %v4761
    %v7170 = vpack.c.b16 %v4770, %v4762
    %v7171 = vpack.c.b16 %v4771, %v4763
    %v7172 = vpack.c.b16 %v4780, %v4772
    %v7173 = vpack.c.b16 %v4781, %v4773
    %v7174 = vpack.c.b16 %v4782, %v4774
    %v7175 = vpack.c.b16 %v4783, %v4775
    %v7176 = vpack.c.b16 %v4784, %v4776
    %v7177 = vpack.c.b16 %v4785, %v4777
    %v7178 = vpack.c.b16 %v4786, %v4778
    %v7179 = vpack.c.b16 %v4787, %v4779
    %v7180 = vpack.c.b16 %v4796, %v4788
    %v7181 = vpack.c.b16 %v4797, %v4789
    %v7182 = vpack.c.b16 %v4798, %v4790
    %v7183 = vpack.c.b16 %v4799, %v4791
    %v7184 = vpack.c.b16 %v4800, %v4792
    %v7185 = vpack.c.b16 %v4801, %v4793
    %v7186 = vpack.c.b16 %v4802, %v4794
    %v7187 = vpack.c.b16 %v4803, %v4795
    %v7188 = vpack.c.b16 %v4812, %v4804
    %v7189 = vpack.c.b16 %v4813, %v4805
    %v7190 = vpack.c.b16 %v4814, %v4806
    %v7191 = vpack.c.b16 %v4815, %v4807
    %v7192 = vpack.c.b16 %v4816, %v4808
    %v7193 = vpack.c.b16 %v4817, %v4809
    %v7194 = vpack.c.b16 %v4818, %v4810
    %v7195 = vpack.c.b16 %v4819, %v4811
    %v7196 = vpack.c.b16 %v4828, %v4820
    %v7197 = vpack.c.b16 %v4829, %v4821
    %v7198 = vpack.c.b16 %v4830, %v4822
    %v7199 = vpack.c.b16 %v4831, %v4823
    %v7200 = vpack.c.b16 %v4832, %v4824
    %v7201 = vpack.c.b16 %v4833, %v4825
    %v7202 = vpack.c.b16 %v4834, %v4826
    %v7203 = vpack.c.b16 %v4835, %v4827
    %v7204 = vpack.c.b16 %v4844, %v4836
    %v7205 = vpack.c.b16 %v4845, %v4837
    %v7206 = vpack.c.b16 %v4846, %v4838
    %v7207 = vpack.c.b16 %v4847, %v4839
    %v7208 = vpack.c.b16 %v4848, %v4840
    %v7209 = vpack.c.b16 %v4849, %v4841
    %v7210 = vpack.c.b16 %v4850, %v4842
    %v7211 = vpack.c.b16 %v4851, %v4843
    %v7212 = vpack.c.b16 %v4860, %v4852
    %v7213 = vpack.c.b16 %v4861, %v4853
    %v7214 = vpack.c.b16 %v4862, %v4854
    %v7215 = vpack.c.b16 %v4863, %v4855
    %v7216 = vpack.c.b16 %v4864, %v4856
    %v7217 = vpack.c.b16 %v4865, %v4857
    %v7218 = vpack.c.b16 %v4866, %v4858
    %v7219 = vpack.c.b16 %v4867, %v4859
    %v7220 = vpack.c.b16 %v4876, %v4868
    %v7221 = vpack.c.b16 %v4877, %v4869
    %v7222 = vpack.c.b16 %v4878, %v4870
    %v7223 = vpack.c.b16 %v4879, %v4871
    %v7224 = vpack.c.b16 %v4880, %v4872
    %v7225 = vpack.c.b16 %v4881, %v4873
    %v7226 = vpack.c.b16 %v4882, %v4874
    %v7227 = vpack.c.b16 %v4883, %v4875
    %v7228 = vpack.c.b16 %v4892, %v4884
    %v7229 = vpack.c.b16 %v4893, %v4885
    %v7230 = vpack.c.b16 %v4894, %v4886
    %v7231 = vpack.c.b16 %v4895, %v4887
    %v7232 = vpack.c.b16 %v4896, %v4888
    %v7233 = vpack.c.b16 %v4897, %v4889
    %v7234 = vpack.c.b16 %v4898, %v4890
    %v7235 = vpack.c.b16 %v4899, %v4891
    %v7236 = vpack.c.b16 %v4908, %v4900
    %v7237 = vpack.c.b16 %v4909, %v4901
    %v7238 = vpack.c.b16 %v4910, %v4902
    %v7239 = vpack.c.b16 %v4911, %v4903
    %v7240 = vpack.c.b16 %v4912, %v4904
    %v7241 = vpack.c.b16 %v4913, %v4905
    %v7242 = vpack.c.b16 %v4914, %v4906
    %v7243 = vpack.c.b16 %v4915, %v4907
    %v7244 = vpack.c.b16 %v4924, %v4916
    %v7245 = vpack.c.b16 %v4925, %v4917
    %v7246 = vpack.c.b16 %v4926, %v4918
    %v7247 = vpack.c.b16 %v4927, %v4919
    %v7248 = vpack.c.b16 %v4928, %v4920
    %v7249 = vpack.c.b16 %v4929, %v4921
    %v7250 = vpack.c.b16 %v4930, %v4922
    %v7251 = vpack.c.b16 %v4931, %v4923
    %v7252 = vpack.c.b16 %v4940, %v4932
    %v7253 = vpack.c.b16 %v4941, %v4933
    %v7254 = vpack.c.b16 %v4942, %v4934
    %v7255 = vpack.c.b16 %v4943, %v4935
    %v7256 = vpack.c.b16 %v4944, %v4936
    %v7257 = vpack.c.b16 %v4945, %v4937
    %v7258 = vpack.c.b16 %v4946, %v4938
    %v7259 = vpack.c.b16 %v4947, %v4939
    %v7260 = vpack.c.b16 %v4956, %v4948
    %v7261 = vpack.c.b16 %v4957, %v4949
    %v7262 = vpack.c.b16 %v4958, %v4950
    %v7263 = vpack.c.b16 %v4959, %v4951
    %v7264 = vpack.c.b16 %v4960, %v4952
    %v7265 = vpack.c.b16 %v4961, %v4953
    %v7266 = vpack.c.b16 %v4962, %v4954
    %v7267 = vpack.c.b16 %v4963, %v4955
    %v7268 = vpack.c.b16 %v4972, %v4964
    %v7269 = vpack.c.b16 %v4973, %v4965
    %v7270 = vpack.c.b16 %v4974, %v4966
    %v7271 = vpack.c.b16 %v4975, %v4967
    %v7272 = vpack.c.b16 %v4976, %v4968
    %v7273 = vpack.c.b16 %v4977, %v4969
    %v7274 = vpack.c.b16 %v4978, %v4970
    %v7275 = vpack.c.b16 %v4979, %v4971
    %v7276 = vpack.c.b16 %v4988, %v4980
    %v7277 = vpack.c.b16 %v4989, %v4981
    %v7278 = vpack.c.b16 %v4990, %v4982
    %v7279 = vpack.c.b16 %v4991, %v4983
    %v7280 = vpack.c.b16 %v4992, %v4984
    %v7281 = vpack.c.b16 %v4993, %v4985
    %v7282 = vpack.c.b16 %v4994, %v4986
    %v7283 = vpack.c.b16 %v4995, %v4987
    %v7284 = vpack.c.b16 %v5004, %v4996
    %v7285 = vpack.c.b16 %v5005, %v4997
    %v7286 = vpack.c.b16 %v5006, %v4998
    %v7287 = vpack.c.b16 %v5007, %v4999
    %v7288 = vpack.c.b16 %v5008, %v5000
    %v7289 = vpack.c.b16 %v5009, %v5001
    %v7290 = vpack.c.b16 %v5010, %v5002
    %v7291 = vpack.c.b16 %v5011, %v5003
    %v7292 = vpack.c.b16 %v5020, %v5012
    %v7293 = vpack.c.b16 %v5021, %v5013
    %v7294 = vpack.c.b16 %v5022, %v5014
    %v7295 = vpack.c.b16 %v5023, %v5015
    %v7296 = vpack.c.b16 %v5024, %v5016
    %v7297 = vpack.c.b16 %v5025, %v5017
    %v7298 = vpack.c.b16 %v5026, %v5018
    %v7299 = vpack.c.b16 %v5027, %v5019
    %v7300 = vpack.c.b16 %v5036, %v5028
    %v7301 = vpack.c.b16 %v5037, %v5029
    %v7302 = vpack.c.b16 %v5038, %v5030
    %v7303 = vpack.c.b16 %v5039, %v5031
    %v7304 = vpack.c.b16 %v5040, %v5032
    %v7305 = vpack.c.b16 %v5041, %v5033
    %v7306 = vpack.c.b16 %v5042, %v5034
    %v7307 = vpack.c.b16 %v5043, %v5035
    %v7308 = vpack.c.b16 %v5052, %v5044
    %v7309 = vpack.c.b16 %v5053, %v5045
    %v7310 = vpack.c.b16 %v5054, %v5046
    %v7311 = vpack.c.b16 %v5055, %v5047
    %v7312 = vpack.c.b16 %v5056, %v5048
    %v7313 = vpack.c.b16 %v5057, %v5049
    %v7314 = vpack.c.b16 %v5058, %v5050
    %v7315 = vpack.c.b16 %v5059, %v5051
    %v7316 = vpack.c.b16 %v5068, %v5060
    %v7317 = vpack.c.b16 %v5069, %v5061
    %v7318 = vpack.c.b16 %v5070, %v5062
    %v7319 = vpack.c.b16 %v5071, %v5063
    %v7320 = vpack.c.b16 %v5072, %v5064
    %v7321 = vpack.c.b16 %v5073, %v5065
    %v7322 = vpack.c.b16 %v5074, %v5066
    %v7323 = vpack.c.b16 %v5075, %v5067
    %v7324 = vpack.c.b16 %v5084, %v5076
    %v7325 = vpack.c.b16 %v5085, %v5077
    %v7326 = vpack.c.b16 %v5086, %v5078
    %v7327 = vpack.c.b16 %v5087, %v5079
    %v7328 = vpack.c.b16 %v5088, %v5080
    %v7329 = vpack.c.b16 %v5089, %v5081
    %v7330 = vpack.c.b16 %v5090, %v5082
    %v7331 = vpack.c.b16 %v5091, %v5083
    %v7332 = vpack.c.b16 %v5100, %v5092
    %v7333 = vpack.c.b16 %v5101, %v5093
    %v7334 = vpack.c.b16 %v5102, %v5094
    %v7335 = vpack.c.b16 %v5103, %v5095
    %v7336 = vpack.c.b16 %v5104, %v5096
    %v7337 = vpack.c.b16 %v5105, %v5097
    %v7338 = vpack.c.b16 %v5106, %v5098
    %v7339 = vpack.c.b16 %v5107, %v5099
    %v7340 = vpack.c.b16 %v5116, %v5108
    %v7341 = vpack.c.b16 %v5117, %v5109
    %v7342 = vpack.c.b16 %v5118, %v5110
    %v7343 = vpack.c.b16 %v5119, %v5111
    %v7344 = vpack.c.b16 %v5120, %v5112
    %v7345 = vpack.c.b16 %v5121, %v5113
    %v7346 = vpack.c.b16 %v5122, %v5114
    %v7347 = vpack.c.b16 %v5123, %v5115
    %v7348 = vpack.c.b16 %v5132, %v5124
    %v7349 = vpack.c.b16 %v5133, %v5125
    %v7350 = vpack.c.b16 %v5134, %v5126
    %v7351 = vpack.c.b16 %v5135, %v5127
    %v7352 = vpack.c.b16 %v5136, %v5128
    %v7353 = vpack.c.b16 %v5137, %v5129
    %v7354 = vpack.c.b16 %v5138, %v5130
    %v7355 = vpack.c.b16 %v5139, %v5131
    %v7356 = vpack.c.b16 %v5148, %v5140
    %v7357 = vpack.c.b16 %v5149, %v5141
    %v7358 = vpack.c.b16 %v5150, %v5142
    %v7359 = vpack.c.b16 %v5151, %v5143
    %v7360 = vpack.c.b16 %v5152, %v5144
    %v7361 = vpack.c.b16 %v5153, %v5145
    %v7362 = vpack.c.b16 %v5154, %v5146
    %v7363 = vpack.c.b16 %v5155, %v5147
    %v7364 = vpack.c.b16 %v5164, %v5156
    %v7365 = vpack.c.b16 %v5165, %v5157
    %v7366 = vpack.c.b16 %v5166, %v5158
    %v7367 = vpack.c.b16 %v5167, %v5159
    %v7368 = vpack.c.b16 %v5168, %v5160
    %v7369 = vpack.c.b16 %v5169, %v5161
    %v7370 = vpack.c.b16 %v5170, %v5162
    %v7371 = vpack.c.b16 %v5171, %v5163
    %v7372 = vpack.c.b16 %v5180, %v5172
    %v7373 = vpack.c.b16 %v5181, %v5173
    %v7374 = vpack.c.b16 %v5182, %v5174
    %v7375 = vpack.c.b16 %v5183, %v5175
    %v7376 = vpack.c.b16 %v5184, %v5176
    %v7377 = vpack.c.b16 %v5185, %v5177
    %v7378 = vpack.c.b16 %v5186, %v5178
    %v7379 = vpack.c.b16 %v5187, %v5179
    %v7380 = vpack.c.b16 %v5196, %v5188
    %v7381 = vpack.c.b16 %v5197, %v5189
    %v7382 = vpack.c.b16 %v5198, %v5190
    %v7383 = vpack.c.b16 %v5199, %v5191
    %v7384 = vpack.c.b16 %v5200, %v5192
    %v7385 = vpack.c.b16 %v5201, %v5193
    %v7386 = vpack.c.b16 %v5202, %v5194
    %v7387 = vpack.c.b16 %v5203, %v5195
    %v7388 = vpack.c.b16 %v5212, %v5204
    %v7389 = vpack.c.b16 %v5213, %v5205
    %v7390 = vpack.c.b16 %v5214, %v5206
    %v7391 = vpack.c.b16 %v5215, %v5207
    %v7392 = vpack.c.b16 %v5216, %v5208
    %v7393 = vpack.c.b16 %v5217, %v5209
    %v7394 = vpack.c.b16 %v5218, %v5210
    %v7395 = vpack.c.b16 %v5219, %v5211
    %v7396 = vpack.c.b16 %v5228, %v5220
    %v7397 = vpack.c.b16 %v5229, %v5221
    %v7398 = vpack.c.b16 %v5230, %v5222
    %v7399 = vpack.c.b16 %v5231, %v5223
    %v7400 = vpack.c.b16 %v5232, %v5224
    %v7401 = vpack.c.b16 %v5233, %v5225
    %v7402 = vpack.c.b16 %v5234, %v5226
    %v7403 = vpack.c.b16 %v5235, %v5227
    %v7404 = vpack.c.b16 %v5244, %v5236
    %v7405 = vpack.c.b16 %v5245, %v5237
    %v7406 = vpack.c.b16 %v5246, %v5238
    %v7407 = vpack.c.b16 %v5247, %v5239
    %v7408 = vpack.c.b16 %v5248, %v5240
    %v7409 = vpack.c.b16 %v5249, %v5241
    %v7410 = vpack.c.b16 %v5250, %v5242
    %v7411 = vpack.c.b16 %v5251, %v5243
    %v7412 = vpack.c.b16 %v5260, %v5252
    %v7413 = vpack.c.b16 %v5261, %v5253
    %v7414 = vpack.c.b16 %v5262, %v5254
    %v7415 = vpack.c.b16 %v5263, %v5255
    %v7416 = vpack.c.b16 %v5264, %v5256
    %v7417 = vpack.c.b16 %v5265, %v5257
    %v7418 = vpack.c.b16 %v5266, %v5258
    %v7419 = vpack.c.b16 %v5267, %v5259
    %v7420 = vpack.c.b16 %v5276, %v5268
    %v7421 = vpack.c.b16 %v5277, %v5269
    %v7422 = vpack.c.b16 %v5278, %v5270
    %v7423 = vpack.c.b16 %v5279, %v5271
    %v7424 = vpack.c.b16 %v5280, %v5272
    %v7425 = vpack.c.b16 %v5281, %v5273
    %v7426 = vpack.c.b16 %v5282, %v5274
    %v7427 = vpack.c.b16 %v5283, %v5275
    %v7428 = vpack.c.b16 %v5292, %v5284
    %v7429 = vpack.c.b16 %v5293, %v5285
    %v7430 = vpack.c.b16 %v5294, %v5286
    %v7431 = vpack.c.b16 %v5295, %v5287
    %v7432 = vpack.c.b16 %v5296, %v5288
    %v7433 = vpack.c.b16 %v5297, %v5289
    %v7434 = vpack.c.b16 %v5298, %v5290
    %v7435 = vpack.c.b16 %v5299, %v5291
    %v7436 = vpack.c.b16 %v5308, %v5300
    %v7437 = vpack.c.b16 %v5309, %v5301
    %v7438 = vpack.c.b16 %v5310, %v5302
    %v7439 = vpack.c.b16 %v5311, %v5303
    %v7440 = vpack.c.b16 %v5312, %v5304
    %v7441 = vpack.c.b16 %v5313, %v5305
    %v7442 = vpack.c.b16 %v5314, %v5306
    %v7443 = vpack.c.b16 %v5315, %v5307
    %v7444 = vpack.c.b16 %v5324, %v5316
    %v7445 = vpack.c.b16 %v5325, %v5317
    %v7446 = vpack.c.b16 %v5326, %v5318
    %v7447 = vpack.c.b16 %v5327, %v5319
    %v7448 = vpack.c.b16 %v5328, %v5320
    %v7449 = vpack.c.b16 %v5329, %v5321
    %v7450 = vpack.c.b16 %v5330, %v5322
    %v7451 = vpack.c.b16 %v5331, %v5323
    %v7452 = vpack.c.b16 %v5340, %v5332
    %v7453 = vpack.c.b16 %v5341, %v5333
    %v7454 = vpack.c.b16 %v5342, %v5334
    %v7455 = vpack.c.b16 %v5343, %v5335
    %v7456 = vpack.c.b16 %v5344, %v5336
    %v7457 = vpack.c.b16 %v5345, %v5337
    %v7458 = vpack.c.b16 %v5346, %v5338
    %v7459 = vpack.c.b16 %v5347, %v5339
    %v7460 = vpack.c.b16 %v5356, %v5348
    %v7461 = vpack.c.b16 %v5357, %v5349
    %v7462 = vpack.c.b16 %v5358, %v5350
    %v7463 = vpack.c.b16 %v5359, %v5351
    %v7464 = vpack.c.b16 %v5360, %v5352
    %v7465 = vpack.c.b16 %v5361, %v5353
    %v7466 = vpack.c.b16 %v5362, %v5354
    %v7467 = vpack.c.b16 %v5363, %v5355
    %v7468 = vpack.c.b16 %v5372, %v5364
    %v7469 = vpack.c.b16 %v5373, %v5365
    %v7470 = vpack.c.b16 %v5374, %v5366
    %v7471 = vpack.c.b16 %v5375, %v5367
    %v7472 = vpack.c.b16 %v5376, %v5368
    %v7473 = vpack.c.b16 %v5377, %v5369
    %v7474 = vpack.c.b16 %v5378, %v5370
    %v7475 = vpack.c.b16 %v5379, %v5371
    %v7476 = vpack.c.b16 %v5388, %v5380
    %v7477 = vpack.c.b16 %v5389, %v5381
    %v7478 = vpack.c.b16 %v5390, %v5382
    %v7479 = vpack.c.b16 %v5391, %v5383
    %v7480 = vpack.c.b16 %v5392, %v5384
    %v7481 = vpack.c.b16 %v5393, %v5385
    %v7482 = vpack.c.b16 %v5394, %v5386
    %v7483 = vpack.c.b16 %v5395, %v5387
    %v7484 = vpack.c.b16 %v5404, %v5396
    %v7485 = vpack.c.b16 %v5405, %v5397
    %v7486 = vpack.c.b16 %v5406, %v5398
    %v7487 = vpack.c.b16 %v5407, %v5399
    %v7488 = vpack.c.b16 %v5408, %v5400
    %v7489 = vpack.c.b16 %v5409, %v5401
    %v7490 = vpack.c.b16 %v5410, %v5402
    %v7491 = vpack.c.b16 %v5411, %v5403
    %v7492 = vpack.c.b16 %v5420, %v5412
    %v7493 = vpack.c.b16 %v5421, %v5413
    %v7494 = vpack.c.b16 %v5422, %v5414
    %v7495 = vpack.c.b16 %v5423, %v5415
    %v7496 = vpack.c.b16 %v5424, %v5416
    %v7497 = vpack.c.b16 %v5425, %v5417
    %v7498 = vpack.c.b16 %v5426, %v5418
    %v7499 = vpack.c.b16 %v5427, %v5419
    %v7500 = vpack.c.b16 %v5436, %v5428
    %v7501 = vpack.c.b16 %v5437, %v5429
    %v7502 = vpack.c.b16 %v5438, %v5430
    %v7503 = vpack.c.b16 %v5439, %v5431
    %v7504 = vpack.c.b16 %v5440, %v5432
    %v7505 = vpack.c.b16 %v5441, %v5433
    %v7506 = vpack.c.b16 %v5442, %v5434
    %v7507 = vpack.c.b16 %v5443, %v5435
    %v7508 = vpack.c.b16 %v5452, %v5444
    %v7509 = vpack.c.b16 %v5453, %v5445
    %v7510 = vpack.c.b16 %v5454, %v5446
    %v7511 = vpack.c.b16 %v5455, %v5447
    %v7512 = vpack.c.b16 %v5456, %v5448
    %v7513 = vpack.c.b16 %v5457, %v5449
    %v7514 = vpack.c.b16 %v5458, %v5450
    %v7515 = vpack.c.b16 %v5459, %v5451
    %v7516 = vpack.c.b16 %v5468, %v5460
    %v7517 = vpack.c.b16 %v5469, %v5461
    %v7518 = vpack.c.b16 %v5470, %v5462
    %v7519 = vpack.c.b16 %v5471, %v5463
    %v7520 = vpack.c.b16 %v5472, %v5464
    %v7521 = vpack.c.b16 %v5473, %v5465
    %v7522 = vpack.c.b16 %v5474, %v5466
    %v7523 = vpack.c.b16 %v5475, %v5467
    %v7524 = vpack.c.b16 %v5484, %v5476
    %v7525 = vpack.c.b16 %v5485, %v5477
    %v7526 = vpack.c.b16 %v5486, %v5478
    %v7527 = vpack.c.b16 %v5487, %v5479
    %v7528 = vpack.c.b16 %v5488, %v5480
    %v7529 = vpack.c.b16 %v5489, %v5481
    %v7530 = vpack.c.b16 %v5490, %v5482
    %v7531 = vpack.c.b16 %v5491, %v5483
    %v7532 = vpack.c.b16 %v5500, %v5492
    %v7533 = vpack.c.b16 %v5501, %v5493
    %v7534 = vpack.c.b16 %v5502, %v5494
    %v7535 = vpack.c.b16 %v5503, %v5495
    %v7536 = vpack.c.b16 %v5504, %v5496
    %v7537 = vpack.c.b16 %v5505, %v5497
    %v7538 = vpack.c.b16 %v5506, %v5498
    %v7539 = vpack.c.b16 %v5507, %v5499
    %v7540 = vpack.c.b16 %v5516, %v5508
    %v7541 = vpack.c.b16 %v5517, %v5509
    %v7542 = vpack.c.b16 %v5518, %v5510
    %v7543 = vpack.c.b16 %v5519, %v5511
    %v7544 = vpack.c.b16 %v5520, %v5512
    %v7545 = vpack.c.b16 %v5521, %v5513
    %v7546 = vpack.c.b16 %v5522, %v5514
    %v7547 = vpack.c.b16 %v5523, %v5515
    %v7548 = vpack.c.b16 %v5532, %v5524
    %v7549 = vpack.c.b16 %v5533, %v5525
    %v7550 = vpack.c.b16 %v5534, %v5526
    %v7551 = vpack.c.b16 %v5535, %v5527
    %v7552 = vpack.c.b16 %v5536, %v5528
    %v7553 = vpack.c.b16 %v5537, %v5529
    %v7554 = vpack.c.b16 %v5538, %v5530
    %v7555 = vpack.c.b16 %v5539, %v5531
    %v7556 = vpack.c.b16 %v5548, %v5540
    %v7557 = vpack.c.b16 %v5549, %v5541
    %v7558 = vpack.c.b16 %v5550, %v5542
    %v7559 = vpack.c.b16 %v5551, %v5543
    %v7560 = vpack.c.b16 %v5552, %v5544
    %v7561 = vpack.c.b16 %v5553, %v5545
    %v7562 = vpack.c.b16 %v5554, %v5546
    %v7563 = vpack.c.b16 %v5555, %v5547
    %v7564 = vpack.c.b16 %v5564, %v5556
    %v7565 = vpack.c.b16 %v5565, %v5557
    %v7566 = vpack.c.b16 %v5566, %v5558
    %v7567 = vpack.c.b16 %v5567, %v5559
    %v7568 = vpack.c.b16 %v5568, %v5560
    %v7569 = vpack.c.b16 %v5569, %v5561
    %v7570 = vpack.c.b16 %v5570, %v5562
    %v7571 = vpack.c.b16 %v5571, %v5563
    %v7572 = vpack.c.b16 %v5580, %v5572
    %v7573 = vpack.c.b16 %v5581, %v5573
    %v7574 = vpack.c.b16 %v5582, %v5574
    %v7575 = vpack.c.b16 %v5583, %v5575
    %v7576 = vpack.c.b16 %v5584, %v5576
    %v7577 = vpack.c.b16 %v5585, %v5577
    %v7578 = vpack.c.b16 %v5586, %v5578
    %v7579 = vpack.c.b16 %v5587, %v5579
    %v7580 = vpack.c.b16 %v5596, %v5588
    %v7581 = vpack.c.b16 %v5597, %v5589
    %v7582 = vpack.c.b16 %v5598, %v5590
    %v7583 = vpack.c.b16 %v5599, %v5591
    %v7584 = vpack.c.b16 %v5600, %v5592
    %v7585 = vpack.c.b16 %v5601, %v5593
    %v7586 = vpack.c.b16 %v5602, %v5594
    %v7587 = vpack.c.b16 %v5603, %v5595
    %v7588 = vpack.c.b16 %v5612, %v5604
    %v7589 = vpack.c.b16 %v5613, %v5605
    %v7590 = vpack.c.b16 %v5614, %v5606
    %v7591 = vpack.c.b16 %v5615, %v5607
    %v7592 = vpack.c.b16 %v5616, %v5608
    %v7593 = vpack.c.b16 %v5617, %v5609
    %v7594 = vpack.c.b16 %v5618, %v5610
    %v7595 = vpack.c.b16 %v5619, %v5611
    %v7596 = vpack.c.b16 %v5628, %v5620
    %v7597 = vpack.c.b16 %v5629, %v5621
    %v7598 = vpack.c.b16 %v5630, %v5622
    %v7599 = vpack.c.b16 %v5631, %v5623
    %v7600 = vpack.c.b16 %v5632, %v5624
    %v7601 = vpack.c.b16 %v5633, %v5625
    %v7602 = vpack.c.b16 %v5634, %v5626
    %v7603 = vpack.c.b16 %v5635, %v5627
    %v7604 = vpack.c.b16 %v5644, %v5636
    %v7605 = vpack.c.b16 %v5645, %v5637
    %v7606 = vpack.c.b16 %v5646, %v5638
    %v7607 = vpack.c.b16 %v5647, %v5639
    %v7608 = vpack.c.b16 %v5648, %v5640
    %v7609 = vpack.c.b16 %v5649, %v5641
    %v7610 = vpack.c.b16 %v5650, %v5642
    %v7611 = vpack.c.b16 %v5651, %v5643
    %v7612 = vpack.c.b16 %v5660, %v5652
    %v7613 = vpack.c.b16 %v5661, %v5653
    %v7614 = vpack.c.b16 %v5662, %v5654
    %v7615 = vpack.c.b16 %v5663, %v5655
    %v7616 = vpack.c.b16 %v5664, %v5656
    %v7617 = vpack.c.b16 %v5665, %v5657
    %v7618 = vpack.c.b16 %v5666, %v5658
    %v7619 = vpack.c.b16 %v5667, %v5659
    %v7620 = vpack.c.b16 %v5676, %v5668
    %v7621 = vpack.c.b16 %v5677, %v5669
    %v7622 = vpack.c.b16 %v5678, %v5670
    %v7623 = vpack.c.b16 %v5679, %v5671
    %v7624 = vpack.c.b16 %v5680, %v5672
    %v7625 = vpack.c.b16 %v5681, %v5673
    %v7626 = vpack.c.b16 %v5682, %v5674
    %v7627 = vpack.c.b16 %v5683, %v5675
    %v7628 = vpack.c.b16 %v5692, %v5684
    %v7629 = vpack.c.b16 %v5693, %v5685
    %v7630 = vpack.c.b16 %v5694, %v5686
    %v7631 = vpack.c.b16 %v5695, %v5687
    %v7632 = vpack.c.b16 %v5696, %v5688
    %v7633 = vpack.c.b16 %v5697, %v5689
    %v7634 = vpack.c.b16 %v5698, %v5690
    %v7635 = vpack.c.b16 %v5699, %v5691
    %v7636 = vpack.c.b16 %v5708, %v5700
    %v7637 = vpack.c.b16 %v5709, %v5701
    %v7638 = vpack.c.b16 %v5710, %v5702
    %v7639 = vpack.c.b16 %v5711, %v5703
    %v7640 = vpack.c.b16 %v5712, %v5704
    %v7641 = vpack.c.b16 %v5713, %v5705
    %v7642 = vpack.c.b16 %v5714, %v5706
    %v7643 = vpack.c.b16 %v5715, %v5707
    %v7644 = vpack.c.b16 %v5724, %v5716
    %v7645 = vpack.c.b16 %v5725, %v5717
    %v7646 = vpack.c.b16 %v5726, %v5718
    %v7647 = vpack.c.b16 %v5727, %v5719
    %v7648 = vpack.c.b16 %v5728, %v5720
    %v7649 = vpack.c.b16 %v5729, %v5721
    %v7650 = vpack.c.b16 %v5730, %v5722
    %v7651 = vpack.c.b16 %v5731, %v5723
    %v7652 = vpack.c.b16 %v5740, %v5732
    %v7653 = vpack.c.b16 %v5741, %v5733
    %v7654 = vpack.c.b16 %v5742, %v5734
    %v7655 = vpack.c.b16 %v5743, %v5735
    %v7656 = vpack.c.b16 %v5744, %v5736
    %v7657 = vpack.c.b16 %v5745, %v5737
    %v7658 = vpack.c.b16 %v5746, %v5738
    %v7659 = vpack.c.b16 %v5747, %v5739
    %v7660 = vpack.c.b16 %v5756, %v5748
    %v7661 = vpack.c.b16 %v5757, %v5749
    %v7662 = vpack.c.b16 %v5758, %v5750
    %v7663 = vpack.c.b16 %v5759, %v5751
    %v7664 = vpack.c.b16 %v5760, %v5752
    %v7665 = vpack.c.b16 %v5761, %v5753
    %v7666 = vpack.c.b16 %v5762, %v5754
    %v7667 = vpack.c.b16 %v5763, %v5755
    %v7668 = vpack.c.b16 %v5772, %v5764
    %v7669 = vpack.c.b16 %v5773, %v5765
    %v7670 = vpack.c.b16 %v5774, %v5766
    %v7671 = vpack.c.b16 %v5775, %v5767
    %v7672 = vpack.c.b16 %v5776, %v5768
    %v7673 = vpack.c.b16 %v5777, %v5769
    %v7674 = vpack.c.b16 %v5778, %v5770
    %v7675 = vpack.c.b16 %v5779, %v5771
    %v7676 = vpack.c.b16 %v5788, %v5780
    %v7677 = vpack.c.b16 %v5789, %v5781
    %v7678 = vpack.c.b16 %v5790, %v5782
    %v7679 = vpack.c.b16 %v5791, %v5783
    %v7680 = vpack.c.b16 %v5792, %v5784
    %v7681 = vpack.c.b16 %v5793, %v5785
    %v7682 = vpack.c.b16 %v5794, %v5786
    %v7683 = vpack.c.b16 %v5795, %v5787
    %v7684 = vpack.c.b16 %v5804, %v5796
    %v7685 = vpack.c.b16 %v5805, %v5797
    %v7686 = vpack.c.b16 %v5806, %v5798
    %v7687 = vpack.c.b16 %v5807, %v5799
    %v7688 = vpack.c.b16 %v5808, %v5800
    %v7689 = vpack.c.b16 %v5809, %v5801
    %v7690 = vpack.c.b16 %v5810, %v5802
    %v7691 = vpack.c.b16 %v5811, %v5803
    %v7692 = vpack.c.b16 %v5820, %v5812
    %v7693 = vpack.c.b16 %v5821, %v5813
    %v7694 = vpack.c.b16 %v5822, %v5814
    %v7695 = vpack.c.b16 %v5823, %v5815
    %v7696 = vpack.c.b16 %v5824, %v5816
    %v7697 = vpack.c.b16 %v5825, %v5817
    %v7698 = vpack.c.b16 %v5826, %v5818
    %v7699 = vpack.c.b16 %v5827, %v5819
    %v7700 = vpack.c.b16 %v5836, %v5828
    %v7701 = vpack.c.b16 %v5837, %v5829
    %v7702 = vpack.c.b16 %v5838, %v5830
    %v7703 = vpack.c.b16 %v5839, %v5831
    %v7704 = vpack.c.b16 %v5840, %v5832
    %v7705 = vpack.c.b16 %v5841, %v5833
    %v7706 = vpack.c.b16 %v5842, %v5834
    %v7707 = vpack.c.b16 %v5843, %v5835
    %v7708 = vpack.c.b16 %v5852, %v5844
    %v7709 = vpack.c.b16 %v5853, %v5845
    %v7710 = vpack.c.b16 %v5854, %v5846
    %v7711 = vpack.c.b16 %v5855, %v5847
    %v7712 = vpack.c.b16 %v5856, %v5848
    %v7713 = vpack.c.b16 %v5857, %v5849
    %v7714 = vpack.c.b16 %v5858, %v5850
    %v7715 = vpack.c.b16 %v5859, %v5851
    %v7716 = vpack.c.b16 %v5868, %v5860
    %v7717 = vpack.c.b16 %v5869, %v5861
    %v7718 = vpack.c.b16 %v5870, %v5862
    %v7719 = vpack.c.b16 %v5871, %v5863
    %v7720 = vpack.c.b16 %v5872, %v5864
    %v7721 = vpack.c.b16 %v5873, %v5865
    %v7722 = vpack.c.b16 %v5874, %v5866
    %v7723 = vpack.c.b16 %v5875, %v5867
    %v7724 = vpack.c.b16 %v5884, %v5876
    %v7725 = vpack.c.b16 %v5885, %v5877
    %v7726 = vpack.c.b16 %v5886, %v5878
    %v7727 = vpack.c.b16 %v5887, %v5879
    %v7728 = vpack.c.b16 %v5888, %v5880
    %v7729 = vpack.c.b16 %v5889, %v5881
    %v7730 = vpack.c.b16 %v5890, %v5882
    %v7731 = vpack.c.b16 %v5891, %v5883
    %v7732 = vpack.c.b16 %v5900, %v5892
    %v7733 = vpack.c.b16 %v5901, %v5893
    %v7734 = vpack.c.b16 %v5902, %v5894
    %v7735 = vpack.c.b16 %v5903, %v5895
    %v7736 = vpack.c.b16 %v5904, %v5896
    %v7737 = vpack.c.b16 %v5905, %v5897
    %v7738 = vpack.c.b16 %v5906, %v5898
    %v7739 = vpack.c.b16 %v5907, %v5899
    %v7740 = vpack.c.b16 %v5916, %v5908
    %v7741 = vpack.c.b16 %v5917, %v5909
    %v7742 = vpack.c.b16 %v5918, %v5910
    %v7743 = vpack.c.b16 %v5919, %v5911
    %v7744 = vpack.c.b16 %v5920, %v5912
    %v7745 = vpack.c.b16 %v5921, %v5913
    %v7746 = vpack.c.b16 %v5922, %v5914
    %v7747 = vpack.c.b16 %v5923, %v5915
    %v7748 = vpack.c.b16 %v5932, %v5924
    %v7749 = vpack.c.b16 %v5933, %v5925
    %v7750 = vpack.c.b16 %v5934, %v5926
    %v7751 = vpack.c.b16 %v5935, %v5927
    %v7752 = vpack.c.b16 %v5936, %v5928
    %v7753 = vpack.c.b16 %v5937, %v5929
    %v7754 = vpack.c.b16 %v5938, %v5930
    %v7755 = vpack.c.b16 %v5939, %v5931
    %v7756 = vpack.c.b16 %v5948, %v5940
    %v7757 = vpack.c.b16 %v5949, %v5941
    %v7758 = vpack.c.b16 %v5950, %v5942
    %v7759 = vpack.c.b16 %v5951, %v5943
    %v7760 = vpack.c.b16 %v5952, %v5944
    %v7761 = vpack.c.b16 %v5953, %v5945
    %v7762 = vpack.c.b16 %v5954, %v5946
    %v7763 = vpack.c.b16 %v5955, %v5947
    %v7764 = vpack.c.b16 %v5964, %v5956
    %v7765 = vpack.c.b16 %v5965, %v5957
    %v7766 = vpack.c.b16 %v5966, %v5958
    %v7767 = vpack.c.b16 %v5967, %v5959
    %v7768 = vpack.c.b16 %v5968, %v5960
    %v7769 = vpack.c.b16 %v5969, %v5961
    %v7770 = vpack.c.b16 %v5970, %v5962
    %v7771 = vpack.c.b16 %v5971, %v5963
    %v7772 = vpack.c.b16 %v5980, %v5972
    %v7773 = vpack.c.b16 %v5981, %v5973
    %v7774 = vpack.c.b16 %v5982, %v5974
    %v7775 = vpack.c.b16 %v5983, %v5975
    %v7776 = vpack.c.b16 %v5984, %v5976
    %v7777 = vpack.c.b16 %v5985, %v5977
    %v7778 = vpack.c.b16 %v5986, %v5978
    %v7779 = vpack.c.b16 %v5987, %v5979
    %v7780 = vpack.c.b16 %v5996, %v5988
    %v7781 = vpack.c.b16 %v5997, %v5989
    %v7782 = vpack.c.b16 %v5998, %v5990
    %v7783 = vpack.c.b16 %v5999, %v5991
    %v7784 = vpack.c.b16 %v6000, %v5992
    %v7785 = vpack.c.b16 %v6001, %v5993
    %v7786 = vpack.c.b16 %v6002, %v5994
    %v7787 = vpack.c.b16 %v6003, %v5995
    %v7788 = vpack.c.b16 %v6012, %v6004
    %v7789 = vpack.c.b16 %v6013, %v6005
    %v7790 = vpack.c.b16 %v6014, %v6006
    %v7791 = vpack.c.b16 %v6015, %v6007
    %v7792 = vpack.c.b16 %v6016, %v6008
    %v7793 = vpack.c.b16 %v6017, %v6009
    %v7794 = vpack.c.b16 %v6018, %v6010
    %v7795 = vpack.c.b16 %v6019, %v6011
    %v7796 = vpack.c.b16 %v6028, %v6020
    %v7797 = vpack.c.b16 %v6029, %v6021
    %v7798 = vpack.c.b16 %v6030, %v6022
    %v7799 = vpack.c.b16 %v6031, %v6023
    %v7800 = vpack.c.b16 %v6032, %v6024
    %v7801 = vpack.c.b16 %v6033, %v6025
    %v7802 = vpack.c.b16 %v6034, %v6026
    %v7803 = vpack.c.b16 %v6035, %v6027
    %v7804 = vpack.c.b16 %v6044, %v6036
    %v7805 = vpack.c.b16 %v6045, %v6037
    %v7806 = vpack.c.b16 %v6046, %v6038
    %v7807 = vpack.c.b16 %v6047, %v6039
    %v7808 = vpack.c.b16 %v6048, %v6040
    %v7809 = vpack.c.b16 %v6049, %v6041
    %v7810 = vpack.c.b16 %v6050, %v6042
    %v7811 = vpack.c.b16 %v6051, %v6043
    %v7812 = vpack.c.b16 %v6060, %v6052
    %v7813 = vpack.c.b16 %v6061, %v6053
    %v7814 = vpack.c.b16 %v6062, %v6054
    %v7815 = vpack.c.b16 %v6063, %v6055
    %v7816 = vpack.c.b16 %v6064, %v6056
    %v7817 = vpack.c.b16 %v6065, %v6057
    %v7818 = vpack.c.b16 %v6066, %v6058
    %v7819 = vpack.c.b16 %v6067, %v6059
    %v7820 = vpack.c.b16 %v6076, %v6068
    %v7821 = vpack.c.b16 %v6077, %v6069
    %v7822 = vpack.c.b16 %v6078, %v6070
    %v7823 = vpack.c.b16 %v6079, %v6071
    %v7824 = vpack.c.b16 %v6080, %v6072
    %v7825 = vpack.c.b16 %v6081, %v6073
    %v7826 = vpack.c.b16 %v6082, %v6074
    %v7827 = vpack.c.b16 %v6083, %v6075
    %v7828 = vpack.c.b16 %v6092, %v6084
    %v7829 = vpack.c.b16 %v6093, %v6085
    %v7830 = vpack.c.b16 %v6094, %v6086
    %v7831 = vpack.c.b16 %v6095, %v6087
    %v7832 = vpack.c.b16 %v6096, %v6088
    %v7833 = vpack.c.b16 %v6097, %v6089
    %v7834 = vpack.c.b16 %v6098, %v6090
    %v7835 = vpack.c.b16 %v6099, %v6091
    %v7836 = vpack.c.b16 %v6108, %v6100
    %v7837 = vpack.c.b16 %v6109, %v6101
    %v7838 = vpack.c.b16 %v6110, %v6102
    %v7839 = vpack.c.b16 %v6111, %v6103
    %v7840 = vpack.c.b16 %v6112, %v6104
    %v7841 = vpack.c.b16 %v6113, %v6105
    %v7842 = vpack.c.b16 %v6114, %v6106
    %v7843 = vpack.c.b16 %v6115, %v6107
    %v7844 = vpack.c.b16 %v6124, %v6116
    %v7845 = vpack.c.b16 %v6125, %v6117
    %v7846 = vpack.c.b16 %v6126, %v6118
    %v7847 = vpack.c.b16 %v6127, %v6119
    %v7848 = vpack.c.b16 %v6128, %v6120
    %v7849 = vpack.c.b16 %v6129, %v6121
    %v7850 = vpack.c.b16 %v6130, %v6122
    %v7851 = vpack.c.b16 %v6131, %v6123
    %v7852 = vpack.c.b16 %v6140, %v6132
    %v7853 = vpack.c.b16 %v6141, %v6133
    %v7854 = vpack.c.b16 %v6142, %v6134
    %v7855 = vpack.c.b16 %v6143, %v6135
    %v7856 = vpack.c.b16 %v6144, %v6136
    %v7857 = vpack.c.b16 %v6145, %v6137
    %v7858 = vpack.c.b16 %v6146, %v6138
    %v7859 = vpack.c.b16 %v6147, %v6139
    %v7860 = vpack.c.b16 %v6156, %v6148
    %v7861 = vpack.c.b16 %v6157, %v6149
    %v7862 = vpack.c.b16 %v6158, %v6150
    %v7863 = vpack.c.b16 %v6159, %v6151
    %v7864 = vpack.c.b16 %v6160, %v6152
    %v7865 = vpack.c.b16 %v6161, %v6153
    %v7866 = vpack.c.b16 %v6162, %v6154
    %v7867 = vpack.c.b16 %v6163, %v6155
    %v7868 = vpack.c.b16 %v6172, %v6164
    %v7869 = vpack.c.b16 %v6173, %v6165
    %v7870 = vpack.c.b16 %v6174, %v6166
    %v7871 = vpack.c.b16 %v6175, %v6167
    %v7872 = vpack.c.b16 %v6176, %v6168
    %v7873 = vpack.c.b16 %v6177, %v6169
    %v7874 = vpack.c.b16 %v6178, %v6170
    %v7875 = vpack.c.b16 %v6179, %v6171
    %v7876 = vpack.c.b16 %v6188, %v6180
    %v7877 = vpack.c.b16 %v6189, %v6181
    %v7878 = vpack.c.b16 %v6190, %v6182
    %v7879 = vpack.c.b16 %v6191, %v6183
    %v7880 = vpack.c.b16 %v6192, %v6184
    %v7881 = vpack.c.b16 %v6193, %v6185
    %v7882 = vpack.c.b16 %v6194, %v6186
    %v7883 = vpack.c.b16 %v6195, %v6187
    %v7884 = vpack.c.b16 %v6204, %v6196
    %v7885 = vpack.c.b16 %v6205, %v6197
    %v7886 = vpack.c.b16 %v6206, %v6198
    %v7887 = vpack.c.b16 %v6207, %v6199
    %v7888 = vpack.c.b16 %v6208, %v6200
    %v7889 = vpack.c.b16 %v6209, %v6201
    %v7890 = vpack.c.b16 %v6210, %v6202
    %v7891 = vpack.c.b16 %v6211, %v6203
    %v7892 = vpack.c.b16 %v6220, %v6212
    %v7893 = vpack.c.b16 %v6221, %v6213
    %v7894 = vpack.c.b16 %v6222, %v6214
    %v7895 = vpack.c.b16 %v6223, %v6215
    %v7896 = vpack.c.b16 %v6224, %v6216
    %v7897 = vpack.c.b16 %v6225, %v6217
    %v7898 = vpack.c.b16 %v6226, %v6218
    %v7899 = vpack.c.b16 %v6227, %v6219
    %v7900 = vpack.c.b16 %v6236, %v6228
    %v7901 = vpack.c.b16 %v6237, %v6229
    %v7902 = vpack.c.b16 %v6238, %v6230
    %v7903 = vpack.c.b16 %v6239, %v6231
    %v7904 = vpack.c.b16 %v6240, %v6232
    %v7905 = vpack.c.b16 %v6241, %v6233
    %v7906 = vpack.c.b16 %v6242, %v6234
    %v7907 = vpack.c.b16 %v6243, %v6235
    %v7908 = vpack.c.b16 %v6252, %v6244
    %v7909 = vpack.c.b16 %v6253, %v6245
    %v7910 = vpack.c.b16 %v6254, %v6246
    %v7911 = vpack.c.b16 %v6255, %v6247
    %v7912 = vpack.c.b16 %v6256, %v6248
    %v7913 = vpack.c.b16 %v6257, %v6249
    %v7914 = vpack.c.b16 %v6258, %v6250
    %v7915 = vpack.c.b16 %v6259, %v6251
    %v7916 = vpack.c.b16 %v6268, %v6260
    %v7917 = vpack.c.b16 %v6269, %v6261
    %v7918 = vpack.c.b16 %v6270, %v6262
    %v7919 = vpack.c.b16 %v6271, %v6263
    %v7920 = vpack.c.b16 %v6272, %v6264
    %v7921 = vpack.c.b16 %v6273, %v6265
    %v7922 = vpack.c.b16 %v6274, %v6266
    %v7923 = vpack.c.b16 %v6275, %v6267
    %v7924 = vpack.c.b16 %v6284, %v6276
    %v7925 = vpack.c.b16 %v6285, %v6277
    %v7926 = vpack.c.b16 %v6286, %v6278
    %v7927 = vpack.c.b16 %v6287, %v6279
    %v7928 = vpack.c.b16 %v6288, %v6280
    %v7929 = vpack.c.b16 %v6289, %v6281
    %v7930 = vpack.c.b16 %v6290, %v6282
    %v7931 = vpack.c.b16 %v6291, %v6283
    %v7932 = vpack.c.b16 %v6300, %v6292
    %v7933 = vpack.c.b16 %v6301, %v6293
    %v7934 = vpack.c.b16 %v6302, %v6294
    %v7935 = vpack.c.b16 %v6303, %v6295
    %v7936 = vpack.c.b16 %v6304, %v6296
    %v7937 = vpack.c.b16 %v6305, %v6297
    %v7938 = vpack.c.b16 %v6306, %v6298
    %v7939 = vpack.c.b16 %v6307, %v6299
    %v7940 = vpack.c.b16 %v6316, %v6308
    %v7941 = vpack.c.b16 %v6317, %v6309
    %v7942 = vpack.c.b16 %v6318, %v6310
    %v7943 = vpack.c.b16 %v6319, %v6311
    %v7944 = vpack.c.b16 %v6320, %v6312
    %v7945 = vpack.c.b16 %v6321, %v6313
    %v7946 = vpack.c.b16 %v6322, %v6314
    %v7947 = vpack.c.b16 %v6323, %v6315
    %v7948 = vpack.c.b16 %v6332, %v6324
    %v7949 = vpack.c.b16 %v6333, %v6325
    %v7950 = vpack.c.b16 %v6334, %v6326
    %v7951 = vpack.c.b16 %v6335, %v6327
    %v7952 = vpack.c.b16 %v6336, %v6328
    %v7953 = vpack.c.b16 %v6337, %v6329
    %v7954 = vpack.c.b16 %v6338, %v6330
    %v7955 = vpack.c.b16 %v6339, %v6331
    %v7956 = vpack.c.b16 %v6348, %v6340
    %v7957 = vpack.c.b16 %v6349, %v6341
    %v7958 = vpack.c.b16 %v6350, %v6342
    %v7959 = vpack.c.b16 %v6351, %v6343
    %v7960 = vpack.c.b16 %v6352, %v6344
    %v7961 = vpack.c.b16 %v6353, %v6345
    %v7962 = vpack.c.b16 %v6354, %v6346
    %v7963 = vpack.c.b16 %v6355, %v6347
    %v7964 = vpack.c.b16 %v6364, %v6356
    %v7965 = vpack.c.b16 %v6365, %v6357
    %v7966 = vpack.c.b16 %v6366, %v6358
    %v7967 = vpack.c.b16 %v6367, %v6359
    %v7968 = vpack.c.b16 %v6368, %v6360
    %v7969 = vpack.c.b16 %v6369, %v6361
    %v7970 = vpack.c.b16 %v6370, %v6362
    %v7971 = vpack.c.b16 %v6371, %v6363
    %v7972 = vpack.c.b16 %v6380, %v6372
    %v7973 = vpack.c.b16 %v6381, %v6373
    %v7974 = vpack.c.b16 %v6382, %v6374
    %v7975 = vpack.c.b16 %v6383, %v6375
    %v7976 = vpack.c.b16 %v6384, %v6376
    %v7977 = vpack.c.b16 %v6385, %v6377
    %v7978 = vpack.c.b16 %v6386, %v6378
    %v7979 = vpack.c.b16 %v6387, %v6379
    %v7980 = vpack.c.b16 %v6396, %v6388
    %v7981 = vpack.c.b16 %v6397, %v6389
    %v7982 = vpack.c.b16 %v6398, %v6390
    %v7983 = vpack.c.b16 %v6399, %v6391
    %v7984 = vpack.c.b16 %v6400, %v6392
    %v7985 = vpack.c.b16 %v6401, %v6393
    %v7986 = vpack.c.b16 %v6402, %v6394
    %v7987 = vpack.c.b16 %v6403, %v6395
    %v7988 = vpack.c.b16 %v6412, %v6404
    %v7989 = vpack.c.b16 %v6413, %v6405
    %v7990 = vpack.c.b16 %v6414, %v6406
    %v7991 = vpack.c.b16 %v6415, %v6407
    %v7992 = vpack.c.b16 %v6416, %v6408
    %v7993 = vpack.c.b16 %v6417, %v6409
    %v7994 = vpack.c.b16 %v6418, %v6410
    %v7995 = vpack.c.b16 %v6419, %v6411
    %v7996 = vpack.c.b16 %v6428, %v6420
    %v7997 = vpack.c.b16 %v6429, %v6421
    %v7998 = vpack.c.b16 %v6430, %v6422
    %v7999 = vpack.c.b16 %v6431, %v6423
    %v8000 = vpack.c.b16 %v6432, %v6424
    %v8001 = vpack.c.b16 %v6433, %v6425
    %v8002 = vpack.c.b16 %v6434, %v6426
    %v8003 = vpack.c.b16 %v6435, %v6427
    %vm9572 = vcmask 523264
    %v9574 = vsel %vm9572, %v121, 0
    %9576 = vmatprep.subr.bf16.mxu0 %v6437
    %9577 = vmatpush1.bf16.msra.mxu0 %v6436
    %9578 = vmatprep.subr.bf16.mxu0 %v6445
    %9579 = vmatpush1.bf16.msra.mxu0 %v6444
    %9580 = vmatprep.subr.bf16.mxu0 %v6453
    %9581 = vmatpush1.bf16.msra.mxu0 %v6452
    %9582 = vmatprep.subr.bf16.mxu0 %v6461
    %9583 = vmatpush1.bf16.msra.mxu0 %v6460
    %9584 = vmatprep.subr.bf16.mxu0 %v6469
    %9585 = vmatpush1.bf16.msra.mxu0 %v6468
    %9586 = vmatprep.subr.bf16.mxu0 %v6477
    %9587 = vmatpush1.bf16.msra.mxu0 %v6476
    %9588 = vmatprep.subr.bf16.mxu0 %v6485
    %9589 = vmatpush1.bf16.msra.mxu0 %v6484
    %9590 = vmatprep.subr.bf16.mxu0 %v6493
    %9591 = vmatpush1.bf16.msra.mxu0 %v6492
    %9592 = vmatprep.subr.bf16.mxu0 %v6501
    %9593 = vmatpush1.bf16.msra.mxu0 %v6500
    %9594 = vmatprep.subr.bf16.mxu0 %v6509
    %9595 = vmatpush1.bf16.msra.mxu0 %v6508
    %9596 = vmatprep.subr.bf16.mxu0 %v6517
    %9597 = vmatpush1.bf16.msra.mxu0 %v6516
    %9598 = vmatprep.subr.bf16.mxu0 %v6525
    %9599 = vmatpush1.bf16.msra.mxu0 %v6524
    %9600 = vmatprep.subr.bf16.mxu0 %v6533
    %9601 = vmatpush1.bf16.msra.mxu0 %v6532
    %9602 = vmatprep.subr.bf16.mxu0 %v6541
    %9603 = vmatpush1.bf16.msra.mxu0 %v6540
    %9604 = vmatprep.subr.bf16.mxu0 %v6549
    %9605 = vmatpush1.bf16.msra.mxu0 %v6548
    %9606 = vmatprep.subr.bf16.mxu0 %v6557
    %9607 = vmatpush1.bf16.msra.mxu0 %v6556
    %9608 = vmatprep.mubr.bf16.mxu0 %v98
    %9609 = vmatmul.mubr.bf16.gmra.mrb[0].mxu0 %v97
    %v9610 = vpop.f32.mrb[0].mxu0
    %v9611 = vadd.f32 %v1695, %v9610
    %v9612 = vpop.f32.mrb[0].mxu0
    %v9613 = vadd.f32 %v1699, %v9612
    %v9614 = vpop.f32.mrb[0].mxu0
    %v9615 = vpop.f32.mrb[0].mxu0
    %9616 = vdwg.mxu0
    %9617 = vmatprep.subr.bf16.mxu0 %v6565
    %9618 = vmatpush1.bf16.msra.mxu0 %v6564
    %9619 = vmatprep.subr.bf16.mxu0 %v6573
    %9620 = vmatpush1.bf16.msra.mxu0 %v6572
    %9621 = vmatprep.subr.bf16.mxu0 %v6581
    %9622 = vmatpush1.bf16.msra.mxu0 %v6580
    %9623 = vmatprep.subr.bf16.mxu0 %v6589
    %9624 = vmatpush1.bf16.msra.mxu0 %v6588
    %9625 = vmatprep.subr.bf16.mxu0 %v6597
    %9626 = vmatpush1.bf16.msra.mxu0 %v6596
    %9627 = vmatprep.subr.bf16.mxu0 %v6605
    %9628 = vmatpush1.bf16.msra.mxu0 %v6604
    %9629 = vmatprep.subr.bf16.mxu0 %v6613
    %9630 = vmatpush1.bf16.msra.mxu0 %v6612
    %9631 = vmatprep.subr.bf16.mxu0 %v6621
    %9632 = vmatpush1.bf16.msra.mxu0 %v6620
    %9633 = vmatprep.subr.bf16.mxu0 %v6629
    %9634 = vmatpush1.bf16.msra.mxu0 %v6628
    %9635 = vmatprep.subr.bf16.mxu0 %v6637
    %9636 = vmatpush1.bf16.msra.mxu0 %v6636
    %9637 = vmatprep.subr.bf16.mxu0 %v6645
    %9638 = vmatpush1.bf16.msra.mxu0 %v6644
    %9639 = vmatprep.subr.bf16.mxu0 %v6653
    %9640 = vmatpush1.bf16.msra.mxu0 %v6652
    %9641 = vmatprep.subr.bf16.mxu0 %v6661
    %9642 = vmatpush1.bf16.msra.mxu0 %v6660
    %9643 = vmatprep.subr.bf16.mxu0 %v6669
    %9644 = vmatpush1.bf16.msra.mxu0 %v6668
    %9645 = vmatprep.subr.bf16.mxu0 %v6677
    %9646 = vmatpush1.bf16.msra.mxu0 %v6676
    %9647 = vmatprep.subr.bf16.mxu0 %v6685
    %9648 = vmatpush1.bf16.msra.mxu0 %v6684
    %9649 = vmatprep.mubr.bf16.mxu0 %v100
    %9650 = vmatmul.mubr.bf16.gmra.mrb[0].mxu0 %v99
    %v9651 = vpop.f32.mrb[0].mxu0
    %v9652 = vadd.f32 %v9611, %v9651
    %v9653 = vpop.f32.mrb[0].mxu0
    %v9654 = vadd.f32 %v9613, %v9653
    %v9655 = vpop.f32.mrb[0].mxu0
    %v9656 = vpop.f32.mrb[0].mxu0
    %9657 = vdwg.mxu0
    %9658 = vmatprep.subr.bf16.mxu0 %v6693
    %9659 = vmatpush1.bf16.msra.mxu0 %v6692
    %9660 = vmatprep.subr.bf16.mxu0 %v6701
    %9661 = vmatpush1.bf16.msra.mxu0 %v6700
    %9662 = vmatprep.subr.bf16.mxu0 %v6709
    %9663 = vmatpush1.bf16.msra.mxu0 %v6708
    %9664 = vmatprep.subr.bf16.mxu0 %v6717
    %9665 = vmatpush1.bf16.msra.mxu0 %v6716
    %9666 = vmatprep.subr.bf16.mxu0 %v6725
    %9667 = vmatpush1.bf16.msra.mxu0 %v6724
    %9668 = vmatprep.subr.bf16.mxu0 %v6733
    %9669 = vmatpush1.bf16.msra.mxu0 %v6732
    %9670 = vmatprep.subr.bf16.mxu0 %v6741
    %9671 = vmatpush1.bf16.msra.mxu0 %v6740
    %9672 = vmatprep.subr.bf16.mxu0 %v6749
    %9673 = vmatpush1.bf16.msra.mxu0 %v6748
    %9674 = vmatprep.subr.bf16.mxu0 %v6757
    %9675 = vmatpush1.bf16.msra.mxu0 %v6756
    %9676 = vmatprep.subr.bf16.mxu0 %v6765
    %9677 = vmatpush1.bf16.msra.mxu0 %v6764
    %9678 = vmatprep.subr.bf16.mxu0 %v6773
    %9679 = vmatpush1.bf16.msra.mxu0 %v6772
    %9680 = vmatprep.subr.bf16.mxu0 %v6781
    %9681 = vmatpush1.bf16.msra.mxu0 %v6780
    %9682 = vmatprep.subr.bf16.mxu0 %v6789
    %9683 = vmatpush1.bf16.msra.mxu0 %v6788
    %9684 = vmatprep.subr.bf16.mxu0 %v6797
    %9685 = vmatpush1.bf16.msra.mxu0 %v6796
    %9686 = vmatprep.subr.bf16.mxu0 %v6805
    %9687 = vmatpush1.bf16.msra.mxu0 %v6804
    %9688 = vmatprep.subr.bf16.mxu0 %v6813
    %9689 = vmatpush1.bf16.msra.mxu0 %v6812
    %9690 = vmatprep.mubr.bf16.mxu0 %v102
    %9691 = vmatmul.mubr.bf16.gmra.mrb[0].mxu0 %v101
    %v9692 = vpop.f32.mrb[0].mxu0
    %v9693 = vadd.f32 %v9652, %v9692
    %v9694 = vpop.f32.mrb[0].mxu0
    %v9695 = vadd.f32 %v9654, %v9694
    %v9696 = vpop.f32.mrb[0].mxu0
    %v9697 = vpop.f32.mrb[0].mxu0
    %9698 = vdwg.mxu0
    %9699 = vmatprep.subr.bf16.mxu0 %v6821
    %9700 = vmatpush1.bf16.msra.mxu0 %v6820
    %9701 = vmatprep.subr.bf16.mxu0 %v6829
    %9702 = vmatpush1.bf16.msra.mxu0 %v6828
    %9703 = vmatprep.subr.bf16.mxu0 %v6837
    %9704 = vmatpush1.bf16.msra.mxu0 %v6836
    %9705 = vmatprep.subr.bf16.mxu0 %v6845
    %9706 = vmatpush1.bf16.msra.mxu0 %v6844
    %9707 = vmatprep.subr.bf16.mxu0 %v6853
    %9708 = vmatpush1.bf16.msra.mxu0 %v6852
    %9709 = vmatprep.subr.bf16.mxu0 %v6861
    %9710 = vmatpush1.bf16.msra.mxu0 %v6860
    %9711 = vmatprep.subr.bf16.mxu0 %v6869
    %9712 = vmatpush1.bf16.msra.mxu0 %v6868
    %9713 = vmatprep.subr.bf16.mxu0 %v6877
    %9714 = vmatpush1.bf16.msra.mxu0 %v6876
    %9715 = vmatprep.subr.bf16.mxu0 %v6885
    %9716 = vmatpush1.bf16.msra.mxu0 %v6884
    %9717 = vmatprep.subr.bf16.mxu0 %v6893
    %9718 = vmatpush1.bf16.msra.mxu0 %v6892
    %9719 = vmatprep.subr.bf16.mxu0 %v6901
    %9720 = vmatpush1.bf16.msra.mxu0 %v6900
    %9721 = vmatprep.subr.bf16.mxu0 %v6909
    %9722 = vmatpush1.bf16.msra.mxu0 %v6908
    %9723 = vmatprep.subr.bf16.mxu0 %v6917
    %9724 = vmatpush1.bf16.msra.mxu0 %v6916
    %9725 = vmatprep.subr.bf16.mxu0 %v6925
    %9726 = vmatpush1.bf16.msra.mxu0 %v6924
    %9727 = vmatprep.subr.bf16.mxu0 %v6933
    %9728 = vmatpush1.bf16.msra.mxu0 %v6932
    %9729 = vmatprep.subr.bf16.mxu0 %v6941
    %9730 = vmatpush1.bf16.msra.mxu0 %v6940
    %9731 = vmatprep.mubr.bf16.mxu0 %v104
    %9732 = vmatmul.mubr.bf16.gmra.mrb[0].mxu0 %v103
    %v9733 = vpop.f32.mrb[0].mxu0
    %v9734 = vadd.f32 %v9693, %v9733
    %v9735 = vpop.f32.mrb[0].mxu0
    %v9736 = vadd.f32 %v9695, %v9735
    %v9737 = vpop.f32.mrb[0].mxu0
    %v9738 = vpop.f32.mrb[0].mxu0
    %9739 = vdwg.mxu0
    %9740 = vmatprep.subr.bf16.mxu0 %v6949
    %9741 = vmatpush1.bf16.msra.mxu0 %v6948
    %9742 = vmatprep.subr.bf16.mxu0 %v6957
    %9743 = vmatpush1.bf16.msra.mxu0 %v6956
    %9744 = vmatprep.subr.bf16.mxu0 %v6965
    %9745 = vmatpush1.bf16.msra.mxu0 %v6964
    %9746 = vmatprep.subr.bf16.mxu0 %v6973
    %9747 = vmatpush1.bf16.msra.mxu0 %v6972
    %9748 = vmatprep.subr.bf16.mxu0 %v6981
    %9749 = vmatpush1.bf16.msra.mxu0 %v6980
    %9750 = vmatprep.subr.bf16.mxu0 %v6989
    %9751 = vmatpush1.bf16.msra.mxu0 %v6988
    %9752 = vmatprep.subr.bf16.mxu0 %v6997
    %9753 = vmatpush1.bf16.msra.mxu0 %v6996
    %9754 = vmatprep.subr.bf16.mxu0 %v7005
    %9755 = vmatpush1.bf16.msra.mxu0 %v7004
    %9756 = vmatprep.subr.bf16.mxu0 %v7013
    %9757 = vmatpush1.bf16.msra.mxu0 %v7012
    %9758 = vmatprep.subr.bf16.mxu0 %v7021
    %9759 = vmatpush1.bf16.msra.mxu0 %v7020
    %9760 = vmatprep.subr.bf16.mxu0 %v7029
    %9761 = vmatpush1.bf16.msra.mxu0 %v7028
    %9762 = vmatprep.subr.bf16.mxu0 %v7037
    %9763 = vmatpush1.bf16.msra.mxu0 %v7036
    %9764 = vmatprep.subr.bf16.mxu0 %v7045
    %9765 = vmatpush1.bf16.msra.mxu0 %v7044
    %9766 = vmatprep.subr.bf16.mxu0 %v7053
    %9767 = vmatpush1.bf16.msra.mxu0 %v7052
    %9768 = vmatprep.subr.bf16.mxu0 %v7061
    %9769 = vmatpush1.bf16.msra.mxu0 %v7060
    %9770 = vmatprep.subr.bf16.mxu0 %v7069
    %9771 = vmatpush1.bf16.msra.mxu0 %v7068
    %9772 = vmatprep.mubr.bf16.mxu0 %v106
    %9773 = vmatmul.mubr.bf16.gmra.mrb[0].mxu0 %v105
    %v9774 = vpop.f32.mrb[0].mxu0
    %v9775 = vadd.f32 %v9734, %v9774
    %v9776 = vpop.f32.mrb[0].mxu0
    %v9777 = vadd.f32 %v9736, %v9776
    %v9778 = vpop.f32.mrb[0].mxu0
    %v9779 = vpop.f32.mrb[0].mxu0
    %9780 = vdwg.mxu0
    %9781 = vmatprep.subr.bf16.mxu0 %v7077
    %9782 = vmatpush1.bf16.msra.mxu0 %v7076
    %9783 = vmatprep.subr.bf16.mxu0 %v7085
    %9784 = vmatpush1.bf16.msra.mxu0 %v7084
    %9785 = vmatprep.subr.bf16.mxu0 %v7093
    %9786 = vmatpush1.bf16.msra.mxu0 %v7092
    %9787 = vmatprep.subr.bf16.mxu0 %v7101
    %9788 = vmatpush1.bf16.msra.mxu0 %v7100
    %9789 = vmatprep.subr.bf16.mxu0 %v7109
    %9790 = vmatpush1.bf16.msra.mxu0 %v7108
    %9791 = vmatprep.subr.bf16.mxu0 %v7117
    %9792 = vmatpush1.bf16.msra.mxu0 %v7116
    %9793 = vmatprep.subr.bf16.mxu0 %v7125
    %9794 = vmatpush1.bf16.msra.mxu0 %v7124
    %9795 = vmatprep.subr.bf16.mxu0 %v7133
    %9796 = vmatpush1.bf16.msra.mxu0 %v7132
    %9797 = vmatprep.subr.bf16.mxu0 %v7141
    %9798 = vmatpush1.bf16.msra.mxu0 %v7140
    %9799 = vmatprep.subr.bf16.mxu0 %v7149
    %9800 = vmatpush1.bf16.msra.mxu0 %v7148
    %9801 = vmatprep.subr.bf16.mxu0 %v7157
    %9802 = vmatpush1.bf16.msra.mxu0 %v7156
    %9803 = vmatprep.subr.bf16.mxu0 %v7165
    %9804 = vmatpush1.bf16.msra.mxu0 %v7164
    %9805 = vmatprep.subr.bf16.mxu0 %v7173
    %9806 = vmatpush1.bf16.msra.mxu0 %v7172
    %9807 = vmatprep.subr.bf16.mxu0 %v7181
    %9808 = vmatpush1.bf16.msra.mxu0 %v7180
    %9809 = vmatprep.subr.bf16.mxu0 %v7189
    %9810 = vmatpush1.bf16.msra.mxu0 %v7188
    %9811 = vmatprep.subr.bf16.mxu0 %v7197
    %9812 = vmatpush1.bf16.msra.mxu0 %v7196
    %9813 = vmatprep.mubr.bf16.mxu0 %v108
    %9814 = vmatmul.mubr.bf16.gmra.mrb[0].mxu0 %v107
    %v9815 = vpop.f32.mrb[0].mxu0
    %v9816 = vadd.f32 %v9775, %v9815
    %v9817 = vpop.f32.mrb[0].mxu0
    %v9818 = vadd.f32 %v9777, %v9817
    %v9819 = vpop.f32.mrb[0].mxu0
    %v9820 = vpop.f32.mrb[0].mxu0
    %9821 = vdwg.mxu0
    %9822 = vmatprep.subr.bf16.mxu0 %v7205
    %9823 = vmatpush1.bf16.msra.mxu0 %v7204
    %9824 = vmatprep.subr.bf16.mxu0 %v7213
    %9825 = vmatpush1.bf16.msra.mxu0 %v7212
    %9826 = vmatprep.subr.bf16.mxu0 %v7221
    %9827 = vmatpush1.bf16.msra.mxu0 %v7220
    %9828 = vmatprep.subr.bf16.mxu0 %v7229
    %9829 = vmatpush1.bf16.msra.mxu0 %v7228
    %9830 = vmatprep.subr.bf16.mxu0 %v7237
    %9831 = vmatpush1.bf16.msra.mxu0 %v7236
    %9832 = vmatprep.subr.bf16.mxu0 %v7245
    %9833 = vmatpush1.bf16.msra.mxu0 %v7244
    %9834 = vmatprep.subr.bf16.mxu0 %v7253
    %9835 = vmatpush1.bf16.msra.mxu0 %v7252
    %9836 = vmatprep.subr.bf16.mxu0 %v7261
    %9837 = vmatpush1.bf16.msra.mxu0 %v7260
    %9838 = vmatprep.subr.bf16.mxu0 %v7269
    %9839 = vmatpush1.bf16.msra.mxu0 %v7268
    %9840 = vmatprep.subr.bf16.mxu0 %v7277
    %9841 = vmatpush1.bf16.msra.mxu0 %v7276
    %9842 = vmatprep.subr.bf16.mxu0 %v7285
    %9843 = vmatpush1.bf16.msra.mxu0 %v7284
    %9844 = vmatprep.subr.bf16.mxu0 %v7293
    %9845 = vmatpush1.bf16.msra.mxu0 %v7292
    %9846 = vmatprep.subr.bf16.mxu0 %v7301
    %9847 = vmatpush1.bf16.msra.mxu0 %v7300
    %9848 = vmatprep.subr.bf16.mxu0 %v7309
    %9849 = vmatpush1.bf16.msra.mxu0 %v7308
    %9850 = vmatprep.subr.bf16.mxu0 %v7317
    %9851 = vmatpush1.bf16.msra.mxu0 %v7316
    %9852 = vmatprep.subr.bf16.mxu0 %v7325
    %9853 = vmatpush1.bf16.msra.mxu0 %v7324
    %9854 = vmatprep.mubr.bf16.mxu0 %v110
    %9855 = vmatmul.mubr.bf16.gmra.mrb[0].mxu0 %v109
    %v9856 = vpop.f32.mrb[0].mxu0
    %v9857 = vadd.f32 %v9816, %v9856
    %v9858 = vpop.f32.mrb[0].mxu0
    %v9859 = vadd.f32 %v9818, %v9858
    %v9860 = vpop.f32.mrb[0].mxu0
    %v9861 = vpop.f32.mrb[0].mxu0
    %9862 = vdwg.mxu0
    %9863 = vmatprep.subr.bf16.mxu0 %v7333
    %9864 = vmatpush1.bf16.msra.mxu0 %v7332
    %9865 = vmatprep.subr.bf16.mxu0 %v7341
    %9866 = vmatpush1.bf16.msra.mxu0 %v7340
    %9867 = vmatprep.subr.bf16.mxu0 %v7349
    %9868 = vmatpush1.bf16.msra.mxu0 %v7348
    %9869 = vmatprep.subr.bf16.mxu0 %v7357
    %9870 = vmatpush1.bf16.msra.mxu0 %v7356
    %9871 = vmatprep.subr.bf16.mxu0 %v7365
    %9872 = vmatpush1.bf16.msra.mxu0 %v7364
    %9873 = vmatprep.subr.bf16.mxu0 %v7373
    %9874 = vmatpush1.bf16.msra.mxu0 %v7372
    %9875 = vmatprep.subr.bf16.mxu0 %v7381
    %9876 = vmatpush1.bf16.msra.mxu0 %v7380
    %9877 = vmatprep.subr.bf16.mxu0 %v7389
    %9878 = vmatpush1.bf16.msra.mxu0 %v7388
    %9879 = vmatprep.subr.bf16.mxu0 %v7397
    %9880 = vmatpush1.bf16.msra.mxu0 %v7396
    %9881 = vmatprep.subr.bf16.mxu0 %v7405
    %9882 = vmatpush1.bf16.msra.mxu0 %v7404
    %9883 = vmatprep.subr.bf16.mxu0 %v7413
    %9884 = vmatpush1.bf16.msra.mxu0 %v7412
    %9885 = vmatprep.subr.bf16.mxu0 %v7421
    %9886 = vmatpush1.bf16.msra.mxu0 %v7420
    %9887 = vmatprep.subr.bf16.mxu0 %v7429
    %9888 = vmatpush1.bf16.msra.mxu0 %v7428
    %9889 = vmatprep.subr.bf16.mxu0 %v7437
    %9890 = vmatpush1.bf16.msra.mxu0 %v7436
    %9891 = vmatprep.subr.bf16.mxu0 %v7445
    %9892 = vmatpush1.bf16.msra.mxu0 %v7444
    %9893 = vmatprep.subr.bf16.mxu0 %v7453
    %9894 = vmatpush1.bf16.msra.mxu0 %v7452
    %9895 = vmatprep.mubr.bf16.mxu0 %v112
    %9896 = vmatmul.mubr.bf16.gmra.mrb[0].mxu0 %v111
    %v9897 = vpop.f32.mrb[0].mxu0
    %v9898 = vadd.f32 %v9857, %v9897
    %v9899 = vpop.f32.mrb[0].mxu0
    %v9900 = vadd.f32 %v9859, %v9899
    %v9901 = vpop.f32.mrb[0].mxu0
    %v9902 = vpop.f32.mrb[0].mxu0
    %9903 = vdwg.mxu0
    %9904 = vmatprep.subr.bf16.mxu0 %v7461
    %9905 = vmatpush1.bf16.msra.mxu0 %v7460
    %9906 = vmatprep.subr.bf16.mxu0 %v7469
    %9907 = vmatpush1.bf16.msra.mxu0 %v7468
    %9908 = vmatprep.subr.bf16.mxu0 %v7477
    %9909 = vmatpush1.bf16.msra.mxu0 %v7476
    %9910 = vmatprep.subr.bf16.mxu0 %v7485
    %9911 = vmatpush1.bf16.msra.mxu0 %v7484
    %9912 = vmatprep.subr.bf16.mxu0 %v7493
    %9913 = vmatpush1.bf16.msra.mxu0 %v7492
    %9914 = vmatprep.subr.bf16.mxu0 %v7501
    %9915 = vmatpush1.bf16.msra.mxu0 %v7500
    %9916 = vmatprep.subr.bf16.mxu0 %v7509
    %9917 = vmatpush1.bf16.msra.mxu0 %v7508
    %9918 = vmatprep.subr.bf16.mxu0 %v7517
    %9919 = vmatpush1.bf16.msra.mxu0 %v7516
    %9920 = vmatprep.subr.bf16.mxu0 %v7525
    %9921 = vmatpush1.bf16.msra.mxu0 %v7524
    %9922 = vmatprep.subr.bf16.mxu0 %v7533
    %9923 = vmatpush1.bf16.msra.mxu0 %v7532
    %9924 = vmatprep.subr.bf16.mxu0 %v7541
    %9925 = vmatpush1.bf16.msra.mxu0 %v7540
    %9926 = vmatprep.subr.bf16.mxu0 %v7549
    %9927 = vmatpush1.bf16.msra.mxu0 %v7548
    %9928 = vmatprep.subr.bf16.mxu0 %v7557
    %9929 = vmatpush1.bf16.msra.mxu0 %v7556
    %9930 = vmatprep.subr.bf16.mxu0 %v7565
    %9931 = vmatpush1.bf16.msra.mxu0 %v7564
    %9932 = vmatprep.subr.bf16.mxu0 %v7573
    %9933 = vmatpush1.bf16.msra.mxu0 %v7572
    %9934 = vmatprep.subr.bf16.mxu0 %v7581
    %9935 = vmatpush1.bf16.msra.mxu0 %v7580
    %9936 = vmatprep.mubr.bf16.mxu0 %v114
    %9937 = vmatmul.mubr.bf16.gmra.mrb[0].mxu0 %v113
    %v9938 = vpop.f32.mrb[0].mxu0
    %v9939 = vadd.f32 %v9898, %v9938
    %v9940 = vpop.f32.mrb[0].mxu0
    %v9941 = vadd.f32 %v9900, %v9940
    %v9942 = vpop.f32.mrb[0].mxu0
    %v9943 = vpop.f32.mrb[0].mxu0
    %9944 = vdwg.mxu0
    %9945 = vmatprep.subr.bf16.mxu0 %v7589
    %9946 = vmatpush1.bf16.msra.mxu0 %v7588
    %9947 = vmatprep.subr.bf16.mxu0 %v7597
    %9948 = vmatpush1.bf16.msra.mxu0 %v7596
    %9949 = vmatprep.subr.bf16.mxu0 %v7605
    %9950 = vmatpush1.bf16.msra.mxu0 %v7604
    %9951 = vmatprep.subr.bf16.mxu0 %v7613
    %9952 = vmatpush1.bf16.msra.mxu0 %v7612
    %9953 = vmatprep.subr.bf16.mxu0 %v7621
    %9954 = vmatpush1.bf16.msra.mxu0 %v7620
    %9955 = vmatprep.subr.bf16.mxu0 %v7629
    %9956 = vmatpush1.bf16.msra.mxu0 %v7628
    %9957 = vmatprep.subr.bf16.mxu0 %v7637
    %9958 = vmatpush1.bf16.msra.mxu0 %v7636
    %9959 = vmatprep.subr.bf16.mxu0 %v7645
    %9960 = vmatpush1.bf16.msra.mxu0 %v7644
    %9961 = vmatprep.subr.bf16.mxu0 %v7653
    %9962 = vmatpush1.bf16.msra.mxu0 %v7652
    %9963 = vmatprep.subr.bf16.mxu0 %v7661
    %9964 = vmatpush1.bf16.msra.mxu0 %v7660
    %9965 = vmatprep.subr.bf16.mxu0 %v7669
    %9966 = vmatpush1.bf16.msra.mxu0 %v7668
    %9967 = vmatprep.subr.bf16.mxu0 %v7677
    %9968 = vmatpush1.bf16.msra.mxu0 %v7676
    %9969 = vmatprep.subr.bf16.mxu0 %v7685
    %9970 = vmatpush1.bf16.msra.mxu0 %v7684
    %9971 = vmatprep.subr.bf16.mxu0 %v7693
    %9972 = vmatpush1.bf16.msra.mxu0 %v7692
    %9973 = vmatprep.subr.bf16.mxu0 %v7701
    %9974 = vmatpush1.bf16.msra.mxu0 %v7700
    %9975 = vmatprep.subr.bf16.mxu0 %v7709
    %9976 = vmatpush1.bf16.msra.mxu0 %v7708
    %9977 = vmatprep.mubr.bf16.mxu0 %v116
    %9978 = vmatmul.mubr.bf16.gmra.mrb[0].mxu0 %v115
    %v9979 = vpop.f32.mrb[0].mxu0
    %v9980 = vadd.f32 %v9939, %v9979
    %v9981 = vpop.f32.mrb[0].mxu0
    %v9982 = vadd.f32 %v9941, %v9981
    %v9983 = vpop.f32.mrb[0].mxu0
    %v9984 = vpop.f32.mrb[0].mxu0
    %9985 = vdwg.mxu0
    %9986 = vmatprep.subr.bf16.mxu0 %v7717
    %9987 = vmatpush1.bf16.msra.mxu0 %v7716
    %9988 = vmatprep.subr.bf16.mxu0 %v7725
    %9989 = vmatpush1.bf16.msra.mxu0 %v7724
    %9990 = vmatprep.subr.bf16.mxu0 %v7733
    %9991 = vmatpush1.bf16.msra.mxu0 %v7732
    %9992 = vmatprep.subr.bf16.mxu0 %v7741
    %9993 = vmatpush1.bf16.msra.mxu0 %v7740
    %9994 = vmatprep.subr.bf16.mxu0 %v7749
    %9995 = vmatpush1.bf16.msra.mxu0 %v7748
    %9996 = vmatprep.subr.bf16.mxu0 %v7757
    %9997 = vmatpush1.bf16.msra.mxu0 %v7756
    %9998 = vmatprep.subr.bf16.mxu0 %v7765
    %9999 = vmatpush1.bf16.msra.mxu0 %v7764
    %10000 = vmatprep.subr.bf16.mxu0 %v7773
    %10001 = vmatpush1.bf16.msra.mxu0 %v7772
    %10002 = vmatprep.subr.bf16.mxu0 %v7781
    %10003 = vmatpush1.bf16.msra.mxu0 %v7780
    %10004 = vmatprep.subr.bf16.mxu0 %v7789
    %10005 = vmatpush1.bf16.msra.mxu0 %v7788
    %10006 = vmatprep.subr.bf16.mxu0 %v7797
    %10007 = vmatpush1.bf16.msra.mxu0 %v7796
    %10008 = vmatprep.subr.bf16.mxu0 %v7805
    %10009 = vmatpush1.bf16.msra.mxu0 %v7804
    %10010 = vmatprep.subr.bf16.mxu0 %v7813
    %10011 = vmatpush1.bf16.msra.mxu0 %v7812
    %10012 = vmatprep.subr.bf16.mxu0 %v7821
    %10013 = vmatpush1.bf16.msra.mxu0 %v7820
    %10014 = vmatprep.subr.bf16.mxu0 %v7829
    %10015 = vmatpush1.bf16.msra.mxu0 %v7828
    %10016 = vmatprep.subr.bf16.mxu0 %v7837
    %10017 = vmatpush1.bf16.msra.mxu0 %v7836
    %10018 = vmatprep.mubr.bf16.mxu0 %v118
    %10019 = vmatmul.mubr.bf16.gmra.mrb[0].mxu0 %v117
    %v10020 = vpop.f32.mrb[0].mxu0
    %v10021 = vadd.f32 %v9980, %v10020
    %v10022 = vpop.f32.mrb[0].mxu0
    %v10023 = vadd.f32 %v9982, %v10022
    %v10024 = vpop.f32.mrb[0].mxu0
    %v10025 = vpop.f32.mrb[0].mxu0
    %10026 = vdwg.mxu0
    %10027 = vmatprep.subr.bf16.mxu0 %v7845
    %10028 = vmatpush1.bf16.msra.mxu0 %v7844
    %10029 = vmatprep.subr.bf16.mxu0 %v7853
    %10030 = vmatpush1.bf16.msra.mxu0 %v7852
    %10031 = vmatprep.subr.bf16.mxu0 %v7861
    %10032 = vmatpush1.bf16.msra.mxu0 %v7860
    %10033 = vmatprep.subr.bf16.mxu0 %v7869
    %10034 = vmatpush1.bf16.msra.mxu0 %v7868
    %10035 = vmatprep.subr.bf16.mxu0 %v7877
    %10036 = vmatpush1.bf16.msra.mxu0 %v7876
    %10037 = vmatprep.subr.bf16.mxu0 %v7885
    %10038 = vmatpush1.bf16.msra.mxu0 %v7884
    %10039 = vmatprep.subr.bf16.mxu0 %v7893
    %10040 = vmatpush1.bf16.msra.mxu0 %v7892
    %10041 = vmatprep.subr.bf16.mxu0 %v7901
    %10042 = vmatpush1.bf16.msra.mxu0 %v7900
    %10043 = vmatprep.subr.bf16.mxu0 %v7909
    %10044 = vmatpush1.bf16.msra.mxu0 %v7908
    %10045 = vmatprep.subr.bf16.mxu0 %v7917
    %10046 = vmatpush1.bf16.msra.mxu0 %v7916
    %10047 = vmatprep.subr.bf16.mxu0 %v7925
    %10048 = vmatpush1.bf16.msra.mxu0 %v7924
    %10049 = vmatprep.subr.bf16.mxu0 %v7933
    %10050 = vmatpush1.bf16.msra.mxu0 %v7932
    %10051 = vmatprep.subr.bf16.mxu0 %v7941
    %10052 = vmatpush1.bf16.msra.mxu0 %v7940
    %10053 = vmatprep.subr.bf16.mxu0 %v7949
    %10054 = vmatpush1.bf16.msra.mxu0 %v7948
    %10055 = vmatprep.subr.bf16.mxu0 %v7957
    %10056 = vmatpush1.bf16.msra.mxu0 %v7956
    %10057 = vmatprep.subr.bf16.mxu0 %v7965
    %10058 = vmatpush1.bf16.msra.mxu0 %v7964
    %10059 = vmatprep.mubr.bf16.mxu0 %v120
    %10060 = vmatmul.mubr.bf16.gmra.mrb[0].mxu0 %v119
    %v10061 = vpop.f32.mrb[0].mxu0
    %v10062 = vadd.f32 %v10021, %v10061
    %v10063 = vpop.f32.mrb[0].mxu0
    %v10064 = vadd.f32 %v10023, %v10063
    %v10065 = vpop.f32.mrb[0].mxu0
    %v10066 = vpop.f32.mrb[0].mxu0
    %10067 = vdwg.mxu0
    %10068 = vmatprep.subr.bf16.mxu0 %v7973
    %10069 = vmatpush1.bf16.msra.mxu0 %v7972
    %10070 = vmatprep.subr.bf16.mxu0 %v7981
    %10071 = vmatpush1.bf16.msra.mxu0 %v7980
    %10072 = vmatprep.subr.bf16.mxu0 %v7989
    %10073 = vmatpush1.bf16.msra.mxu0 %v7988
    %10074 = vmatprep.subr.bf16.mxu0 %v7997
    %10075 = vmatpush1.bf16.msra.mxu0 %v7996
    %10076 = vmatprep.subr.bf16.mxu0 0
    %10077 = vmatpush1.bf16.msra.mxu0 0
    %10078 = vmatprep.subr.bf16.mxu0 0
    %10079 = vmatpush1.bf16.msra.mxu0 0
    %10080 = vmatprep.subr.bf16.mxu0 0
    %10081 = vmatpush1.bf16.msra.mxu0 0
    %10082 = vmatprep.subr.bf16.mxu0 0
    %10083 = vmatpush1.bf16.msra.mxu0 0
    %10084 = vmatprep.subr.bf16.mxu0 0
    %10085 = vmatpush1.bf16.msra.mxu0 0
    %10086 = vmatprep.subr.bf16.mxu0 0
    %10087 = vmatpush1.bf16.msra.mxu0 0
    %10088 = vmatprep.subr.bf16.mxu0 0
    %10089 = vmatpush1.bf16.msra.mxu0 0
    %10090 = vmatprep.subr.bf16.mxu0 0
    %10091 = vmatpush1.bf16.msra.mxu0 0
    %10092 = vmatprep.subr.bf16.mxu0 0
    %10093 = vmatpush1.bf16.msra.mxu0 0
    %10094 = vmatprep.subr.bf16.mxu0 0
    %10095 = vmatpush1.bf16.msra.mxu0 0
    %10096 = vmatprep.subr.bf16.mxu0 0
    %10097 = vmatpush1.bf16.msra.mxu0 0
    %10098 = vmatprep.subr.bf16.mxu0 0
    %10099 = vmatpush1.bf16.msra.mxu0 0
    %10100 = vmatprep.mubr.bf16.mxu0 0
    %10101 = vmatmul.mubr.bf16.gmra.mrb[0].mxu0 %v9574
    %v10102 = vpop.f32.mrb[0].mxu0
    %v10103 = vadd.f32 %v10062, %v10102
    %v10104 = vpop.f32.mrb[0].mxu0
    %v10105 = vadd.f32 %v10064, %v10104
    %v10106 = vpop.f32.mrb[0].mxu0
    %v10107 = vpop.f32.mrb[0].mxu0
    %10108 = vdwg.mxu0
    %10109 = vmatprep.subr.bf16.mxu0 %v6439
    %10110 = vmatpush1.bf16.msra.mxu0 %v6438
    %10111 = vmatprep.subr.bf16.mxu0 %v6447
    %10112 = vmatpush1.bf16.msra.mxu0 %v6446
    %10113 = vmatprep.subr.bf16.mxu0 %v6455
    %10114 = vmatpush1.bf16.msra.mxu0 %v6454
    %10115 = vmatprep.subr.bf16.mxu0 %v6463
    %10116 = vmatpush1.bf16.msra.mxu0 %v6462
    %10117 = vmatprep.subr.bf16.mxu0 %v6471
    %10118 = vmatpush1.bf16.msra.mxu0 %v6470
    %10119 = vmatprep.subr.bf16.mxu0 %v6479
    %10120 = vmatpush1.bf16.msra.mxu0 %v6478
    %10121 = vmatprep.subr.bf16.mxu0 %v6487
    %10122 = vmatpush1.bf16.msra.mxu0 %v6486
    %10123 = vmatprep.subr.bf16.mxu0 %v6495
    %10124 = vmatpush1.bf16.msra.mxu0 %v6494
    %10125 = vmatprep.subr.bf16.mxu0 %v6503
    %10126 = vmatpush1.bf16.msra.mxu0 %v6502
    %10127 = vmatprep.subr.bf16.mxu0 %v6511
    %10128 = vmatpush1.bf16.msra.mxu0 %v6510
    %10129 = vmatprep.subr.bf16.mxu0 %v6519
    %10130 = vmatpush1.bf16.msra.mxu0 %v6518
    %10131 = vmatprep.subr.bf16.mxu0 %v6527
    %10132 = vmatpush1.bf16.msra.mxu0 %v6526
    %10133 = vmatprep.subr.bf16.mxu0 %v6535
    %10134 = vmatpush1.bf16.msra.mxu0 %v6534
    %10135 = vmatprep.subr.bf16.mxu0 %v6543
    %10136 = vmatpush1.bf16.msra.mxu0 %v6542
    %10137 = vmatprep.subr.bf16.mxu0 %v6551
    %10138 = vmatpush1.bf16.msra.mxu0 %v6550
    %10139 = vmatprep.subr.bf16.mxu0 %v6559
    %10140 = vmatpush1.bf16.msra.mxu0 %v6558
    %10141 = vmatprep.mubr.bf16.mxu0 %v98
    %10142 = vmatmul.mubr.bf16.gmra.mrb[0].mxu0 %v97
    %v10143 = vpop.f32.mrb[0].mxu0
    %v10144 = vadd.f32 %v1703, %v10143
    %v10145 = vpop.f32.mrb[0].mxu0
    %v10146 = vadd.f32 %v1707, %v10145
    %v10147 = vpop.f32.mrb[0].mxu0
    %v10148 = vpop.f32.mrb[0].mxu0
    %10149 = vdwg.mxu0
    %10150 = vmatprep.subr.bf16.mxu0 %v6567
    %10151 = vmatpush1.bf16.msra.mxu0 %v6566
    %10152 = vmatprep.subr.bf16.mxu0 %v6575
    %10153 = vmatpush1.bf16.msra.mxu0 %v6574
    %10154 = vmatprep.subr.bf16.mxu0 %v6583
    %10155 = vmatpush1.bf16.msra.mxu0 %v6582
    %10156 = vmatprep.subr.bf16.mxu0 %v6591
    %10157 = vmatpush1.bf16.msra.mxu0 %v6590
    %10158 = vmatprep.subr.bf16.mxu0 %v6599
    %10159 = vmatpush1.bf16.msra.mxu0 %v6598
    %10160 = vmatprep.subr.bf16.mxu0 %v6607
    %10161 = vmatpush1.bf16.msra.mxu0 %v6606
    %10162 = vmatprep.subr.bf16.mxu0 %v6615
    %10163 = vmatpush1.bf16.msra.mxu0 %v6614
    %10164 = vmatprep.subr.bf16.mxu0 %v6623
    %10165 = vmatpush1.bf16.msra.mxu0 %v6622
    %10166 = vmatprep.subr.bf16.mxu0 %v6631
    %10167 = vmatpush1.bf16.msra.mxu0 %v6630
    %10168 = vmatprep.subr.bf16.mxu0 %v6639
    %10169 = vmatpush1.bf16.msra.mxu0 %v6638
    %10170 = vmatprep.subr.bf16.mxu0 %v6647
    %10171 = vmatpush1.bf16.msra.mxu0 %v6646
    %10172 = vmatprep.subr.bf16.mxu0 %v6655
    %10173 = vmatpush1.bf16.msra.mxu0 %v6654
    %10174 = vmatprep.subr.bf16.mxu0 %v6663
    %10175 = vmatpush1.bf16.msra.mxu0 %v6662
    %10176 = vmatprep.subr.bf16.mxu0 %v6671
    %10177 = vmatpush1.bf16.msra.mxu0 %v6670
    %10178 = vmatprep.subr.bf16.mxu0 %v6679
    %10179 = vmatpush1.bf16.msra.mxu0 %v6678
    %10180 = vmatprep.subr.bf16.mxu0 %v6687
    %10181 = vmatpush1.bf16.msra.mxu0 %v6686
    %10182 = vmatprep.mubr.bf16.mxu0 %v100
    %10183 = vmatmul.mubr.bf16.gmra.mrb[0].mxu0 %v99
    %v10184 = vpop.f32.mrb[0].mxu0
    %v10185 = vadd.f32 %v10144, %v10184
    %v10186 = vpop.f32.mrb[0].mxu0
    %v10187 = vadd.f32 %v10146, %v10186
    %v10188 = vpop.f32.mrb[0].mxu0
    %v10189 = vpop.f32.mrb[0].mxu0
    %10190 = vdwg.mxu0
    %10191 = vmatprep.subr.bf16.mxu0 %v6695
    %10192 = vmatpush1.bf16.msra.mxu0 %v6694
    %10193 = vmatprep.subr.bf16.mxu0 %v6703
    %10194 = vmatpush1.bf16.msra.mxu0 %v6702
    %10195 = vmatprep.subr.bf16.mxu0 %v6711
    %10196 = vmatpush1.bf16.msra.mxu0 %v6710
    %10197 = vmatprep.subr.bf16.mxu0 %v6719
    %10198 = vmatpush1.bf16.msra.mxu0 %v6718
    %10199 = vmatprep.subr.bf16.mxu0 %v6727
    %10200 = vmatpush1.bf16.msra.mxu0 %v6726
    %10201 = vmatprep.subr.bf16.mxu0 %v6735
    %10202 = vmatpush1.bf16.msra.mxu0 %v6734
    %10203 = vmatprep.subr.bf16.mxu0 %v6743
    %10204 = vmatpush1.bf16.msra.mxu0 %v6742
    %10205 = vmatprep.subr.bf16.mxu0 %v6751
    %10206 = vmatpush1.bf16.msra.mxu0 %v6750
    %10207 = vmatprep.subr.bf16.mxu0 %v6759
    %10208 = vmatpush1.bf16.msra.mxu0 %v6758
    %10209 = vmatprep.subr.bf16.mxu0 %v6767
    %10210 = vmatpush1.bf16.msra.mxu0 %v6766
    %10211 = vmatprep.subr.bf16.mxu0 %v6775
    %10212 = vmatpush1.bf16.msra.mxu0 %v6774
    %10213 = vmatprep.subr.bf16.mxu0 %v6783
    %10214 = vmatpush1.bf16.msra.mxu0 %v6782
    %10215 = vmatprep.subr.bf16.mxu0 %v6791
    %10216 = vmatpush1.bf16.msra.mxu0 %v6790
    %10217 = vmatprep.subr.bf16.mxu0 %v6799
    %10218 = vmatpush1.bf16.msra.mxu0 %v6798
    %10219 = vmatprep.subr.bf16.mxu0 %v6807
    %10220 = vmatpush1.bf16.msra.mxu0 %v6806
    %10221 = vmatprep.subr.bf16.mxu0 %v6815
    %10222 = vmatpush1.bf16.msra.mxu0 %v6814
    %10223 = vmatprep.mubr.bf16.mxu0 %v102
    %10224 = vmatmul.mubr.bf16.gmra.mrb[0].mxu0 %v101
    %v10225 = vpop.f32.mrb[0].mxu0
    %v10226 = vadd.f32 %v10185, %v10225
    %v10227 = vpop.f32.mrb[0].mxu0
    %v10228 = vadd.f32 %v10187, %v10227
    %v10229 = vpop.f32.mrb[0].mxu0
    %v10230 = vpop.f32.mrb[0].mxu0
    %10231 = vdwg.mxu0
    %10232 = vmatprep.subr.bf16.mxu0 %v6823
    %10233 = vmatpush1.bf16.msra.mxu0 %v6822
    %10234 = vmatprep.subr.bf16.mxu0 %v6831
    %10235 = vmatpush1.bf16.msra.mxu0 %v6830
    %10236 = vmatprep.subr.bf16.mxu0 %v6839
    %10237 = vmatpush1.bf16.msra.mxu0 %v6838
    %10238 = vmatprep.subr.bf16.mxu0 %v6847
    %10239 = vmatpush1.bf16.msra.mxu0 %v6846
    %10240 = vmatprep.subr.bf16.mxu0 %v6855
    %10241 = vmatpush1.bf16.msra.mxu0 %v6854
    %10242 = vmatprep.subr.bf16.mxu0 %v6863
    %10243 = vmatpush1.bf16.msra.mxu0 %v6862
    %10244 = vmatprep.subr.bf16.mxu0 %v6871
    %10245 = vmatpush1.bf16.msra.mxu0 %v6870
    %10246 = vmatprep.subr.bf16.mxu0 %v6879
    %10247 = vmatpush1.bf16.msra.mxu0 %v6878
    %10248 = vmatprep.subr.bf16.mxu0 %v6887
    %10249 = vmatpush1.bf16.msra.mxu0 %v6886
    %10250 = vmatprep.subr.bf16.mxu0 %v6895
    %10251 = vmatpush1.bf16.msra.mxu0 %v6894
    %10252 = vmatprep.subr.bf16.mxu0 %v6903
    %10253 = vmatpush1.bf16.msra.mxu0 %v6902
    %10254 = vmatprep.subr.bf16.mxu0 %v6911
    %10255 = vmatpush1.bf16.msra.mxu0 %v6910
    %10256 = vmatprep.subr.bf16.mxu0 %v6919
    %10257 = vmatpush1.bf16.msra.mxu0 %v6918
    %10258 = vmatprep.subr.bf16.mxu0 %v6927
    %10259 = vmatpush1.bf16.msra.mxu0 %v6926
    %10260 = vmatprep.subr.bf16.mxu0 %v6935
    %10261 = vmatpush1.bf16.msra.mxu0 %v6934
    %10262 = vmatprep.subr.bf16.mxu0 %v6943
    %10263 = vmatpush1.bf16.msra.mxu0 %v6942
    %10264 = vmatprep.mubr.bf16.mxu0 %v104
    %10265 = vmatmul.mubr.bf16.gmra.mrb[0].mxu0 %v103
    %v10266 = vpop.f32.mrb[0].mxu0
    %v10267 = vadd.f32 %v10226, %v10266
    %v10268 = vpop.f32.mrb[0].mxu0
    %v10269 = vadd.f32 %v10228, %v10268
    %v10270 = vpop.f32.mrb[0].mxu0
    %v10271 = vpop.f32.mrb[0].mxu0
    %10272 = vdwg.mxu0
    %10273 = vmatprep.subr.bf16.mxu0 %v6951
    %10274 = vmatpush1.bf16.msra.mxu0 %v6950
    %10275 = vmatprep.subr.bf16.mxu0 %v6959
    %10276 = vmatpush1.bf16.msra.mxu0 %v6958
    %10277 = vmatprep.subr.bf16.mxu0 %v6967
    %10278 = vmatpush1.bf16.msra.mxu0 %v6966
    %10279 = vmatprep.subr.bf16.mxu0 %v6975
    %10280 = vmatpush1.bf16.msra.mxu0 %v6974
    %10281 = vmatprep.subr.bf16.mxu0 %v6983
    %10282 = vmatpush1.bf16.msra.mxu0 %v6982
    %10283 = vmatprep.subr.bf16.mxu0 %v6991
    %10284 = vmatpush1.bf16.msra.mxu0 %v6990
    %10285 = vmatprep.subr.bf16.mxu0 %v6999
    %10286 = vmatpush1.bf16.msra.mxu0 %v6998
    %10287 = vmatprep.subr.bf16.mxu0 %v7007
    %10288 = vmatpush1.bf16.msra.mxu0 %v7006
    %10289 = vmatprep.subr.bf16.mxu0 %v7015
    %10290 = vmatpush1.bf16.msra.mxu0 %v7014
    %10291 = vmatprep.subr.bf16.mxu0 %v7023
    %10292 = vmatpush1.bf16.msra.mxu0 %v7022
    %10293 = vmatprep.subr.bf16.mxu0 %v7031
    %10294 = vmatpush1.bf16.msra.mxu0 %v7030
    %10295 = vmatprep.subr.bf16.mxu0 %v7039
    %10296 = vmatpush1.bf16.msra.mxu0 %v7038
    %10297 = vmatprep.subr.bf16.mxu0 %v7047
    %10298 = vmatpush1.bf16.msra.mxu0 %v7046
    %10299 = vmatprep.subr.bf16.mxu0 %v7055
    %10300 = vmatpush1.bf16.msra.mxu0 %v7054
    %10301 = vmatprep.subr.bf16.mxu0 %v7063
    %10302 = vmatpush1.bf16.msra.mxu0 %v7062
    %10303 = vmatprep.subr.bf16.mxu0 %v7071
    %10304 = vmatpush1.bf16.msra.mxu0 %v7070
    %10305 = vmatprep.mubr.bf16.mxu0 %v106
    %10306 = vmatmul.mubr.bf16.gmra.mrb[0].mxu0 %v105
    %v10307 = vpop.f32.mrb[0].mxu0
    %v10308 = vadd.f32 %v10267, %v10307
    %v10309 = vpop.f32.mrb[0].mxu0
    %v10310 = vadd.f32 %v10269, %v10309
    %v10311 = vpop.f32.mrb[0].mxu0
    %v10312 = vpop.f32.mrb[0].mxu0
    %10313 = vdwg.mxu0
    %10314 = vmatprep.subr.bf16.mxu0 %v7079
    %10315 = vmatpush1.bf16.msra.mxu0 %v7078
    %10316 = vmatprep.subr.bf16.mxu0 %v7087
    %10317 = vmatpush1.bf16.msra.mxu0 %v7086
    %10318 = vmatprep.subr.bf16.mxu0 %v7095
    %10319 = vmatpush1.bf16.msra.mxu0 %v7094
    %10320 = vmatprep.subr.bf16.mxu0 %v7103
    %10321 = vmatpush1.bf16.msra.mxu0 %v7102
    %10322 = vmatprep.subr.bf16.mxu0 %v7111
    %10323 = vmatpush1.bf16.msra.mxu0 %v7110
    %10324 = vmatprep.subr.bf16.mxu0 %v7119
    %10325 = vmatpush1.bf16.msra.mxu0 %v7118
    %10326 = vmatprep.subr.bf16.mxu0 %v7127
    %10327 = vmatpush1.bf16.msra.mxu0 %v7126
    %10328 = vmatprep.subr.bf16.mxu0 %v7135
    %10329 = vmatpush1.bf16.msra.mxu0 %v7134
    %10330 = vmatprep.subr.bf16.mxu0 %v7143
    %10331 = vmatpush1.bf16.msra.mxu0 %v7142
    %10332 = vmatprep.subr.bf16.mxu0 %v7151
    %10333 = vmatpush1.bf16.msra.mxu0 %v7150
    %10334 = vmatprep.subr.bf16.mxu0 %v7159
    %10335 = vmatpush1.bf16.msra.mxu0 %v7158
    %10336 = vmatprep.subr.bf16.mxu0 %v7167
    %10337 = vmatpush1.bf16.msra.mxu0 %v7166
    %10338 = vmatprep.subr.bf16.mxu0 %v7175
    %10339 = vmatpush1.bf16.msra.mxu0 %v7174
    %10340 = vmatprep.subr.bf16.mxu0 %v7183
    %10341 = vmatpush1.bf16.msra.mxu0 %v7182
    %10342 = vmatprep.subr.bf16.mxu0 %v7191
    %10343 = vmatpush1.bf16.msra.mxu0 %v7190
    %10344 = vmatprep.subr.bf16.mxu0 %v7199
    %10345 = vmatpush1.bf16.msra.mxu0 %v7198
    %10346 = vmatprep.mubr.bf16.mxu0 %v108
    %10347 = vmatmul.mubr.bf16.gmra.mrb[0].mxu0 %v107
    %v10348 = vpop.f32.mrb[0].mxu0
    %v10349 = vadd.f32 %v10308, %v10348
    %v10350 = vpop.f32.mrb[0].mxu0
    %v10351 = vadd.f32 %v10310, %v10350
    %v10352 = vpop.f32.mrb[0].mxu0
    %v10353 = vpop.f32.mrb[0].mxu0
    %10354 = vdwg.mxu0
    %10355 = vmatprep.subr.bf16.mxu0 %v7207
    %10356 = vmatpush1.bf16.msra.mxu0 %v7206
    %10357 = vmatprep.subr.bf16.mxu0 %v7215
    %10358 = vmatpush1.bf16.msra.mxu0 %v7214
    %10359 = vmatprep.subr.bf16.mxu0 %v7223
    %10360 = vmatpush1.bf16.msra.mxu0 %v7222
    %10361 = vmatprep.subr.bf16.mxu0 %v7231
    %10362 = vmatpush1.bf16.msra.mxu0 %v7230
    %10363 = vmatprep.subr.bf16.mxu0 %v7239
    %10364 = vmatpush1.bf16.msra.mxu0 %v7238
    %10365 = vmatprep.subr.bf16.mxu0 %v7247
    %10366 = vmatpush1.bf16.msra.mxu0 %v7246
    %10367 = vmatprep.subr.bf16.mxu0 %v7255
    %10368 = vmatpush1.bf16.msra.mxu0 %v7254
    %10369 = vmatprep.subr.bf16.mxu0 %v7263
    %10370 = vmatpush1.bf16.msra.mxu0 %v7262
    %10371 = vmatprep.subr.bf16.mxu0 %v7271
    %10372 = vmatpush1.bf16.msra.mxu0 %v7270
    %10373 = vmatprep.subr.bf16.mxu0 %v7279
    %10374 = vmatpush1.bf16.msra.mxu0 %v7278
    %10375 = vmatprep.subr.bf16.mxu0 %v7287
    %10376 = vmatpush1.bf16.msra.mxu0 %v7286
    %10377 = vmatprep.subr.bf16.mxu0 %v7295
    %10378 = vmatpush1.bf16.msra.mxu0 %v7294
    %10379 = vmatprep.subr.bf16.mxu0 %v7303
    %10380 = vmatpush1.bf16.msra.mxu0 %v7302
    %10381 = vmatprep.subr.bf16.mxu0 %v7311
    %10382 = vmatpush1.bf16.msra.mxu0 %v7310
    %10383 = vmatprep.subr.bf16.mxu0 %v7319
    %10384 = vmatpush1.bf16.msra.mxu0 %v7318
    %10385 = vmatprep.subr.bf16.mxu0 %v7327
    %10386 = vmatpush1.bf16.msra.mxu0 %v7326
    %10387 = vmatprep.mubr.bf16.mxu0 %v110
    %10388 = vmatmul.mubr.bf16.gmra.mrb[0].mxu0 %v109
    %v10389 = vpop.f32.mrb[0].mxu0
    %v10390 = vadd.f32 %v10349, %v10389
    %v10391 = vpop.f32.mrb[0].mxu0
    %v10392 = vadd.f32 %v10351, %v10391
    %v10393 = vpop.f32.mrb[0].mxu0
    %v10394 = vpop.f32.mrb[0].mxu0
    %10395 = vdwg.mxu0
    %10396 = vmatprep.subr.bf16.mxu0 %v7335
    %10397 = vmatpush1.bf16.msra.mxu0 %v7334
    %10398 = vmatprep.subr.bf16.mxu0 %v7343
    %10399 = vmatpush1.bf16.msra.mxu0 %v7342
    %10400 = vmatprep.subr.bf16.mxu0 %v7351
    %10401 = vmatpush1.bf16.msra.mxu0 %v7350
    %10402 = vmatprep.subr.bf16.mxu0 %v7359
    %10403 = vmatpush1.bf16.msra.mxu0 %v7358
    %10404 = vmatprep.subr.bf16.mxu0 %v7367
    %10405 = vmatpush1.bf16.msra.mxu0 %v7366
    %10406 = vmatprep.subr.bf16.mxu0 %v7375
    %10407 = vmatpush1.bf16.msra.mxu0 %v7374
    %10408 = vmatprep.subr.bf16.mxu0 %v7383
    %10409 = vmatpush1.bf16.msra.mxu0 %v7382
    %10410 = vmatprep.subr.bf16.mxu0 %v7391
    %10411 = vmatpush1.bf16.msra.mxu0 %v7390
    %10412 = vmatprep.subr.bf16.mxu0 %v7399
    %10413 = vmatpush1.bf16.msra.mxu0 %v7398
    %10414 = vmatprep.subr.bf16.mxu0 %v7407
    %10415 = vmatpush1.bf16.msra.mxu0 %v7406
    %10416 = vmatprep.subr.bf16.mxu0 %v7415
    %10417 = vmatpush1.bf16.msra.mxu0 %v7414
    %10418 = vmatprep.subr.bf16.mxu0 %v7423
    %10419 = vmatpush1.bf16.msra.mxu0 %v7422
    %10420 = vmatprep.subr.bf16.mxu0 %v7431
    %10421 = vmatpush1.bf16.msra.mxu0 %v7430
    %10422 = vmatprep.subr.bf16.mxu0 %v7439
    %10423 = vmatpush1.bf16.msra.mxu0 %v7438
    %10424 = vmatprep.subr.bf16.mxu0 %v7447
    %10425 = vmatpush1.bf16.msra.mxu0 %v7446
    %10426 = vmatprep.subr.bf16.mxu0 %v7455
    %10427 = vmatpush1.bf16.msra.mxu0 %v7454
    %10428 = vmatprep.mubr.bf16.mxu0 %v112
    %10429 = vmatmul.mubr.bf16.gmra.mrb[0].mxu0 %v111
    %v10430 = vpop.f32.mrb[0].mxu0
    %v10431 = vadd.f32 %v10390, %v10430
    %v10432 = vpop.f32.mrb[0].mxu0
    %v10433 = vadd.f32 %v10392, %v10432
    %v10434 = vpop.f32.mrb[0].mxu0
    %v10435 = vpop.f32.mrb[0].mxu0
    %10436 = vdwg.mxu0
    %10437 = vmatprep.subr.bf16.mxu0 %v7463
    %10438 = vmatpush1.bf16.msra.mxu0 %v7462
    %10439 = vmatprep.subr.bf16.mxu0 %v7471
    %10440 = vmatpush1.bf16.msra.mxu0 %v7470
    %10441 = vmatprep.subr.bf16.mxu0 %v7479
    %10442 = vmatpush1.bf16.msra.mxu0 %v7478
    %10443 = vmatprep.subr.bf16.mxu0 %v7487
    %10444 = vmatpush1.bf16.msra.mxu0 %v7486
    %10445 = vmatprep.subr.bf16.mxu0 %v7495
    %10446 = vmatpush1.bf16.msra.mxu0 %v7494
    %10447 = vmatprep.subr.bf16.mxu0 %v7503
    %10448 = vmatpush1.bf16.msra.mxu0 %v7502
    %10449 = vmatprep.subr.bf16.mxu0 %v7511
    %10450 = vmatpush1.bf16.msra.mxu0 %v7510
    %10451 = vmatprep.subr.bf16.mxu0 %v7519
    %10452 = vmatpush1.bf16.msra.mxu0 %v7518
    %10453 = vmatprep.subr.bf16.mxu0 %v7527
    %10454 = vmatpush1.bf16.msra.mxu0 %v7526
    %10455 = vmatprep.subr.bf16.mxu0 %v7535
    %10456 = vmatpush1.bf16.msra.mxu0 %v7534
    %10457 = vmatprep.subr.bf16.mxu0 %v7543
    %10458 = vmatpush1.bf16.msra.mxu0 %v7542
    %10459 = vmatprep.subr.bf16.mxu0 %v7551
    %10460 = vmatpush1.bf16.msra.mxu0 %v7550
    %10461 = vmatprep.subr.bf16.mxu0 %v7559
    %10462 = vmatpush1.bf16.msra.mxu0 %v7558
    %10463 = vmatprep.subr.bf16.mxu0 %v7567
    %10464 = vmatpush1.bf16.msra.mxu0 %v7566
    %10465 = vmatprep.subr.bf16.mxu0 %v7575
    %10466 = vmatpush1.bf16.msra.mxu0 %v7574
    %10467 = vmatprep.subr.bf16.mxu0 %v7583
    %10468 = vmatpush1.bf16.msra.mxu0 %v7582
    %10469 = vmatprep.mubr.bf16.mxu0 %v114
    %10470 = vmatmul.mubr.bf16.gmra.mrb[0].mxu0 %v113
    %v10471 = vpop.f32.mrb[0].mxu0
    %v10472 = vadd.f32 %v10431, %v10471
    %v10473 = vpop.f32.mrb[0].mxu0
    %v10474 = vadd.f32 %v10433, %v10473
    %v10475 = vpop.f32.mrb[0].mxu0
    %v10476 = vpop.f32.mrb[0].mxu0
    %10477 = vdwg.mxu0
    %10478 = vmatprep.subr.bf16.mxu0 %v7591
    %10479 = vmatpush1.bf16.msra.mxu0 %v7590
    %10480 = vmatprep.subr.bf16.mxu0 %v7599
    %10481 = vmatpush1.bf16.msra.mxu0 %v7598
    %10482 = vmatprep.subr.bf16.mxu0 %v7607
    %10483 = vmatpush1.bf16.msra.mxu0 %v7606
    %10484 = vmatprep.subr.bf16.mxu0 %v7615
    %10485 = vmatpush1.bf16.msra.mxu0 %v7614
    %10486 = vmatprep.subr.bf16.mxu0 %v7623
    %10487 = vmatpush1.bf16.msra.mxu0 %v7622
    %10488 = vmatprep.subr.bf16.mxu0 %v7631
    %10489 = vmatpush1.bf16.msra.mxu0 %v7630
    %10490 = vmatprep.subr.bf16.mxu0 %v7639
    %10491 = vmatpush1.bf16.msra.mxu0 %v7638
    %10492 = vmatprep.subr.bf16.mxu0 %v7647
    %10493 = vmatpush1.bf16.msra.mxu0 %v7646
    %10494 = vmatprep.subr.bf16.mxu0 %v7655
    %10495 = vmatpush1.bf16.msra.mxu0 %v7654
    %10496 = vmatprep.subr.bf16.mxu0 %v7663
    %10497 = vmatpush1.bf16.msra.mxu0 %v7662
    %10498 = vmatprep.subr.bf16.mxu0 %v7671
    %10499 = vmatpush1.bf16.msra.mxu0 %v7670
    %10500 = vmatprep.subr.bf16.mxu0 %v7679
    %10501 = vmatpush1.bf16.msra.mxu0 %v7678
    %10502 = vmatprep.subr.bf16.mxu0 %v7687
    %10503 = vmatpush1.bf16.msra.mxu0 %v7686
    %10504 = vmatprep.subr.bf16.mxu0 %v7695
    %10505 = vmatpush1.bf16.msra.mxu0 %v7694
    %10506 = vmatprep.subr.bf16.mxu0 %v7703
    %10507 = vmatpush1.bf16.msra.mxu0 %v7702
    %10508 = vmatprep.subr.bf16.mxu0 %v7711
    %10509 = vmatpush1.bf16.msra.mxu0 %v7710
    %10510 = vmatprep.mubr.bf16.mxu0 %v116
    %10511 = vmatmul.mubr.bf16.gmra.mrb[0].mxu0 %v115
    %v10512 = vpop.f32.mrb[0].mxu0
    %v10513 = vadd.f32 %v10472, %v10512
    %v10514 = vpop.f32.mrb[0].mxu0
    %v10515 = vadd.f32 %v10474, %v10514
    %v10516 = vpop.f32.mrb[0].mxu0
    %v10517 = vpop.f32.mrb[0].mxu0
    %10518 = vdwg.mxu0
    %10519 = vmatprep.subr.bf16.mxu0 %v7719
    %10520 = vmatpush1.bf16.msra.mxu0 %v7718
    %10521 = vmatprep.subr.bf16.mxu0 %v7727
    %10522 = vmatpush1.bf16.msra.mxu0 %v7726
    %10523 = vmatprep.subr.bf16.mxu0 %v7735
    %10524 = vmatpush1.bf16.msra.mxu0 %v7734
    %10525 = vmatprep.subr.bf16.mxu0 %v7743
    %10526 = vmatpush1.bf16.msra.mxu0 %v7742
    %10527 = vmatprep.subr.bf16.mxu0 %v7751
    %10528 = vmatpush1.bf16.msra.mxu0 %v7750
    %10529 = vmatprep.subr.bf16.mxu0 %v7759
    %10530 = vmatpush1.bf16.msra.mxu0 %v7758
    %10531 = vmatprep.subr.bf16.mxu0 %v7767
    %10532 = vmatpush1.bf16.msra.mxu0 %v7766
    %10533 = vmatprep.subr.bf16.mxu0 %v7775
    %10534 = vmatpush1.bf16.msra.mxu0 %v7774
    %10535 = vmatprep.subr.bf16.mxu0 %v7783
    %10536 = vmatpush1.bf16.msra.mxu0 %v7782
    %10537 = vmatprep.subr.bf16.mxu0 %v7791
    %10538 = vmatpush1.bf16.msra.mxu0 %v7790
    %10539 = vmatprep.subr.bf16.mxu0 %v7799
    %10540 = vmatpush1.bf16.msra.mxu0 %v7798
    %10541 = vmatprep.subr.bf16.mxu0 %v7807
    %10542 = vmatpush1.bf16.msra.mxu0 %v7806
    %10543 = vmatprep.subr.bf16.mxu0 %v7815
    %10544 = vmatpush1.bf16.msra.mxu0 %v7814
    %10545 = vmatprep.subr.bf16.mxu0 %v7823
    %10546 = vmatpush1.bf16.msra.mxu0 %v7822
    %10547 = vmatprep.subr.bf16.mxu0 %v7831
    %10548 = vmatpush1.bf16.msra.mxu0 %v7830
    %10549 = vmatprep.subr.bf16.mxu0 %v7839
    %10550 = vmatpush1.bf16.msra.mxu0 %v7838
    %10551 = vmatprep.mubr.bf16.mxu0 %v118
    %10552 = vmatmul.mubr.bf16.gmra.mrb[0].mxu0 %v117
    %v10553 = vpop.f32.mrb[0].mxu0
    %v10554 = vadd.f32 %v10513, %v10553
    %v10555 = vpop.f32.mrb[0].mxu0
    %v10556 = vadd.f32 %v10515, %v10555
    %v10557 = vpop.f32.mrb[0].mxu0
    %v10558 = vpop.f32.mrb[0].mxu0
    %10559 = vdwg.mxu0
    %10560 = vmatprep.subr.bf16.mxu0 %v7847
    %10561 = vmatpush1.bf16.msra.mxu0 %v7846
    %10562 = vmatprep.subr.bf16.mxu0 %v7855
    %10563 = vmatpush1.bf16.msra.mxu0 %v7854
    %10564 = vmatprep.subr.bf16.mxu0 %v7863
    %10565 = vmatpush1.bf16.msra.mxu0 %v7862
    %10566 = vmatprep.subr.bf16.mxu0 %v7871
    %10567 = vmatpush1.bf16.msra.mxu0 %v7870
    %10568 = vmatprep.subr.bf16.mxu0 %v7879
    %10569 = vmatpush1.bf16.msra.mxu0 %v7878
    %10570 = vmatprep.subr.bf16.mxu0 %v7887
    %10571 = vmatpush1.bf16.msra.mxu0 %v7886
    %10572 = vmatprep.subr.bf16.mxu0 %v7895
    %10573 = vmatpush1.bf16.msra.mxu0 %v7894
    %10574 = vmatprep.subr.bf16.mxu0 %v7903
    %10575 = vmatpush1.bf16.msra.mxu0 %v7902
    %10576 = vmatprep.subr.bf16.mxu0 %v7911
    %10577 = vmatpush1.bf16.msra.mxu0 %v7910
    %10578 = vmatprep.subr.bf16.mxu0 %v7919
    %10579 = vmatpush1.bf16.msra.mxu0 %v7918
    %10580 = vmatprep.subr.bf16.mxu0 %v7927
    %10581 = vmatpush1.bf16.msra.mxu0 %v7926
    %10582 = vmatprep.subr.bf16.mxu0 %v7935
    %10583 = vmatpush1.bf16.msra.mxu0 %v7934
    %10584 = vmatprep.subr.bf16.mxu0 %v7943
    %10585 = vmatpush1.bf16.msra.mxu0 %v7942
    %10586 = vmatprep.subr.bf16.mxu0 %v7951
    %10587 = vmatpush1.bf16.msra.mxu0 %v7950
    %10588 = vmatprep.subr.bf16.mxu0 %v7959
    %10589 = vmatpush1.bf16.msra.mxu0 %v7958
    %10590 = vmatprep.subr.bf16.mxu0 %v7967
    %10591 = vmatpush1.bf16.msra.mxu0 %v7966
    %10592 = vmatprep.mubr.bf16.mxu0 %v120
    %10593 = vmatmul.mubr.bf16.gmra.mrb[0].mxu0 %v119
    %v10594 = vpop.f32.mrb[0].mxu0
    %v10595 = vadd.f32 %v10554, %v10594
    %v10596 = vpop.f32.mrb[0].mxu0
    %v10597 = vadd.f32 %v10556, %v10596
    %v10598 = vpop.f32.mrb[0].mxu0
    %v10599 = vpop.f32.mrb[0].mxu0
    %10600 = vdwg.mxu0
    %10601 = vmatprep.subr.bf16.mxu0 %v7975
    %10602 = vmatpush1.bf16.msra.mxu0 %v7974
    %10603 = vmatprep.subr.bf16.mxu0 %v7983
    %10604 = vmatpush1.bf16.msra.mxu0 %v7982
    %10605 = vmatprep.subr.bf16.mxu0 %v7991
    %10606 = vmatpush1.bf16.msra.mxu0 %v7990
    %10607 = vmatprep.subr.bf16.mxu0 %v7999
    %10608 = vmatpush1.bf16.msra.mxu0 %v7998
    %10609 = vmatprep.subr.bf16.mxu0 0
    %10610 = vmatpush1.bf16.msra.mxu0 0
    %10611 = vmatprep.subr.bf16.mxu0 0
    %10612 = vmatpush1.bf16.msra.mxu0 0
    %10613 = vmatprep.subr.bf16.mxu0 0
    %10614 = vmatpush1.bf16.msra.mxu0 0
    %10615 = vmatprep.subr.bf16.mxu0 0
    %10616 = vmatpush1.bf16.msra.mxu0 0
    %10617 = vmatprep.subr.bf16.mxu0 0
    %10618 = vmatpush1.bf16.msra.mxu0 0
    %10619 = vmatprep.subr.bf16.mxu0 0
    %10620 = vmatpush1.bf16.msra.mxu0 0
    %10621 = vmatprep.subr.bf16.mxu0 0
    %10622 = vmatpush1.bf16.msra.mxu0 0
    %10623 = vmatprep.subr.bf16.mxu0 0
    %10624 = vmatpush1.bf16.msra.mxu0 0
    %10625 = vmatprep.subr.bf16.mxu0 0
    %10626 = vmatpush1.bf16.msra.mxu0 0
    %10627 = vmatprep.subr.bf16.mxu0 0
    %10628 = vmatpush1.bf16.msra.mxu0 0
    %10629 = vmatprep.subr.bf16.mxu0 0
    %10630 = vmatpush1.bf16.msra.mxu0 0
    %10631 = vmatprep.subr.bf16.mxu0 0
    %10632 = vmatpush1.bf16.msra.mxu0 0
    %10633 = vmatprep.mubr.bf16.mxu0 0
    %10634 = vmatmul.mubr.bf16.gmra.mrb[0].mxu0 %v9574
    %v10635 = vpop.f32.mrb[0].mxu0
    %v10636 = vadd.f32 %v10595, %v10635
    %v10637 = vpop.f32.mrb[0].mxu0
    %v10638 = vadd.f32 %v10597, %v10637
    %v10639 = vpop.f32.mrb[0].mxu0
    %v10640 = vpop.f32.mrb[0].mxu0
    %10641 = vdwg.mxu0
    %10642 = vmatprep.subr.bf16.mxu0 %v6441
    %10643 = vmatpush1.bf16.msra.mxu0 %v6440
    %10644 = vmatprep.subr.bf16.mxu0 %v6449
    %10645 = vmatpush1.bf16.msra.mxu0 %v6448
    %10646 = vmatprep.subr.bf16.mxu0 %v6457
    %10647 = vmatpush1.bf16.msra.mxu0 %v6456
    %10648 = vmatprep.subr.bf16.mxu0 %v6465
    %10649 = vmatpush1.bf16.msra.mxu0 %v6464
    %10650 = vmatprep.subr.bf16.mxu0 %v6473
    %10651 = vmatpush1.bf16.msra.mxu0 %v6472
    %10652 = vmatprep.subr.bf16.mxu0 %v6481
    %10653 = vmatpush1.bf16.msra.mxu0 %v6480
    %10654 = vmatprep.subr.bf16.mxu0 %v6489
    %10655 = vmatpush1.bf16.msra.mxu0 %v6488
    %10656 = vmatprep.subr.bf16.mxu0 %v6497
    %10657 = vmatpush1.bf16.msra.mxu0 %v6496
    %10658 = vmatprep.subr.bf16.mxu0 %v6505
    %10659 = vmatpush1.bf16.msra.mxu0 %v6504
    %10660 = vmatprep.subr.bf16.mxu0 %v6513
    %10661 = vmatpush1.bf16.msra.mxu0 %v6512
    %10662 = vmatprep.subr.bf16.mxu0 %v6521
    %10663 = vmatpush1.bf16.msra.mxu0 %v6520
    %10664 = vmatprep.subr.bf16.mxu0 %v6529
    %10665 = vmatpush1.bf16.msra.mxu0 %v6528
    %10666 = vmatprep.subr.bf16.mxu0 %v6537
    %10667 = vmatpush1.bf16.msra.mxu0 %v6536
    %10668 = vmatprep.subr.bf16.mxu0 %v6545
    %10669 = vmatpush1.bf16.msra.mxu0 %v6544
    %10670 = vmatprep.subr.bf16.mxu0 %v6553
    %10671 = vmatpush1.bf16.msra.mxu0 %v6552
    %10672 = vmatprep.subr.bf16.mxu0 %v6561
    %10673 = vmatpush1.bf16.msra.mxu0 %v6560
    %10674 = vmatprep.mubr.bf16.mxu0 %v98
    %10675 = vmatmul.mubr.bf16.gmra.mrb[0].mxu0 %v97
    %v10676 = vpop.f32.mrb[0].mxu0
    %v10677 = vadd.f32 %v1711, %v10676
    %v10678 = vpop.f32.mrb[0].mxu0
    %v10679 = vadd.f32 %v1715, %v10678
    %v10680 = vpop.f32.mrb[0].mxu0
    %v10681 = vpop.f32.mrb[0].mxu0
    %10682 = vdwg.mxu0
    %10683 = vmatprep.subr.bf16.mxu0 %v6569
    %10684 = vmatpush1.bf16.msra.mxu0 %v6568
    %10685 = vmatprep.subr.bf16.mxu0 %v6577
    %10686 = vmatpush1.bf16.msra.mxu0 %v6576
    %10687 = vmatprep.subr.bf16.mxu0 %v6585
    %10688 = vmatpush1.bf16.msra.mxu0 %v6584
    %10689 = vmatprep.subr.bf16.mxu0 %v6593
    %10690 = vmatpush1.bf16.msra.mxu0 %v6592
    %10691 = vmatprep.subr.bf16.mxu0 %v6601
    %10692 = vmatpush1.bf16.msra.mxu0 %v6600
    %10693 = vmatprep.subr.bf16.mxu0 %v6609
    %10694 = vmatpush1.bf16.msra.mxu0 %v6608
    %10695 = vmatprep.subr.bf16.mxu0 %v6617
    %10696 = vmatpush1.bf16.msra.mxu0 %v6616
    %10697 = vmatprep.subr.bf16.mxu0 %v6625
    %10698 = vmatpush1.bf16.msra.mxu0 %v6624
    %10699 = vmatprep.subr.bf16.mxu0 %v6633
    %10700 = vmatpush1.bf16.msra.mxu0 %v6632
    %10701 = vmatprep.subr.bf16.mxu0 %v6641
    %10702 = vmatpush1.bf16.msra.mxu0 %v6640
    %10703 = vmatprep.subr.bf16.mxu0 %v6649
    %10704 = vmatpush1.bf16.msra.mxu0 %v6648
    %10705 = vmatprep.subr.bf16.mxu0 %v6657
    %10706 = vmatpush1.bf16.msra.mxu0 %v6656
    %10707 = vmatprep.subr.bf16.mxu0 %v6665
    %10708 = vmatpush1.bf16.msra.mxu0 %v6664
    %10709 = vmatprep.subr.bf16.mxu0 %v6673
    %10710 = vmatpush1.bf16.msra.mxu0 %v6672
    %10711 = vmatprep.subr.bf16.mxu0 %v6681
    %10712 = vmatpush1.bf16.msra.mxu0 %v6680
    %10713 = vmatprep.subr.bf16.mxu0 %v6689
    %10714 = vmatpush1.bf16.msra.mxu0 %v6688
    %10715 = vmatprep.mubr.bf16.mxu0 %v100
    %10716 = vmatmul.mubr.bf16.gmra.mrb[0].mxu0 %v99
    %v10717 = vpop.f32.mrb[0].mxu0
    %v10718 = vadd.f32 %v10677, %v10717
    %v10719 = vpop.f32.mrb[0].mxu0
    %v10720 = vadd.f32 %v10679, %v10719
    %v10721 = vpop.f32.mrb[0].mxu0
    %v10722 = vpop.f32.mrb[0].mxu0
    %10723 = vdwg.mxu0
    %10724 = vmatprep.subr.bf16.mxu0 %v6697
    %10725 = vmatpush1.bf16.msra.mxu0 %v6696
    %10726 = vmatprep.subr.bf16.mxu0 %v6705
    %10727 = vmatpush1.bf16.msra.mxu0 %v6704
    %10728 = vmatprep.subr.bf16.mxu0 %v6713
    %10729 = vmatpush1.bf16.msra.mxu0 %v6712
    %10730 = vmatprep.subr.bf16.mxu0 %v6721
    %10731 = vmatpush1.bf16.msra.mxu0 %v6720
    %10732 = vmatprep.subr.bf16.mxu0 %v6729
    %10733 = vmatpush1.bf16.msra.mxu0 %v6728
    %10734 = vmatprep.subr.bf16.mxu0 %v6737
    %10735 = vmatpush1.bf16.msra.mxu0 %v6736
    %10736 = vmatprep.subr.bf16.mxu0 %v6745
    %10737 = vmatpush1.bf16.msra.mxu0 %v6744
    %10738 = vmatprep.subr.bf16.mxu0 %v6753
    %10739 = vmatpush1.bf16.msra.mxu0 %v6752
    %10740 = vmatprep.subr.bf16.mxu0 %v6761
    %10741 = vmatpush1.bf16.msra.mxu0 %v6760
    %10742 = vmatprep.subr.bf16.mxu0 %v6769
    %10743 = vmatpush1.bf16.msra.mxu0 %v6768
    %10744 = vmatprep.subr.bf16.mxu0 %v6777
    %10745 = vmatpush1.bf16.msra.mxu0 %v6776
    %10746 = vmatprep.subr.bf16.mxu0 %v6785
    %10747 = vmatpush1.bf16.msra.mxu0 %v6784
    %10748 = vmatprep.subr.bf16.mxu0 %v6793
    %10749 = vmatpush1.bf16.msra.mxu0 %v6792
    %10750 = vmatprep.subr.bf16.mxu0 %v6801
    %10751 = vmatpush1.bf16.msra.mxu0 %v6800
    %10752 = vmatprep.subr.bf16.mxu0 %v6809
    %10753 = vmatpush1.bf16.msra.mxu0 %v6808
    %10754 = vmatprep.subr.bf16.mxu0 %v6817
    %10755 = vmatpush1.bf16.msra.mxu0 %v6816
    %10756 = vmatprep.mubr.bf16.mxu0 %v102
    %10757 = vmatmul.mubr.bf16.gmra.mrb[0].mxu0 %v101
    %v10758 = vpop.f32.mrb[0].mxu0
    %v10759 = vadd.f32 %v10718, %v10758
    %v10760 = vpop.f32.mrb[0].mxu0
    %v10761 = vadd.f32 %v10720, %v10760
    %v10762 = vpop.f32.mrb[0].mxu0
    %v10763 = vpop.f32.mrb[0].mxu0
    %10764 = vdwg.mxu0
    %10765 = vmatprep.subr.bf16.mxu0 %v6825
    %10766 = vmatpush1.bf16.msra.mxu0 %v6824
    %10767 = vmatprep.subr.bf16.mxu0 %v6833
    %10768 = vmatpush1.bf16.msra.mxu0 %v6832
    %10769 = vmatprep.subr.bf16.mxu0 %v6841
    %10770 = vmatpush1.bf16.msra.mxu0 %v6840
    %10771 = vmatprep.subr.bf16.mxu0 %v6849
    %10772 = vmatpush1.bf16.msra.mxu0 %v6848
    %10773 = vmatprep.subr.bf16.mxu0 %v6857
    %10774 = vmatpush1.bf16.msra.mxu0 %v6856
    %10775 = vmatprep.subr.bf16.mxu0 %v6865
    %10776 = vmatpush1.bf16.msra.mxu0 %v6864
    %10777 = vmatprep.subr.bf16.mxu0 %v6873
    %10778 = vmatpush1.bf16.msra.mxu0 %v6872
    %10779 = vmatprep.subr.bf16.mxu0 %v6881
    %10780 = vmatpush1.bf16.msra.mxu0 %v6880
    %10781 = vmatprep.subr.bf16.mxu0 %v6889
    %10782 = vmatpush1.bf16.msra.mxu0 %v6888
    %10783 = vmatprep.subr.bf16.mxu0 %v6897
    %10784 = vmatpush1.bf16.msra.mxu0 %v6896
    %10785 = vmatprep.subr.bf16.mxu0 %v6905
    %10786 = vmatpush1.bf16.msra.mxu0 %v6904
    %10787 = vmatprep.subr.bf16.mxu0 %v6913
    %10788 = vmatpush1.bf16.msra.mxu0 %v6912
    %10789 = vmatprep.subr.bf16.mxu0 %v6921
    %10790 = vmatpush1.bf16.msra.mxu0 %v6920
    %10791 = vmatprep.subr.bf16.mxu0 %v6929
    %10792 = vmatpush1.bf16.msra.mxu0 %v6928
    %10793 = vmatprep.subr.bf16.mxu0 %v6937
    %10794 = vmatpush1.bf16.msra.mxu0 %v6936
    %10795 = vmatprep.subr.bf16.mxu0 %v6945
    %10796 = vmatpush1.bf16.msra.mxu0 %v6944
    %10797 = vmatprep.mubr.bf16.mxu0 %v104
    %10798 = vmatmul.mubr.bf16.gmra.mrb[0].mxu0 %v103
    %v10799 = vpop.f32.mrb[0].mxu0
    %v10800 = vadd.f32 %v10759, %v10799
    %v10801 = vpop.f32.mrb[0].mxu0
    %v10802 = vadd.f32 %v10761, %v10801
    %v10803 = vpop.f32.mrb[0].mxu0
    %v10804 = vpop.f32.mrb[0].mxu0
    %10805 = vdwg.mxu0
    %10806 = vmatprep.subr.bf16.mxu0 %v6953
    %10807 = vmatpush1.bf16.msra.mxu0 %v6952
    %10808 = vmatprep.subr.bf16.mxu0 %v6961
    %10809 = vmatpush1.bf16.msra.mxu0 %v6960
    %10810 = vmatprep.subr.bf16.mxu0 %v6969
    %10811 = vmatpush1.bf16.msra.mxu0 %v6968
    %10812 = vmatprep.subr.bf16.mxu0 %v6977
    %10813 = vmatpush1.bf16.msra.mxu0 %v6976
    %10814 = vmatprep.subr.bf16.mxu0 %v6985
    %10815 = vmatpush1.bf16.msra.mxu0 %v6984
    %10816 = vmatprep.subr.bf16.mxu0 %v6993
    %10817 = vmatpush1.bf16.msra.mxu0 %v6992
    %10818 = vmatprep.subr.bf16.mxu0 %v7001
    %10819 = vmatpush1.bf16.msra.mxu0 %v7000
    %10820 = vmatprep.subr.bf16.mxu0 %v7009
    %10821 = vmatpush1.bf16.msra.mxu0 %v7008
    %10822 = vmatprep.subr.bf16.mxu0 %v7017
    %10823 = vmatpush1.bf16.msra.mxu0 %v7016
    %10824 = vmatprep.subr.bf16.mxu0 %v7025
    %10825 = vmatpush1.bf16.msra.mxu0 %v7024
    %10826 = vmatprep.subr.bf16.mxu0 %v7033
    %10827 = vmatpush1.bf16.msra.mxu0 %v7032
    %10828 = vmatprep.subr.bf16.mxu0 %v7041
    %10829 = vmatpush1.bf16.msra.mxu0 %v7040
    %10830 = vmatprep.subr.bf16.mxu0 %v7049
    %10831 = vmatpush1.bf16.msra.mxu0 %v7048
    %10832 = vmatprep.subr.bf16.mxu0 %v7057
    %10833 = vmatpush1.bf16.msra.mxu0 %v7056
    %10834 = vmatprep.subr.bf16.mxu0 %v7065
    %10835 = vmatpush1.bf16.msra.mxu0 %v7064
    %10836 = vmatprep.subr.bf16.mxu0 %v7073
    %10837 = vmatpush1.bf16.msra.mxu0 %v7072
    %10838 = vmatprep.mubr.bf16.mxu0 %v106
    %10839 = vmatmul.mubr.bf16.gmra.mrb[0].mxu0 %v105
    %v10840 = vpop.f32.mrb[0].mxu0
    %v10841 = vadd.f32 %v10800, %v10840
    %v10842 = vpop.f32.mrb[0].mxu0
    %v10843 = vadd.f32 %v10802, %v10842
    %v10844 = vpop.f32.mrb[0].mxu0
    %v10845 = vpop.f32.mrb[0].mxu0
    %10846 = vdwg.mxu0
    %10847 = vmatprep.subr.bf16.mxu0 %v7081
    %10848 = vmatpush1.bf16.msra.mxu0 %v7080
    %10849 = vmatprep.subr.bf16.mxu0 %v7089
    %10850 = vmatpush1.bf16.msra.mxu0 %v7088
    %10851 = vmatprep.subr.bf16.mxu0 %v7097
    %10852 = vmatpush1.bf16.msra.mxu0 %v7096
    %10853 = vmatprep.subr.bf16.mxu0 %v7105
    %10854 = vmatpush1.bf16.msra.mxu0 %v7104
    %10855 = vmatprep.subr.bf16.mxu0 %v7113
    %10856 = vmatpush1.bf16.msra.mxu0 %v7112
    %10857 = vmatprep.subr.bf16.mxu0 %v7121
    %10858 = vmatpush1.bf16.msra.mxu0 %v7120
    %10859 = vmatprep.subr.bf16.mxu0 %v7129
    %10860 = vmatpush1.bf16.msra.mxu0 %v7128
    %10861 = vmatprep.subr.bf16.mxu0 %v7137
    %10862 = vmatpush1.bf16.msra.mxu0 %v7136
    %10863 = vmatprep.subr.bf16.mxu0 %v7145
    %10864 = vmatpush1.bf16.msra.mxu0 %v7144
    %10865 = vmatprep.subr.bf16.mxu0 %v7153
    %10866 = vmatpush1.bf16.msra.mxu0 %v7152
    %10867 = vmatprep.subr.bf16.mxu0 %v7161
    %10868 = vmatpush1.bf16.msra.mxu0 %v7160
    %10869 = vmatprep.subr.bf16.mxu0 %v7169
    %10870 = vmatpush1.bf16.msra.mxu0 %v7168
    %10871 = vmatprep.subr.bf16.mxu0 %v7177
    %10872 = vmatpush1.bf16.msra.mxu0 %v7176
    %10873 = vmatprep.subr.bf16.mxu0 %v7185
    %10874 = vmatpush1.bf16.msra.mxu0 %v7184
    %10875 = vmatprep.subr.bf16.mxu0 %v7193
    %10876 = vmatpush1.bf16.msra.mxu0 %v7192
    %10877 = vmatprep.subr.bf16.mxu0 %v7201
    %10878 = vmatpush1.bf16.msra.mxu0 %v7200
    %10879 = vmatprep.mubr.bf16.mxu0 %v108
    %10880 = vmatmul.mubr.bf16.gmra.mrb[0].mxu0 %v107
    %v10881 = vpop.f32.mrb[0].mxu0
    %v10882 = vadd.f32 %v10841, %v10881
    %v10883 = vpop.f32.mrb[0].mxu0
    %v10884 = vadd.f32 %v10843, %v10883
    %v10885 = vpop.f32.mrb[0].mxu0
    %v10886 = vpop.f32.mrb[0].mxu0
    %10887 = vdwg.mxu0
    %10888 = vmatprep.subr.bf16.mxu0 %v7209
    %10889 = vmatpush1.bf16.msra.mxu0 %v7208
    %10890 = vmatprep.subr.bf16.mxu0 %v7217
    %10891 = vmatpush1.bf16.msra.mxu0 %v7216
    %10892 = vmatprep.subr.bf16.mxu0 %v7225
    %10893 = vmatpush1.bf16.msra.mxu0 %v7224
    %10894 = vmatprep.subr.bf16.mxu0 %v7233
    %10895 = vmatpush1.bf16.msra.mxu0 %v7232
    %10896 = vmatprep.subr.bf16.mxu0 %v7241
    %10897 = vmatpush1.bf16.msra.mxu0 %v7240
    %10898 = vmatprep.subr.bf16.mxu0 %v7249
    %10899 = vmatpush1.bf16.msra.mxu0 %v7248
    %10900 = vmatprep.subr.bf16.mxu0 %v7257
    %10901 = vmatpush1.bf16.msra.mxu0 %v7256
    %10902 = vmatprep.subr.bf16.mxu0 %v7265
    %10903 = vmatpush1.bf16.msra.mxu0 %v7264
    %10904 = vmatprep.subr.bf16.mxu0 %v7273
    %10905 = vmatpush1.bf16.msra.mxu0 %v7272
    %10906 = vmatprep.subr.bf16.mxu0 %v7281
    %10907 = vmatpush1.bf16.msra.mxu0 %v7280
    %10908 = vmatprep.subr.bf16.mxu0 %v7289
    %10909 = vmatpush1.bf16.msra.mxu0 %v7288
    %10910 = vmatprep.subr.bf16.mxu0 %v7297
    %10911 = vmatpush1.bf16.msra.mxu0 %v7296
    %10912 = vmatprep.subr.bf16.mxu0 %v7305
    %10913 = vmatpush1.bf16.msra.mxu0 %v7304
    %10914 = vmatprep.subr.bf16.mxu0 %v7313
    %10915 = vmatpush1.bf16.msra.mxu0 %v7312
    %10916 = vmatprep.subr.bf16.mxu0 %v7321
    %10917 = vmatpush1.bf16.msra.mxu0 %v7320
    %10918 = vmatprep.subr.bf16.mxu0 %v7329
    %10919 = vmatpush1.bf16.msra.mxu0 %v7328
    %10920 = vmatprep.mubr.bf16.mxu0 %v110
    %10921 = vmatmul.mubr.bf16.gmra.mrb[0].mxu0 %v109
    %v10922 = vpop.f32.mrb[0].mxu0
    %v10923 = vadd.f32 %v10882, %v10922
    %v10924 = vpop.f32.mrb[0].mxu0
    %v10925 = vadd.f32 %v10884, %v10924
    %v10926 = vpop.f32.mrb[0].mxu0
    %v10927 = vpop.f32.mrb[0].mxu0
    %10928 = vdwg.mxu0
    %10929 = vmatprep.subr.bf16.mxu0 %v7337
    %10930 = vmatpush1.bf16.msra.mxu0 %v7336
    %10931 = vmatprep.subr.bf16.mxu0 %v7345
    %10932 = vmatpush1.bf16.msra.mxu0 %v7344
    %10933 = vmatprep.subr.bf16.mxu0 %v7353
    %10934 = vmatpush1.bf16.msra.mxu0 %v7352
    %10935 = vmatprep.subr.bf16.mxu0 %v7361
    %10936 = vmatpush1.bf16.msra.mxu0 %v7360
    %10937 = vmatprep.subr.bf16.mxu0 %v7369
    %10938 = vmatpush1.bf16.msra.mxu0 %v7368
    %10939 = vmatprep.subr.bf16.mxu0 %v7377
    %10940 = vmatpush1.bf16.msra.mxu0 %v7376
    %10941 = vmatprep.subr.bf16.mxu0 %v7385
    %10942 = vmatpush1.bf16.msra.mxu0 %v7384
    %10943 = vmatprep.subr.bf16.mxu0 %v7393
    %10944 = vmatpush1.bf16.msra.mxu0 %v7392
    %10945 = vmatprep.subr.bf16.mxu0 %v7401
    %10946 = vmatpush1.bf16.msra.mxu0 %v7400
    %10947 = vmatprep.subr.bf16.mxu0 %v7409
    %10948 = vmatpush1.bf16.msra.mxu0 %v7408
    %10949 = vmatprep.subr.bf16.mxu0 %v7417
    %10950 = vmatpush1.bf16.msra.mxu0 %v7416
    %10951 = vmatprep.subr.bf16.mxu0 %v7425
    %10952 = vmatpush1.bf16.msra.mxu0 %v7424
    %10953 = vmatprep.subr.bf16.mxu0 %v7433
    %10954 = vmatpush1.bf16.msra.mxu0 %v7432
    %10955 = vmatprep.subr.bf16.mxu0 %v7441
    %10956 = vmatpush1.bf16.msra.mxu0 %v7440
    %10957 = vmatprep.subr.bf16.mxu0 %v7449
    %10958 = vmatpush1.bf16.msra.mxu0 %v7448
    %10959 = vmatprep.subr.bf16.mxu0 %v7457
    %10960 = vmatpush1.bf16.msra.mxu0 %v7456
    %10961 = vmatprep.mubr.bf16.mxu0 %v112
    %10962 = vmatmul.mubr.bf16.gmra.mrb[0].mxu0 %v111
    %v10963 = vpop.f32.mrb[0].mxu0
    %v10964 = vadd.f32 %v10923, %v10963
    %v10965 = vpop.f32.mrb[0].mxu0
    %v10966 = vadd.f32 %v10925, %v10965
    %v10967 = vpop.f32.mrb[0].mxu0
    %v10968 = vpop.f32.mrb[0].mxu0
    %10969 = vdwg.mxu0
    %10970 = vmatprep.subr.bf16.mxu0 %v7465
    %10971 = vmatpush1.bf16.msra.mxu0 %v7464
    %10972 = vmatprep.subr.bf16.mxu0 %v7473
    %10973 = vmatpush1.bf16.msra.mxu0 %v7472
    %10974 = vmatprep.subr.bf16.mxu0 %v7481
    %10975 = vmatpush1.bf16.msra.mxu0 %v7480
    %10976 = vmatprep.subr.bf16.mxu0 %v7489
    %10977 = vmatpush1.bf16.msra.mxu0 %v7488
    %10978 = vmatprep.subr.bf16.mxu0 %v7497
    %10979 = vmatpush1.bf16.msra.mxu0 %v7496
    %10980 = vmatprep.subr.bf16.mxu0 %v7505
    %10981 = vmatpush1.bf16.msra.mxu0 %v7504
    %10982 = vmatprep.subr.bf16.mxu0 %v7513
    %10983 = vmatpush1.bf16.msra.mxu0 %v7512
    %10984 = vmatprep.subr.bf16.mxu0 %v7521
    %10985 = vmatpush1.bf16.msra.mxu0 %v7520
    %10986 = vmatprep.subr.bf16.mxu0 %v7529
    %10987 = vmatpush1.bf16.msra.mxu0 %v7528
    %10988 = vmatprep.subr.bf16.mxu0 %v7537
    %10989 = vmatpush1.bf16.msra.mxu0 %v7536
    %10990 = vmatprep.subr.bf16.mxu0 %v7545
    %10991 = vmatpush1.bf16.msra.mxu0 %v7544
    %10992 = vmatprep.subr.bf16.mxu0 %v7553
    %10993 = vmatpush1.bf16.msra.mxu0 %v7552
    %10994 = vmatprep.subr.bf16.mxu0 %v7561
    %10995 = vmatpush1.bf16.msra.mxu0 %v7560
    %10996 = vmatprep.subr.bf16.mxu0 %v7569
    %10997 = vmatpush1.bf16.msra.mxu0 %v7568
    %10998 = vmatprep.subr.bf16.mxu0 %v7577
    %10999 = vmatpush1.bf16.msra.mxu0 %v7576
    %11000 = vmatprep.subr.bf16.mxu0 %v7585
    %11001 = vmatpush1.bf16.msra.mxu0 %v7584
    %11002 = vmatprep.mubr.bf16.mxu0 %v114
    %11003 = vmatmul.mubr.bf16.gmra.mrb[0].mxu0 %v113
    %v11004 = vpop.f32.mrb[0].mxu0
    %v11005 = vadd.f32 %v10964, %v11004
    %v11006 = vpop.f32.mrb[0].mxu0
    %v11007 = vadd.f32 %v10966, %v11006
    %v11008 = vpop.f32.mrb[0].mxu0
    %v11009 = vpop.f32.mrb[0].mxu0
    %11010 = vdwg.mxu0
    %11011 = vmatprep.subr.bf16.mxu0 %v7593
    %11012 = vmatpush1.bf16.msra.mxu0 %v7592
    %11013 = vmatprep.subr.bf16.mxu0 %v7601
    %11014 = vmatpush1.bf16.msra.mxu0 %v7600
    %11015 = vmatprep.subr.bf16.mxu0 %v7609
    %11016 = vmatpush1.bf16.msra.mxu0 %v7608
    %11017 = vmatprep.subr.bf16.mxu0 %v7617
    %11018 = vmatpush1.bf16.msra.mxu0 %v7616
    %11019 = vmatprep.subr.bf16.mxu0 %v7625
    %11020 = vmatpush1.bf16.msra.mxu0 %v7624
    %11021 = vmatprep.subr.bf16.mxu0 %v7633
    %11022 = vmatpush1.bf16.msra.mxu0 %v7632
    %11023 = vmatprep.subr.bf16.mxu0 %v7641
    %11024 = vmatpush1.bf16.msra.mxu0 %v7640
    %11025 = vmatprep.subr.bf16.mxu0 %v7649
    %11026 = vmatpush1.bf16.msra.mxu0 %v7648
    %11027 = vmatprep.subr.bf16.mxu0 %v7657
    %11028 = vmatpush1.bf16.msra.mxu0 %v7656
    %11029 = vmatprep.subr.bf16.mxu0 %v7665
    %11030 = vmatpush1.bf16.msra.mxu0 %v7664
    %11031 = vmatprep.subr.bf16.mxu0 %v7673
    %11032 = vmatpush1.bf16.msra.mxu0 %v7672
    %11033 = vmatprep.subr.bf16.mxu0 %v7681
    %11034 = vmatpush1.bf16.msra.mxu0 %v7680
    %11035 = vmatprep.subr.bf16.mxu0 %v7689
    %11036 = vmatpush1.bf16.msra.mxu0 %v7688
    %11037 = vmatprep.subr.bf16.mxu0 %v7697
    %11038 = vmatpush1.bf16.msra.mxu0 %v7696
    %11039 = vmatprep.subr.bf16.mxu0 %v7705
    %11040 = vmatpush1.bf16.msra.mxu0 %v7704
    %11041 = vmatprep.subr.bf16.mxu0 %v7713
    %11042 = vmatpush1.bf16.msra.mxu0 %v7712
    %11043 = vmatprep.mubr.bf16.mxu0 %v116
    %11044 = vmatmul.mubr.bf16.gmra.mrb[0].mxu0 %v115
    %v11045 = vpop.f32.mrb[0].mxu0
    %v11046 = vadd.f32 %v11005, %v11045
    %v11047 = vpop.f32.mrb[0].mxu0
    %v11048 = vadd.f32 %v11007, %v11047
    %v11049 = vpop.f32.mrb[0].mxu0
    %v11050 = vpop.f32.mrb[0].mxu0
    %11051 = vdwg.mxu0
    %11052 = vmatprep.subr.bf16.mxu0 %v7721
    %11053 = vmatpush1.bf16.msra.mxu0 %v7720
    %11054 = vmatprep.subr.bf16.mxu0 %v7729
    %11055 = vmatpush1.bf16.msra.mxu0 %v7728
    %11056 = vmatprep.subr.bf16.mxu0 %v7737
    %11057 = vmatpush1.bf16.msra.mxu0 %v7736
    %11058 = vmatprep.subr.bf16.mxu0 %v7745
    %11059 = vmatpush1.bf16.msra.mxu0 %v7744
    %11060 = vmatprep.subr.bf16.mxu0 %v7753
    %11061 = vmatpush1.bf16.msra.mxu0 %v7752
    %11062 = vmatprep.subr.bf16.mxu0 %v7761
    %11063 = vmatpush1.bf16.msra.mxu0 %v7760
    %11064 = vmatprep.subr.bf16.mxu0 %v7769
    %11065 = vmatpush1.bf16.msra.mxu0 %v7768
    %11066 = vmatprep.subr.bf16.mxu0 %v7777
    %11067 = vmatpush1.bf16.msra.mxu0 %v7776
    %11068 = vmatprep.subr.bf16.mxu0 %v7785
    %11069 = vmatpush1.bf16.msra.mxu0 %v7784
    %11070 = vmatprep.subr.bf16.mxu0 %v7793
    %11071 = vmatpush1.bf16.msra.mxu0 %v7792
    %11072 = vmatprep.subr.bf16.mxu0 %v7801
    %11073 = vmatpush1.bf16.msra.mxu0 %v7800
    %11074 = vmatprep.subr.bf16.mxu0 %v7809
    %11075 = vmatpush1.bf16.msra.mxu0 %v7808
    %11076 = vmatprep.subr.bf16.mxu0 %v7817
    %11077 = vmatpush1.bf16.msra.mxu0 %v7816
    %11078 = vmatprep.subr.bf16.mxu0 %v7825
    %11079 = vmatpush1.bf16.msra.mxu0 %v7824
    %11080 = vmatprep.subr.bf16.mxu0 %v7833
    %11081 = vmatpush1.bf16.msra.mxu0 %v7832
    %11082 = vmatprep.subr.bf16.mxu0 %v7841
    %11083 = vmatpush1.bf16.msra.mxu0 %v7840
    %11084 = vmatprep.mubr.bf16.mxu0 %v118
    %11085 = vmatmul.mubr.bf16.gmra.mrb[0].mxu0 %v117
    %v11086 = vpop.f32.mrb[0].mxu0
    %v11087 = vadd.f32 %v11046, %v11086
    %v11088 = vpop.f32.mrb[0].mxu0
    %v11089 = vadd.f32 %v11048, %v11088
    %v11090 = vpop.f32.mrb[0].mxu0
    %v11091 = vpop.f32.mrb[0].mxu0
    %11092 = vdwg.mxu0
    %11093 = vmatprep.subr.bf16.mxu0 %v7849
    %11094 = vmatpush1.bf16.msra.mxu0 %v7848
    %11095 = vmatprep.subr.bf16.mxu0 %v7857
    %11096 = vmatpush1.bf16.msra.mxu0 %v7856
    %11097 = vmatprep.subr.bf16.mxu0 %v7865
    %11098 = vmatpush1.bf16.msra.mxu0 %v7864
    %11099 = vmatprep.subr.bf16.mxu0 %v7873
    %11100 = vmatpush1.bf16.msra.mxu0 %v7872
    %11101 = vmatprep.subr.bf16.mxu0 %v7881
    %11102 = vmatpush1.bf16.msra.mxu0 %v7880
    %11103 = vmatprep.subr.bf16.mxu0 %v7889
    %11104 = vmatpush1.bf16.msra.mxu0 %v7888
    %11105 = vmatprep.subr.bf16.mxu0 %v7897
    %11106 = vmatpush1.bf16.msra.mxu0 %v7896
    %11107 = vmatprep.subr.bf16.mxu0 %v7905
    %11108 = vmatpush1.bf16.msra.mxu0 %v7904
    %11109 = vmatprep.subr.bf16.mxu0 %v7913
    %11110 = vmatpush1.bf16.msra.mxu0 %v7912
    %11111 = vmatprep.subr.bf16.mxu0 %v7921
    %11112 = vmatpush1.bf16.msra.mxu0 %v7920
    %11113 = vmatprep.subr.bf16.mxu0 %v7929
    %11114 = vmatpush1.bf16.msra.mxu0 %v7928
    %11115 = vmatprep.subr.bf16.mxu0 %v7937
    %11116 = vmatpush1.bf16.msra.mxu0 %v7936
    %11117 = vmatprep.subr.bf16.mxu0 %v7945
    %11118 = vmatpush1.bf16.msra.mxu0 %v7944
    %11119 = vmatprep.subr.bf16.mxu0 %v7953
    %11120 = vmatpush1.bf16.msra.mxu0 %v7952
    %11121 = vmatprep.subr.bf16.mxu0 %v7961
    %11122 = vmatpush1.bf16.msra.mxu0 %v7960
    %11123 = vmatprep.subr.bf16.mxu0 %v7969
    %11124 = vmatpush1.bf16.msra.mxu0 %v7968
    %11125 = vmatprep.mubr.bf16.mxu0 %v120
    %11126 = vmatmul.mubr.bf16.gmra.mrb[0].mxu0 %v119
    %v11127 = vpop.f32.mrb[0].mxu0
    %v11128 = vadd.f32 %v11087, %v11127
    %v11129 = vpop.f32.mrb[0].mxu0
    %v11130 = vadd.f32 %v11089, %v11129
    %v11131 = vpop.f32.mrb[0].mxu0
    %v11132 = vpop.f32.mrb[0].mxu0
    %11133 = vdwg.mxu0
    %11134 = vmatprep.subr.bf16.mxu0 %v7977
    %11135 = vmatpush1.bf16.msra.mxu0 %v7976
    %11136 = vmatprep.subr.bf16.mxu0 %v7985
    %11137 = vmatpush1.bf16.msra.mxu0 %v7984
    %11138 = vmatprep.subr.bf16.mxu0 %v7993
    %11139 = vmatpush1.bf16.msra.mxu0 %v7992
    %11140 = vmatprep.subr.bf16.mxu0 %v8001
    %11141 = vmatpush1.bf16.msra.mxu0 %v8000
    %11142 = vmatprep.subr.bf16.mxu0 0
    %11143 = vmatpush1.bf16.msra.mxu0 0
    %11144 = vmatprep.subr.bf16.mxu0 0
    %11145 = vmatpush1.bf16.msra.mxu0 0
    %11146 = vmatprep.subr.bf16.mxu0 0
    %11147 = vmatpush1.bf16.msra.mxu0 0
    %11148 = vmatprep.subr.bf16.mxu0 0
    %11149 = vmatpush1.bf16.msra.mxu0 0
    %11150 = vmatprep.subr.bf16.mxu0 0
    %11151 = vmatpush1.bf16.msra.mxu0 0
    %11152 = vmatprep.subr.bf16.mxu0 0
    %11153 = vmatpush1.bf16.msra.mxu0 0
    %11154 = vmatprep.subr.bf16.mxu0 0
    %11155 = vmatpush1.bf16.msra.mxu0 0
    %11156 = vmatprep.subr.bf16.mxu0 0
    %11157 = vmatpush1.bf16.msra.mxu0 0
    %11158 = vmatprep.subr.bf16.mxu0 0
    %11159 = vmatpush1.bf16.msra.mxu0 0
    %11160 = vmatprep.subr.bf16.mxu0 0
    %11161 = vmatpush1.bf16.msra.mxu0 0
    %11162 = vmatprep.subr.bf16.mxu0 0
    %11163 = vmatpush1.bf16.msra.mxu0 0
    %11164 = vmatprep.subr.bf16.mxu0 0
    %11165 = vmatpush1.bf16.msra.mxu0 0
    %11166 = vmatprep.mubr.bf16.mxu0 0
    %11167 = vmatmul.mubr.bf16.gmra.mrb[0].mxu0 %v9574
    %v11168 = vpop.f32.mrb[0].mxu0
    %v11169 = vadd.f32 %v11128, %v11168
    %v11170 = vpop.f32.mrb[0].mxu0
    %v11171 = vadd.f32 %v11130, %v11170
    %v11172 = vpop.f32.mrb[0].mxu0
    %v11173 = vpop.f32.mrb[0].mxu0
    %11174 = vdwg.mxu0
    %11175 = vmatprep.subr.bf16.mxu0 %v6443
    %11176 = vmatpush1.bf16.msra.mxu0 %v6442
    %11177 = vmatprep.subr.bf16.mxu0 %v6451
    %11178 = vmatpush1.bf16.msra.mxu0 %v6450
    %11179 = vmatprep.subr.bf16.mxu0 %v6459
    %11180 = vmatpush1.bf16.msra.mxu0 %v6458
    %11181 = vmatprep.subr.bf16.mxu0 %v6467
    %11182 = vmatpush1.bf16.msra.mxu0 %v6466
    %11183 = vmatprep.subr.bf16.mxu0 %v6475
    %11184 = vmatpush1.bf16.msra.mxu0 %v6474
    %11185 = vmatprep.subr.bf16.mxu0 %v6483
    %11186 = vmatpush1.bf16.msra.mxu0 %v6482
    %11187 = vmatprep.subr.bf16.mxu0 %v6491
    %11188 = vmatpush1.bf16.msra.mxu0 %v6490
    %11189 = vmatprep.subr.bf16.mxu0 %v6499
    %11190 = vmatpush1.bf16.msra.mxu0 %v6498
    %11191 = vmatprep.subr.bf16.mxu0 %v6507
    %11192 = vmatpush1.bf16.msra.mxu0 %v6506
    %11193 = vmatprep.subr.bf16.mxu0 %v6515
    %11194 = vmatpush1.bf16.msra.mxu0 %v6514
    %11195 = vmatprep.subr.bf16.mxu0 %v6523
    %11196 = vmatpush1.bf16.msra.mxu0 %v6522
    %11197 = vmatprep.subr.bf16.mxu0 %v6531
    %11198 = vmatpush1.bf16.msra.mxu0 %v6530
    %11199 = vmatprep.subr.bf16.mxu0 %v6539
    %11200 = vmatpush1.bf16.msra.mxu0 %v6538
    %11201 = vmatprep.subr.bf16.mxu0 %v6547
    %11202 = vmatpush1.bf16.msra.mxu0 %v6546
    %11203 = vmatprep.subr.bf16.mxu0 %v6555
    %11204 = vmatpush1.bf16.msra.mxu0 %v6554
    %11205 = vmatprep.subr.bf16.mxu0 %v6563
    %11206 = vmatpush1.bf16.msra.mxu0 %v6562
    %11207 = vmatprep.mubr.bf16.mxu0 %v98
    %11208 = vmatmul.mubr.bf16.gmra.mrb[0].mxu0 %v97
    %v11209 = vpop.f32.mrb[0].mxu0
    %v11210 = vadd.f32 %v1719, %v11209
    %v11211 = vpop.f32.mrb[0].mxu0
    %v11212 = vadd.f32 %v1723, %v11211
    %v11213 = vpop.f32.mrb[0].mxu0
    %v11214 = vpop.f32.mrb[0].mxu0
    %11215 = vdwg.mxu0
    %11216 = vmatprep.subr.bf16.mxu0 %v6571
    %11217 = vmatpush1.bf16.msra.mxu0 %v6570
    %11218 = vmatprep.subr.bf16.mxu0 %v6579
    %11219 = vmatpush1.bf16.msra.mxu0 %v6578
    %11220 = vmatprep.subr.bf16.mxu0 %v6587
    %11221 = vmatpush1.bf16.msra.mxu0 %v6586
    %11222 = vmatprep.subr.bf16.mxu0 %v6595
    %11223 = vmatpush1.bf16.msra.mxu0 %v6594
    %11224 = vmatprep.subr.bf16.mxu0 %v6603
    %11225 = vmatpush1.bf16.msra.mxu0 %v6602
    %11226 = vmatprep.subr.bf16.mxu0 %v6611
    %11227 = vmatpush1.bf16.msra.mxu0 %v6610
    %11228 = vmatprep.subr.bf16.mxu0 %v6619
    %11229 = vmatpush1.bf16.msra.mxu0 %v6618
    %11230 = vmatprep.subr.bf16.mxu0 %v6627
    %11231 = vmatpush1.bf16.msra.mxu0 %v6626
    %11232 = vmatprep.subr.bf16.mxu0 %v6635
    %11233 = vmatpush1.bf16.msra.mxu0 %v6634
    %11234 = vmatprep.subr.bf16.mxu0 %v6643
    %11235 = vmatpush1.bf16.msra.mxu0 %v6642
    %11236 = vmatprep.subr.bf16.mxu0 %v6651
    %11237 = vmatpush1.bf16.msra.mxu0 %v6650
    %11238 = vmatprep.subr.bf16.mxu0 %v6659
    %11239 = vmatpush1.bf16.msra.mxu0 %v6658
    %11240 = vmatprep.subr.bf16.mxu0 %v6667
    %11241 = vmatpush1.bf16.msra.mxu0 %v6666
    %11242 = vmatprep.subr.bf16.mxu0 %v6675
    %11243 = vmatpush1.bf16.msra.mxu0 %v6674
    %11244 = vmatprep.subr.bf16.mxu0 %v6683
    %11245 = vmatpush1.bf16.msra.mxu0 %v6682
    %11246 = vmatprep.subr.bf16.mxu0 %v6691
    %11247 = vmatpush1.bf16.msra.mxu0 %v6690
    %11248 = vmatprep.mubr.bf16.mxu0 %v100
    %11249 = vmatmul.mubr.bf16.gmra.mrb[0].mxu0 %v99
    %v11250 = vpop.f32.mrb[0].mxu0
    %v11251 = vadd.f32 %v11210, %v11250
    %v11252 = vpop.f32.mrb[0].mxu0
    %v11253 = vadd.f32 %v11212, %v11252
    %v11254 = vpop.f32.mrb[0].mxu0
    %v11255 = vpop.f32.mrb[0].mxu0
    %11256 = vdwg.mxu0
    %11257 = vmatprep.subr.bf16.mxu0 %v6699
    %11258 = vmatpush1.bf16.msra.mxu0 %v6698
    %11259 = vmatprep.subr.bf16.mxu0 %v6707
    %11260 = vmatpush1.bf16.msra.mxu0 %v6706
    %11261 = vmatprep.subr.bf16.mxu0 %v6715
    %11262 = vmatpush1.bf16.msra.mxu0 %v6714
    %11263 = vmatprep.subr.bf16.mxu0 %v6723
    %11264 = vmatpush1.bf16.msra.mxu0 %v6722
    %11265 = vmatprep.subr.bf16.mxu0 %v6731
    %11266 = vmatpush1.bf16.msra.mxu0 %v6730
    %11267 = vmatprep.subr.bf16.mxu0 %v6739
    %11268 = vmatpush1.bf16.msra.mxu0 %v6738
    %11269 = vmatprep.subr.bf16.mxu0 %v6747
    %11270 = vmatpush1.bf16.msra.mxu0 %v6746
    %11271 = vmatprep.subr.bf16.mxu0 %v6755
    %11272 = vmatpush1.bf16.msra.mxu0 %v6754
    %11273 = vmatprep.subr.bf16.mxu0 %v6763
    %11274 = vmatpush1.bf16.msra.mxu0 %v6762
    %11275 = vmatprep.subr.bf16.mxu0 %v6771
    %11276 = vmatpush1.bf16.msra.mxu0 %v6770
    %11277 = vmatprep.subr.bf16.mxu0 %v6779
    %11278 = vmatpush1.bf16.msra.mxu0 %v6778
    %11279 = vmatprep.subr.bf16.mxu0 %v6787
    %11280 = vmatpush1.bf16.msra.mxu0 %v6786
    %11281 = vmatprep.subr.bf16.mxu0 %v6795
    %11282 = vmatpush1.bf16.msra.mxu0 %v6794
    %11283 = vmatprep.subr.bf16.mxu0 %v6803
    %11284 = vmatpush1.bf16.msra.mxu0 %v6802
    %11285 = vmatprep.subr.bf16.mxu0 %v6811
    %11286 = vmatpush1.bf16.msra.mxu0 %v6810
    %11287 = vmatprep.subr.bf16.mxu0 %v6819
    %11288 = vmatpush1.bf16.msra.mxu0 %v6818
    %11289 = vmatprep.mubr.bf16.mxu0 %v102
    %11290 = vmatmul.mubr.bf16.gmra.mrb[0].mxu0 %v101
    %v11291 = vpop.f32.mrb[0].mxu0
    %v11292 = vadd.f32 %v11251, %v11291
    %v11293 = vpop.f32.mrb[0].mxu0
    %v11294 = vadd.f32 %v11253, %v11293
    %v11295 = vpop.f32.mrb[0].mxu0
    %v11296 = vpop.f32.mrb[0].mxu0
    %11297 = vdwg.mxu0
    %11298 = vmatprep.subr.bf16.mxu0 %v6827
    %11299 = vmatpush1.bf16.msra.mxu0 %v6826
    %11300 = vmatprep.subr.bf16.mxu0 %v6835
    %11301 = vmatpush1.bf16.msra.mxu0 %v6834
    %11302 = vmatprep.subr.bf16.mxu0 %v6843
    %11303 = vmatpush1.bf16.msra.mxu0 %v6842
    %11304 = vmatprep.subr.bf16.mxu0 %v6851
    %11305 = vmatpush1.bf16.msra.mxu0 %v6850
    %11306 = vmatprep.subr.bf16.mxu0 %v6859
    %11307 = vmatpush1.bf16.msra.mxu0 %v6858
    %11308 = vmatprep.subr.bf16.mxu0 %v6867
    %11309 = vmatpush1.bf16.msra.mxu0 %v6866
    %11310 = vmatprep.subr.bf16.mxu0 %v6875
    %11311 = vmatpush1.bf16.msra.mxu0 %v6874
    %11312 = vmatprep.subr.bf16.mxu0 %v6883
    %11313 = vmatpush1.bf16.msra.mxu0 %v6882
    %11314 = vmatprep.subr.bf16.mxu0 %v6891
    %11315 = vmatpush1.bf16.msra.mxu0 %v6890
    %11316 = vmatprep.subr.bf16.mxu0 %v6899
    %11317 = vmatpush1.bf16.msra.mxu0 %v6898
    %11318 = vmatprep.subr.bf16.mxu0 %v6907
    %11319 = vmatpush1.bf16.msra.mxu0 %v6906
    %11320 = vmatprep.subr.bf16.mxu0 %v6915
    %11321 = vmatpush1.bf16.msra.mxu0 %v6914
    %11322 = vmatprep.subr.bf16.mxu0 %v6923
    %11323 = vmatpush1.bf16.msra.mxu0 %v6922
    %11324 = vmatprep.subr.bf16.mxu0 %v6931
    %11325 = vmatpush1.bf16.msra.mxu0 %v6930
    %11326 = vmatprep.subr.bf16.mxu0 %v6939
    %11327 = vmatpush1.bf16.msra.mxu0 %v6938
    %11328 = vmatprep.subr.bf16.mxu0 %v6947
    %11329 = vmatpush1.bf16.msra.mxu0 %v6946
    %11330 = vmatprep.mubr.bf16.mxu0 %v104
    %11331 = vmatmul.mubr.bf16.gmra.mrb[0].mxu0 %v103
    %v11332 = vpop.f32.mrb[0].mxu0
    %v11333 = vadd.f32 %v11292, %v11332
    %v11334 = vpop.f32.mrb[0].mxu0
    %v11335 = vadd.f32 %v11294, %v11334
    %v11336 = vpop.f32.mrb[0].mxu0
    %v11337 = vpop.f32.mrb[0].mxu0
    %11338 = vdwg.mxu0
    %11339 = vmatprep.subr.bf16.mxu0 %v6955
    %11340 = vmatpush1.bf16.msra.mxu0 %v6954
    %11341 = vmatprep.subr.bf16.mxu0 %v6963
    %11342 = vmatpush1.bf16.msra.mxu0 %v6962
    %11343 = vmatprep.subr.bf16.mxu0 %v6971
    %11344 = vmatpush1.bf16.msra.mxu0 %v6970
    %11345 = vmatprep.subr.bf16.mxu0 %v6979
    %11346 = vmatpush1.bf16.msra.mxu0 %v6978
    %11347 = vmatprep.subr.bf16.mxu0 %v6987
    %11348 = vmatpush1.bf16.msra.mxu0 %v6986
    %11349 = vmatprep.subr.bf16.mxu0 %v6995
    %11350 = vmatpush1.bf16.msra.mxu0 %v6994
    %11351 = vmatprep.subr.bf16.mxu0 %v7003
    %11352 = vmatpush1.bf16.msra.mxu0 %v7002
    %11353 = vmatprep.subr.bf16.mxu0 %v7011
    %11354 = vmatpush1.bf16.msra.mxu0 %v7010
    %11355 = vmatprep.subr.bf16.mxu0 %v7019
    %11356 = vmatpush1.bf16.msra.mxu0 %v7018
    %11357 = vmatprep.subr.bf16.mxu0 %v7027
    %11358 = vmatpush1.bf16.msra.mxu0 %v7026
    %11359 = vmatprep.subr.bf16.mxu0 %v7035
    %11360 = vmatpush1.bf16.msra.mxu0 %v7034
    %11361 = vmatprep.subr.bf16.mxu0 %v7043
    %11362 = vmatpush1.bf16.msra.mxu0 %v7042
    %11363 = vmatprep.subr.bf16.mxu0 %v7051
    %11364 = vmatpush1.bf16.msra.mxu0 %v7050
    %11365 = vmatprep.subr.bf16.mxu0 %v7059
    %11366 = vmatpush1.bf16.msra.mxu0 %v7058
    %11367 = vmatprep.subr.bf16.mxu0 %v7067
    %11368 = vmatpush1.bf16.msra.mxu0 %v7066
    %11369 = vmatprep.subr.bf16.mxu0 %v7075
    %11370 = vmatpush1.bf16.msra.mxu0 %v7074
    %11371 = vmatprep.mubr.bf16.mxu0 %v106
    %11372 = vmatmul.mubr.bf16.gmra.mrb[0].mxu0 %v105
    %v11373 = vpop.f32.mrb[0].mxu0
    %v11374 = vadd.f32 %v11333, %v11373
    %v11375 = vpop.f32.mrb[0].mxu0
    %v11376 = vadd.f32 %v11335, %v11375
    %v11377 = vpop.f32.mrb[0].mxu0
    %v11378 = vpop.f32.mrb[0].mxu0
    %11379 = vdwg.mxu0
    %11380 = vmatprep.subr.bf16.mxu0 %v7083
    %11381 = vmatpush1.bf16.msra.mxu0 %v7082
    %11382 = vmatprep.subr.bf16.mxu0 %v7091
    %11383 = vmatpush1.bf16.msra.mxu0 %v7090
    %11384 = vmatprep.subr.bf16.mxu0 %v7099
    %11385 = vmatpush1.bf16.msra.mxu0 %v7098
    %11386 = vmatprep.subr.bf16.mxu0 %v7107
    %11387 = vmatpush1.bf16.msra.mxu0 %v7106
    %11388 = vmatprep.subr.bf16.mxu0 %v7115
    %11389 = vmatpush1.bf16.msra.mxu0 %v7114
    %11390 = vmatprep.subr.bf16.mxu0 %v7123
    %11391 = vmatpush1.bf16.msra.mxu0 %v7122
    %11392 = vmatprep.subr.bf16.mxu0 %v7131
    %11393 = vmatpush1.bf16.msra.mxu0 %v7130
    %11394 = vmatprep.subr.bf16.mxu0 %v7139
    %11395 = vmatpush1.bf16.msra.mxu0 %v7138
    %11396 = vmatprep.subr.bf16.mxu0 %v7147
    %11397 = vmatpush1.bf16.msra.mxu0 %v7146
    %11398 = vmatprep.subr.bf16.mxu0 %v7155
    %11399 = vmatpush1.bf16.msra.mxu0 %v7154
    %11400 = vmatprep.subr.bf16.mxu0 %v7163
    %11401 = vmatpush1.bf16.msra.mxu0 %v7162
    %11402 = vmatprep.subr.bf16.mxu0 %v7171
    %11403 = vmatpush1.bf16.msra.mxu0 %v7170
    %11404 = vmatprep.subr.bf16.mxu0 %v7179
    %11405 = vmatpush1.bf16.msra.mxu0 %v7178
    %11406 = vmatprep.subr.bf16.mxu0 %v7187
    %11407 = vmatpush1.bf16.msra.mxu0 %v7186
    %11408 = vmatprep.subr.bf16.mxu0 %v7195
    %11409 = vmatpush1.bf16.msra.mxu0 %v7194
    %11410 = vmatprep.subr.bf16.mxu0 %v7203
    %11411 = vmatpush1.bf16.msra.mxu0 %v7202
    %11412 = vmatprep.mubr.bf16.mxu0 %v108
    %11413 = vmatmul.mubr.bf16.gmra.mrb[0].mxu0 %v107
    %v11414 = vpop.f32.mrb[0].mxu0
    %v11415 = vadd.f32 %v11374, %v11414
    %v11416 = vpop.f32.mrb[0].mxu0
    %v11417 = vadd.f32 %v11376, %v11416
    %v11418 = vpop.f32.mrb[0].mxu0
    %v11419 = vpop.f32.mrb[0].mxu0
    %11420 = vdwg.mxu0
    %11421 = vmatprep.subr.bf16.mxu0 %v7211
    %11422 = vmatpush1.bf16.msra.mxu0 %v7210
    %11423 = vmatprep.subr.bf16.mxu0 %v7219
    %11424 = vmatpush1.bf16.msra.mxu0 %v7218
    %11425 = vmatprep.subr.bf16.mxu0 %v7227
    %11426 = vmatpush1.bf16.msra.mxu0 %v7226
    %11427 = vmatprep.subr.bf16.mxu0 %v7235
    %11428 = vmatpush1.bf16.msra.mxu0 %v7234
    %11429 = vmatprep.subr.bf16.mxu0 %v7243
    %11430 = vmatpush1.bf16.msra.mxu0 %v7242
    %11431 = vmatprep.subr.bf16.mxu0 %v7251
    %11432 = vmatpush1.bf16.msra.mxu0 %v7250
    %11433 = vmatprep.subr.bf16.mxu0 %v7259
    %11434 = vmatpush1.bf16.msra.mxu0 %v7258
    %11435 = vmatprep.subr.bf16.mxu0 %v7267
    %11436 = vmatpush1.bf16.msra.mxu0 %v7266
    %11437 = vmatprep.subr.bf16.mxu0 %v7275
    %11438 = vmatpush1.bf16.msra.mxu0 %v7274
    %11439 = vmatprep.subr.bf16.mxu0 %v7283
    %11440 = vmatpush1.bf16.msra.mxu0 %v7282
    %11441 = vmatprep.subr.bf16.mxu0 %v7291
    %11442 = vmatpush1.bf16.msra.mxu0 %v7290
    %11443 = vmatprep.subr.bf16.mxu0 %v7299
    %11444 = vmatpush1.bf16.msra.mxu0 %v7298
    %11445 = vmatprep.subr.bf16.mxu0 %v7307
    %11446 = vmatpush1.bf16.msra.mxu0 %v7306
    %11447 = vmatprep.subr.bf16.mxu0 %v7315
    %11448 = vmatpush1.bf16.msra.mxu0 %v7314
    %11449 = vmatprep.subr.bf16.mxu0 %v7323
    %11450 = vmatpush1.bf16.msra.mxu0 %v7322
    %11451 = vmatprep.subr.bf16.mxu0 %v7331
    %11452 = vmatpush1.bf16.msra.mxu0 %v7330
    %11453 = vmatprep.mubr.bf16.mxu0 %v110
    %11454 = vmatmul.mubr.bf16.gmra.mrb[0].mxu0 %v109
    %v11455 = vpop.f32.mrb[0].mxu0
    %v11456 = vadd.f32 %v11415, %v11455
    %v11457 = vpop.f32.mrb[0].mxu0
    %v11458 = vadd.f32 %v11417, %v11457
    %v11459 = vpop.f32.mrb[0].mxu0
    %v11460 = vpop.f32.mrb[0].mxu0
    %11461 = vdwg.mxu0
    %11462 = vmatprep.subr.bf16.mxu0 %v7339
    %11463 = vmatpush1.bf16.msra.mxu0 %v7338
    %11464 = vmatprep.subr.bf16.mxu0 %v7347
    %11465 = vmatpush1.bf16.msra.mxu0 %v7346
    %11466 = vmatprep.subr.bf16.mxu0 %v7355
    %11467 = vmatpush1.bf16.msra.mxu0 %v7354
    %11468 = vmatprep.subr.bf16.mxu0 %v7363
    %11469 = vmatpush1.bf16.msra.mxu0 %v7362
    %11470 = vmatprep.subr.bf16.mxu0 %v7371
    %11471 = vmatpush1.bf16.msra.mxu0 %v7370
    %11472 = vmatprep.subr.bf16.mxu0 %v7379
    %11473 = vmatpush1.bf16.msra.mxu0 %v7378
    %11474 = vmatprep.subr.bf16.mxu0 %v7387
    %11475 = vmatpush1.bf16.msra.mxu0 %v7386
    %11476 = vmatprep.subr.bf16.mxu0 %v7395
    %11477 = vmatpush1.bf16.msra.mxu0 %v7394
    %11478 = vmatprep.subr.bf16.mxu0 %v7403
    %11479 = vmatpush1.bf16.msra.mxu0 %v7402
    %11480 = vmatprep.subr.bf16.mxu0 %v7411
    %11481 = vmatpush1.bf16.msra.mxu0 %v7410
    %11482 = vmatprep.subr.bf16.mxu0 %v7419
    %11483 = vmatpush1.bf16.msra.mxu0 %v7418
    %11484 = vmatprep.subr.bf16.mxu0 %v7427
    %11485 = vmatpush1.bf16.msra.mxu0 %v7426
    %11486 = vmatprep.subr.bf16.mxu0 %v7435
    %11487 = vmatpush1.bf16.msra.mxu0 %v7434
    %11488 = vmatprep.subr.bf16.mxu0 %v7443
    %11489 = vmatpush1.bf16.msra.mxu0 %v7442
    %11490 = vmatprep.subr.bf16.mxu0 %v7451
    %11491 = vmatpush1.bf16.msra.mxu0 %v7450
    %11492 = vmatprep.subr.bf16.mxu0 %v7459
    %11493 = vmatpush1.bf16.msra.mxu0 %v7458
    %11494 = vmatprep.mubr.bf16.mxu0 %v112
    %11495 = vmatmul.mubr.bf16.gmra.mrb[0].mxu0 %v111
    %v11496 = vpop.f32.mrb[0].mxu0
    %v11497 = vadd.f32 %v11456, %v11496
    %v11498 = vpop.f32.mrb[0].mxu0
    %v11499 = vadd.f32 %v11458, %v11498
    %v11500 = vpop.f32.mrb[0].mxu0
    %v11501 = vpop.f32.mrb[0].mxu0
    %11502 = vdwg.mxu0
    %11503 = vmatprep.subr.bf16.mxu0 %v7467
    %11504 = vmatpush1.bf16.msra.mxu0 %v7466
    %11505 = vmatprep.subr.bf16.mxu0 %v7475
    %11506 = vmatpush1.bf16.msra.mxu0 %v7474
    %11507 = vmatprep.subr.bf16.mxu0 %v7483
    %11508 = vmatpush1.bf16.msra.mxu0 %v7482
    %11509 = vmatprep.subr.bf16.mxu0 %v7491
    %11510 = vmatpush1.bf16.msra.mxu0 %v7490
    %11511 = vmatprep.subr.bf16.mxu0 %v7499
    %11512 = vmatpush1.bf16.msra.mxu0 %v7498
    %11513 = vmatprep.subr.bf16.mxu0 %v7507
    %11514 = vmatpush1.bf16.msra.mxu0 %v7506
    %11515 = vmatprep.subr.bf16.mxu0 %v7515
    %11516 = vmatpush1.bf16.msra.mxu0 %v7514
    %11517 = vmatprep.subr.bf16.mxu0 %v7523
    %11518 = vmatpush1.bf16.msra.mxu0 %v7522
    %11519 = vmatprep.subr.bf16.mxu0 %v7531
    %11520 = vmatpush1.bf16.msra.mxu0 %v7530
    %11521 = vmatprep.subr.bf16.mxu0 %v7539
    %11522 = vmatpush1.bf16.msra.mxu0 %v7538
    %11523 = vmatprep.subr.bf16.mxu0 %v7547
    %11524 = vmatpush1.bf16.msra.mxu0 %v7546
    %11525 = vmatprep.subr.bf16.mxu0 %v7555
    %11526 = vmatpush1.bf16.msra.mxu0 %v7554
    %11527 = vmatprep.subr.bf16.mxu0 %v7563
    %11528 = vmatpush1.bf16.msra.mxu0 %v7562
    %11529 = vmatprep.subr.bf16.mxu0 %v7571
    %11530 = vmatpush1.bf16.msra.mxu0 %v7570
    %11531 = vmatprep.subr.bf16.mxu0 %v7579
    %11532 = vmatpush1.bf16.msra.mxu0 %v7578
    %11533 = vmatprep.subr.bf16.mxu0 %v7587
    %11534 = vmatpush1.bf16.msra.mxu0 %v7586
    %11535 = vmatprep.mubr.bf16.mxu0 %v114
    %11536 = vmatmul.mubr.bf16.gmra.mrb[0].mxu0 %v113
    %v11537 = vpop.f32.mrb[0].mxu0
    %v11538 = vadd.f32 %v11497, %v11537
    %v11539 = vpop.f32.mrb[0].mxu0
    %v11540 = vadd.f32 %v11499, %v11539
    %v11541 = vpop.f32.mrb[0].mxu0
    %v11542 = vpop.f32.mrb[0].mxu0
    %11543 = vdwg.mxu0
    %11544 = vmatprep.subr.bf16.mxu0 %v7595
    %11545 = vmatpush1.bf16.msra.mxu0 %v7594
    %11546 = vmatprep.subr.bf16.mxu0 %v7603
    %11547 = vmatpush1.bf16.msra.mxu0 %v7602
    %11548 = vmatprep.subr.bf16.mxu0 %v7611
    %11549 = vmatpush1.bf16.msra.mxu0 %v7610
    %11550 = vmatprep.subr.bf16.mxu0 %v7619
    %11551 = vmatpush1.bf16.msra.mxu0 %v7618
    %11552 = vmatprep.subr.bf16.mxu0 %v7627
    %11553 = vmatpush1.bf16.msra.mxu0 %v7626
    %11554 = vmatprep.subr.bf16.mxu0 %v7635
    %11555 = vmatpush1.bf16.msra.mxu0 %v7634
    %11556 = vmatprep.subr.bf16.mxu0 %v7643
    %11557 = vmatpush1.bf16.msra.mxu0 %v7642
    %11558 = vmatprep.subr.bf16.mxu0 %v7651
    %11559 = vmatpush1.bf16.msra.mxu0 %v7650
    %11560 = vmatprep.subr.bf16.mxu0 %v7659
    %11561 = vmatpush1.bf16.msra.mxu0 %v7658
    %11562 = vmatprep.subr.bf16.mxu0 %v7667
    %11563 = vmatpush1.bf16.msra.mxu0 %v7666
    %11564 = vmatprep.subr.bf16.mxu0 %v7675
    %11565 = vmatpush1.bf16.msra.mxu0 %v7674
    %11566 = vmatprep.subr.bf16.mxu0 %v7683
    %11567 = vmatpush1.bf16.msra.mxu0 %v7682
    %11568 = vmatprep.subr.bf16.mxu0 %v7691
    %11569 = vmatpush1.bf16.msra.mxu0 %v7690
    %11570 = vmatprep.subr.bf16.mxu0 %v7699
    %11571 = vmatpush1.bf16.msra.mxu0 %v7698
    %11572 = vmatprep.subr.bf16.mxu0 %v7707
    %11573 = vmatpush1.bf16.msra.mxu0 %v7706
    %11574 = vmatprep.subr.bf16.mxu0 %v7715
    %11575 = vmatpush1.bf16.msra.mxu0 %v7714
    %11576 = vmatprep.mubr.bf16.mxu0 %v116
    %11577 = vmatmul.mubr.bf16.gmra.mrb[0].mxu0 %v115
    %v11578 = vpop.f32.mrb[0].mxu0
    %v11579 = vadd.f32 %v11538, %v11578
    %v11580 = vpop.f32.mrb[0].mxu0
    %v11581 = vadd.f32 %v11540, %v11580
    %v11582 = vpop.f32.mrb[0].mxu0
    %v11583 = vpop.f32.mrb[0].mxu0
    %11584 = vdwg.mxu0
    %11585 = vmatprep.subr.bf16.mxu0 %v7723
    %11586 = vmatpush1.bf16.msra.mxu0 %v7722
    %11587 = vmatprep.subr.bf16.mxu0 %v7731
    %11588 = vmatpush1.bf16.msra.mxu0 %v7730
    %11589 = vmatprep.subr.bf16.mxu0 %v7739
    %11590 = vmatpush1.bf16.msra.mxu0 %v7738
    %11591 = vmatprep.subr.bf16.mxu0 %v7747
    %11592 = vmatpush1.bf16.msra.mxu0 %v7746
    %11593 = vmatprep.subr.bf16.mxu0 %v7755
    %11594 = vmatpush1.bf16.msra.mxu0 %v7754
    %11595 = vmatprep.subr.bf16.mxu0 %v7763
    %11596 = vmatpush1.bf16.msra.mxu0 %v7762
    %11597 = vmatprep.subr.bf16.mxu0 %v7771
    %11598 = vmatpush1.bf16.msra.mxu0 %v7770
    %11599 = vmatprep.subr.bf16.mxu0 %v7779
    %11600 = vmatpush1.bf16.msra.mxu0 %v7778
    %11601 = vmatprep.subr.bf16.mxu0 %v7787
    %11602 = vmatpush1.bf16.msra.mxu0 %v7786
    %11603 = vmatprep.subr.bf16.mxu0 %v7795
    %11604 = vmatpush1.bf16.msra.mxu0 %v7794
    %11605 = vmatprep.subr.bf16.mxu0 %v7803
    %11606 = vmatpush1.bf16.msra.mxu0 %v7802
    %11607 = vmatprep.subr.bf16.mxu0 %v7811
    %11608 = vmatpush1.bf16.msra.mxu0 %v7810
    %11609 = vmatprep.subr.bf16.mxu0 %v7819
    %11610 = vmatpush1.bf16.msra.mxu0 %v7818
    %11611 = vmatprep.subr.bf16.mxu0 %v7827
    %11612 = vmatpush1.bf16.msra.mxu0 %v7826
    %11613 = vmatprep.subr.bf16.mxu0 %v7835
    %11614 = vmatpush1.bf16.msra.mxu0 %v7834
    %11615 = vmatprep.subr.bf16.mxu0 %v7843
    %11616 = vmatpush1.bf16.msra.mxu0 %v7842
    %11617 = vmatprep.mubr.bf16.mxu0 %v118
    %11618 = vmatmul.mubr.bf16.gmra.mrb[0].mxu0 %v117
    %v11619 = vpop.f32.mrb[0].mxu0
    %v11620 = vadd.f32 %v11579, %v11619
    %v11621 = vpop.f32.mrb[0].mxu0
    %v11622 = vadd.f32 %v11581, %v11621
    %v11623 = vpop.f32.mrb[0].mxu0
    %v11624 = vpop.f32.mrb[0].mxu0
    %11625 = vdwg.mxu0
    %11626 = vmatprep.subr.bf16.mxu0 %v7851
    %11627 = vmatpush1.bf16.msra.mxu0 %v7850
    %11628 = vmatprep.subr.bf16.mxu0 %v7859
    %11629 = vmatpush1.bf16.msra.mxu0 %v7858
    %11630 = vmatprep.subr.bf16.mxu0 %v7867
    %11631 = vmatpush1.bf16.msra.mxu0 %v7866
    %11632 = vmatprep.subr.bf16.mxu0 %v7875
    %11633 = vmatpush1.bf16.msra.mxu0 %v7874
    %11634 = vmatprep.subr.bf16.mxu0 %v7883
    %11635 = vmatpush1.bf16.msra.mxu0 %v7882
    %11636 = vmatprep.subr.bf16.mxu0 %v7891
    %11637 = vmatpush1.bf16.msra.mxu0 %v7890
    %11638 = vmatprep.subr.bf16.mxu0 %v7899
    %11639 = vmatpush1.bf16.msra.mxu0 %v7898
    %11640 = vmatprep.subr.bf16.mxu0 %v7907
    %11641 = vmatpush1.bf16.msra.mxu0 %v7906
    %11642 = vmatprep.subr.bf16.mxu0 %v7915
    %11643 = vmatpush1.bf16.msra.mxu0 %v7914
    %11644 = vmatprep.subr.bf16.mxu0 %v7923
    %11645 = vmatpush1.bf16.msra.mxu0 %v7922
    %11646 = vmatprep.subr.bf16.mxu0 %v7931
    %11647 = vmatpush1.bf16.msra.mxu0 %v7930
    %11648 = vmatprep.subr.bf16.mxu0 %v7939
    %11649 = vmatpush1.bf16.msra.mxu0 %v7938
    %11650 = vmatprep.subr.bf16.mxu0 %v7947
    %11651 = vmatpush1.bf16.msra.mxu0 %v7946
    %11652 = vmatprep.subr.bf16.mxu0 %v7955
    %11653 = vmatpush1.bf16.msra.mxu0 %v7954
    %11654 = vmatprep.subr.bf16.mxu0 %v7963
    %11655 = vmatpush1.bf16.msra.mxu0 %v7962
    %11656 = vmatprep.subr.bf16.mxu0 %v7971
    %11657 = vmatpush1.bf16.msra.mxu0 %v7970
    %11658 = vmatprep.mubr.bf16.mxu0 %v120
    %11659 = vmatmul.mubr.bf16.gmra.mrb[0].mxu0 %v119
    %v11660 = vpop.f32.mrb[0].mxu0
    %v11661 = vadd.f32 %v11620, %v11660
    %v11662 = vpop.f32.mrb[0].mxu0
    %v11663 = vadd.f32 %v11622, %v11662
    %v11664 = vpop.f32.mrb[0].mxu0
    %v11665 = vpop.f32.mrb[0].mxu0
    %11666 = vdwg.mxu0
    %11667 = vmatprep.subr.bf16.mxu0 %v7979
    %11668 = vmatpush1.bf16.msra.mxu0 %v7978
    %11669 = vmatprep.subr.bf16.mxu0 %v7987
    %11670 = vmatpush1.bf16.msra.mxu0 %v7986
    %11671 = vmatprep.subr.bf16.mxu0 %v7995
    %11672 = vmatpush1.bf16.msra.mxu0 %v7994
    %11673 = vmatprep.subr.bf16.mxu0 %v8003
    %11674 = vmatpush1.bf16.msra.mxu0 %v8002
    %11675 = vmatprep.subr.bf16.mxu0 0
    %11676 = vmatpush1.bf16.msra.mxu0 0
    %11677 = vmatprep.subr.bf16.mxu0 0
    %11678 = vmatpush1.bf16.msra.mxu0 0
    %11679 = vmatprep.subr.bf16.mxu0 0
    %11680 = vmatpush1.bf16.msra.mxu0 0
    %11681 = vmatprep.subr.bf16.mxu0 0
    %11682 = vmatpush1.bf16.msra.mxu0 0
    %11683 = vmatprep.subr.bf16.mxu0 0
    %11684 = vmatpush1.bf16.msra.mxu0 0
    %11685 = vmatprep.subr.bf16.mxu0 0
    %11686 = vmatpush1.bf16.msra.mxu0 0
    %11687 = vmatprep.subr.bf16.mxu0 0
    %11688 = vmatpush1.bf16.msra.mxu0 0
    %11689 = vmatprep.subr.bf16.mxu0 0
    %11690 = vmatpush1.bf16.msra.mxu0 0
    %11691 = vmatprep.subr.bf16.mxu0 0
    %11692 = vmatpush1.bf16.msra.mxu0 0
    %11693 = vmatprep.subr.bf16.mxu0 0
    %11694 = vmatpush1.bf16.msra.mxu0 0
    %11695 = vmatprep.subr.bf16.mxu0 0
    %11696 = vmatpush1.bf16.msra.mxu0 0
    %11697 = vmatprep.subr.bf16.mxu0 0
    %11698 = vmatpush1.bf16.msra.mxu0 0
    %11699 = vmatprep.mubr.bf16.mxu0 0
    %11700 = vmatmul.mubr.bf16.gmra.mrb[0].mxu0 %v9574
    %v11701 = vpop.f32.mrb[0].mxu0
    %v11702 = vadd.f32 %v11661, %v11701
    %v11703 = vpop.f32.mrb[0].mxu0
    %v11704 = vadd.f32 %v11663, %v11703
    %v11705 = vpop.f32.mrb[0].mxu0
    %v11706 = vpop.f32.mrb[0].mxu0
    %11707 = vdwg.mxu0
    %v11708 = vmax.f32 %v10103, 0.0
    %v11709 = vmax.f32 %v10105, 0.0
    %v11710 = vmax.f32 %v10636, 0.0
    %v11711 = vmax.f32 %v10638, 0.0
    %v11712 = vmax.f32 %v11169, 0.0
    %v11713 = vmax.f32 %v11171, 0.0
    %v11714 = vmax.f32 %v11702, 0.0
    %v11715 = vmax.f32 %v11704, 0.0
    %v11716 = vpack.c.bf16 %v11708, %v11708
    %v11717 = vpack.c.bf16 %v11709, %v11709
    %v11718 = vpack.c.bf16 %v11710, %v11710
    %v11719 = vpack.c.bf16 %v11711, %v11711
    %v11720 = vpack.c.bf16 %v11712, %v11712
    %v11721 = vpack.c.bf16 %v11713, %v11713
    %v11722 = vpack.c.bf16 %v11714, %v11714
    %v11723 = vpack.c.bf16 %v11715, %v11715
    %v11724 = vld [vmem:[#allocation6] sm:$0xf]
    %v11725 = vld [vmem:[#allocation6 + $0x4] sm:$0xf]
    %v11726 = vld [vmem:[#allocation6 + $0x8] sm:$0xf]
    %v11727 = vld [vmem:[#allocation6 + $0xc] sm:$0xf]
    %v11728 = vld [vmem:[#allocation6 + $0x10] sm:$0xf]
    %v11729 = vld [vmem:[#allocation6 + $0x14] sm:$0xf]
    %v11730 = vld [vmem:[#allocation6 + $0x18] sm:$0xf]
    %v11731 = vld [vmem:[#allocation6 + $0x1c] sm:$0xf]
    %v11732 = vld [vmem:[#allocation6 + $0x20] sm:$0xf]
    %v11733 = vld [vmem:[#allocation6 + $0x24] sm:$0xf]
    %v11734 = vld [vmem:[#allocation6 + $0x28] sm:$0xf]
    %v11735 = vld [vmem:[#allocation6 + $0x2c] sm:$0xf]
    %v11736 = vld [vmem:[#allocation6 + $0x30] sm:$0xf]
    %v11737 = vld [vmem:[#allocation6 + $0x34] sm:$0xf]
    %v11738 = vld [vmem:[#allocation6 + $0x38] sm:$0xf]
    %v11739 = vld [vmem:[#allocation6 + $0x3c] sm:$0xf]
    %v11740 = vld [vmem:[#allocation6 + $0x40] sm:$0xf]
    %v11741 = vld [vmem:[#allocation6 + $0x44] sm:$0xf]
    %v11742 = vld [vmem:[#allocation6 + $0x48] sm:$0xf]
    %v11743 = vld [vmem:[#allocation6 + $0x4c] sm:$0xf]
    %v11744 = vld [vmem:[#allocation6 + $0x50] sm:$0xf]
    %v11745 = vld [vmem:[#allocation6 + $0x54] sm:$0xf]
    %v11746 = vld [vmem:[#allocation6 + $0x58] sm:$0xf]
    %v11747 = vld [vmem:[#allocation6 + $0x5c] sm:$0xf]
    %v11748 = vld [vmem:[#allocation6 + $0x60] sm:$0xf]
    %v11749 = vld [vmem:[#allocation6 + $0x64] sm:$0xf]
    %v11750 = vld [vmem:[#allocation6 + $0x68] sm:$0xf]
    %v11751 = vld [vmem:[#allocation6 + $0x6c] sm:$0xf]
    %v11752 = vld [vmem:[#allocation6 + $0x70] sm:$0xf]
    %v11753 = vld [vmem:[#allocation6 + $0x74] sm:$0xf]
    %v11754 = vld [vmem:[#allocation6 + $0x78] sm:$0xf]
    %v11755 = vld [vmem:[#allocation6 + $0x7c] sm:$0xf]
    %v11756 = vld [vmem:[#allocation6 + $0x80] sm:$0xf]
    %v11757 = vld [vmem:[#allocation6 + $0x84] sm:$0xf]
    %v11758 = vld [vmem:[#allocation6 + $0x88] sm:$0xf]
    %v11759 = vld [vmem:[#allocation6 + $0x8c] sm:$0xf]
    %v11760 = vld [vmem:[#allocation6 + $0x90] sm:$0xf]
    %v11761 = vld [vmem:[#allocation6 + $0x94] sm:$0xf]
    %v11762 = vld [vmem:[#allocation6 + $0x98] sm:$0xf]
    %v11763 = vld [vmem:[#allocation6 + $0x9c] sm:$0xf]
    %v11764 = vld [vmem:[#allocation6 + $0xa0] sm:$0xf]
    %v11765 = vld [vmem:[#allocation6 + $0xa4] sm:$0xf]
    %v11766 = vld [vmem:[#allocation6 + $0xa8] sm:$0xf]
    %v11767 = vld [vmem:[#allocation6 + $0xac] sm:$0xf]
    %v11768 = vld [vmem:[#allocation6 + $0xb0] sm:$0xf]
    %v11769 = vld [vmem:[#allocation6 + $0xb4] sm:$0xf]
    %v11770 = vld [vmem:[#allocation6 + $0xb8] sm:$0xf]
    %v11771 = vld [vmem:[#allocation6 + $0xbc] sm:$0xf]
    %v11772 = vld [vmem:[#allocation6 + $0xc0] sm:$0xf]
    %v11773 = vld [vmem:[#allocation6 + $0xc4] sm:$0xf]
    %v11774 = vld [vmem:[#allocation6 + $0xc8] sm:$0xf]
    %v11775 = vld [vmem:[#allocation6 + $0xcc] sm:$0xf]
    %v11776 = vld [vmem:[#allocation6 + $0xd0] sm:$0xf]
    %v11777 = vld [vmem:[#allocation6 + $0xd4] sm:$0xf]
    %v11778 = vld [vmem:[#allocation6 + $0xd8] sm:$0xf]
    %v11779 = vld [vmem:[#allocation6 + $0xdc] sm:$0xf]
    %v11780 = vld [vmem:[#allocation6 + $0xe0] sm:$0xf]
    %v11781 = vld [vmem:[#allocation6 + $0xe4] sm:$0xf]
    %v11782 = vld [vmem:[#allocation6 + $0xe8] sm:$0xf]
    %v11783 = vld [vmem:[#allocation6 + $0xec] sm:$0xf]
    %v11784 = vld [vmem:[#allocation6 + $0xf0] sm:$0xf]
    %v11785 = vld [vmem:[#allocation6 + $0xf4] sm:$0xf]
    %v11786 = vld [vmem:[#allocation6 + $0xf8] sm:$0xf]
    %v11787 = vld [vmem:[#allocation6 + $0xfc] sm:$0xf]
    %v11788 = vld [vmem:[#allocation6 + $0x100] sm:$0xf]
    %v11789 = vld [vmem:[#allocation6 + $0x104] sm:$0xf]
    %v11790 = vld [vmem:[#allocation6 + $0x108] sm:$0xf]
    %v11791 = vld [vmem:[#allocation6 + $0x10c] sm:$0xf]
    %v11792 = vld [vmem:[#allocation6 + $0x110] sm:$0xf]
    %v11793 = vld [vmem:[#allocation6 + $0x114] sm:$0xf]
    %v11794 = vld [vmem:[#allocation6 + $0x118] sm:$0xf]
    %v11795 = vld [vmem:[#allocation6 + $0x11c] sm:$0xf]
    %v11796 = vld [vmem:[#allocation6 + $0x120] sm:$0xf]
    %v11797 = vld [vmem:[#allocation6 + $0x124] sm:$0xf]
    %v11798 = vld [vmem:[#allocation6 + $0x128] sm:$0xf]
    %v11799 = vld [vmem:[#allocation6 + $0x12c] sm:$0xf]
    %v11800 = vld [vmem:[#allocation6 + $0x130] sm:$0xf]
    %v11801 = vld [vmem:[#allocation6 + $0x134] sm:$0xf]
    %v11802 = vld [vmem:[#allocation6 + $0x138] sm:$0xf]
    %v11803 = vld [vmem:[#allocation6 + $0x13c] sm:$0xf]
    %v11804 = vld [vmem:[#allocation6 + $0x140] sm:$0xf]
    %v11805 = vld [vmem:[#allocation6 + $0x144] sm:$0xf]
    %v11806 = vld [vmem:[#allocation6 + $0x148] sm:$0xf]
    %v11807 = vld [vmem:[#allocation6 + $0x14c] sm:$0xf]
    %v11808 = vld [vmem:[#allocation6 + $0x150] sm:$0xf]
    %v11809 = vld [vmem:[#allocation6 + $0x154] sm:$0xf]
    %v11810 = vld [vmem:[#allocation6 + $0x158] sm:$0xf]
    %v11811 = vld [vmem:[#allocation6 + $0x15c] sm:$0xf]
    %v11812 = vld [vmem:[#allocation6 + $0x160] sm:$0xf]
    %v11813 = vld [vmem:[#allocation6 + $0x164] sm:$0xf]
    %v11814 = vld [vmem:[#allocation6 + $0x168] sm:$0xf]
    %v11815 = vld [vmem:[#allocation6 + $0x16c] sm:$0xf]
    %v11816 = vld [vmem:[#allocation6 + $0x170] sm:$0xf]
    %v11817 = vld [vmem:[#allocation6 + $0x174] sm:$0xf]
    %v11818 = vld [vmem:[#allocation6 + $0x178] sm:$0xf]
    %v11819 = vld [vmem:[#allocation6 + $0x17c] sm:$0xf]
    %v11820 = vld [vmem:[#allocation6 + $0x180] sm:$0xf]
    %v11821 = vld [vmem:[#allocation6 + $0x184] sm:$0xf]
    %v11822 = vld [vmem:[#allocation6 + $0x188] sm:$0xf]
    %v11823 = vld [vmem:[#allocation6 + $0x18c] sm:$0xf]
    %v11824 = vld [vmem:[#allocation6 + $0x190] sm:$0xf]
    %v11825 = vld [vmem:[#allocation6 + $0x194] sm:$0xf]
    %v11826 = vld [vmem:[#allocation6 + $0x198] sm:$0xf]
    %v11827 = vld [vmem:[#allocation6 + $0x19c] sm:$0xf]
    %v11828 = vld [vmem:[#allocation6 + $0x1a0] sm:$0xf]
    %v11829 = vld [vmem:[#allocation6 + $0x1a4] sm:$0xf]
    %v11830 = vld [vmem:[#allocation6 + $0x1a8] sm:$0xf]
    %v11831 = vld [vmem:[#allocation6 + $0x1ac] sm:$0xf]
    %v11832 = vld [vmem:[#allocation6 + $0x1b0] sm:$0xf]
    %v11833 = vld [vmem:[#allocation6 + $0x1b4] sm:$0xf]
    %v11834 = vld [vmem:[#allocation6 + $0x1b8] sm:$0xf]
    %v11835 = vld [vmem:[#allocation6 + $0x1bc] sm:$0xf]
    %v11836 = vld [vmem:[#allocation6 + $0x1c0] sm:$0xf]
    %v11837 = vld [vmem:[#allocation6 + $0x1c4] sm:$0xf]
    %v11838 = vld [vmem:[#allocation6 + $0x1c8] sm:$0xf]
    %v11839 = vld [vmem:[#allocation6 + $0x1cc] sm:$0xf]
    %v11840 = vld [vmem:[#allocation6 + $0x1d0] sm:$0xf]
    %v11841 = vld [vmem:[#allocation6 + $0x1d4] sm:$0xf]
    %v11842 = vld [vmem:[#allocation6 + $0x1d8] sm:$0xf]
    %v11843 = vld [vmem:[#allocation6 + $0x1dc] sm:$0xf]
    %v11844 = vld [vmem:[#allocation6 + $0x1e0] sm:$0xf]
    %v11845 = vld [vmem:[#allocation6 + $0x1e4] sm:$0xf]
    %v11846 = vld [vmem:[#allocation6 + $0x1e8] sm:$0xf]
    %v11847 = vld [vmem:[#allocation6 + $0x1ec] sm:$0xf]
    %v11848 = vld [vmem:[#allocation6 + $0x1f0] sm:$0xf]
    %v11849 = vld [vmem:[#allocation6 + $0x1f4] sm:$0xf]
    %v11850 = vld [vmem:[#allocation6 + $0x1f8] sm:$0xf]
    %v11851 = vld [vmem:[#allocation6 + $0x1fc] sm:$0xf]
    %v11852 = vld [vmem:[#allocation7] sm:$0x1]
    %v11854 = vlaneseq
    %v11855 = vshrl.u32 %v11854, 7
    %v11856 = vsub.s32 0, %v11855
    %v11857 = vrot.slane %v11852, %v11856
    %v11987 = vunpack.c.l.b16 %v11724
    %v11988 = vunpack.c.l.b16 %v11725
    %v11989 = vunpack.c.l.b16 %v11726
    %v11990 = vunpack.c.l.b16 %v11727
    %v11991 = vunpack.c.l.b16 %v11728
    %v11992 = vunpack.c.l.b16 %v11729
    %v11993 = vunpack.c.l.b16 %v11730
    %v11994 = vunpack.c.l.b16 %v11731
    %v11995 = vunpack.c.l.b16 %v11732
    %v11996 = vunpack.c.l.b16 %v11733
    %v11997 = vunpack.c.l.b16 %v11734
    %v11998 = vunpack.c.l.b16 %v11735
    %v11999 = vunpack.c.l.b16 %v11736
    %v12000 = vunpack.c.l.b16 %v11737
    %v12001 = vunpack.c.l.b16 %v11738
    %v12002 = vunpack.c.l.b16 %v11739
    %v12003 = vunpack.c.l.b16 %v11740
    %v12004 = vunpack.c.l.b16 %v11741
    %v12005 = vunpack.c.l.b16 %v11742
    %v12006 = vunpack.c.l.b16 %v11743
    %v12007 = vunpack.c.l.b16 %v11744
    %v12008 = vunpack.c.l.b16 %v11745
    %v12009 = vunpack.c.l.b16 %v11746
    %v12010 = vunpack.c.l.b16 %v11747
    %v12011 = vunpack.c.l.b16 %v11748
    %v12012 = vunpack.c.l.b16 %v11749
    %v12013 = vunpack.c.l.b16 %v11750
    %v12014 = vunpack.c.l.b16 %v11751
    %v12015 = vunpack.c.l.b16 %v11752
    %v12016 = vunpack.c.l.b16 %v11753
    %v12017 = vunpack.c.l.b16 %v11754
    %v12018 = vunpack.c.l.b16 %v11755
    %v12019 = vunpack.c.l.b16 %v11756
    %v12020 = vunpack.c.l.b16 %v11757
    %v12021 = vunpack.c.l.b16 %v11758
    %v12022 = vunpack.c.l.b16 %v11759
    %v12023 = vunpack.c.l.b16 %v11760
    %v12024 = vunpack.c.l.b16 %v11761
    %v12025 = vunpack.c.l.b16 %v11762
    %v12026 = vunpack.c.l.b16 %v11763
    %v12027 = vunpack.c.l.b16 %v11764
    %v12028 = vunpack.c.l.b16 %v11765
    %v12029 = vunpack.c.l.b16 %v11766
    %v12030 = vunpack.c.l.b16 %v11767
    %v12031 = vunpack.c.l.b16 %v11768
    %v12032 = vunpack.c.l.b16 %v11769
    %v12033 = vunpack.c.l.b16 %v11770
    %v12034 = vunpack.c.l.b16 %v11771
    %v12035 = vunpack.c.l.b16 %v11772
    %v12036 = vunpack.c.l.b16 %v11773
    %v12037 = vunpack.c.l.b16 %v11774
    %v12038 = vunpack.c.l.b16 %v11775
    %v12039 = vunpack.c.l.b16 %v11776
    %v12040 = vunpack.c.l.b16 %v11777
    %v12041 = vunpack.c.l.b16 %v11778
    %v12042 = vunpack.c.l.b16 %v11779
    %v12043 = vunpack.c.l.b16 %v11780
    %v12044 = vunpack.c.l.b16 %v11781
    %v12045 = vunpack.c.l.b16 %v11782
    %v12046 = vunpack.c.l.b16 %v11783
    %v12047 = vunpack.c.l.b16 %v11784
    %v12048 = vunpack.c.l.b16 %v11785
    %v12049 = vunpack.c.l.b16 %v11786
    %v12050 = vunpack.c.l.b16 %v11787
    %v12051 = vunpack.c.l.b16 %v11788
    %v12052 = vunpack.c.l.b16 %v11789
    %v12053 = vunpack.c.l.b16 %v11790
    %v12054 = vunpack.c.l.b16 %v11791
    %v12055 = vunpack.c.l.b16 %v11792
    %v12056 = vunpack.c.l.b16 %v11793
    %v12057 = vunpack.c.l.b16 %v11794
    %v12058 = vunpack.c.l.b16 %v11795
    %v12059 = vunpack.c.l.b16 %v11796
    %v12060 = vunpack.c.l.b16 %v11797
    %v12061 = vunpack.c.l.b16 %v11798
    %v12062 = vunpack.c.l.b16 %v11799
    %v12063 = vunpack.c.l.b16 %v11800
    %v12064 = vunpack.c.l.b16 %v11801
    %v12065 = vunpack.c.l.b16 %v11802
    %v12066 = vunpack.c.l.b16 %v11803
    %v12067 = vunpack.c.l.b16 %v11804
    %v12068 = vunpack.c.l.b16 %v11805
    %v12069 = vunpack.c.l.b16 %v11806
    %v12070 = vunpack.c.l.b16 %v11807
    %v12071 = vunpack.c.l.b16 %v11808
    %v12072 = vunpack.c.l.b16 %v11809
    %v12073 = vunpack.c.l.b16 %v11810
    %v12074 = vunpack.c.l.b16 %v11811
    %v12075 = vunpack.c.l.b16 %v11812
    %v12076 = vunpack.c.l.b16 %v11813
    %v12077 = vunpack.c.l.b16 %v11814
    %v12078 = vunpack.c.l.b16 %v11815
    %v12079 = vunpack.c.l.b16 %v11816
    %v12080 = vunpack.c.l.b16 %v11817
    %v12081 = vunpack.c.l.b16 %v11818
    %v12082 = vunpack.c.l.b16 %v11819
    %v12083 = vunpack.c.l.b16 %v11820
    %v12084 = vunpack.c.l.b16 %v11821
    %v12085 = vunpack.c.l.b16 %v11822
    %v12086 = vunpack.c.l.b16 %v11823
    %v12087 = vunpack.c.l.b16 %v11824
    %v12088 = vunpack.c.l.b16 %v11825
    %v12089 = vunpack.c.l.b16 %v11826
    %v12090 = vunpack.c.l.b16 %v11827
    %v12091 = vunpack.c.l.b16 %v11828
    %v12092 = vunpack.c.l.b16 %v11829
    %v12093 = vunpack.c.l.b16 %v11830
    %v12094 = vunpack.c.l.b16 %v11831
    %v12095 = vunpack.c.l.b16 %v11832
    %v12096 = vunpack.c.l.b16 %v11833
    %v12097 = vunpack.c.l.b16 %v11834
    %v12098 = vunpack.c.l.b16 %v11835
    %v12099 = vunpack.c.l.b16 %v11836
    %v12100 = vunpack.c.l.b16 %v11837
    %v12101 = vunpack.c.l.b16 %v11838
    %v12102 = vunpack.c.l.b16 %v11839
    %v12103 = vunpack.c.l.b16 %v11840
    %v12104 = vunpack.c.l.b16 %v11841
    %v12105 = vunpack.c.l.b16 %v11842
    %v12106 = vunpack.c.l.b16 %v11843
    %v12107 = vunpack.c.l.b16 %v11844
    %v12108 = vunpack.c.l.b16 %v11845
    %v12109 = vunpack.c.l.b16 %v11846
    %v12110 = vunpack.c.l.b16 %v11847
    %v12111 = vunpack.c.l.b16 %v11848
    %v12112 = vunpack.c.l.b16 %v11849
    %v12113 = vunpack.c.l.b16 %v11850
    %v12114 = vunpack.c.l.b16 %v11851
    %v12115 = vpack.c.b16 %v11988, %v11987
    %v12116 = vpack.c.b16 %v11990, %v11989
    %v12117 = vpack.c.b16 %v11992, %v11991
    %v12118 = vpack.c.b16 %v11994, %v11993
    %v12119 = vpack.c.b16 %v11996, %v11995
    %v12120 = vpack.c.b16 %v11998, %v11997
    %v12121 = vpack.c.b16 %v12000, %v11999
    %v12122 = vpack.c.b16 %v12002, %v12001
    %v12123 = vpack.c.b16 %v12004, %v12003
    %v12124 = vpack.c.b16 %v12006, %v12005
    %v12125 = vpack.c.b16 %v12008, %v12007
    %v12126 = vpack.c.b16 %v12010, %v12009
    %v12127 = vpack.c.b16 %v12012, %v12011
    %v12128 = vpack.c.b16 %v12014, %v12013
    %v12129 = vpack.c.b16 %v12016, %v12015
    %v12130 = vpack.c.b16 %v12018, %v12017
    %v12131 = vpack.c.b16 %v12020, %v12019
    %v12132 = vpack.c.b16 %v12022, %v12021
    %v12133 = vpack.c.b16 %v12024, %v12023
    %v12134 = vpack.c.b16 %v12026, %v12025
    %v12135 = vpack.c.b16 %v12028, %v12027
    %v12136 = vpack.c.b16 %v12030, %v12029
    %v12137 = vpack.c.b16 %v12032, %v12031
    %v12138 = vpack.c.b16 %v12034, %v12033
    %v12139 = vpack.c.b16 %v12036, %v12035
    %v12140 = vpack.c.b16 %v12038, %v12037
    %v12141 = vpack.c.b16 %v12040, %v12039
    %v12142 = vpack.c.b16 %v12042, %v12041
    %v12143 = vpack.c.b16 %v12044, %v12043
    %v12144 = vpack.c.b16 %v12046, %v12045
    %v12145 = vpack.c.b16 %v12048, %v12047
    %v12146 = vpack.c.b16 %v12050, %v12049
    %v12147 = vpack.c.b16 %v12052, %v12051
    %v12148 = vpack.c.b16 %v12054, %v12053
    %v12149 = vpack.c.b16 %v12056, %v12055
    %v12150 = vpack.c.b16 %v12058, %v12057
    %v12151 = vpack.c.b16 %v12060, %v12059
    %v12152 = vpack.c.b16 %v12062, %v12061
    %v12153 = vpack.c.b16 %v12064, %v12063
    %v12154 = vpack.c.b16 %v12066, %v12065
    %v12155 = vpack.c.b16 %v12068, %v12067
    %v12156 = vpack.c.b16 %v12070, %v12069
    %v12157 = vpack.c.b16 %v12072, %v12071
    %v12158 = vpack.c.b16 %v12074, %v12073
    %v12159 = vpack.c.b16 %v12076, %v12075
    %v12160 = vpack.c.b16 %v12078, %v12077
    %v12161 = vpack.c.b16 %v12080, %v12079
    %v12162 = vpack.c.b16 %v12082, %v12081
    %v12163 = vpack.c.b16 %v12084, %v12083
    %v12164 = vpack.c.b16 %v12086, %v12085
    %v12165 = vpack.c.b16 %v12088, %v12087
    %v12166 = vpack.c.b16 %v12090, %v12089
    %v12167 = vpack.c.b16 %v12092, %v12091
    %v12168 = vpack.c.b16 %v12094, %v12093
    %v12169 = vpack.c.b16 %v12096, %v12095
    %v12170 = vpack.c.b16 %v12098, %v12097
    %v12171 = vpack.c.b16 %v12100, %v12099
    %v12172 = vpack.c.b16 %v12102, %v12101
    %v12173 = vpack.c.b16 %v12104, %v12103
    %v12174 = vpack.c.b16 %v12106, %v12105
    %v12175 = vpack.c.b16 %v12108, %v12107
    %v12176 = vpack.c.b16 %v12110, %v12109
    %v12177 = vpack.c.b16 %v12112, %v12111
    %v12178 = vpack.c.b16 %v12114, %v12113
    %12243 = vmatprep.subr.bf16.mxu0 0
    %12244 = vmatpush1.bf16.msra.mxu0 %v12115
    %12245 = vmatprep.subr.bf16.mxu0 0
    %12246 = vmatpush1.bf16.msra.mxu0 %v12116
    %12247 = vmatprep.subr.bf16.mxu0 0
    %12248 = vmatpush1.bf16.msra.mxu0 %v12117
    %12249 = vmatprep.subr.bf16.mxu0 0
    %12250 = vmatpush1.bf16.msra.mxu0 %v12118
    %12251 = vmatprep.subr.bf16.mxu0 0
    %12252 = vmatpush1.bf16.msra.mxu0 %v12119
    %12253 = vmatprep.subr.bf16.mxu0 0
    %12254 = vmatpush1.bf16.msra.mxu0 %v12120
    %12255 = vmatprep.subr.bf16.mxu0 0
    %12256 = vmatpush1.bf16.msra.mxu0 %v12121
    %12257 = vmatprep.subr.bf16.mxu0 0
    %12258 = vmatpush1.bf16.msra.mxu0 %v12122
    %12259 = vmatprep.subr.bf16.mxu0 0
    %12260 = vmatpush1.bf16.msra.mxu0 %v12123
    %12261 = vmatprep.subr.bf16.mxu0 0
    %12262 = vmatpush1.bf16.msra.mxu0 %v12124
    %12263 = vmatprep.subr.bf16.mxu0 0
    %12264 = vmatpush1.bf16.msra.mxu0 %v12125
    %12265 = vmatprep.subr.bf16.mxu0 0
    %12266 = vmatpush1.bf16.msra.mxu0 %v12126
    %12267 = vmatprep.subr.bf16.mxu0 0
    %12268 = vmatpush1.bf16.msra.mxu0 %v12127
    %12269 = vmatprep.subr.bf16.mxu0 0
    %12270 = vmatpush1.bf16.msra.mxu0 %v12128
    %12271 = vmatprep.subr.bf16.mxu0 0
    %12272 = vmatpush1.bf16.msra.mxu0 %v12129
    %12273 = vmatprep.subr.bf16.mxu0 0
    %12274 = vmatpush1.bf16.msra.mxu0 %v12130
    %12275 = vmatprep.mubr.bf16.mxu0 %v11717
    %12276 = vmatmul.mubr.bf16.gmra.mrb[0].mxu0 %v11716
    %v12277 = vpop.f32.mrb[0].mxu0
    %v12278 = vadd.f32 %v11857, %v12277
    %v12279 = vpop.f32.mrb[0].mxu0
    %v12280 = vpop.f32.mrb[0].mxu0
    %v12281 = vpop.f32.mrb[0].mxu0
    %12282 = vdwg.mxu0
    %12283 = vmatprep.subr.bf16.mxu0 0
    %12284 = vmatpush1.bf16.msra.mxu0 %v12131
    %12285 = vmatprep.subr.bf16.mxu0 0
    %12286 = vmatpush1.bf16.msra.mxu0 %v12132
    %12287 = vmatprep.subr.bf16.mxu0 0
    %12288 = vmatpush1.bf16.msra.mxu0 %v12133
    %12289 = vmatprep.subr.bf16.mxu0 0
    %12290 = vmatpush1.bf16.msra.mxu0 %v12134
    %12291 = vmatprep.subr.bf16.mxu0 0
    %12292 = vmatpush1.bf16.msra.mxu0 %v12135
    %12293 = vmatprep.subr.bf16.mxu0 0
    %12294 = vmatpush1.bf16.msra.mxu0 %v12136
    %12295 = vmatprep.subr.bf16.mxu0 0
    %12296 = vmatpush1.bf16.msra.mxu0 %v12137
    %12297 = vmatprep.subr.bf16.mxu0 0
    %12298 = vmatpush1.bf16.msra.mxu0 %v12138
    %12299 = vmatprep.subr.bf16.mxu0 0
    %12300 = vmatpush1.bf16.msra.mxu0 %v12139
    %12301 = vmatprep.subr.bf16.mxu0 0
    %12302 = vmatpush1.bf16.msra.mxu0 %v12140
    %12303 = vmatprep.subr.bf16.mxu0 0
    %12304 = vmatpush1.bf16.msra.mxu0 %v12141
    %12305 = vmatprep.subr.bf16.mxu0 0
    %12306 = vmatpush1.bf16.msra.mxu0 %v12142
    %12307 = vmatprep.subr.bf16.mxu0 0
    %12308 = vmatpush1.bf16.msra.mxu0 %v12143
    %12309 = vmatprep.subr.bf16.mxu0 0
    %12310 = vmatpush1.bf16.msra.mxu0 %v12144
    %12311 = vmatprep.subr.bf16.mxu0 0
    %12312 = vmatpush1.bf16.msra.mxu0 %v12145
    %12313 = vmatprep.subr.bf16.mxu0 0
    %12314 = vmatpush1.bf16.msra.mxu0 %v12146
    %12315 = vmatprep.mubr.bf16.mxu0 %v11719
    %12316 = vmatmul.mubr.bf16.gmra.mrb[0].mxu0 %v11718
    %v12317 = vpop.f32.mrb[0].mxu0
    %v12318 = vadd.f32 %v12278, %v12317
    %v12319 = vpop.f32.mrb[0].mxu0
    %v12320 = vpop.f32.mrb[0].mxu0
    %v12321 = vpop.f32.mrb[0].mxu0
    %12322 = vdwg.mxu0
    %12323 = vmatprep.subr.bf16.mxu0 0
    %12324 = vmatpush1.bf16.msra.mxu0 %v12147
    %12325 = vmatprep.subr.bf16.mxu0 0
    %12326 = vmatpush1.bf16.msra.mxu0 %v12148
    %12327 = vmatprep.subr.bf16.mxu0 0
    %12328 = vmatpush1.bf16.msra.mxu0 %v12149
    %12329 = vmatprep.subr.bf16.mxu0 0
    %12330 = vmatpush1.bf16.msra.mxu0 %v12150
    %12331 = vmatprep.subr.bf16.mxu0 0
    %12332 = vmatpush1.bf16.msra.mxu0 %v12151
    %12333 = vmatprep.subr.bf16.mxu0 0
    %12334 = vmatpush1.bf16.msra.mxu0 %v12152
    %12335 = vmatprep.subr.bf16.mxu0 0
    %12336 = vmatpush1.bf16.msra.mxu0 %v12153
    %12337 = vmatprep.subr.bf16.mxu0 0
    %12338 = vmatpush1.bf16.msra.mxu0 %v12154
    %12339 = vmatprep.subr.bf16.mxu0 0
    %12340 = vmatpush1.bf16.msra.mxu0 %v12155
    %12341 = vmatprep.subr.bf16.mxu0 0
    %12342 = vmatpush1.bf16.msra.mxu0 %v12156
    %12343 = vmatprep.subr.bf16.mxu0 0
    %12344 = vmatpush1.bf16.msra.mxu0 %v12157
    %12345 = vmatprep.subr.bf16.mxu0 0
    %12346 = vmatpush1.bf16.msra.mxu0 %v12158
    %12347 = vmatprep.subr.bf16.mxu0 0
    %12348 = vmatpush1.bf16.msra.mxu0 %v12159
    %12349 = vmatprep.subr.bf16.mxu0 0
    %12350 = vmatpush1.bf16.msra.mxu0 %v12160
    %12351 = vmatprep.subr.bf16.mxu0 0
    %12352 = vmatpush1.bf16.msra.mxu0 %v12161
    %12353 = vmatprep.subr.bf16.mxu0 0
    %12354 = vmatpush1.bf16.msra.mxu0 %v12162
    %12355 = vmatprep.mubr.bf16.mxu0 %v11721
    %12356 = vmatmul.mubr.bf16.gmra.mrb[0].mxu0 %v11720
    %v12357 = vpop.f32.mrb[0].mxu0
    %v12358 = vadd.f32 %v12318, %v12357
    %v12359 = vpop.f32.mrb[0].mxu0
    %v12360 = vpop.f32.mrb[0].mxu0
    %v12361 = vpop.f32.mrb[0].mxu0
    %12362 = vdwg.mxu0
    %12363 = vmatprep.subr.bf16.mxu0 0
    %12364 = vmatpush1.bf16.msra.mxu0 %v12163
    %12365 = vmatprep.subr.bf16.mxu0 0
    %12366 = vmatpush1.bf16.msra.mxu0 %v12164
    %12367 = vmatprep.subr.bf16.mxu0 0
    %12368 = vmatpush1.bf16.msra.mxu0 %v12165
    %12369 = vmatprep.subr.bf16.mxu0 0
    %12370 = vmatpush1.bf16.msra.mxu0 %v12166
    %12371 = vmatprep.subr.bf16.mxu0 0
    %12372 = vmatpush1.bf16.msra.mxu0 %v12167
    %12373 = vmatprep.subr.bf16.mxu0 0
    %12374 = vmatpush1.bf16.msra.mxu0 %v12168
    %12375 = vmatprep.subr.bf16.mxu0 0
    %12376 = vmatpush1.bf16.msra.mxu0 %v12169
    %12377 = vmatprep.subr.bf16.mxu0 0
    %12378 = vmatpush1.bf16.msra.mxu0 %v12170
    %12379 = vmatprep.subr.bf16.mxu0 0
    %12380 = vmatpush1.bf16.msra.mxu0 %v12171
    %12381 = vmatprep.subr.bf16.mxu0 0
    %12382 = vmatpush1.bf16.msra.mxu0 %v12172
    %12383 = vmatprep.subr.bf16.mxu0 0
    %12384 = vmatpush1.bf16.msra.mxu0 %v12173
    %12385 = vmatprep.subr.bf16.mxu0 0
    %12386 = vmatpush1.bf16.msra.mxu0 %v12174
    %12387 = vmatprep.subr.bf16.mxu0 0
    %12388 = vmatpush1.bf16.msra.mxu0 %v12175
    %12389 = vmatprep.subr.bf16.mxu0 0
    %12390 = vmatpush1.bf16.msra.mxu0 %v12176
    %12391 = vmatprep.subr.bf16.mxu0 0
    %12392 = vmatpush1.bf16.msra.mxu0 %v12177
    %12393 = vmatprep.subr.bf16.mxu0 0
    %12394 = vmatpush1.bf16.msra.mxu0 %v12178
    %12395 = vmatprep.mubr.bf16.mxu0 %v11723
    %12396 = vmatmul.mubr.bf16.gmra.mrb[0].mxu0 %v11722
    %v12397 = vpop.f32.mrb[0].mxu0
    %v12398 = vadd.f32 %v12358, %v12397
    %v12399 = vpop.f32.mrb[0].mxu0
    %v12400 = vpop.f32.mrb[0].mxu0
    %v12401 = vpop.f32.mrb[0].mxu0
    %12402 = vdwg.mxu0
    %12403 = vst [vmem:[%s5] sm:$0xff] %v12398
    // Predicated region
    $region38: #{dueling_head_forward.1} parent=1 // pred_check
      _
    $region39: #{dueling_head_forward.1} parent=1 // pred_check_branch
      %12405 = sbr.rel (0) target = $region41
    $region40: #{dueling_head_forward.1} parent=1 // pred_region
      _
    $region41: #{dueling_head_forward.1} parent=1 // pred_fallthru
      _
    // Predicated region
    $region42: #{dueling_head_forward.1} parent=1 // pred_check
      _
    $region43: #{dueling_head_forward.1} parent=1 // pred_check_branch
      %12407 = sbr.rel (0) target = $region45
    $region44: #{dueling_head_forward.1} parent=1 // pred_region
      _
    $region45: #{dueling_head_forward.1} parent=1 // pred_fallthru
      _
    %12408 = vsyncpa [#allocation3], 1
    %12409 = vsyncpa [#allocation5], 1
    %12410 = vsyncpa [#allocation8], 1

</llo_original>
